<compile_context>
chip_gen: v7x
topology: tpu7x:2x2x1
jax: 0.10.0
libtpu: 0.0.40
codegen_flags: <defaults>
</compile_context>

<pallas_src>
import functools

import numpy as np
import jax
import jax.numpy as jnp
from jax.experimental import pallas as pl
from jax.experimental.pallas import tpu as pltpu

NDF = 8
NUM_CLASSES = 10
LRELU_SLOPE = 0.2
BN_EPS = 1e-5


def _ru(x, m):
    return ((x + m - 1) // m) * m


def _lrelu(z):
    return jnp.where(z >= 0, z, LRELU_SLOPE * z)


def _vmem_specs(n):
    return [pl.BlockSpec(memory_space=pltpu.MemorySpace.VMEM) for _ in range(n)]


# ----------------------------------------------------------------------------
# Fused kernel: conv1+LReLU -> im2col -> conv2+BN+LReLU -> im2col
#               -> conv3+BN+LReLU -> conv4 + Sigmoid.  Everything in VMEM.
# ----------------------------------------------------------------------------

def _bn_lrelu(y, g, b, m_true):
    """Train-mode BatchNorm (masked batch stats over valid M cols) + LeakyReLU."""
    inv_m = 1.0 / float(m_true)
    lane = jax.lax.broadcasted_iota(jnp.int32, (1, y.shape[1]), 1)
    valid = (lane < m_true).astype(jnp.float32)
    mu = jnp.sum(y * valid, axis=1, keepdims=True) * inv_m
    d = (y - mu) * valid
    var = jnp.sum(d * d, axis=1, keepdims=True) * inv_m
    z = (y - mu) * jax.lax.rsqrt(var + BN_EPS) * g + b
    return _lrelu(z)


def _im2col_mm(y_bf16, s_ref):
    """In-kernel im2col as matmuls: patches^T[(ij,c), m_out] = (y @ S_ij)[c, m_out].

    y_bf16: (Cin, Mp_in) bf16 activations.
    s_ref : (KH*KW, Mp_in, Mp_out) 0/1 bf16 shift-selection constants.
    Each output element is a single selected bf16 value (exact gather).
    """
    parts = [
        jnp.dot(y_bf16, s_ref[k], preferred_element_type=jnp.float32)
        for k in range(s_ref.shape[0])
    ]
    return jnp.concatenate(parts, axis=0).astype(jnp.bfloat16)


def _fused_kernel(pt1_ref, wt1_ref, s2_ref, wt2_ref, g2_ref, b2_ref,
                  s3_ref, wt3_ref, g3_ref, b3_ref, w4_ref, sel4_ref,
                  o_ref, *, m2, m3):
    # conv1 (4,2,1), im2col precomputed on the raw input, + LeakyReLU(0.2)
    y1 = _lrelu(jnp.dot(wt1_ref[...], pt1_ref[...],
                        preferred_element_type=jnp.float32))
    # TODO(synk): nn.Dropout(0.2) has no deterministic equivalent; identity used.
    y1 = y1.astype(jnp.bfloat16)                                   # (C1, Mp1)

    # conv2 (4,2,1) + BatchNorm(batch stats) + LeakyReLU(0.2)
    pt2 = _im2col_mm(y1, s2_ref)                                   # (K2, Mp2)
    y2 = _bn_lrelu(jnp.dot(wt2_ref[...], pt2, preferred_element_type=jnp.float32),
                   g2_ref[...], b2_ref[...], m2)
    y2 = y2.astype(jnp.bfloat16)                                   # (C2, Mp2)

    # conv3 (3,2,1) + BatchNorm + LeakyReLU(0.2)
    pt3 = _im2col_mm(y2, s3_ref)                                   # (K3, Mp3)
    y3 = _bn_lrelu(jnp.dot(wt3_ref[...], pt3, preferred_element_type=jnp.float32),
                   g3_ref[...], b3_ref[...], m3)                   # (C3, Mp3) f32

    # conv4 (4,1,0) over the final 4x4 map + Sigmoid.  w4_ref tiles the conv4
    # weights over each batch's spatial columns (zero in padded columns);
    # sel4_ref group-sums each spatial block on the MXU -> one logit / sample.
    t = jnp.sum(y3 * w4_ref[...], axis=0, keepdims=True)           # (1, Mp3)
    logits = jnp.dot(t, sel4_ref[...], preferred_element_type=jnp.float32)
    o_ref[...] = 1.0 / (1.0 + jnp.exp(-logits))                    # (1, Npad)


def _fused_call(pt1, wt1, s2, wt2, g2, b2, s3, wt3, g3, b3, w4map, sel4,
                m2, m3):
    npad = sel4.shape[1]
    return pl.pallas_call(
        functools.partial(_fused_kernel, m2=m2, m3=m3),
        out_shape=jax.ShapeDtypeStruct((1, npad), jnp.float32),
        in_specs=_vmem_specs(12),
        out_specs=pl.BlockSpec(memory_space=pltpu.MemorySpace.VMEM),
    )(pt1, wt1, s2, wt2, g2, b2, s3, wt3, g3, b3, w4map, sel4)


# ----------------------------------------------------------------------------
# XLA-side layout glue (layer-1 im2col, weight reshapes) + constant builders.
# ----------------------------------------------------------------------------

def _im2col_T(x_nhwc, kh, kw, stride, pad):
    """Conv patches of the raw input, transposed & lane-padded: (K, Mp) bf16."""
    if pad:
        x_nhwc = jnp.pad(x_nhwc, ((0, 0), (pad, pad), (pad, pad), (0, 0)))
    B, Hp, Wp, C = x_nhwc.shape
    Ho = (Hp - kh) // stride + 1
    Wo = (Wp - kw) // stride + 1
    cols = []
    for i in range(kh):
        for j in range(kw):
            cols.append(
                x_nhwc[:, i:i + Ho * stride:stride, j:j + Wo * stride:stride, :])
    patches = jnp.stack(cols, axis=3)                      # (B,Ho,Wo,KH*KW,C)
    M = B * Ho * Wo
    pt = patches.reshape(M, kh * kw * C).T                 # (K, M)
    Mp = _ru(M, 128)
    pt = jnp.pad(pt, ((0, 0), (0, Mp - M)))
    return pt.astype(jnp.bfloat16), (Ho, Wo, M)


def _w_t(w_oihw):
    """PyTorch (Cout,Cin,KH,KW) -> (Cout, KH*KW*Cin) bf16 matching im2col K."""
    cout, cin, kh, kw = w_oihw.shape
    return jnp.transpose(w_oihw, (0, 2, 3, 1)).reshape(
        cout, kh * kw * cin).astype(jnp.bfloat16)


def _build_selectors(B, H, W, kh, kw, stride, pad, m_in_pad):
    """0/1 shift-selection matrices that turn in-kernel im2col into matmuls.

    S[ij][m_in, m_out] = 1 iff conv-output column m_out reads input column m_in
    at kernel offset ij (implicit zero padding => missing entries stay zero).
    Column ordering is (batch, out_row, out_col) row-major on both sides.
    """
    Ho = (H + 2 * pad - kh) // stride + 1
    Wo = (W + 2 * pad - kw) // stride + 1
    m_out = B * Ho * Wo
    m_out_pad = _ru(m_out, 128)
    S = np.zeros((kh * kw, m_in_pad, m_out_pad), np.float32)
    for b in range(B):
        for oh in range(Ho):
            for ow in range(Wo):
                col = b * Ho * Wo + oh * Wo + ow
                for di in range(kh):
                    hin = oh * stride + di - pad
                    if hin < 0 or hin >= H:
                        continue
                    for dj in range(kw):
                        win = ow * stride + dj - pad
                        if win < 0 or win >= W:
                            continue
                        S[di * kw + dj, b * H * W + hin * W + win, col] = 1.0
    return jnp.asarray(S, dtype=jnp.bfloat16), (Ho, Wo, m_out, m_out_pad)


# ----------------------------------------------------------------------------
# Model.
# ----------------------------------------------------------------------------

def init_params(key, ndf=NDF, num_classes=NUM_CLASSES):
    ks = jax.random.split(key, 8)
    p = {}
    p["w1"] = 0.05 * jax.random.normal(ks[0], (ndf, 1 + num_classes, 4, 4), jnp.float32)
    p["w2"] = 0.05 * jax.random.normal(ks[1], (ndf * 2, ndf, 4, 4), jnp.float32)
    p["w3"] = 0.05 * jax.random.normal(ks[2], (ndf * 4, ndf * 2, 3, 3), jnp.float32)
    p["w4"] = 0.05 * jax.random.normal(ks[3], (1, ndf * 4, 4, 4), jnp.float32)
    p["g2"] = 1.0 + 0.1 * jax.random.normal(ks[4], (ndf * 2,), jnp.float32)
    p["b2"] = 0.1 * jax.random.normal(ks[5], (ndf * 2,), jnp.float32)
    p["g3"] = 1.0 + 0.1 * jax.random.normal(ks[6], (ndf * 4,), jnp.float32)
    p["b3"] = 0.1 * jax.random.normal(ks[7], (ndf * 4,), jnp.float32)
    return p


def discriminator_forward(params, x_nchw, labels, num_classes=NUM_CLASSES):
    B, _, H, W = x_nchw.shape
    x = jnp.transpose(x_nchw, (0, 2, 3, 1)).astype(jnp.float32)   # NCHW -> NHWC
    # label_onehot scatter_ onto zeros == per-pixel one-hot label maps.
    onehot = jax.nn.one_hot(labels, num_classes, dtype=jnp.float32)
    onehot_map = jnp.broadcast_to(onehot[:, None, None, :], (B, H, W, num_classes))
    xin = jnp.concatenate([x, onehot_map], axis=-1)               # (B,H,W,1+nc)

    # Layer-1 im2col is the only XLA-side data movement; layers 2/3 im2col run
    # in-kernel as shift-selection matmuls against compile-time constants.
    pt1, (h1, w1, _) = _im2col_T(xin, 4, 4, 2, 1)
    mp1 = pt1.shape[1]
    s2, (h2, w2, m2, mp2) = _build_selectors(B, h1, w1, 4, 4, 2, 1, mp1)
    s3, (h3, w3, m3, mp3) = _build_selectors(B, h2, w2, 3, 3, 2, 1, mp2)

    # conv4 + Sigmoid head constants.
    c3 = params["w3"].shape[0]
    kh4, kw4 = params["w4"].shape[2], params["w4"].shape[3]
    assert (kh4, kw4) == (h3, w3), "conv4 must reduce the full final map"
    spatial = h3 * w3
    w4_cs = params["w4"][0].reshape(c3, spatial).astype(jnp.float32)
    w4map = jnp.pad(jnp.tile(w4_cs, (1, B)),
                    ((0, 0), (0, mp3 - B * spatial)))             # (C3, Mp3)
    npad = _ru(max(B, 1), 128)                                    # lane-dense out
    sel_np = np.zeros((mp3, npad), np.float32)
    for m in range(B * spatial):
        sel_np[m, m // spatial] = 1.0                             # per-sample group-sum
    sel4 = jnp.asarray(sel_np)

    g2 = params["g2"].astype(jnp.float32).reshape(-1, 1)
    b2 = params["b2"].astype(jnp.float32).reshape(-1, 1)
    g3 = params["g3"].astype(jnp.float32).reshape(-1, 1)
    b3 = params["b3"].astype(jnp.float32).reshape(-1, 1)

    out = _fused_call(pt1, _w_t(params["w1"]), s2, _w_t(params["w2"]), g2, b2,
                      s3, _w_t(params["w3"]), g3, b3, w4map, sel4, m2, m3)
    return out[0, :B]                                             # .view(-1)


# ----------------------------------------------------------------------------
# Pure-JAX reference (XLA convs) with identical semantics, for self-check.
# ----------------------------------------------------------------------------

def _reference_forward(params, x_nchw, labels, num_classes=NUM_CLASSES):
    B, _, H, W = x_nchw.shape
    onehot = jax.nn.one_hot(labels, num_classes, dtype=jnp.float32)
    onehot_map = jnp.broadcast_to(onehot[:, :, None, None], (B, num_classes, H, W))
    h = jnp.concatenate([x_nchw.astype(jnp.float32), onehot_map], axis=1)

    def conv(z, w, stride, pad):
        return jax.lax.conv_general_dilated(
            z, w, (stride, stride), [(pad, pad), (pad, pad)],
            dimension_numbers=("NCHW", "OIHW", "NCHW"))

    def bn(z, g, b):
        mu = jnp.mean(z, axis=(0, 2, 3), keepdims=True)
        var = jnp.mean((z - mu) ** 2, axis=(0, 2, 3), keepdims=True)
        return ((z - mu) * jax.lax.rsqrt(var + BN_EPS)
                * g.reshape(1, -1, 1, 1) + b.reshape(1, -1, 1, 1))

    h = _lrelu(conv(h, params["w1"], 2, 1))
    h = _lrelu(bn(conv(h, params["w2"], 2, 1), params["g2"], params["b2"]))
    h = _lrelu(bn(conv(h, params["w3"], 2, 1), params["g3"], params["b3"]))
    h = conv(h, params["w4"], 1, 0)
    return jax.nn.sigmoid(h).reshape(-1)


if __name__ == "__main__":
    key = jax.random.PRNGKey(0)
    kp, kx, kl = jax.random.split(key, 3)
    params = init_params(kp)

    # MNIST-style input implied by the conv stack (28 -> 14 -> 7 -> 4 -> 1).
    B, H, W = 2, 28, 28
    x = jax.random.normal(kx, (B, 1, H, W), jnp.float32)
    labels = jax.random.randint(kl, (B,), 0, NUM_CLASSES, dtype=jnp.int32)

    fwd = jax.jit(functools.partial(discriminator_forward, params))
    out = jax.block_until_ready(fwd(x, labels))

    assert out.shape == (B,), out.shape
    assert bool(jnp.all(jnp.isfinite(out)))
    assert bool(jnp.all((out >= 0.0) & (out <= 1.0)))

    # Self-check against the XLA conv reference (bf16 MXU tolerance).
    ref = jax.block_until_ready(
        jax.jit(functools.partial(_reference_forward, params))(x, labels))
    max_err = float(jnp.max(jnp.abs(out - ref)))
    assert max_err < 0.1, f"mismatch vs reference: max abs err {max_err}"

    print("KERNEL_OK")
</pallas_src>

<mosaic_0001>
module attributes {stable_mosaic.version = 11 : i64} {
  func.func @_fused_kernel(%arg0: memref<176x512xbf16, #tpu.memory_space<vmem>>, %arg1: memref<8x176xbf16, #tpu.memory_space<vmem>>, %arg2: memref<16x512x128xbf16, #tpu.memory_space<vmem>>, %arg3: memref<16x128xbf16, #tpu.memory_space<vmem>>, %arg4: memref<16x1xf32, #tpu.memory_space<vmem>>, %arg5: memref<16x1xf32, #tpu.memory_space<vmem>>, %arg6: memref<9x128x128xbf16, #tpu.memory_space<vmem>>, %arg7: memref<32x144xbf16, #tpu.memory_space<vmem>>, %arg8: memref<32x1xf32, #tpu.memory_space<vmem>>, %arg9: memref<32x1xf32, #tpu.memory_space<vmem>>, %arg10: memref<32x128xf32, #tpu.memory_space<vmem>>, %arg11: memref<128x128xf32, #tpu.memory_space<vmem>>, %arg12: memref<1x128xf32, #tpu.memory_space<vmem>>) attributes {dimension_semantics = [], scalar_prefetch = 0 : i64, scratch_operands = 0 : i64, tpu.core_type = #tpu.core_type<tc>} {
    %c0 = arith.constant 0 : index
    %c0_0 = arith.constant 0 : index
    %0 = vector.load %arg1[%c0, %c0_0] : memref<8x176xbf16, #tpu.memory_space<vmem>>, vector<8x176xbf16>
    %c0_1 = arith.constant 0 : index
    %c0_2 = arith.constant 0 : index
    %1 = vector.load %arg0[%c0_1, %c0_2] : memref<176x512xbf16, #tpu.memory_space<vmem>>, vector<176x512xbf16>
    %cst = arith.constant dense<0.000000e+00> : vector<8x512xf32>
    %2 = tpu.matmul %0, %1, %cst {dimension_numbers = #tpu.dot_dimension_numbers<[1], [0], [0], [1], [0, 0, 1, 1], [], []>} : vector<8x176xbf16>, vector<176x512xbf16>, vector<8x512xf32> -> vector<8x512xf32>
    %cst_3 = arith.constant 0.000000e+00 : f32
    %3 = vector.broadcast %cst_3 : f32 to vector<8x512xf32>
    %4 = arith.cmpf oge, %2, %3 : vector<8x512xf32>
    %cst_4 = arith.constant 2.000000e-01 : f32
    %5 = vector.broadcast %cst_4 : f32 to vector<8x512xf32>
    %6 = arith.mulf %5, %2 : vector<8x512xf32>
    %7 = arith.select %4, %2, %6 : vector<8x512xi1>, vector<8x512xf32>
    %8 = arith.truncf %7 : vector<8x512xf32> to vector<8x512xbf16>
    %c0_5 = arith.constant 0 : index
    %c0_6 = arith.constant 0 : index
    %c0_7 = arith.constant 0 : index
    %9 = vector.load %arg2[%c0_5, %c0_6, %c0_7] : memref<16x512x128xbf16, #tpu.memory_space<vmem>>, vector<1x512x128xbf16>
    %10 = vector.shape_cast %9 : vector<1x512x128xbf16> to vector<512x128xbf16>
    %cst_8 = arith.constant dense<0.000000e+00> : vector<8x128xf32>
    %11 = tpu.matmul %8, %10, %cst_8 {dimension_numbers = #tpu.dot_dimension_numbers<[1], [0], [0], [1], [0, 0, 1, 1], [], []>} : vector<8x512xbf16>, vector<512x128xbf16>, vector<8x128xf32> -> vector<8x128xf32>
    %c1 = arith.constant 1 : index
    %c0_9 = arith.constant 0 : index
    %c0_10 = arith.constant 0 : index
    %12 = vector.load %arg2[%c1, %c0_9, %c0_10] : memref<16x512x128xbf16, #tpu.memory_space<vmem>>, vector<1x512x128xbf16>
    %13 = vector.shape_cast %12 : vector<1x512x128xbf16> to vector<512x128xbf16>
    %cst_11 = arith.constant dense<0.000000e+00> : vector<8x128xf32>
    %14 = tpu.matmul %8, %13, %cst_11 {dimension_numbers = #tpu.dot_dimension_numbers<[1], [0], [0], [1], [0, 0, 1, 1], [], []>} : vector<8x512xbf16>, vector<512x128xbf16>, vector<8x128xf32> -> vector<8x128xf32>
    %c2 = arith.constant 2 : index
    %c0_12 = arith.constant 0 : index
    %c0_13 = arith.constant 0 : index
    %15 = vector.load %arg2[%c2, %c0_12, %c0_13] : memref<16x512x128xbf16, #tpu.memory_space<vmem>>, vector<1x512x128xbf16>
    %16 = vector.shape_cast %15 : vector<1x512x128xbf16> to vector<512x128xbf16>
    %cst_14 = arith.constant dense<0.000000e+00> : vector<8x128xf32>
    %17 = tpu.matmul %8, %16, %cst_14 {dimension_numbers = #tpu.dot_dimension_numbers<[1], [0], [0], [1], [0, 0, 1, 1], [], []>} : vector<8x512xbf16>, vector<512x128xbf16>, vector<8x128xf32> -> vector<8x128xf32>
    %c3 = arith.constant 3 : index
    %c0_15 = arith.constant 0 : index
    %c0_16 = arith.constant 0 : index
    %18 = vector.load %arg2[%c3, %c0_15, %c0_16] : memref<16x512x128xbf16, #tpu.memory_space<vmem>>, vector<1x512x128xbf16>
    %19 = vector.shape_cast %18 : vector<1x512x128xbf16> to vector<512x128xbf16>
    %cst_17 = arith.constant dense<0.000000e+00> : vector<8x128xf32>
    %20 = tpu.matmul %8, %19, %cst_17 {dimension_numbers = #tpu.dot_dimension_numbers<[1], [0], [0], [1], [0, 0, 1, 1], [], []>} : vector<8x512xbf16>, vector<512x128xbf16>, vector<8x128xf32> -> vector<8x128xf32>
    %c4 = arith.constant 4 : index
    %c0_18 = arith.constant 0 : index
    %c0_19 = arith.constant 0 : index
    %21 = vector.load %arg2[%c4, %c0_18, %c0_19] : memref<16x512x128xbf16, #tpu.memory_space<vmem>>, vector<1x512x128xbf16>
    %22 = vector.shape_cast %21 : vector<1x512x128xbf16> to vector<512x128xbf16>
    %cst_20 = arith.constant dense<0.000000e+00> : vector<8x128xf32>
    %23 = tpu.matmul %8, %22, %cst_20 {dimension_numbers = #tpu.dot_dimension_numbers<[1], [0], [0], [1], [0, 0, 1, 1], [], []>} : vector<8x512xbf16>, vector<512x128xbf16>, vector<8x128xf32> -> vector<8x128xf32>
    %c5 = arith.constant 5 : index
    %c0_21 = arith.constant 0 : index
    %c0_22 = arith.constant 0 : index
    %24 = vector.load %arg2[%c5, %c0_21, %c0_22] : memref<16x512x128xbf16, #tpu.memory_space<vmem>>, vector<1x512x128xbf16>
    %25 = vector.shape_cast %24 : vector<1x512x128xbf16> to vector<512x128xbf16>
    %cst_23 = arith.constant dense<0.000000e+00> : vector<8x128xf32>
    %26 = tpu.matmul %8, %25, %cst_23 {dimension_numbers = #tpu.dot_dimension_numbers<[1], [0], [0], [1], [0, 0, 1, 1], [], []>} : vector<8x512xbf16>, vector<512x128xbf16>, vector<8x128xf32> -> vector<8x128xf32>
    %c6 = arith.constant 6 : index
    %c0_24 = arith.constant 0 : index
    %c0_25 = arith.constant 0 : index
    %27 = vector.load %arg2[%c6, %c0_24, %c0_25] : memref<16x512x128xbf16, #tpu.memory_space<vmem>>, vector<1x512x128xbf16>
    %28 = vector.shape_cast %27 : vector<1x512x128xbf16> to vector<512x128xbf16>
    %cst_26 = arith.constant dense<0.000000e+00> : vector<8x128xf32>
    %29 = tpu.matmul %8, %28, %cst_26 {dimension_numbers = #tpu.dot_dimension_numbers<[1], [0], [0], [1], [0, 0, 1, 1], [], []>} : vector<8x512xbf16>, vector<512x128xbf16>, vector<8x128xf32> -> vector<8x128xf32>
    %c7 = arith.constant 7 : index
    %c0_27 = arith.constant 0 : index
    %c0_28 = arith.constant 0 : index
    %30 = vector.load %arg2[%c7, %c0_27, %c0_28] : memref<16x512x128xbf16, #tpu.memory_space<vmem>>, vector<1x512x128xbf16>
    %31 = vector.shape_cast %30 : vector<1x512x128xbf16> to vector<512x128xbf16>
    %cst_29 = arith.constant dense<0.000000e+00> : vector<8x128xf32>
    %32 = tpu.matmul %8, %31, %cst_29 {dimension_numbers = #tpu.dot_dimension_numbers<[1], [0], [0], [1], [0, 0, 1, 1], [], []>} : vector<8x512xbf16>, vector<512x128xbf16>, vector<8x128xf32> -> vector<8x128xf32>
    %c8 = arith.constant 8 : index
    %c0_30 = arith.constant 0 : index
    %c0_31 = arith.constant 0 : index
    %33 = vector.load %arg2[%c8, %c0_30, %c0_31] : memref<16x512x128xbf16, #tpu.memory_space<vmem>>, vector<1x512x128xbf16>
    %34 = vector.shape_cast %33 : vector<1x512x128xbf16> to vector<512x128xbf16>
    %cst_32 = arith.constant dense<0.000000e+00> : vector<8x128xf32>
    %35 = tpu.matmul %8, %34, %cst_32 {dimension_numbers = #tpu.dot_dimension_numbers<[1], [0], [0], [1], [0, 0, 1, 1], [], []>} : vector<8x512xbf16>, vector<512x128xbf16>, vector<8x128xf32> -> vector<8x128xf32>
    %c9 = arith.constant 9 : index
    %c0_33 = arith.constant 0 : index
    %c0_34 = arith.constant 0 : index
    %36 = vector.load %arg2[%c9, %c0_33, %c0_34] : memref<16x512x128xbf16, #tpu.memory_space<vmem>>, vector<1x512x128xbf16>
    %37 = vector.shape_cast %36 : vector<1x512x128xbf16> to vector<512x128xbf16>
    %cst_35 = arith.constant dense<0.000000e+00> : vector<8x128xf32>
    %38 = tpu.matmul %8, %37, %cst_35 {dimension_numbers = #tpu.dot_dimension_numbers<[1], [0], [0], [1], [0, 0, 1, 1], [], []>} : vector<8x512xbf16>, vector<512x128xbf16>, vector<8x128xf32> -> vector<8x128xf32>
    %c10 = arith.constant 10 : index
    %c0_36 = arith.constant 0 : index
    %c0_37 = arith.constant 0 : index
    %39 = vector.load %arg2[%c10, %c0_36, %c0_37] : memref<16x512x128xbf16, #tpu.memory_space<vmem>>, vector<1x512x128xbf16>
    %40 = vector.shape_cast %39 : vector<1x512x128xbf16> to vector<512x128xbf16>
    %cst_38 = arith.constant dense<0.000000e+00> : vector<8x128xf32>
    %41 = tpu.matmul %8, %40, %cst_38 {dimension_numbers = #tpu.dot_dimension_numbers<[1], [0], [0], [1], [0, 0, 1, 1], [], []>} : vector<8x512xbf16>, vector<512x128xbf16>, vector<8x128xf32> -> vector<8x128xf32>
    %c11 = arith.constant 11 : index
    %c0_39 = arith.constant 0 : index
    %c0_40 = arith.constant 0 : index
    %42 = vector.load %arg2[%c11, %c0_39, %c0_40] : memref<16x512x128xbf16, #tpu.memory_space<vmem>>, vector<1x512x128xbf16>
    %43 = vector.shape_cast %42 : vector<1x512x128xbf16> to vector<512x128xbf16>
    %cst_41 = arith.constant dense<0.000000e+00> : vector<8x128xf32>
    %44 = tpu.matmul %8, %43, %cst_41 {dimension_numbers = #tpu.dot_dimension_numbers<[1], [0], [0], [1], [0, 0, 1, 1], [], []>} : vector<8x512xbf16>, vector<512x128xbf16>, vector<8x128xf32> -> vector<8x128xf32>
    %c12 = arith.constant 12 : index
    %c0_42 = arith.constant 0 : index
    %c0_43 = arith.constant 0 : index
    %45 = vector.load %arg2[%c12, %c0_42, %c0_43] : memref<16x512x128xbf16, #tpu.memory_space<vmem>>, vector<1x512x128xbf16>
    %46 = vector.shape_cast %45 : vector<1x512x128xbf16> to vector<512x128xbf16>
    %cst_44 = arith.constant dense<0.000000e+00> : vector<8x128xf32>
    %47 = tpu.matmul %8, %46, %cst_44 {dimension_numbers = #tpu.dot_dimension_numbers<[1], [0], [0], [1], [0, 0, 1, 1], [], []>} : vector<8x512xbf16>, vector<512x128xbf16>, vector<8x128xf32> -> vector<8x128xf32>
    %c13 = arith.constant 13 : index
    %c0_45 = arith.constant 0 : index
    %c0_46 = arith.constant 0 : index
    %48 = vector.load %arg2[%c13, %c0_45, %c0_46] : memref<16x512x128xbf16, #tpu.memory_space<vmem>>, vector<1x512x128xbf16>
    %49 = vector.shape_cast %48 : vector<1x512x128xbf16> to vector<512x128xbf16>
    %cst_47 = arith.constant dense<0.000000e+00> : vector<8x128xf32>
    %50 = tpu.matmul %8, %49, %cst_47 {dimension_numbers = #tpu.dot_dimension_numbers<[1], [0], [0], [1], [0, 0, 1, 1], [], []>} : vector<8x512xbf16>, vector<512x128xbf16>, vector<8x128xf32> -> vector<8x128xf32>
    %c14 = arith.constant 14 : index
    %c0_48 = arith.constant 0 : index
    %c0_49 = arith.constant 0 : index
    %51 = vector.load %arg2[%c14, %c0_48, %c0_49] : memref<16x512x128xbf16, #tpu.memory_space<vmem>>, vector<1x512x128xbf16>
    %52 = vector.shape_cast %51 : vector<1x512x128xbf16> to vector<512x128xbf16>
    %cst_50 = arith.constant dense<0.000000e+00> : vector<8x128xf32>
    %53 = tpu.matmul %8, %52, %cst_50 {dimension_numbers = #tpu.dot_dimension_numbers<[1], [0], [0], [1], [0, 0, 1, 1], [], []>} : vector<8x512xbf16>, vector<512x128xbf16>, vector<8x128xf32> -> vector<8x128xf32>
    %c15 = arith.constant 15 : index
    %c0_51 = arith.constant 0 : index
    %c0_52 = arith.constant 0 : index
    %54 = vector.load %arg2[%c15, %c0_51, %c0_52] : memref<16x512x128xbf16, #tpu.memory_space<vmem>>, vector<1x512x128xbf16>
    %55 = vector.shape_cast %54 : vector<1x512x128xbf16> to vector<512x128xbf16>
    %cst_53 = arith.constant dense<0.000000e+00> : vector<8x128xf32>
    %56 = tpu.matmul %8, %55, %cst_53 {dimension_numbers = #tpu.dot_dimension_numbers<[1], [0], [0], [1], [0, 0, 1, 1], [], []>} : vector<8x512xbf16>, vector<512x128xbf16>, vector<8x128xf32> -> vector<8x128xf32>
    %57 = tpu.concatenate %11, %14, %17, %20, %23, %26, %29, %32, %35, %38, %41, %44, %47, %50, %53, %56 in 0 : vector<8x128xf32>, vector<8x128xf32>, vector<8x128xf32>, vector<8x128xf32>, vector<8x128xf32>, vector<8x128xf32>, vector<8x128xf32>, vector<8x128xf32>, vector<8x128xf32>, vector<8x128xf32>, vector<8x128xf32>, vector<8x128xf32>, vector<8x128xf32>, vector<8x128xf32>, vector<8x128xf32>, vector<8x128xf32> -> vector<128x128xf32>
    %58 = arith.truncf %57 : vector<128x128xf32> to vector<128x128xbf16>
    %c0_54 = arith.constant 0 : index
    %c0_55 = arith.constant 0 : index
    %59 = vector.load %arg3[%c0_54, %c0_55] : memref<16x128xbf16, #tpu.memory_space<vmem>>, vector<16x128xbf16>
    %cst_56 = arith.constant dense<0.000000e+00> : vector<16x128xf32>
    %60 = tpu.matmul %59, %58, %cst_56 {dimension_numbers = #tpu.dot_dimension_numbers<[1], [0], [0], [1], [0, 0, 1, 1], [], []>} : vector<16x128xbf16>, vector<128x128xbf16>, vector<16x128xf32> -> vector<16x128xf32>
    %c0_57 = arith.constant 0 : index
    %c0_58 = arith.constant 0 : index
    %61 = vector.load %arg4[%c0_57, %c0_58] : memref<16x1xf32, #tpu.memory_space<vmem>>, vector<16x1xf32>
    %c0_59 = arith.constant 0 : index
    %c0_60 = arith.constant 0 : index
    %62 = vector.load %arg5[%c0_59, %c0_60] : memref<16x1xf32, #tpu.memory_space<vmem>>, vector<16x1xf32>
    %63 = tpu.iota {dimensions = array<i32: 1>} : vector<1x128xi32>
    %c98_i32 = arith.constant 98 : i32
    %64 = vector.broadcast %c98_i32 : i32 to vector<1x128xi32>
    %65 = arith.cmpi slt, %63, %64 : vector<1x128xi32>
    %66 = arith.extui %65 : vector<1x128xi1> to vector<1x128xi32>
    %67 = arith.sitofp %66 : vector<1x128xi32> to vector<1x128xf32>
    %68 = vector.broadcast %67 : vector<1x128xf32> to vector<16x128xf32>
    %69 = arith.mulf %60, %68 : vector<16x128xf32>
    %cst_61 = arith.constant dense<0.000000e+00> : vector<16xf32>
    %70 = vector.multi_reduction <add>, %69, %cst_61 [1] : vector<16x128xf32> to vector<16xf32>
    %71 = vector.shape_cast %70 : vector<16xf32> to vector<16x1xf32>
    %cst_62 = arith.constant 0.0102040814 : f32
    %72 = vector.broadcast %cst_62 : f32 to vector<16x1xf32>
    %73 = arith.mulf %71, %72 : vector<16x1xf32>
    %74 = vector.broadcast %73 : vector<16x1xf32> to vector<16x128xf32>
    %75 = arith.subf %60, %74 : vector<16x128xf32>
    %76 = vector.broadcast %67 : vector<1x128xf32> to vector<16x128xf32>
    %77 = arith.mulf %75, %76 : vector<16x128xf32>
    %78 = arith.mulf %77, %77 : vector<16x128xf32>
    %cst_63 = arith.constant dense<0.000000e+00> : vector<16xf32>
    %79 = vector.multi_reduction <add>, %78, %cst_63 [1] : vector<16x128xf32> to vector<16xf32>
    %80 = vector.shape_cast %79 : vector<16xf32> to vector<16x1xf32>
    %cst_64 = arith.constant 0.0102040814 : f32
    %81 = vector.broadcast %cst_64 : f32 to vector<16x1xf32>
    %82 = arith.mulf %80, %81 : vector<16x1xf32>
    %83 = vector.broadcast %73 : vector<16x1xf32> to vector<16x128xf32>
    %84 = arith.subf %60, %83 : vector<16x128xf32>
    %cst_65 = arith.constant 9.99999974E-6 : f32
    %85 = vector.broadcast %cst_65 : f32 to vector<16x1xf32>
    %86 = arith.addf %82, %85 : vector<16x1xf32>
    %87 = math.rsqrt %86 : vector<16x1xf32>
    %88 = vector.broadcast %87 : vector<16x1xf32> to vector<16x128xf32>
    %89 = arith.mulf %84, %88 : vector<16x128xf32>
    %90 = vector.broadcast %61 : vector<16x1xf32> to vector<16x128xf32>
    %91 = arith.mulf %89, %90 : vector<16x128xf32>
    %92 = vector.broadcast %62 : vector<16x1xf32> to vector<16x128xf32>
    %93 = arith.addf %91, %92 : vector<16x128xf32>
    %cst_66 = arith.constant 0.000000e+00 : f32
    %94 = vector.broadcast %cst_66 : f32 to vector<16x128xf32>
    %95 = arith.cmpf oge, %93, %94 : vector<16x128xf32>
    %cst_67 = arith.constant 2.000000e-01 : f32
    %96 = vector.broadcast %cst_67 : f32 to vector<16x128xf32>
    %97 = arith.mulf %96, %93 : vector<16x128xf32>
    %98 = arith.select %95, %93, %97 : vector<16x128xi1>, vector<16x128xf32>
    %99 = arith.truncf %98 : vector<16x128xf32> to vector<16x128xbf16>
    %c0_68 = arith.constant 0 : index
    %c0_69 = arith.constant 0 : index
    %c0_70 = arith.constant 0 : index
    %100 = vector.load %arg6[%c0_68, %c0_69, %c0_70] : memref<9x128x128xbf16, #tpu.memory_space<vmem>>, vector<1x128x128xbf16>
    %101 = vector.shape_cast %100 : vector<1x128x128xbf16> to vector<128x128xbf16>
    %cst_71 = arith.constant dense<0.000000e+00> : vector<16x128xf32>
    %102 = tpu.matmul %99, %101, %cst_71 {dimension_numbers = #tpu.dot_dimension_numbers<[1], [0], [0], [1], [0, 0, 1, 1], [], []>} : vector<16x128xbf16>, vector<128x128xbf16>, vector<16x128xf32> -> vector<16x128xf32>
    %c1_72 = arith.constant 1 : index
    %c0_73 = arith.constant 0 : index
    %c0_74 = arith.constant 0 : index
    %103 = vector.load %arg6[%c1_72, %c0_73, %c0_74] : memref<9x128x128xbf16, #tpu.memory_space<vmem>>, vector<1x128x128xbf16>
    %104 = vector.shape_cast %103 : vector<1x128x128xbf16> to vector<128x128xbf16>
    %cst_75 = arith.constant dense<0.000000e+00> : vector<16x128xf32>
    %105 = tpu.matmul %99, %104, %cst_75 {dimension_numbers = #tpu.dot_dimension_numbers<[1], [0], [0], [1], [0, 0, 1, 1], [], []>} : vector<16x128xbf16>, vector<128x128xbf16>, vector<16x128xf32> -> vector<16x128xf32>
    %c2_76 = arith.constant 2 : index
    %c0_77 = arith.constant 0 : index
    %c0_78 = arith.constant 0 : index
    %106 = vector.load %arg6[%c2_76, %c0_77, %c0_78] : memref<9x128x128xbf16, #tpu.memory_space<vmem>>, vector<1x128x128xbf16>
    %107 = vector.shape_cast %106 : vector<1x128x128xbf16> to vector<128x128xbf16>
    %cst_79 = arith.constant dense<0.000000e+00> : vector<16x128xf32>
    %108 = tpu.matmul %99, %107, %cst_79 {dimension_numbers = #tpu.dot_dimension_numbers<[1], [0], [0], [1], [0, 0, 1, 1], [], []>} : vector<16x128xbf16>, vector<128x128xbf16>, vector<16x128xf32> -> vector<16x128xf32>
    %c3_80 = arith.constant 3 : index
    %c0_81 = arith.constant 0 : index
    %c0_82 = arith.constant 0 : index
    %109 = vector.load %arg6[%c3_80, %c0_81, %c0_82] : memref<9x128x128xbf16, #tpu.memory_space<vmem>>, vector<1x128x128xbf16>
    %110 = vector.shape_cast %109 : vector<1x128x128xbf16> to vector<128x128xbf16>
    %cst_83 = arith.constant dense<0.000000e+00> : vector<16x128xf32>
    %111 = tpu.matmul %99, %110, %cst_83 {dimension_numbers = #tpu.dot_dimension_numbers<[1], [0], [0], [1], [0, 0, 1, 1], [], []>} : vector<16x128xbf16>, vector<128x128xbf16>, vector<16x128xf32> -> vector<16x128xf32>
    %c4_84 = arith.constant 4 : index
    %c0_85 = arith.constant 0 : index
    %c0_86 = arith.constant 0 : index
    %112 = vector.load %arg6[%c4_84, %c0_85, %c0_86] : memref<9x128x128xbf16, #tpu.memory_space<vmem>>, vector<1x128x128xbf16>
    %113 = vector.shape_cast %112 : vector<1x128x128xbf16> to vector<128x128xbf16>
    %cst_87 = arith.constant dense<0.000000e+00> : vector<16x128xf32>
    %114 = tpu.matmul %99, %113, %cst_87 {dimension_numbers = #tpu.dot_dimension_numbers<[1], [0], [0], [1], [0, 0, 1, 1], [], []>} : vector<16x128xbf16>, vector<128x128xbf16>, vector<16x128xf32> -> vector<16x128xf32>
    %c5_88 = arith.constant 5 : index
    %c0_89 = arith.constant 0 : index
    %c0_90 = arith.constant 0 : index
    %115 = vector.load %arg6[%c5_88, %c0_89, %c0_90] : memref<9x128x128xbf16, #tpu.memory_space<vmem>>, vector<1x128x128xbf16>
    %116 = vector.shape_cast %115 : vector<1x128x128xbf16> to vector<128x128xbf16>
    %cst_91 = arith.constant dense<0.000000e+00> : vector<16x128xf32>
    %117 = tpu.matmul %99, %116, %cst_91 {dimension_numbers = #tpu.dot_dimension_numbers<[1], [0], [0], [1], [0, 0, 1, 1], [], []>} : vector<16x128xbf16>, vector<128x128xbf16>, vector<16x128xf32> -> vector<16x128xf32>
    %c6_92 = arith.constant 6 : index
    %c0_93 = arith.constant 0 : index
    %c0_94 = arith.constant 0 : index
    %118 = vector.load %arg6[%c6_92, %c0_93, %c0_94] : memref<9x128x128xbf16, #tpu.memory_space<vmem>>, vector<1x128x128xbf16>
    %119 = vector.shape_cast %118 : vector<1x128x128xbf16> to vector<128x128xbf16>
    %cst_95 = arith.constant dense<0.000000e+00> : vector<16x128xf32>
    %120 = tpu.matmul %99, %119, %cst_95 {dimension_numbers = #tpu.dot_dimension_numbers<[1], [0], [0], [1], [0, 0, 1, 1], [], []>} : vector<16x128xbf16>, vector<128x128xbf16>, vector<16x128xf32> -> vector<16x128xf32>
    %c7_96 = arith.constant 7 : index
    %c0_97 = arith.constant 0 : index
    %c0_98 = arith.constant 0 : index
    %121 = vector.load %arg6[%c7_96, %c0_97, %c0_98] : memref<9x128x128xbf16, #tpu.memory_space<vmem>>, vector<1x128x128xbf16>
    %122 = vector.shape_cast %121 : vector<1x128x128xbf16> to vector<128x128xbf16>
    %cst_99 = arith.constant dense<0.000000e+00> : vector<16x128xf32>
    %123 = tpu.matmul %99, %122, %cst_99 {dimension_numbers = #tpu.dot_dimension_numbers<[1], [0], [0], [1], [0, 0, 1, 1], [], []>} : vector<16x128xbf16>, vector<128x128xbf16>, vector<16x128xf32> -> vector<16x128xf32>
    %c8_100 = arith.constant 8 : index
    %c0_101 = arith.constant 0 : index
    %c0_102 = arith.constant 0 : index
    %124 = vector.load %arg6[%c8_100, %c0_101, %c0_102] : memref<9x128x128xbf16, #tpu.memory_space<vmem>>, vector<1x128x128xbf16>
    %125 = vector.shape_cast %124 : vector<1x128x128xbf16> to vector<128x128xbf16>
    %cst_103 = arith.constant dense<0.000000e+00> : vector<16x128xf32>
    %126 = tpu.matmul %99, %125, %cst_103 {dimension_numbers = #tpu.dot_dimension_numbers<[1], [0], [0], [1], [0, 0, 1, 1], [], []>} : vector<16x128xbf16>, vector<128x128xbf16>, vector<16x128xf32> -> vector<16x128xf32>
    %127 = tpu.concatenate %102, %105, %108, %111, %114, %117, %120, %123, %126 in 0 : vector<16x128xf32>, vector<16x128xf32>, vector<16x128xf32>, vector<16x128xf32>, vector<16x128xf32>, vector<16x128xf32>, vector<16x128xf32>, vector<16x128xf32>, vector<16x128xf32> -> vector<144x128xf32>
    %128 = arith.truncf %127 : vector<144x128xf32> to vector<144x128xbf16>
    %c0_104 = arith.constant 0 : index
    %c0_105 = arith.constant 0 : index
    %129 = vector.load %arg7[%c0_104, %c0_105] : memref<32x144xbf16, #tpu.memory_space<vmem>>, vector<32x144xbf16>
    %cst_106 = arith.constant dense<0.000000e+00> : vector<32x128xf32>
    %130 = tpu.matmul %129, %128, %cst_106 {dimension_numbers = #tpu.dot_dimension_numbers<[1], [0], [0], [1], [0, 0, 1, 1], [], []>} : vector<32x144xbf16>, vector<144x128xbf16>, vector<32x128xf32> -> vector<32x128xf32>
    %c0_107 = arith.constant 0 : index
    %c0_108 = arith.constant 0 : index
    %131 = vector.load %arg8[%c0_107, %c0_108] : memref<32x1xf32, #tpu.memory_space<vmem>>, vector<32x1xf32>
    %c0_109 = arith.constant 0 : index
    %c0_110 = arith.constant 0 : index
    %132 = vector.load %arg9[%c0_109, %c0_110] : memref<32x1xf32, #tpu.memory_space<vmem>>, vector<32x1xf32>
    %133 = tpu.iota {dimensions = array<i32: 1>} : vector<1x128xi32>
    %c32_i32 = arith.constant 32 : i32
    %134 = vector.broadcast %c32_i32 : i32 to vector<1x128xi32>
    %135 = arith.cmpi slt, %133, %134 : vector<1x128xi32>
    %136 = arith.extui %135 : vector<1x128xi1> to vector<1x128xi32>
    %137 = arith.sitofp %136 : vector<1x128xi32> to vector<1x128xf32>
    %138 = vector.broadcast %137 : vector<1x128xf32> to vector<32x128xf32>
    %139 = arith.mulf %130, %138 : vector<32x128xf32>
    %cst_111 = arith.constant dense<0.000000e+00> : vector<32xf32>
    %140 = vector.multi_reduction <add>, %139, %cst_111 [1] : vector<32x128xf32> to vector<32xf32>
    %141 = vector.shape_cast %140 : vector<32xf32> to vector<32x1xf32>
    %cst_112 = arith.constant 3.125000e-02 : f32
    %142 = vector.broadcast %cst_112 : f32 to vector<32x1xf32>
    %143 = arith.mulf %141, %142 : vector<32x1xf32>
    %144 = vector.broadcast %143 : vector<32x1xf32> to vector<32x128xf32>
    %145 = arith.subf %130, %144 : vector<32x128xf32>
    %146 = vector.broadcast %137 : vector<1x128xf32> to vector<32x128xf32>
    %147 = arith.mulf %145, %146 : vector<32x128xf32>
    %148 = arith.mulf %147, %147 : vector<32x128xf32>
    %cst_113 = arith.constant dense<0.000000e+00> : vector<32xf32>
    %149 = vector.multi_reduction <add>, %148, %cst_113 [1] : vector<32x128xf32> to vector<32xf32>
    %150 = vector.shape_cast %149 : vector<32xf32> to vector<32x1xf32>
    %cst_114 = arith.constant 3.125000e-02 : f32
    %151 = vector.broadcast %cst_114 : f32 to vector<32x1xf32>
    %152 = arith.mulf %150, %151 : vector<32x1xf32>
    %153 = vector.broadcast %143 : vector<32x1xf32> to vector<32x128xf32>
    %154 = arith.subf %130, %153 : vector<32x128xf32>
    %cst_115 = arith.constant 9.99999974E-6 : f32
    %155 = vector.broadcast %cst_115 : f32 to vector<32x1xf32>
    %156 = arith.addf %152, %155 : vector<32x1xf32>
    %157 = math.rsqrt %156 : vector<32x1xf32>
    %158 = vector.broadcast %157 : vector<32x1xf32> to vector<32x128xf32>
    %159 = arith.mulf %154, %158 : vector<32x128xf32>
    %160 = vector.broadcast %131 : vector<32x1xf32> to vector<32x128xf32>
    %161 = arith.mulf %159, %160 : vector<32x128xf32>
    %162 = vector.broadcast %132 : vector<32x1xf32> to vector<32x128xf32>
    %163 = arith.addf %161, %162 : vector<32x128xf32>
    %cst_116 = arith.constant 0.000000e+00 : f32
    %164 = vector.broadcast %cst_116 : f32 to vector<32x128xf32>
    %165 = arith.cmpf oge, %163, %164 : vector<32x128xf32>
    %cst_117 = arith.constant 2.000000e-01 : f32
    %166 = vector.broadcast %cst_117 : f32 to vector<32x128xf32>
    %167 = arith.mulf %166, %163 : vector<32x128xf32>
    %168 = arith.select %165, %163, %167 : vector<32x128xi1>, vector<32x128xf32>
    %c0_118 = arith.constant 0 : index
    %c0_119 = arith.constant 0 : index
    %169 = vector.load %arg10[%c0_118, %c0_119] : memref<32x128xf32, #tpu.memory_space<vmem>>, vector<32x128xf32>
    %170 = arith.mulf %168, %169 : vector<32x128xf32>
    %cst_120 = arith.constant dense<0.000000e+00> : vector<128xf32>
    %171 = vector.multi_reduction <add>, %170, %cst_120 [0] : vector<32x128xf32> to vector<128xf32>
    %172 = vector.shape_cast %171 : vector<128xf32> to vector<1x128xf32>
    %c0_121 = arith.constant 0 : index
    %c0_122 = arith.constant 0 : index
    %173 = vector.load %arg11[%c0_121, %c0_122] : memref<128x128xf32, #tpu.memory_space<vmem>>, vector<128x128xf32>
    %cst_123 = arith.constant dense<0.000000e+00> : vector<1x128xf32>
    %174 = tpu.matmul %172, %173, %cst_123 {dimension_numbers = #tpu.dot_dimension_numbers<[1], [0], [0], [1], [0, 0, 1, 1], [], []>} : vector<1x128xf32>, vector<128x128xf32>, vector<1x128xf32> -> vector<1x128xf32>
    %cst_124 = arith.constant 0.000000e+00 : f32
    %175 = vector.broadcast %cst_124 : f32 to vector<1x128xf32>
    %176 = arith.subf %175, %174 : vector<1x128xf32>
    %177 = math.exp %176 : vector<1x128xf32>
    %cst_125 = arith.constant 1.000000e+00 : f32
    %178 = vector.broadcast %cst_125 : f32 to vector<1x128xf32>
    %179 = arith.addf %178, %177 : vector<1x128xf32>
    %cst_126 = arith.constant 1.000000e+00 : f32
    %180 = vector.broadcast %cst_126 : f32 to vector<1x128xf32>
    %181 = arith.divf %180, %179 : vector<1x128xf32>
    %c0_127 = arith.constant 0 : index
    %c0_128 = arith.constant 0 : index
    %182 = vector.load %arg12[%c0_127, %c0_128] : memref<1x128xf32, #tpu.memory_space<vmem>>, vector<1x128xf32>
    tpu.vector_store %arg12[%c0_127, %c0_128], %181 {strides = array<i32>} : memref<1x128xf32, #tpu.memory_space<vmem>>, vector<1x128xf32>,
    return
  }
}

</mosaic_0001>

<llo_original>
// kernel: discriminator_forward.1
$region0: #{discriminator_forward.1}
  #allocation0 [shape = 'u32[]', space=smem, size = 0x4, offset = 0x4, fixed_abs, tag = 'smem constant byte address 0x4 - core index']
  #allocation1 [shape = 'u32[144,128]{1,0:T(1,128)}', space=vmem, size = 0x12000, scoped, tag = 'internal scratch']
  %s0 = inlined_call_operand.vmem [shape: bf16[176,512], index: 0, kind: input, shape index: {}]
  %s1 = inlined_call_operand.vmem [shape: bf16[8,176], index: 1, kind: input, shape index: {}]
  %s2 = inlined_call_operand.vmem [shape: bf16[16,512,128], index: 2, kind: input, shape index: {}]
  %s3 = inlined_call_operand.vmem [shape: bf16[16,128], index: 3, kind: input, shape index: {}]
  %s4 = inlined_call_operand.vmem [shape: f32[16,1], index: 4, kind: input, shape index: {}]
  %s5 = inlined_call_operand.vmem [shape: f32[16,1], index: 5, kind: input, shape index: {}]
  %s6 = inlined_call_operand.vmem [shape: bf16[9,128,128], index: 6, kind: input, shape index: {}]
  %s7 = inlined_call_operand.vmem [shape: bf16[32,144], index: 7, kind: input, shape index: {}]
  %s8 = inlined_call_operand.vmem [shape: f32[32,1], index: 8, kind: input, shape index: {}]
  %s9 = inlined_call_operand.vmem [shape: f32[32,1], index: 9, kind: input, shape index: {}]
  %s10 = inlined_call_operand.vmem [shape: f32[32,128], index: 10, kind: input, shape index: {}]
  %s11 = inlined_call_operand.vmem [shape: f32[128,128], index: 11, kind: input, shape index: {}]
  %s12 = inlined_call_operand.vmem [shape: f32[1,128], index: 12, kind: output, shape index: {}]
  %s13 = sld [smem:[#allocation0]]
  $region58: #{discriminator_forward.1} parent=0
    _
  %s15 = ssub.s32 1, %s13
  %s16 = scalar_select 0, %s15, %s13
  // Predicated region
  $region2: #{discriminator_forward.1} parent=0 // pred_check
    _
  $region3: #{discriminator_forward.1} parent=0 // pred_check_branch
    %18 = sbr.rel (0) target = $region5
  $region4: #{discriminator_forward.1} parent=0 // pred_region
    _
  $region5: #{discriminator_forward.1} parent=0 // pred_fallthru
    _
  // Predicated region
  $region6: #{discriminator_forward.1} parent=0 // pred_check
    _
  $region7: #{discriminator_forward.1} parent=0 // pred_check_branch
    %20 = sbr.rel (0) target = $region9
  $region8: #{discriminator_forward.1} parent=0 // pred_region
    _
  $region9: #{discriminator_forward.1} parent=0 // pred_fallthru
    _
  // Predicated region
  $region10: #{discriminator_forward.1} parent=0 // pred_check
    _
  $region11: #{discriminator_forward.1} parent=0 // pred_check_branch
    %22 = sbr.rel (0) target = $region13
  $region12: #{discriminator_forward.1} parent=0 // pred_region
    _
  $region13: #{discriminator_forward.1} parent=0 // pred_fallthru
    _
  // Predicated region
  $region14: #{discriminator_forward.1} parent=0 // pred_check
    _
  $region15: #{discriminator_forward.1} parent=0 // pred_check_branch
    %24 = sbr.rel (0) target = $region17
  $region16: #{discriminator_forward.1} parent=0 // pred_region
    _
  $region17: #{discriminator_forward.1} parent=0 // pred_fallthru
    _
  // Predicated region
  $region18: #{discriminator_forward.1} parent=0 // pred_check
    _
  $region19: #{discriminator_forward.1} parent=0 // pred_check_branch
    %26 = sbr.rel (0) target = $region21
  $region20: #{discriminator_forward.1} parent=0 // pred_region
    _
  $region21: #{discriminator_forward.1} parent=0 // pred_fallthru
    _
  // Predicated region
  $region22: #{discriminator_forward.1} parent=0 // pred_check
    _
  $region23: #{discriminator_forward.1} parent=0 // pred_check_branch
    %28 = sbr.rel (0) target = $region25
  $region24: #{discriminator_forward.1} parent=0 // pred_region
    _
  $region25: #{discriminator_forward.1} parent=0 // pred_fallthru
    _
  // Predicated region
  $region26: #{discriminator_forward.1} parent=0 // pred_check
    _
  $region27: #{discriminator_forward.1} parent=0 // pred_check_branch
    %30 = sbr.rel (0) target = $region29
  $region28: #{discriminator_forward.1} parent=0 // pred_region
    _
  $region29: #{discriminator_forward.1} parent=0 // pred_fallthru
    _
  // Predicated region
  $region30: #{discriminator_forward.1} parent=0 // pred_check
    _
  $region31: #{discriminator_forward.1} parent=0 // pred_check_branch
    %32 = sbr.rel (0) target = $region33
  $region32: #{discriminator_forward.1} parent=0 // pred_region
    _
  $region33: #{discriminator_forward.1} parent=0 // pred_fallthru
    _
  // Predicated region
  $region34: #{discriminator_forward.1} parent=0 // pred_check
    _
  $region35: #{discriminator_forward.1} parent=0 // pred_check_branch
    %34 = sbr.rel (0) target = $region37
  $region36: #{discriminator_forward.1} parent=0 // pred_region
    _
  $region37: #{discriminator_forward.1} parent=0 // pred_fallthru
    _
  // Predicated region
  $region38: #{discriminator_forward.1} parent=0 // pred_check
    _
  $region39: #{discriminator_forward.1} parent=0 // pred_check_branch
    %36 = sbr.rel (0) target = $region41
  $region40: #{discriminator_forward.1} parent=0 // pred_region
    _
  $region41: #{discriminator_forward.1} parent=0 // pred_fallthru
    _
  // Predicated region
  $region42: #{discriminator_forward.1} parent=0 // pred_check
    _
  $region43: #{discriminator_forward.1} parent=0 // pred_check_branch
    %38 = sbr.rel (0) target = $region45
  $region44: #{discriminator_forward.1} parent=0 // pred_region
    _
  $region45: #{discriminator_forward.1} parent=0 // pred_fallthru
    _
  // Predicated region
  $region46: #{discriminator_forward.1} parent=0 // pred_check
    _
  $region47: #{discriminator_forward.1} parent=0 // pred_check_branch
    %40 = sbr.rel (0) target = $region49
  $region48: #{discriminator_forward.1} parent=0 // pred_region
    _
  $region49: #{discriminator_forward.1} parent=0 // pred_fallthru
    _
  %v42 = vld [vmem:[%s1] sm:$0xff]
  %v43 = vld [vmem:[%s0] sm:$0xff]
  %v44 = vld [vmem:[%s0 + $0x8] sm:$0xff]
  %v45 = vld [vmem:[%s0 + $0x10] sm:$0xff]
  %v46 = vld [vmem:[%s0 + $0x18] sm:$0xff]
  %v47 = vld [vmem:[%s0 + $0x20] sm:$0xff]
  %v48 = vld [vmem:[%s0 + $0x28] sm:$0xff]
  %v49 = vld [vmem:[%s0 + $0x30] sm:$0xff]
  %v50 = vld [vmem:[%s0 + $0x38] sm:$0xff]
  %v51 = vld [vmem:[%s0 + $0x40] sm:$0xff]
  %v52 = vld [vmem:[%s0 + $0x48] sm:$0xff]
  %v53 = vld [vmem:[%s0 + $0x50] sm:$0xff]
  %v54 = vld [vmem:[%s0 + $0x58] sm:$0xff]
  %v55 = vld [vmem:[%s0 + $0x60] sm:$0xff]
  %v56 = vld [vmem:[%s0 + $0x68] sm:$0xff]
  %v57 = vld [vmem:[%s0 + $0x70] sm:$0xff]
  %v58 = vld [vmem:[%s0 + $0x78] sm:$0xff]
  %v59 = vld [vmem:[%s0 + $0x80] sm:$0xff]
  %v60 = vld [vmem:[%s0 + $0x88] sm:$0xff]
  %v61 = vld [vmem:[%s0 + $0x90] sm:$0xff]
  %v62 = vld [vmem:[%s0 + $0x98] sm:$0xff]
  %v63 = vld [vmem:[%s0 + $0xa0] sm:$0xff]
  %v64 = vld [vmem:[%s0 + $0xa8] sm:$0xff]
  %v65 = vld [vmem:[%s0 + $0xb0] sm:$0xff]
  %v66 = vld [vmem:[%s0 + $0xb8] sm:$0xff]
  %v67 = vld [vmem:[%s0 + $0xc0] sm:$0xff]
  %v68 = vld [vmem:[%s0 + $0xc8] sm:$0xff]
  %v69 = vld [vmem:[%s0 + $0xd0] sm:$0xff]
  %v70 = vld [vmem:[%s0 + $0xd8] sm:$0xff]
  %v71 = vld [vmem:[%s0 + $0xe0] sm:$0xff]
  %v72 = vld [vmem:[%s0 + $0xe8] sm:$0xff]
  %v73 = vld [vmem:[%s0 + $0xf0] sm:$0xff]
  %v74 = vld [vmem:[%s0 + $0xf8] sm:$0xff]
  %v75 = vld [vmem:[%s0 + $0x100] sm:$0xff]
  %v76 = vld [vmem:[%s0 + $0x108] sm:$0xff]
  %v77 = vld [vmem:[%s0 + $0x110] sm:$0xff]
  %v78 = vld [vmem:[%s0 + $0x118] sm:$0xff]
  %v79 = vld [vmem:[%s0 + $0x120] sm:$0xff]
  %v80 = vld [vmem:[%s0 + $0x128] sm:$0xff]
  %v81 = vld [vmem:[%s0 + $0x130] sm:$0xff]
  %v82 = vld [vmem:[%s0 + $0x138] sm:$0xff]
  %v83 = vld [vmem:[%s0 + $0x140] sm:$0xff]
  %v84 = vld [vmem:[%s0 + $0x148] sm:$0xff]
  %v85 = vld [vmem:[%s0 + $0x150] sm:$0xff]
  %v86 = vld [vmem:[%s0 + $0x158] sm:$0xff]
  %v88 = vunpack.c.l.b16 %v42
  %v89 = vunpack.c.h.b16 %v42
  %v90 = vpack.c.b16 %v88, %v88
  %v91 = vpack.c.b16 %v89, %v89
  %v137 = vunpack.c.l.b16 %v43
  %v138 = vunpack.c.h.b16 %v43
  %v139 = vunpack.c.l.b16 %v44
  %v140 = vunpack.c.h.b16 %v44
  %v141 = vunpack.c.l.b16 %v45
  %v142 = vunpack.c.h.b16 %v45
  %v143 = vunpack.c.l.b16 %v46
  %v144 = vunpack.c.h.b16 %v46
  %v145 = vunpack.c.l.b16 %v47
  %v146 = vunpack.c.h.b16 %v47
  %v147 = vunpack.c.l.b16 %v48
  %v148 = vunpack.c.h.b16 %v48
  %v149 = vunpack.c.l.b16 %v49
  %v150 = vunpack.c.h.b16 %v49
  %v151 = vunpack.c.l.b16 %v50
  %v152 = vunpack.c.h.b16 %v50
  %v153 = vunpack.c.l.b16 %v51
  %v154 = vunpack.c.h.b16 %v51
  %v155 = vunpack.c.l.b16 %v52
  %v156 = vunpack.c.h.b16 %v52
  %v157 = vunpack.c.l.b16 %v53
  %v158 = vunpack.c.h.b16 %v53
  %v159 = vunpack.c.l.b16 %v54
  %v160 = vunpack.c.h.b16 %v54
  %v161 = vunpack.c.l.b16 %v55
  %v162 = vunpack.c.h.b16 %v55
  %v163 = vunpack.c.l.b16 %v56
  %v164 = vunpack.c.h.b16 %v56
  %v165 = vunpack.c.l.b16 %v57
  %v166 = vunpack.c.h.b16 %v57
  %v167 = vunpack.c.l.b16 %v58
  %v168 = vunpack.c.h.b16 %v58
  %v169 = vunpack.c.l.b16 %v59
  %v170 = vunpack.c.h.b16 %v59
  %v171 = vunpack.c.l.b16 %v60
  %v172 = vunpack.c.h.b16 %v60
  %v173 = vunpack.c.l.b16 %v61
  %v174 = vunpack.c.h.b16 %v61
  %v175 = vunpack.c.l.b16 %v62
  %v176 = vunpack.c.h.b16 %v62
  %v177 = vunpack.c.l.b16 %v63
  %v178 = vunpack.c.h.b16 %v63
  %v179 = vunpack.c.l.b16 %v64
  %v180 = vunpack.c.h.b16 %v64
  %v181 = vunpack.c.l.b16 %v65
  %v182 = vunpack.c.h.b16 %v65
  %v183 = vunpack.c.l.b16 %v66
  %v184 = vunpack.c.h.b16 %v66
  %v185 = vunpack.c.l.b16 %v67
  %v186 = vunpack.c.h.b16 %v67
  %v187 = vunpack.c.l.b16 %v68
  %v188 = vunpack.c.h.b16 %v68
  %v189 = vunpack.c.l.b16 %v69
  %v190 = vunpack.c.h.b16 %v69
  %v191 = vunpack.c.l.b16 %v70
  %v192 = vunpack.c.h.b16 %v70
  %v193 = vunpack.c.l.b16 %v71
  %v194 = vunpack.c.h.b16 %v71
  %v195 = vunpack.c.l.b16 %v72
  %v196 = vunpack.c.h.b16 %v72
  %v197 = vunpack.c.l.b16 %v73
  %v198 = vunpack.c.h.b16 %v73
  %v199 = vunpack.c.l.b16 %v74
  %v200 = vunpack.c.h.b16 %v74
  %v201 = vunpack.c.l.b16 %v75
  %v202 = vunpack.c.h.b16 %v75
  %v203 = vunpack.c.l.b16 %v76
  %v204 = vunpack.c.h.b16 %v76
  %v205 = vunpack.c.l.b16 %v77
  %v206 = vunpack.c.h.b16 %v77
  %v207 = vunpack.c.l.b16 %v78
  %v208 = vunpack.c.h.b16 %v78
  %v209 = vunpack.c.l.b16 %v79
  %v210 = vunpack.c.h.b16 %v79
  %v211 = vunpack.c.l.b16 %v80
  %v212 = vunpack.c.h.b16 %v80
  %v213 = vunpack.c.l.b16 %v81
  %v214 = vunpack.c.h.b16 %v81
  %v215 = vunpack.c.l.b16 %v82
  %v216 = vunpack.c.h.b16 %v82
  %v217 = vunpack.c.l.b16 %v83
  %v218 = vunpack.c.h.b16 %v83
  %v219 = vunpack.c.l.b16 %v84
  %v220 = vunpack.c.h.b16 %v84
  %v221 = vunpack.c.l.b16 %v85
  %v222 = vunpack.c.h.b16 %v85
  %v223 = vunpack.c.l.b16 %v86
  %v224 = vunpack.c.h.b16 %v86
  %v225 = vpack.c.b16 %v141, %v137
  %v226 = vpack.c.b16 %v142, %v138
  %v227 = vpack.c.b16 %v143, %v139
  %v228 = vpack.c.b16 %v144, %v140
  %v229 = vpack.c.b16 %v149, %v145
  %v230 = vpack.c.b16 %v150, %v146
  %v231 = vpack.c.b16 %v151, %v147
  %v232 = vpack.c.b16 %v152, %v148
  %v233 = vpack.c.b16 %v157, %v153
  %v234 = vpack.c.b16 %v158, %v154
  %v235 = vpack.c.b16 %v159, %v155
  %v236 = vpack.c.b16 %v160, %v156
  %v237 = vpack.c.b16 %v165, %v161
  %v238 = vpack.c.b16 %v166, %v162
  %v239 = vpack.c.b16 %v167, %v163
  %v240 = vpack.c.b16 %v168, %v164
  %v241 = vpack.c.b16 %v173, %v169
  %v242 = vpack.c.b16 %v174, %v170
  %v243 = vpack.c.b16 %v175, %v171
  %v244 = vpack.c.b16 %v176, %v172
  %v245 = vpack.c.b16 %v181, %v177
  %v246 = vpack.c.b16 %v182, %v178
  %v247 = vpack.c.b16 %v183, %v179
  %v248 = vpack.c.b16 %v184, %v180
  %v249 = vpack.c.b16 %v189, %v185
  %v250 = vpack.c.b16 %v190, %v186
  %v251 = vpack.c.b16 %v191, %v187
  %v252 = vpack.c.b16 %v192, %v188
  %v253 = vpack.c.b16 %v197, %v193
  %v254 = vpack.c.b16 %v198, %v194
  %v255 = vpack.c.b16 %v199, %v195
  %v256 = vpack.c.b16 %v200, %v196
  %v257 = vpack.c.b16 %v205, %v201
  %v258 = vpack.c.b16 %v206, %v202
  %v259 = vpack.c.b16 %v207, %v203
  %v260 = vpack.c.b16 %v208, %v204
  %v261 = vpack.c.b16 %v213, %v209
  %v262 = vpack.c.b16 %v214, %v210
  %v263 = vpack.c.b16 %v215, %v211
  %v264 = vpack.c.b16 %v216, %v212
  %v265 = vpack.c.b16 %v221, %v217
  %v266 = vpack.c.b16 %v222, %v218
  %v267 = vpack.c.b16 %v223, %v219
  %v268 = vpack.c.b16 %v224, %v220
  %vm313 = vcmask 392192
  %v315 = vsel %vm313, %v91, 0
  %317 = vmatprep.subr.bf16.mxu0 %v226
  %318 = vmatpush1.bf16.msra.mxu0 %v225
  %319 = vmatprep.subr.bf16.mxu0 %v230
  %320 = vmatpush1.bf16.msra.mxu0 %v229
  %321 = vmatprep.subr.bf16.mxu0 %v234
  %322 = vmatpush1.bf16.msra.mxu0 %v233
  %323 = vmatprep.subr.bf16.mxu0 %v238
  %324 = vmatpush1.bf16.msra.mxu0 %v237
  %325 = vmatprep.subr.bf16.mxu0 %v242
  %326 = vmatpush1.bf16.msra.mxu0 %v241
  %327 = vmatprep.subr.bf16.mxu0 %v246
  %328 = vmatpush1.bf16.msra.mxu0 %v245
  %329 = vmatprep.subr.bf16.mxu0 %v250
  %330 = vmatpush1.bf16.msra.mxu0 %v249
  %331 = vmatprep.subr.bf16.mxu0 %v254
  %332 = vmatpush1.bf16.msra.mxu0 %v253
  %333 = vmatprep.subr.bf16.mxu0 %v258
  %334 = vmatpush1.bf16.msra.mxu0 %v257
  %335 = vmatprep.subr.bf16.mxu0 %v262
  %336 = vmatpush1.bf16.msra.mxu0 %v261
  %337 = vmatprep.subr.bf16.mxu0 %v266
  %338 = vmatpush1.bf16.msra.mxu0 %v265
  %339 = vmatprep.subr.bf16.mxu0 0
  %340 = vmatpush1.bf16.msra.mxu0 0
  %341 = vmatprep.subr.bf16.mxu0 0
  %342 = vmatpush1.bf16.msra.mxu0 0
  %343 = vmatprep.subr.bf16.mxu0 0
  %344 = vmatpush1.bf16.msra.mxu0 0
  %345 = vmatprep.subr.bf16.mxu0 0
  %346 = vmatpush1.bf16.msra.mxu0 0
  %347 = vmatprep.subr.bf16.mxu0 0
  %348 = vmatpush1.bf16.msra.mxu0 0
  %349 = vmatprep.mubr.bf16.mxu0 %v315
  %350 = vmatmul.mubr.bf16.gmra.mrb[0].mxu0 %v90
  %v351 = vpop.f32.mrb[0].mxu0
  %v352 = vadd.f32 0.0, %v351
  %v353 = vpop.f32.mrb[0].mxu0
  %v354 = vadd.f32 0.0, %v353
  %v355 = vpop.f32.mrb[0].mxu0
  %v356 = vpop.f32.mrb[0].mxu0
  %357 = vdwg.mxu0
  %358 = vmatprep.subr.bf16.mxu0 %v228
  %359 = vmatpush1.bf16.msra.mxu0 %v227
  %360 = vmatprep.subr.bf16.mxu0 %v232
  %361 = vmatpush1.bf16.msra.mxu0 %v231
  %362 = vmatprep.subr.bf16.mxu0 %v236
  %363 = vmatpush1.bf16.msra.mxu0 %v235
  %364 = vmatprep.subr.bf16.mxu0 %v240
  %365 = vmatpush1.bf16.msra.mxu0 %v239
  %366 = vmatprep.subr.bf16.mxu0 %v244
  %367 = vmatpush1.bf16.msra.mxu0 %v243
  %368 = vmatprep.subr.bf16.mxu0 %v248
  %369 = vmatpush1.bf16.msra.mxu0 %v247
  %370 = vmatprep.subr.bf16.mxu0 %v252
  %371 = vmatpush1.bf16.msra.mxu0 %v251
  %372 = vmatprep.subr.bf16.mxu0 %v256
  %373 = vmatpush1.bf16.msra.mxu0 %v255
  %374 = vmatprep.subr.bf16.mxu0 %v260
  %375 = vmatpush1.bf16.msra.mxu0 %v259
  %376 = vmatprep.subr.bf16.mxu0 %v264
  %377 = vmatpush1.bf16.msra.mxu0 %v263
  %378 = vmatprep.subr.bf16.mxu0 %v268
  %379 = vmatpush1.bf16.msra.mxu0 %v267
  %380 = vmatprep.subr.bf16.mxu0 0
  %381 = vmatpush1.bf16.msra.mxu0 0
  %382 = vmatprep.subr.bf16.mxu0 0
  %383 = vmatpush1.bf16.msra.mxu0 0
  %384 = vmatprep.subr.bf16.mxu0 0
  %385 = vmatpush1.bf16.msra.mxu0 0
  %386 = vmatprep.subr.bf16.mxu0 0
  %387 = vmatpush1.bf16.msra.mxu0 0
  %388 = vmatprep.subr.bf16.mxu0 0
  %389 = vmatpush1.bf16.msra.mxu0 0
  %390 = vmatprep.mubr.bf16.mxu0 %v315
  %391 = vmatmul.mubr.bf16.gmra.mrb[0].mxu0 %v90
  %v392 = vpop.f32.mrb[0].mxu0
  %v393 = vadd.f32 0.0, %v392
  %v394 = vpop.f32.mrb[0].mxu0
  %v395 = vadd.f32 0.0, %v394
  %v396 = vpop.f32.mrb[0].mxu0
  %v397 = vpop.f32.mrb[0].mxu0
  %398 = vdwg.mxu0
  %vm399 = vcmp.ge.f32.partialorder %v352, 0.0
  %vm400 = vcmp.ge.f32.partialorder %v354, 0.0
  %vm401 = vcmp.ge.f32.partialorder %v393, 0.0
  %vm402 = vcmp.ge.f32.partialorder %v395, 0.0
  %v403 = vmul.f32 %v352, 0.2
  %v404 = vmul.f32 %v354, 0.2
  %v405 = vmul.f32 %v393, 0.2
  %v406 = vmul.f32 %v395, 0.2
  %v407 = vsel %vm399, %v352, %v403
  %v408 = vsel %vm400, %v354, %v404
  %v409 = vsel %vm401, %v393, %v405
  %v410 = vsel %vm402, %v395, %v406
  %v411 = vpack.c.bf16 %v407, %v407
  %v412 = vpack.c.bf16 %v408, %v408
  %v413 = vpack.c.bf16 %v409, %v409
  %v414 = vpack.c.bf16 %v410, %v410
  %v415 = vld [vmem:[%s2] sm:$0xf]
  %v416 = vld [vmem:[%s2 + $0x4] sm:$0xf]
  %v417 = vld [vmem:[%s2 + $0x8] sm:$0xf]
  %v418 = vld [vmem:[%s2 + $0xc] sm:$0xf]
  %v419 = vld [vmem:[%s2 + $0x10] sm:$0xf]
  %v420 = vld [vmem:[%s2 + $0x14] sm:$0xf]
  %v421 = vld [vmem:[%s2 + $0x18] sm:$0xf]
  %v422 = vld [vmem:[%s2 + $0x1c] sm:$0xf]
  %v423 = vld [vmem:[%s2 + $0x20] sm:$0xf]
  %v424 = vld [vmem:[%s2 + $0x24] sm:$0xf]
  %v425 = vld [vmem:[%s2 + $0x28] sm:$0xf]
  %v426 = vld [vmem:[%s2 + $0x2c] sm:$0xf]
  %v427 = vld [vmem:[%s2 + $0x30] sm:$0xf]
  %v428 = vld [vmem:[%s2 + $0x34] sm:$0xf]
  %v429 = vld [vmem:[%s2 + $0x38] sm:$0xf]
  %v430 = vld [vmem:[%s2 + $0x3c] sm:$0xf]
  %v431 = vld [vmem:[%s2 + $0x40] sm:$0xf]
  %v432 = vld [vmem:[%s2 + $0x44] sm:$0xf]
  %v433 = vld [vmem:[%s2 + $0x48] sm:$0xf]
  %v434 = vld [vmem:[%s2 + $0x4c] sm:$0xf]
  %v435 = vld [vmem:[%s2 + $0x50] sm:$0xf]
  %v436 = vld [vmem:[%s2 + $0x54] sm:$0xf]
  %v437 = vld [vmem:[%s2 + $0x58] sm:$0xf]
  %v438 = vld [vmem:[%s2 + $0x5c] sm:$0xf]
  %v439 = vld [vmem:[%s2 + $0x60] sm:$0xf]
  %v440 = vld [vmem:[%s2 + $0x64] sm:$0xf]
  %v441 = vld [vmem:[%s2 + $0x68] sm:$0xf]
  %v442 = vld [vmem:[%s2 + $0x6c] sm:$0xf]
  %v443 = vld [vmem:[%s2 + $0x70] sm:$0xf]
  %v444 = vld [vmem:[%s2 + $0x74] sm:$0xf]
  %v445 = vld [vmem:[%s2 + $0x78] sm:$0xf]
  %v446 = vld [vmem:[%s2 + $0x7c] sm:$0xf]
  %v447 = vld [vmem:[%s2 + $0x80] sm:$0xf]
  %v448 = vld [vmem:[%s2 + $0x84] sm:$0xf]
  %v449 = vld [vmem:[%s2 + $0x88] sm:$0xf]
  %v450 = vld [vmem:[%s2 + $0x8c] sm:$0xf]
  %v451 = vld [vmem:[%s2 + $0x90] sm:$0xf]
  %v452 = vld [vmem:[%s2 + $0x94] sm:$0xf]
  %v453 = vld [vmem:[%s2 + $0x98] sm:$0xf]
  %v454 = vld [vmem:[%s2 + $0x9c] sm:$0xf]
  %v455 = vld [vmem:[%s2 + $0xa0] sm:$0xf]
  %v456 = vld [vmem:[%s2 + $0xa4] sm:$0xf]
  %v457 = vld [vmem:[%s2 + $0xa8] sm:$0xf]
  %v458 = vld [vmem:[%s2 + $0xac] sm:$0xf]
  %v459 = vld [vmem:[%s2 + $0xb0] sm:$0xf]
  %v460 = vld [vmem:[%s2 + $0xb4] sm:$0xf]
  %v461 = vld [vmem:[%s2 + $0xb8] sm:$0xf]
  %v462 = vld [vmem:[%s2 + $0xbc] sm:$0xf]
  %v463 = vld [vmem:[%s2 + $0xc0] sm:$0xf]
  %v464 = vld [vmem:[%s2 + $0xc4] sm:$0xf]
  %v465 = vld [vmem:[%s2 + $0xc8] sm:$0xf]
  %v466 = vld [vmem:[%s2 + $0xcc] sm:$0xf]
  %v467 = vld [vmem:[%s2 + $0xd0] sm:$0xf]
  %v468 = vld [vmem:[%s2 + $0xd4] sm:$0xf]
  %v469 = vld [vmem:[%s2 + $0xd8] sm:$0xf]
  %v470 = vld [vmem:[%s2 + $0xdc] sm:$0xf]
  %v471 = vld [vmem:[%s2 + $0xe0] sm:$0xf]
  %v472 = vld [vmem:[%s2 + $0xe4] sm:$0xf]
  %v473 = vld [vmem:[%s2 + $0xe8] sm:$0xf]
  %v474 = vld [vmem:[%s2 + $0xec] sm:$0xf]
  %v475 = vld [vmem:[%s2 + $0xf0] sm:$0xf]
  %v476 = vld [vmem:[%s2 + $0xf4] sm:$0xf]
  %v477 = vld [vmem:[%s2 + $0xf8] sm:$0xf]
  %v478 = vld [vmem:[%s2 + $0xfc] sm:$0xf]
  %v543 = vunpack.c.l.b16 %v415
  %v544 = vunpack.c.l.b16 %v416
  %v545 = vunpack.c.l.b16 %v417
  %v546 = vunpack.c.l.b16 %v418
  %v547 = vunpack.c.l.b16 %v419
  %v548 = vunpack.c.l.b16 %v420
  %v549 = vunpack.c.l.b16 %v421
  %v550 = vunpack.c.l.b16 %v422
  %v551 = vunpack.c.l.b16 %v423
  %v552 = vunpack.c.l.b16 %v424
  %v553 = vunpack.c.l.b16 %v425
  %v554 = vunpack.c.l.b16 %v426
  %v555 = vunpack.c.l.b16 %v427
  %v556 = vunpack.c.l.b16 %v428
  %v557 = vunpack.c.l.b16 %v429
  %v558 = vunpack.c.l.b16 %v430
  %v559 = vunpack.c.l.b16 %v431
  %v560 = vunpack.c.l.b16 %v432
  %v561 = vunpack.c.l.b16 %v433
  %v562 = vunpack.c.l.b16 %v434
  %v563 = vunpack.c.l.b16 %v435
  %v564 = vunpack.c.l.b16 %v436
  %v565 = vunpack.c.l.b16 %v437
  %v566 = vunpack.c.l.b16 %v438
  %v567 = vunpack.c.l.b16 %v439
  %v568 = vunpack.c.l.b16 %v440
  %v569 = vunpack.c.l.b16 %v441
  %v570 = vunpack.c.l.b16 %v442
  %v571 = vunpack.c.l.b16 %v443
  %v572 = vunpack.c.l.b16 %v444
  %v573 = vunpack.c.l.b16 %v445
  %v574 = vunpack.c.l.b16 %v446
  %v575 = vunpack.c.l.b16 %v447
  %v576 = vunpack.c.l.b16 %v448
  %v577 = vunpack.c.l.b16 %v449
  %v578 = vunpack.c.l.b16 %v450
  %v579 = vunpack.c.l.b16 %v451
  %v580 = vunpack.c.l.b16 %v452
  %v581 = vunpack.c.l.b16 %v453
  %v582 = vunpack.c.l.b16 %v454
  %v583 = vunpack.c.l.b16 %v455
  %v584 = vunpack.c.l.b16 %v456
  %v585 = vunpack.c.l.b16 %v457
  %v586 = vunpack.c.l.b16 %v458
  %v587 = vunpack.c.l.b16 %v459
  %v588 = vunpack.c.l.b16 %v460
  %v589 = vunpack.c.l.b16 %v461
  %v590 = vunpack.c.l.b16 %v462
  %v591 = vunpack.c.l.b16 %v463
  %v592 = vunpack.c.l.b16 %v464
  %v593 = vunpack.c.l.b16 %v465
  %v594 = vunpack.c.l.b16 %v466
  %v595 = vunpack.c.l.b16 %v467
  %v596 = vunpack.c.l.b16 %v468
  %v597 = vunpack.c.l.b16 %v469
  %v598 = vunpack.c.l.b16 %v470
  %v599 = vunpack.c.l.b16 %v471
  %v600 = vunpack.c.l.b16 %v472
  %v601 = vunpack.c.l.b16 %v473
  %v602 = vunpack.c.l.b16 %v474
  %v603 = vunpack.c.l.b16 %v475
  %v604 = vunpack.c.l.b16 %v476
  %v605 = vunpack.c.l.b16 %v477
  %v606 = vunpack.c.l.b16 %v478
  %v607 = vpack.c.b16 %v544, %v543
  %v608 = vpack.c.b16 %v546, %v545
  %v609 = vpack.c.b16 %v548, %v547
  %v610 = vpack.c.b16 %v550, %v549
  %v611 = vpack.c.b16 %v552, %v551
  %v612 = vpack.c.b16 %v554, %v553
  %v613 = vpack.c.b16 %v556, %v555
  %v614 = vpack.c.b16 %v558, %v557
  %v615 = vpack.c.b16 %v560, %v559
  %v616 = vpack.c.b16 %v562, %v561
  %v617 = vpack.c.b16 %v564, %v563
  %v618 = vpack.c.b16 %v566, %v565
  %v619 = vpack.c.b16 %v568, %v567
  %v620 = vpack.c.b16 %v570, %v569
  %v621 = vpack.c.b16 %v572, %v571
  %v622 = vpack.c.b16 %v574, %v573
  %v623 = vpack.c.b16 %v576, %v575
  %v624 = vpack.c.b16 %v578, %v577
  %v625 = vpack.c.b16 %v580, %v579
  %v626 = vpack.c.b16 %v582, %v581
  %v627 = vpack.c.b16 %v584, %v583
  %v628 = vpack.c.b16 %v586, %v585
  %v629 = vpack.c.b16 %v588, %v587
  %v630 = vpack.c.b16 %v590, %v589
  %v631 = vpack.c.b16 %v592, %v591
  %v632 = vpack.c.b16 %v594, %v593
  %v633 = vpack.c.b16 %v596, %v595
  %v634 = vpack.c.b16 %v598, %v597
  %v635 = vpack.c.b16 %v600, %v599
  %v636 = vpack.c.b16 %v602, %v601
  %v637 = vpack.c.b16 %v604, %v603
  %v638 = vpack.c.b16 %v606, %v605
  %671 = vmatprep.subr.bf16.mxu0 0
  %672 = vmatpush1.bf16.msra.mxu0 %v607
  %673 = vmatprep.subr.bf16.mxu0 0
  %674 = vmatpush1.bf16.msra.mxu0 %v608
  %675 = vmatprep.subr.bf16.mxu0 0
  %676 = vmatpush1.bf16.msra.mxu0 %v609
  %677 = vmatprep.subr.bf16.mxu0 0
  %678 = vmatpush1.bf16.msra.mxu0 %v610
  %679 = vmatprep.subr.bf16.mxu0 0
  %680 = vmatpush1.bf16.msra.mxu0 %v611
  %681 = vmatprep.subr.bf16.mxu0 0
  %682 = vmatpush1.bf16.msra.mxu0 %v612
  %683 = vmatprep.subr.bf16.mxu0 0
  %684 = vmatpush1.bf16.msra.mxu0 %v613
  %685 = vmatprep.subr.bf16.mxu0 0
  %686 = vmatpush1.bf16.msra.mxu0 %v614
  %687 = vmatprep.subr.bf16.mxu0 0
  %688 = vmatpush1.bf16.msra.mxu0 %v615
  %689 = vmatprep.subr.bf16.mxu0 0
  %690 = vmatpush1.bf16.msra.mxu0 %v616
  %691 = vmatprep.subr.bf16.mxu0 0
  %692 = vmatpush1.bf16.msra.mxu0 %v617
  %693 = vmatprep.subr.bf16.mxu0 0
  %694 = vmatpush1.bf16.msra.mxu0 %v618
  %695 = vmatprep.subr.bf16.mxu0 0
  %696 = vmatpush1.bf16.msra.mxu0 %v619
  %697 = vmatprep.subr.bf16.mxu0 0
  %698 = vmatpush1.bf16.msra.mxu0 %v620
  %699 = vmatprep.subr.bf16.mxu0 0
  %700 = vmatpush1.bf16.msra.mxu0 %v621
  %701 = vmatprep.subr.bf16.mxu0 0
  %702 = vmatpush1.bf16.msra.mxu0 %v622
  %703 = vmatprep.mubr.bf16.mxu0 %v412
  %704 = vmatmul.mubr.bf16.gmra.mrb[0].mxu0 %v411
  %v705 = vpop.f32.mrb[0].mxu0
  %v706 = vadd.f32 0.0, %v705
  %v707 = vpop.f32.mrb[0].mxu0
  %v708 = vpop.f32.mrb[0].mxu0
  %v709 = vpop.f32.mrb[0].mxu0
  %710 = vdwg.mxu0
  %711 = vmatprep.subr.bf16.mxu0 0
  %712 = vmatpush1.bf16.msra.mxu0 %v623
  %713 = vmatprep.subr.bf16.mxu0 0
  %714 = vmatpush1.bf16.msra.mxu0 %v624
  %715 = vmatprep.subr.bf16.mxu0 0
  %716 = vmatpush1.bf16.msra.mxu0 %v625
  %717 = vmatprep.subr.bf16.mxu0 0
  %718 = vmatpush1.bf16.msra.mxu0 %v626
  %719 = vmatprep.subr.bf16.mxu0 0
  %720 = vmatpush1.bf16.msra.mxu0 %v627
  %721 = vmatprep.subr.bf16.mxu0 0
  %722 = vmatpush1.bf16.msra.mxu0 %v628
  %723 = vmatprep.subr.bf16.mxu0 0
  %724 = vmatpush1.bf16.msra.mxu0 %v629
  %725 = vmatprep.subr.bf16.mxu0 0
  %726 = vmatpush1.bf16.msra.mxu0 %v630
  %727 = vmatprep.subr.bf16.mxu0 0
  %728 = vmatpush1.bf16.msra.mxu0 %v631
  %729 = vmatprep.subr.bf16.mxu0 0
  %730 = vmatpush1.bf16.msra.mxu0 %v632
  %731 = vmatprep.subr.bf16.mxu0 0
  %732 = vmatpush1.bf16.msra.mxu0 %v633
  %733 = vmatprep.subr.bf16.mxu0 0
  %734 = vmatpush1.bf16.msra.mxu0 %v634
  %735 = vmatprep.subr.bf16.mxu0 0
  %736 = vmatpush1.bf16.msra.mxu0 %v635
  %737 = vmatprep.subr.bf16.mxu0 0
  %738 = vmatpush1.bf16.msra.mxu0 %v636
  %739 = vmatprep.subr.bf16.mxu0 0
  %740 = vmatpush1.bf16.msra.mxu0 %v637
  %741 = vmatprep.subr.bf16.mxu0 0
  %742 = vmatpush1.bf16.msra.mxu0 %v638
  %743 = vmatprep.mubr.bf16.mxu0 %v414
  %744 = vmatmul.mubr.bf16.gmra.mrb[0].mxu0 %v413
  %v745 = vpop.f32.mrb[0].mxu0
  %v746 = vadd.f32 %v706, %v745
  %v747 = vpop.f32.mrb[0].mxu0
  %v748 = vpop.f32.mrb[0].mxu0
  %v749 = vpop.f32.mrb[0].mxu0
  %750 = vdwg.mxu0
  %s751 = scalar_lea.vmem %s2, 256
  %v752 = vld [vmem:[%s751] sm:$0xf]
  %v753 = vld [vmem:[%s751 + $0x4] sm:$0xf]
  %v754 = vld [vmem:[%s751 + $0x8] sm:$0xf]
  %v755 = vld [vmem:[%s751 + $0xc] sm:$0xf]
  %v756 = vld [vmem:[%s751 + $0x10] sm:$0xf]
  %v757 = vld [vmem:[%s751 + $0x14] sm:$0xf]
  %v758 = vld [vmem:[%s751 + $0x18] sm:$0xf]
  %v759 = vld [vmem:[%s751 + $0x1c] sm:$0xf]
  %v760 = vld [vmem:[%s751 + $0x20] sm:$0xf]
  %v761 = vld [vmem:[%s751 + $0x24] sm:$0xf]
  %v762 = vld [vmem:[%s751 + $0x28] sm:$0xf]
  %v763 = vld [vmem:[%s751 + $0x2c] sm:$0xf]
  %v764 = vld [vmem:[%s751 + $0x30] sm:$0xf]
  %v765 = vld [vmem:[%s751 + $0x34] sm:$0xf]
  %v766 = vld [vmem:[%s751 + $0x38] sm:$0xf]
  %v767 = vld [vmem:[%s751 + $0x3c] sm:$0xf]
  %v768 = vld [vmem:[%s751 + $0x40] sm:$0xf]
  %v769 = vld [vmem:[%s751 + $0x44] sm:$0xf]
  %v770 = vld [vmem:[%s751 + $0x48] sm:$0xf]
  %v771 = vld [vmem:[%s751 + $0x4c] sm:$0xf]
  %v772 = vld [vmem:[%s751 + $0x50] sm:$0xf]
  %v773 = vld [vmem:[%s751 + $0x54] sm:$0xf]
  %v774 = vld [vmem:[%s751 + $0x58] sm:$0xf]
  %v775 = vld [vmem:[%s751 + $0x5c] sm:$0xf]
  %v776 = vld [vmem:[%s751 + $0x60] sm:$0xf]
  %v777 = vld [vmem:[%s751 + $0x64] sm:$0xf]
  %v778 = vld [vmem:[%s751 + $0x68] sm:$0xf]
  %v779 = vld [vmem:[%s751 + $0x6c] sm:$0xf]
  %v780 = vld [vmem:[%s751 + $0x70] sm:$0xf]
  %v781 = vld [vmem:[%s751 + $0x74] sm:$0xf]
  %v782 = vld [vmem:[%s751 + $0x78] sm:$0xf]
  %v783 = vld [vmem:[%s751 + $0x7c] sm:$0xf]
  %v784 = vld [vmem:[%s751 + $0x80] sm:$0xf]
  %v785 = vld [vmem:[%s751 + $0x84] sm:$0xf]
  %v786 = vld [vmem:[%s751 + $0x88] sm:$0xf]
  %v787 = vld [vmem:[%s751 + $0x8c] sm:$0xf]
  %v788 = vld [vmem:[%s751 + $0x90] sm:$0xf]
  %v789 = vld [vmem:[%s751 + $0x94] sm:$0xf]
  %v790 = vld [vmem:[%s751 + $0x98] sm:$0xf]
  %v791 = vld [vmem:[%s751 + $0x9c] sm:$0xf]
  %v792 = vld [vmem:[%s751 + $0xa0] sm:$0xf]
  %v793 = vld [vmem:[%s751 + $0xa4] sm:$0xf]
  %v794 = vld [vmem:[%s751 + $0xa8] sm:$0xf]
  %v795 = vld [vmem:[%s751 + $0xac] sm:$0xf]
  %v796 = vld [vmem:[%s751 + $0xb0] sm:$0xf]
  %v797 = vld [vmem:[%s751 + $0xb4] sm:$0xf]
  %v798 = vld [vmem:[%s751 + $0xb8] sm:$0xf]
  %v799 = vld [vmem:[%s751 + $0xbc] sm:$0xf]
  %v800 = vld [vmem:[%s751 + $0xc0] sm:$0xf]
  %v801 = vld [vmem:[%s751 + $0xc4] sm:$0xf]
  %v802 = vld [vmem:[%s751 + $0xc8] sm:$0xf]
  %v803 = vld [vmem:[%s751 + $0xcc] sm:$0xf]
  %v804 = vld [vmem:[%s751 + $0xd0] sm:$0xf]
  %v805 = vld [vmem:[%s751 + $0xd4] sm:$0xf]
  %v806 = vld [vmem:[%s751 + $0xd8] sm:$0xf]
  %v807 = vld [vmem:[%s751 + $0xdc] sm:$0xf]
  %v808 = vld [vmem:[%s751 + $0xe0] sm:$0xf]
  %v809 = vld [vmem:[%s751 + $0xe4] sm:$0xf]
  %v810 = vld [vmem:[%s751 + $0xe8] sm:$0xf]
  %v811 = vld [vmem:[%s751 + $0xec] sm:$0xf]
  %v812 = vld [vmem:[%s751 + $0xf0] sm:$0xf]
  %v813 = vld [vmem:[%s751 + $0xf4] sm:$0xf]
  %v814 = vld [vmem:[%s751 + $0xf8] sm:$0xf]
  %v815 = vld [vmem:[%s751 + $0xfc] sm:$0xf]
  %v880 = vunpack.c.l.b16 %v752
  %v881 = vunpack.c.l.b16 %v753
  %v882 = vunpack.c.l.b16 %v754
  %v883 = vunpack.c.l.b16 %v755
  %v884 = vunpack.c.l.b16 %v756
  %v885 = vunpack.c.l.b16 %v757
  %v886 = vunpack.c.l.b16 %v758
  %v887 = vunpack.c.l.b16 %v759
  %v888 = vunpack.c.l.b16 %v760
  %v889 = vunpack.c.l.b16 %v761
  %v890 = vunpack.c.l.b16 %v762
  %v891 = vunpack.c.l.b16 %v763
  %v892 = vunpack.c.l.b16 %v764
  %v893 = vunpack.c.l.b16 %v765
  %v894 = vunpack.c.l.b16 %v766
  %v895 = vunpack.c.l.b16 %v767
  %v896 = vunpack.c.l.b16 %v768
  %v897 = vunpack.c.l.b16 %v769
  %v898 = vunpack.c.l.b16 %v770
  %v899 = vunpack.c.l.b16 %v771
  %v900 = vunpack.c.l.b16 %v772
  %v901 = vunpack.c.l.b16 %v773
  %v902 = vunpack.c.l.b16 %v774
  %v903 = vunpack.c.l.b16 %v775
  %v904 = vunpack.c.l.b16 %v776
  %v905 = vunpack.c.l.b16 %v777
  %v906 = vunpack.c.l.b16 %v778
  %v907 = vunpack.c.l.b16 %v779
  %v908 = vunpack.c.l.b16 %v780
  %v909 = vunpack.c.l.b16 %v781
  %v910 = vunpack.c.l.b16 %v782
  %v911 = vunpack.c.l.b16 %v783
  %v912 = vunpack.c.l.b16 %v784
  %v913 = vunpack.c.l.b16 %v785
  %v914 = vunpack.c.l.b16 %v786
  %v915 = vunpack.c.l.b16 %v787
  %v916 = vunpack.c.l.b16 %v788
  %v917 = vunpack.c.l.b16 %v789
  %v918 = vunpack.c.l.b16 %v790
  %v919 = vunpack.c.l.b16 %v791
  %v920 = vunpack.c.l.b16 %v792
  %v921 = vunpack.c.l.b16 %v793
  %v922 = vunpack.c.l.b16 %v794
  %v923 = vunpack.c.l.b16 %v795
  %v924 = vunpack.c.l.b16 %v796
  %v925 = vunpack.c.l.b16 %v797
  %v926 = vunpack.c.l.b16 %v798
  %v927 = vunpack.c.l.b16 %v799
  %v928 = vunpack.c.l.b16 %v800
  %v929 = vunpack.c.l.b16 %v801
  %v930 = vunpack.c.l.b16 %v802
  %v931 = vunpack.c.l.b16 %v803
  %v932 = vunpack.c.l.b16 %v804
  %v933 = vunpack.c.l.b16 %v805
  %v934 = vunpack.c.l.b16 %v806
  %v935 = vunpack.c.l.b16 %v807
  %v936 = vunpack.c.l.b16 %v808
  %v937 = vunpack.c.l.b16 %v809
  %v938 = vunpack.c.l.b16 %v810
  %v939 = vunpack.c.l.b16 %v811
  %v940 = vunpack.c.l.b16 %v812
  %v941 = vunpack.c.l.b16 %v813
  %v942 = vunpack.c.l.b16 %v814
  %v943 = vunpack.c.l.b16 %v815
  %v944 = vpack.c.b16 %v881, %v880
  %v945 = vpack.c.b16 %v883, %v882
  %v946 = vpack.c.b16 %v885, %v884
  %v947 = vpack.c.b16 %v887, %v886
  %v948 = vpack.c.b16 %v889, %v888
  %v949 = vpack.c.b16 %v891, %v890
  %v950 = vpack.c.b16 %v893, %v892
  %v951 = vpack.c.b16 %v895, %v894
  %v952 = vpack.c.b16 %v897, %v896
  %v953 = vpack.c.b16 %v899, %v898
  %v954 = vpack.c.b16 %v901, %v900
  %v955 = vpack.c.b16 %v903, %v902
  %v956 = vpack.c.b16 %v905, %v904
  %v957 = vpack.c.b16 %v907, %v906
  %v958 = vpack.c.b16 %v909, %v908
  %v959 = vpack.c.b16 %v911, %v910
  %v960 = vpack.c.b16 %v913, %v912
  %v961 = vpack.c.b16 %v915, %v914
  %v962 = vpack.c.b16 %v917, %v916
  %v963 = vpack.c.b16 %v919, %v918
  %v964 = vpack.c.b16 %v921, %v920
  %v965 = vpack.c.b16 %v923, %v922
  %v966 = vpack.c.b16 %v925, %v924
  %v967 = vpack.c.b16 %v927, %v926
  %v968 = vpack.c.b16 %v929, %v928
  %v969 = vpack.c.b16 %v931, %v930
  %v970 = vpack.c.b16 %v933, %v932
  %v971 = vpack.c.b16 %v935, %v934
  %v972 = vpack.c.b16 %v937, %v936
  %v973 = vpack.c.b16 %v939, %v938
  %v974 = vpack.c.b16 %v941, %v940
  %v975 = vpack.c.b16 %v943, %v942
  %1008 = vmatprep.subr.bf16.mxu0 0
  %1009 = vmatpush1.bf16.msra.mxu0 %v944
  %1010 = vmatprep.subr.bf16.mxu0 0
  %1011 = vmatpush1.bf16.msra.mxu0 %v945
  %1012 = vmatprep.subr.bf16.mxu0 0
  %1013 = vmatpush1.bf16.msra.mxu0 %v946
  %1014 = vmatprep.subr.bf16.mxu0 0
  %1015 = vmatpush1.bf16.msra.mxu0 %v947
  %1016 = vmatprep.subr.bf16.mxu0 0
  %1017 = vmatpush1.bf16.msra.mxu0 %v948
  %1018 = vmatprep.subr.bf16.mxu0 0
  %1019 = vmatpush1.bf16.msra.mxu0 %v949
  %1020 = vmatprep.subr.bf16.mxu0 0
  %1021 = vmatpush1.bf16.msra.mxu0 %v950
  %1022 = vmatprep.subr.bf16.mxu0 0
  %1023 = vmatpush1.bf16.msra.mxu0 %v951
  %1024 = vmatprep.subr.bf16.mxu0 0
  %1025 = vmatpush1.bf16.msra.mxu0 %v952
  %1026 = vmatprep.subr.bf16.mxu0 0
  %1027 = vmatpush1.bf16.msra.mxu0 %v953
  %1028 = vmatprep.subr.bf16.mxu0 0
  %1029 = vmatpush1.bf16.msra.mxu0 %v954
  %1030 = vmatprep.subr.bf16.mxu0 0
  %1031 = vmatpush1.bf16.msra.mxu0 %v955
  %1032 = vmatprep.subr.bf16.mxu0 0
  %1033 = vmatpush1.bf16.msra.mxu0 %v956
  %1034 = vmatprep.subr.bf16.mxu0 0
  %1035 = vmatpush1.bf16.msra.mxu0 %v957
  %1036 = vmatprep.subr.bf16.mxu0 0
  %1037 = vmatpush1.bf16.msra.mxu0 %v958
  %1038 = vmatprep.subr.bf16.mxu0 0
  %1039 = vmatpush1.bf16.msra.mxu0 %v959
  %1040 = vmatprep.mubr.bf16.mxu0 %v412
  %1041 = vmatmul.mubr.bf16.gmra.mrb[0].mxu0 %v411
  %v1042 = vpop.f32.mrb[0].mxu0
  %v1043 = vadd.f32 0.0, %v1042
  %v1044 = vpop.f32.mrb[0].mxu0
  %v1045 = vpop.f32.mrb[0].mxu0
  %v1046 = vpop.f32.mrb[0].mxu0
  %1047 = vdwg.mxu0
  %1048 = vmatprep.subr.bf16.mxu0 0
  %1049 = vmatpush1.bf16.msra.mxu0 %v960
  %1050 = vmatprep.subr.bf16.mxu0 0
  %1051 = vmatpush1.bf16.msra.mxu0 %v961
  %1052 = vmatprep.subr.bf16.mxu0 0
  %1053 = vmatpush1.bf16.msra.mxu0 %v962
  %1054 = vmatprep.subr.bf16.mxu0 0
  %1055 = vmatpush1.bf16.msra.mxu0 %v963
  %1056 = vmatprep.subr.bf16.mxu0 0
  %1057 = vmatpush1.bf16.msra.mxu0 %v964
  %1058 = vmatprep.subr.bf16.mxu0 0
  %1059 = vmatpush1.bf16.msra.mxu0 %v965
  %1060 = vmatprep.subr.bf16.mxu0 0
  %1061 = vmatpush1.bf16.msra.mxu0 %v966
  %1062 = vmatprep.subr.bf16.mxu0 0
  %1063 = vmatpush1.bf16.msra.mxu0 %v967
  %1064 = vmatprep.subr.bf16.mxu0 0
  %1065 = vmatpush1.bf16.msra.mxu0 %v968
  %1066 = vmatprep.subr.bf16.mxu0 0
  %1067 = vmatpush1.bf16.msra.mxu0 %v969
  %1068 = vmatprep.subr.bf16.mxu0 0
  %1069 = vmatpush1.bf16.msra.mxu0 %v970
  %1070 = vmatprep.subr.bf16.mxu0 0
  %1071 = vmatpush1.bf16.msra.mxu0 %v971
  %1072 = vmatprep.subr.bf16.mxu0 0
  %1073 = vmatpush1.bf16.msra.mxu0 %v972
  %1074 = vmatprep.subr.bf16.mxu0 0
  %1075 = vmatpush1.bf16.msra.mxu0 %v973
  %1076 = vmatprep.subr.bf16.mxu0 0
  %1077 = vmatpush1.bf16.msra.mxu0 %v974
  %1078 = vmatprep.subr.bf16.mxu0 0
  %1079 = vmatpush1.bf16.msra.mxu0 %v975
  %1080 = vmatprep.mubr.bf16.mxu0 %v414
  %1081 = vmatmul.mubr.bf16.gmra.mrb[0].mxu0 %v413
  %v1082 = vpop.f32.mrb[0].mxu0
  %v1083 = vadd.f32 %v1043, %v1082
  %v1084 = vpop.f32.mrb[0].mxu0
  %v1085 = vpop.f32.mrb[0].mxu0
  %v1086 = vpop.f32.mrb[0].mxu0
  %1087 = vdwg.mxu0
  %s1088 = scalar_lea.vmem %s2, 512
  %v1089 = vld [vmem:[%s1088] sm:$0xf]
  %v1090 = vld [vmem:[%s1088 + $0x4] sm:$0xf]
  %v1091 = vld [vmem:[%s1088 + $0x8] sm:$0xf]
  %v1092 = vld [vmem:[%s1088 + $0xc] sm:$0xf]
  %v1093 = vld [vmem:[%s1088 + $0x10] sm:$0xf]
  %v1094 = vld [vmem:[%s1088 + $0x14] sm:$0xf]
  %v1095 = vld [vmem:[%s1088 + $0x18] sm:$0xf]
  %v1096 = vld [vmem:[%s1088 + $0x1c] sm:$0xf]
  %v1097 = vld [vmem:[%s1088 + $0x20] sm:$0xf]
  %v1098 = vld [vmem:[%s1088 + $0x24] sm:$0xf]
  %v1099 = vld [vmem:[%s1088 + $0x28] sm:$0xf]
  %v1100 = vld [vmem:[%s1088 + $0x2c] sm:$0xf]
  %v1101 = vld [vmem:[%s1088 + $0x30] sm:$0xf]
  %v1102 = vld [vmem:[%s1088 + $0x34] sm:$0xf]
  %v1103 = vld [vmem:[%s1088 + $0x38] sm:$0xf]
  %v1104 = vld [vmem:[%s1088 + $0x3c] sm:$0xf]
  %v1105 = vld [vmem:[%s1088 + $0x40] sm:$0xf]
  %v1106 = vld [vmem:[%s1088 + $0x44] sm:$0xf]
  %v1107 = vld [vmem:[%s1088 + $0x48] sm:$0xf]
  %v1108 = vld [vmem:[%s1088 + $0x4c] sm:$0xf]
  %v1109 = vld [vmem:[%s1088 + $0x50] sm:$0xf]
  %v1110 = vld [vmem:[%s1088 + $0x54] sm:$0xf]
  %v1111 = vld [vmem:[%s1088 + $0x58] sm:$0xf]
  %v1112 = vld [vmem:[%s1088 + $0x5c] sm:$0xf]
  %v1113 = vld [vmem:[%s1088 + $0x60] sm:$0xf]
  %v1114 = vld [vmem:[%s1088 + $0x64] sm:$0xf]
  %v1115 = vld [vmem:[%s1088 + $0x68] sm:$0xf]
  %v1116 = vld [vmem:[%s1088 + $0x6c] sm:$0xf]
  %v1117 = vld [vmem:[%s1088 + $0x70] sm:$0xf]
  %v1118 = vld [vmem:[%s1088 + $0x74] sm:$0xf]
  %v1119 = vld [vmem:[%s1088 + $0x78] sm:$0xf]
  %v1120 = vld [vmem:[%s1088 + $0x7c] sm:$0xf]
  %v1121 = vld [vmem:[%s1088 + $0x80] sm:$0xf]
  %v1122 = vld [vmem:[%s1088 + $0x84] sm:$0xf]
  %v1123 = vld [vmem:[%s1088 + $0x88] sm:$0xf]
  %v1124 = vld [vmem:[%s1088 + $0x8c] sm:$0xf]
  %v1125 = vld [vmem:[%s1088 + $0x90] sm:$0xf]
  %v1126 = vld [vmem:[%s1088 + $0x94] sm:$0xf]
  %v1127 = vld [vmem:[%s1088 + $0x98] sm:$0xf]
  %v1128 = vld [vmem:[%s1088 + $0x9c] sm:$0xf]
  %v1129 = vld [vmem:[%s1088 + $0xa0] sm:$0xf]
  %v1130 = vld [vmem:[%s1088 + $0xa4] sm:$0xf]
  %v1131 = vld [vmem:[%s1088 + $0xa8] sm:$0xf]
  %v1132 = vld [vmem:[%s1088 + $0xac] sm:$0xf]
  %v1133 = vld [vmem:[%s1088 + $0xb0] sm:$0xf]
  %v1134 = vld [vmem:[%s1088 + $0xb4] sm:$0xf]
  %v1135 = vld [vmem:[%s1088 + $0xb8] sm:$0xf]
  %v1136 = vld [vmem:[%s1088 + $0xbc] sm:$0xf]
  %v1137 = vld [vmem:[%s1088 + $0xc0] sm:$0xf]
  %v1138 = vld [vmem:[%s1088 + $0xc4] sm:$0xf]
  %v1139 = vld [vmem:[%s1088 + $0xc8] sm:$0xf]
  %v1140 = vld [vmem:[%s1088 + $0xcc] sm:$0xf]
  %v1141 = vld [vmem:[%s1088 + $0xd0] sm:$0xf]
  %v1142 = vld [vmem:[%s1088 + $0xd4] sm:$0xf]
  %v1143 = vld [vmem:[%s1088 + $0xd8] sm:$0xf]
  %v1144 = vld [vmem:[%s1088 + $0xdc] sm:$0xf]
  %v1145 = vld [vmem:[%s1088 + $0xe0] sm:$0xf]
  %v1146 = vld [vmem:[%s1088 + $0xe4] sm:$0xf]
  %v1147 = vld [vmem:[%s1088 + $0xe8] sm:$0xf]
  %v1148 = vld [vmem:[%s1088 + $0xec] sm:$0xf]
  %v1149 = vld [vmem:[%s1088 + $0xf0] sm:$0xf]
  %v1150 = vld [vmem:[%s1088 + $0xf4] sm:$0xf]
  %v1151 = vld [vmem:[%s1088 + $0xf8] sm:$0xf]
  %v1152 = vld [vmem:[%s1088 + $0xfc] sm:$0xf]
  %v1217 = vunpack.c.l.b16 %v1089
  %v1218 = vunpack.c.l.b16 %v1090
  %v1219 = vunpack.c.l.b16 %v1091
  %v1220 = vunpack.c.l.b16 %v1092
  %v1221 = vunpack.c.l.b16 %v1093
  %v1222 = vunpack.c.l.b16 %v1094
  %v1223 = vunpack.c.l.b16 %v1095
  %v1224 = vunpack.c.l.b16 %v1096
  %v1225 = vunpack.c.l.b16 %v1097
  %v1226 = vunpack.c.l.b16 %v1098
  %v1227 = vunpack.c.l.b16 %v1099
  %v1228 = vunpack.c.l.b16 %v1100
  %v1229 = vunpack.c.l.b16 %v1101
  %v1230 = vunpack.c.l.b16 %v1102
  %v1231 = vunpack.c.l.b16 %v1103
  %v1232 = vunpack.c.l.b16 %v1104
  %v1233 = vunpack.c.l.b16 %v1105
  %v1234 = vunpack.c.l.b16 %v1106
  %v1235 = vunpack.c.l.b16 %v1107
  %v1236 = vunpack.c.l.b16 %v1108
  %v1237 = vunpack.c.l.b16 %v1109
  %v1238 = vunpack.c.l.b16 %v1110
  %v1239 = vunpack.c.l.b16 %v1111
  %v1240 = vunpack.c.l.b16 %v1112
  %v1241 = vunpack.c.l.b16 %v1113
  %v1242 = vunpack.c.l.b16 %v1114
  %v1243 = vunpack.c.l.b16 %v1115
  %v1244 = vunpack.c.l.b16 %v1116
  %v1245 = vunpack.c.l.b16 %v1117
  %v1246 = vunpack.c.l.b16 %v1118
  %v1247 = vunpack.c.l.b16 %v1119
  %v1248 = vunpack.c.l.b16 %v1120
  %v1249 = vunpack.c.l.b16 %v1121
  %v1250 = vunpack.c.l.b16 %v1122
  %v1251 = vunpack.c.l.b16 %v1123
  %v1252 = vunpack.c.l.b16 %v1124
  %v1253 = vunpack.c.l.b16 %v1125
  %v1254 = vunpack.c.l.b16 %v1126
  %v1255 = vunpack.c.l.b16 %v1127
  %v1256 = vunpack.c.l.b16 %v1128
  %v1257 = vunpack.c.l.b16 %v1129
  %v1258 = vunpack.c.l.b16 %v1130
  %v1259 = vunpack.c.l.b16 %v1131
  %v1260 = vunpack.c.l.b16 %v1132
  %v1261 = vunpack.c.l.b16 %v1133
  %v1262 = vunpack.c.l.b16 %v1134
  %v1263 = vunpack.c.l.b16 %v1135
  %v1264 = vunpack.c.l.b16 %v1136
  %v1265 = vunpack.c.l.b16 %v1137
  %v1266 = vunpack.c.l.b16 %v1138
  %v1267 = vunpack.c.l.b16 %v1139
  %v1268 = vunpack.c.l.b16 %v1140
  %v1269 = vunpack.c.l.b16 %v1141
  %v1270 = vunpack.c.l.b16 %v1142
  %v1271 = vunpack.c.l.b16 %v1143
  %v1272 = vunpack.c.l.b16 %v1144
  %v1273 = vunpack.c.l.b16 %v1145
  %v1274 = vunpack.c.l.b16 %v1146
  %v1275 = vunpack.c.l.b16 %v1147
  %v1276 = vunpack.c.l.b16 %v1148
  %v1277 = vunpack.c.l.b16 %v1149
  %v1278 = vunpack.c.l.b16 %v1150
  %v1279 = vunpack.c.l.b16 %v1151
  %v1280 = vunpack.c.l.b16 %v1152
  %v1281 = vpack.c.b16 %v1218, %v1217
  %v1282 = vpack.c.b16 %v1220, %v1219
  %v1283 = vpack.c.b16 %v1222, %v1221
  %v1284 = vpack.c.b16 %v1224, %v1223
  %v1285 = vpack.c.b16 %v1226, %v1225
  %v1286 = vpack.c.b16 %v1228, %v1227
  %v1287 = vpack.c.b16 %v1230, %v1229
  %v1288 = vpack.c.b16 %v1232, %v1231
  %v1289 = vpack.c.b16 %v1234, %v1233
  %v1290 = vpack.c.b16 %v1236, %v1235
  %v1291 = vpack.c.b16 %v1238, %v1237
  %v1292 = vpack.c.b16 %v1240, %v1239
  %v1293 = vpack.c.b16 %v1242, %v1241
  %v1294 = vpack.c.b16 %v1244, %v1243
  %v1295 = vpack.c.b16 %v1246, %v1245
  %v1296 = vpack.c.b16 %v1248, %v1247
  %v1297 = vpack.c.b16 %v1250, %v1249
  %v1298 = vpack.c.b16 %v1252, %v1251
  %v1299 = vpack.c.b16 %v1254, %v1253
  %v1300 = vpack.c.b16 %v1256, %v1255
  %v1301 = vpack.c.b16 %v1258, %v1257
  %v1302 = vpack.c.b16 %v1260, %v1259
  %v1303 = vpack.c.b16 %v1262, %v1261
  %v1304 = vpack.c.b16 %v1264, %v1263
  %v1305 = vpack.c.b16 %v1266, %v1265
  %v1306 = vpack.c.b16 %v1268, %v1267
  %v1307 = vpack.c.b16 %v1270, %v1269
  %v1308 = vpack.c.b16 %v1272, %v1271
  %v1309 = vpack.c.b16 %v1274, %v1273
  %v1310 = vpack.c.b16 %v1276, %v1275
  %v1311 = vpack.c.b16 %v1278, %v1277
  %v1312 = vpack.c.b16 %v1280, %v1279
  %1345 = vmatprep.subr.bf16.mxu0 0
  %1346 = vmatpush1.bf16.msra.mxu0 %v1281
  %1347 = vmatprep.subr.bf16.mxu0 0
  %1348 = vmatpush1.bf16.msra.mxu0 %v1282
  %1349 = vmatprep.subr.bf16.mxu0 0
  %1350 = vmatpush1.bf16.msra.mxu0 %v1283
  %1351 = vmatprep.subr.bf16.mxu0 0
  %1352 = vmatpush1.bf16.msra.mxu0 %v1284
  %1353 = vmatprep.subr.bf16.mxu0 0
  %1354 = vmatpush1.bf16.msra.mxu0 %v1285
  %1355 = vmatprep.subr.bf16.mxu0 0
  %1356 = vmatpush1.bf16.msra.mxu0 %v1286
  %1357 = vmatprep.subr.bf16.mxu0 0
  %1358 = vmatpush1.bf16.msra.mxu0 %v1287
  %1359 = vmatprep.subr.bf16.mxu0 0
  %1360 = vmatpush1.bf16.msra.mxu0 %v1288
  %1361 = vmatprep.subr.bf16.mxu0 0
  %1362 = vmatpush1.bf16.msra.mxu0 %v1289
  %1363 = vmatprep.subr.bf16.mxu0 0
  %1364 = vmatpush1.bf16.msra.mxu0 %v1290
  %1365 = vmatprep.subr.bf16.mxu0 0
  %1366 = vmatpush1.bf16.msra.mxu0 %v1291
  %1367 = vmatprep.subr.bf16.mxu0 0
  %1368 = vmatpush1.bf16.msra.mxu0 %v1292
  %1369 = vmatprep.subr.bf16.mxu0 0
  %1370 = vmatpush1.bf16.msra.mxu0 %v1293
  %1371 = vmatprep.subr.bf16.mxu0 0
  %1372 = vmatpush1.bf16.msra.mxu0 %v1294
  %1373 = vmatprep.subr.bf16.mxu0 0
  %1374 = vmatpush1.bf16.msra.mxu0 %v1295
  %1375 = vmatprep.subr.bf16.mxu0 0
  %1376 = vmatpush1.bf16.msra.mxu0 %v1296
  %1377 = vmatprep.mubr.bf16.mxu0 %v412
  %1378 = vmatmul.mubr.bf16.gmra.mrb[0].mxu0 %v411
  %v1379 = vpop.f32.mrb[0].mxu0
  %v1380 = vadd.f32 0.0, %v1379
  %v1381 = vpop.f32.mrb[0].mxu0
  %v1382 = vpop.f32.mrb[0].mxu0
  %v1383 = vpop.f32.mrb[0].mxu0
  %1384 = vdwg.mxu0
  %1385 = vmatprep.subr.bf16.mxu0 0
  %1386 = vmatpush1.bf16.msra.mxu0 %v1297
  %1387 = vmatprep.subr.bf16.mxu0 0
  %1388 = vmatpush1.bf16.msra.mxu0 %v1298
  %1389 = vmatprep.subr.bf16.mxu0 0
  %1390 = vmatpush1.bf16.msra.mxu0 %v1299
  %1391 = vmatprep.subr.bf16.mxu0 0
  %1392 = vmatpush1.bf16.msra.mxu0 %v1300
  %1393 = vmatprep.subr.bf16.mxu0 0
  %1394 = vmatpush1.bf16.msra.mxu0 %v1301
  %1395 = vmatprep.subr.bf16.mxu0 0
  %1396 = vmatpush1.bf16.msra.mxu0 %v1302
  %1397 = vmatprep.subr.bf16.mxu0 0
  %1398 = vmatpush1.bf16.msra.mxu0 %v1303
  %1399 = vmatprep.subr.bf16.mxu0 0
  %1400 = vmatpush1.bf16.msra.mxu0 %v1304
  %1401 = vmatprep.subr.bf16.mxu0 0
  %1402 = vmatpush1.bf16.msra.mxu0 %v1305
  %1403 = vmatprep.subr.bf16.mxu0 0
  %1404 = vmatpush1.bf16.msra.mxu0 %v1306
  %1405 = vmatprep.subr.bf16.mxu0 0
  %1406 = vmatpush1.bf16.msra.mxu0 %v1307
  %1407 = vmatprep.subr.bf16.mxu0 0
  %1408 = vmatpush1.bf16.msra.mxu0 %v1308
  %1409 = vmatprep.subr.bf16.mxu0 0
  %1410 = vmatpush1.bf16.msra.mxu0 %v1309
  %1411 = vmatprep.subr.bf16.mxu0 0
  %1412 = vmatpush1.bf16.msra.mxu0 %v1310
  %1413 = vmatprep.subr.bf16.mxu0 0
  %1414 = vmatpush1.bf16.msra.mxu0 %v1311
  %1415 = vmatprep.subr.bf16.mxu0 0
  %1416 = vmatpush1.bf16.msra.mxu0 %v1312
  %1417 = vmatprep.mubr.bf16.mxu0 %v414
  %1418 = vmatmul.mubr.bf16.gmra.mrb[0].mxu0 %v413
  %v1419 = vpop.f32.mrb[0].mxu0
  %v1420 = vadd.f32 %v1380, %v1419
  %v1421 = vpop.f32.mrb[0].mxu0
  %v1422 = vpop.f32.mrb[0].mxu0
  %v1423 = vpop.f32.mrb[0].mxu0
  %1424 = vdwg.mxu0
  %s1425 = scalar_lea.vmem %s2, 768
  %v1426 = vld [vmem:[%s1425] sm:$0xf]
  %v1427 = vld [vmem:[%s1425 + $0x4] sm:$0xf]
  %v1428 = vld [vmem:[%s1425 + $0x8] sm:$0xf]
  %v1429 = vld [vmem:[%s1425 + $0xc] sm:$0xf]
  %v1430 = vld [vmem:[%s1425 + $0x10] sm:$0xf]
  %v1431 = vld [vmem:[%s1425 + $0x14] sm:$0xf]
  %v1432 = vld [vmem:[%s1425 + $0x18] sm:$0xf]
  %v1433 = vld [vmem:[%s1425 + $0x1c] sm:$0xf]
  %v1434 = vld [vmem:[%s1425 + $0x20] sm:$0xf]
  %v1435 = vld [vmem:[%s1425 + $0x24] sm:$0xf]
  %v1436 = vld [vmem:[%s1425 + $0x28] sm:$0xf]
  %v1437 = vld [vmem:[%s1425 + $0x2c] sm:$0xf]
  %v1438 = vld [vmem:[%s1425 + $0x30] sm:$0xf]
  %v1439 = vld [vmem:[%s1425 + $0x34] sm:$0xf]
  %v1440 = vld [vmem:[%s1425 + $0x38] sm:$0xf]
  %v1441 = vld [vmem:[%s1425 + $0x3c] sm:$0xf]
  %v1442 = vld [vmem:[%s1425 + $0x40] sm:$0xf]
  %v1443 = vld [vmem:[%s1425 + $0x44] sm:$0xf]
  %v1444 = vld [vmem:[%s1425 + $0x48] sm:$0xf]
  %v1445 = vld [vmem:[%s1425 + $0x4c] sm:$0xf]
  %v1446 = vld [vmem:[%s1425 + $0x50] sm:$0xf]
  %v1447 = vld [vmem:[%s1425 + $0x54] sm:$0xf]
  %v1448 = vld [vmem:[%s1425 + $0x58] sm:$0xf]
  %v1449 = vld [vmem:[%s1425 + $0x5c] sm:$0xf]
  %v1450 = vld [vmem:[%s1425 + $0x60] sm:$0xf]
  %v1451 = vld [vmem:[%s1425 + $0x64] sm:$0xf]
  %v1452 = vld [vmem:[%s1425 + $0x68] sm:$0xf]
  %v1453 = vld [vmem:[%s1425 + $0x6c] sm:$0xf]
  %v1454 = vld [vmem:[%s1425 + $0x70] sm:$0xf]
  %v1455 = vld [vmem:[%s1425 + $0x74] sm:$0xf]
  %v1456 = vld [vmem:[%s1425 + $0x78] sm:$0xf]
  %v1457 = vld [vmem:[%s1425 + $0x7c] sm:$0xf]
  %v1458 = vld [vmem:[%s1425 + $0x80] sm:$0xf]
  %v1459 = vld [vmem:[%s1425 + $0x84] sm:$0xf]
  %v1460 = vld [vmem:[%s1425 + $0x88] sm:$0xf]
  %v1461 = vld [vmem:[%s1425 + $0x8c] sm:$0xf]
  %v1462 = vld [vmem:[%s1425 + $0x90] sm:$0xf]
  %v1463 = vld [vmem:[%s1425 + $0x94] sm:$0xf]
  %v1464 = vld [vmem:[%s1425 + $0x98] sm:$0xf]
  %v1465 = vld [vmem:[%s1425 + $0x9c] sm:$0xf]
  %v1466 = vld [vmem:[%s1425 + $0xa0] sm:$0xf]
  %v1467 = vld [vmem:[%s1425 + $0xa4] sm:$0xf]
  %v1468 = vld [vmem:[%s1425 + $0xa8] sm:$0xf]
  %v1469 = vld [vmem:[%s1425 + $0xac] sm:$0xf]
  %v1470 = vld [vmem:[%s1425 + $0xb0] sm:$0xf]
  %v1471 = vld [vmem:[%s1425 + $0xb4] sm:$0xf]
  %v1472 = vld [vmem:[%s1425 + $0xb8] sm:$0xf]
  %v1473 = vld [vmem:[%s1425 + $0xbc] sm:$0xf]
  %v1474 = vld [vmem:[%s1425 + $0xc0] sm:$0xf]
  %v1475 = vld [vmem:[%s1425 + $0xc4] sm:$0xf]
  %v1476 = vld [vmem:[%s1425 + $0xc8] sm:$0xf]
  %v1477 = vld [vmem:[%s1425 + $0xcc] sm:$0xf]
  %v1478 = vld [vmem:[%s1425 + $0xd0] sm:$0xf]
  %v1479 = vld [vmem:[%s1425 + $0xd4] sm:$0xf]
  %v1480 = vld [vmem:[%s1425 + $0xd8] sm:$0xf]
  %v1481 = vld [vmem:[%s1425 + $0xdc] sm:$0xf]
  %v1482 = vld [vmem:[%s1425 + $0xe0] sm:$0xf]
  %v1483 = vld [vmem:[%s1425 + $0xe4] sm:$0xf]
  %v1484 = vld [vmem:[%s1425 + $0xe8] sm:$0xf]
  %v1485 = vld [vmem:[%s1425 + $0xec] sm:$0xf]
  %v1486 = vld [vmem:[%s1425 + $0xf0] sm:$0xf]
  %v1487 = vld [vmem:[%s1425 + $0xf4] sm:$0xf]
  %v1488 = vld [vmem:[%s1425 + $0xf8] sm:$0xf]
  %v1489 = vld [vmem:[%s1425 + $0xfc] sm:$0xf]
  %v1554 = vunpack.c.l.b16 %v1426
  %v1555 = vunpack.c.l.b16 %v1427
  %v1556 = vunpack.c.l.b16 %v1428
  %v1557 = vunpack.c.l.b16 %v1429
  %v1558 = vunpack.c.l.b16 %v1430
  %v1559 = vunpack.c.l.b16 %v1431
  %v1560 = vunpack.c.l.b16 %v1432
  %v1561 = vunpack.c.l.b16 %v1433
  %v1562 = vunpack.c.l.b16 %v1434
  %v1563 = vunpack.c.l.b16 %v1435
  %v1564 = vunpack.c.l.b16 %v1436
  %v1565 = vunpack.c.l.b16 %v1437
  %v1566 = vunpack.c.l.b16 %v1438
  %v1567 = vunpack.c.l.b16 %v1439
  %v1568 = vunpack.c.l.b16 %v1440
  %v1569 = vunpack.c.l.b16 %v1441
  %v1570 = vunpack.c.l.b16 %v1442
  %v1571 = vunpack.c.l.b16 %v1443
  %v1572 = vunpack.c.l.b16 %v1444
  %v1573 = vunpack.c.l.b16 %v1445
  %v1574 = vunpack.c.l.b16 %v1446
  %v1575 = vunpack.c.l.b16 %v1447
  %v1576 = vunpack.c.l.b16 %v1448
  %v1577 = vunpack.c.l.b16 %v1449
  %v1578 = vunpack.c.l.b16 %v1450
  %v1579 = vunpack.c.l.b16 %v1451
  %v1580 = vunpack.c.l.b16 %v1452
  %v1581 = vunpack.c.l.b16 %v1453
  %v1582 = vunpack.c.l.b16 %v1454
  %v1583 = vunpack.c.l.b16 %v1455
  %v1584 = vunpack.c.l.b16 %v1456
  %v1585 = vunpack.c.l.b16 %v1457
  %v1586 = vunpack.c.l.b16 %v1458
  %v1587 = vunpack.c.l.b16 %v1459
  %v1588 = vunpack.c.l.b16 %v1460
  %v1589 = vunpack.c.l.b16 %v1461
  %v1590 = vunpack.c.l.b16 %v1462
  %v1591 = vunpack.c.l.b16 %v1463
  %v1592 = vunpack.c.l.b16 %v1464
  %v1593 = vunpack.c.l.b16 %v1465
  %v1594 = vunpack.c.l.b16 %v1466
  %v1595 = vunpack.c.l.b16 %v1467
  %v1596 = vunpack.c.l.b16 %v1468
  %v1597 = vunpack.c.l.b16 %v1469
  %v1598 = vunpack.c.l.b16 %v1470
  %v1599 = vunpack.c.l.b16 %v1471
  %v1600 = vunpack.c.l.b16 %v1472
  %v1601 = vunpack.c.l.b16 %v1473
  %v1602 = vunpack.c.l.b16 %v1474
  %v1603 = vunpack.c.l.b16 %v1475
  %v1604 = vunpack.c.l.b16 %v1476
  %v1605 = vunpack.c.l.b16 %v1477
  %v1606 = vunpack.c.l.b16 %v1478
  %v1607 = vunpack.c.l.b16 %v1479
  %v1608 = vunpack.c.l.b16 %v1480
  %v1609 = vunpack.c.l.b16 %v1481
  %v1610 = vunpack.c.l.b16 %v1482
  %v1611 = vunpack.c.l.b16 %v1483
  %v1612 = vunpack.c.l.b16 %v1484
  %v1613 = vunpack.c.l.b16 %v1485
  %v1614 = vunpack.c.l.b16 %v1486
  %v1615 = vunpack.c.l.b16 %v1487
  %v1616 = vunpack.c.l.b16 %v1488
  %v1617 = vunpack.c.l.b16 %v1489
  %v1618 = vpack.c.b16 %v1555, %v1554
  %v1619 = vpack.c.b16 %v1557, %v1556
  %v1620 = vpack.c.b16 %v1559, %v1558
  %v1621 = vpack.c.b16 %v1561, %v1560
  %v1622 = vpack.c.b16 %v1563, %v1562
  %v1623 = vpack.c.b16 %v1565, %v1564
  %v1624 = vpack.c.b16 %v1567, %v1566
  %v1625 = vpack.c.b16 %v1569, %v1568
  %v1626 = vpack.c.b16 %v1571, %v1570
  %v1627 = vpack.c.b16 %v1573, %v1572
  %v1628 = vpack.c.b16 %v1575, %v1574
  %v1629 = vpack.c.b16 %v1577, %v1576
  %v1630 = vpack.c.b16 %v1579, %v1578
  %v1631 = vpack.c.b16 %v1581, %v1580
  %v1632 = vpack.c.b16 %v1583, %v1582
  %v1633 = vpack.c.b16 %v1585, %v1584
  %v1634 = vpack.c.b16 %v1587, %v1586
  %v1635 = vpack.c.b16 %v1589, %v1588
  %v1636 = vpack.c.b16 %v1591, %v1590
  %v1637 = vpack.c.b16 %v1593, %v1592
  %v1638 = vpack.c.b16 %v1595, %v1594
  %v1639 = vpack.c.b16 %v1597, %v1596
  %v1640 = vpack.c.b16 %v1599, %v1598
  %v1641 = vpack.c.b16 %v1601, %v1600
  %v1642 = vpack.c.b16 %v1603, %v1602
  %v1643 = vpack.c.b16 %v1605, %v1604
  %v1644 = vpack.c.b16 %v1607, %v1606
  %v1645 = vpack.c.b16 %v1609, %v1608
  %v1646 = vpack.c.b16 %v1611, %v1610
  %v1647 = vpack.c.b16 %v1613, %v1612
  %v1648 = vpack.c.b16 %v1615, %v1614
  %v1649 = vpack.c.b16 %v1617, %v1616
  %1682 = vmatprep.subr.bf16.mxu0 0
  %1683 = vmatpush1.bf16.msra.mxu0 %v1618
  %1684 = vmatprep.subr.bf16.mxu0 0
  %1685 = vmatpush1.bf16.msra.mxu0 %v1619
  %1686 = vmatprep.subr.bf16.mxu0 0
  %1687 = vmatpush1.bf16.msra.mxu0 %v1620
  %1688 = vmatprep.subr.bf16.mxu0 0
  %1689 = vmatpush1.bf16.msra.mxu0 %v1621
  %1690 = vmatprep.subr.bf16.mxu0 0
  %1691 = vmatpush1.bf16.msra.mxu0 %v1622
  %1692 = vmatprep.subr.bf16.mxu0 0
  %1693 = vmatpush1.bf16.msra.mxu0 %v1623
  %1694 = vmatprep.subr.bf16.mxu0 0
  %1695 = vmatpush1.bf16.msra.mxu0 %v1624
  %1696 = vmatprep.subr.bf16.mxu0 0
  %1697 = vmatpush1.bf16.msra.mxu0 %v1625
  %1698 = vmatprep.subr.bf16.mxu0 0
  %1699 = vmatpush1.bf16.msra.mxu0 %v1626
  %1700 = vmatprep.subr.bf16.mxu0 0
  %1701 = vmatpush1.bf16.msra.mxu0 %v1627
  %1702 = vmatprep.subr.bf16.mxu0 0
  %1703 = vmatpush1.bf16.msra.mxu0 %v1628
  %1704 = vmatprep.subr.bf16.mxu0 0
  %1705 = vmatpush1.bf16.msra.mxu0 %v1629
  %1706 = vmatprep.subr.bf16.mxu0 0
  %1707 = vmatpush1.bf16.msra.mxu0 %v1630
  %1708 = vmatprep.subr.bf16.mxu0 0
  %1709 = vmatpush1.bf16.msra.mxu0 %v1631
  %1710 = vmatprep.subr.bf16.mxu0 0
  %1711 = vmatpush1.bf16.msra.mxu0 %v1632
  %1712 = vmatprep.subr.bf16.mxu0 0
  %1713 = vmatpush1.bf16.msra.mxu0 %v1633
  %1714 = vmatprep.mubr.bf16.mxu0 %v412
  %1715 = vmatmul.mubr.bf16.gmra.mrb[0].mxu0 %v411
  %v1716 = vpop.f32.mrb[0].mxu0
  %v1717 = vadd.f32 0.0, %v1716
  %v1718 = vpop.f32.mrb[0].mxu0
  %v1719 = vpop.f32.mrb[0].mxu0
  %v1720 = vpop.f32.mrb[0].mxu0
  %1721 = vdwg.mxu0
  %1722 = vmatprep.subr.bf16.mxu0 0
  %1723 = vmatpush1.bf16.msra.mxu0 %v1634
  %1724 = vmatprep.subr.bf16.mxu0 0
  %1725 = vmatpush1.bf16.msra.mxu0 %v1635
  %1726 = vmatprep.subr.bf16.mxu0 0
  %1727 = vmatpush1.bf16.msra.mxu0 %v1636
  %1728 = vmatprep.subr.bf16.mxu0 0
  %1729 = vmatpush1.bf16.msra.mxu0 %v1637
  %1730 = vmatprep.subr.bf16.mxu0 0
  %1731 = vmatpush1.bf16.msra.mxu0 %v1638
  %1732 = vmatprep.subr.bf16.mxu0 0
  %1733 = vmatpush1.bf16.msra.mxu0 %v1639
  %1734 = vmatprep.subr.bf16.mxu0 0
  %1735 = vmatpush1.bf16.msra.mxu0 %v1640
  %1736 = vmatprep.subr.bf16.mxu0 0
  %1737 = vmatpush1.bf16.msra.mxu0 %v1641
  %1738 = vmatprep.subr.bf16.mxu0 0
  %1739 = vmatpush1.bf16.msra.mxu0 %v1642
  %1740 = vmatprep.subr.bf16.mxu0 0
  %1741 = vmatpush1.bf16.msra.mxu0 %v1643
  %1742 = vmatprep.subr.bf16.mxu0 0
  %1743 = vmatpush1.bf16.msra.mxu0 %v1644
  %1744 = vmatprep.subr.bf16.mxu0 0
  %1745 = vmatpush1.bf16.msra.mxu0 %v1645
  %1746 = vmatprep.subr.bf16.mxu0 0
  %1747 = vmatpush1.bf16.msra.mxu0 %v1646
  %1748 = vmatprep.subr.bf16.mxu0 0
  %1749 = vmatpush1.bf16.msra.mxu0 %v1647
  %1750 = vmatprep.subr.bf16.mxu0 0
  %1751 = vmatpush1.bf16.msra.mxu0 %v1648
  %1752 = vmatprep.subr.bf16.mxu0 0
  %1753 = vmatpush1.bf16.msra.mxu0 %v1649
  %1754 = vmatprep.mubr.bf16.mxu0 %v414
  %1755 = vmatmul.mubr.bf16.gmra.mrb[0].mxu0 %v413
  %v1756 = vpop.f32.mrb[0].mxu0
  %v1757 = vadd.f32 %v1717, %v1756
  %v1758 = vpop.f32.mrb[0].mxu0
  %v1759 = vpop.f32.mrb[0].mxu0
  %v1760 = vpop.f32.mrb[0].mxu0
  %1761 = vdwg.mxu0
  %s1762 = scalar_lea.vmem %s2, 1024
  %v1763 = vld [vmem:[%s1762] sm:$0xf]
  %v1764 = vld [vmem:[%s1762 + $0x4] sm:$0xf]
  %v1765 = vld [vmem:[%s1762 + $0x8] sm:$0xf]
  %v1766 = vld [vmem:[%s1762 + $0xc] sm:$0xf]
  %v1767 = vld [vmem:[%s1762 + $0x10] sm:$0xf]
  %v1768 = vld [vmem:[%s1762 + $0x14] sm:$0xf]
  %v1769 = vld [vmem:[%s1762 + $0x18] sm:$0xf]
  %v1770 = vld [vmem:[%s1762 + $0x1c] sm:$0xf]
  %v1771 = vld [vmem:[%s1762 + $0x20] sm:$0xf]
  %v1772 = vld [vmem:[%s1762 + $0x24] sm:$0xf]
  %v1773 = vld [vmem:[%s1762 + $0x28] sm:$0xf]
  %v1774 = vld [vmem:[%s1762 + $0x2c] sm:$0xf]
  %v1775 = vld [vmem:[%s1762 + $0x30] sm:$0xf]
  %v1776 = vld [vmem:[%s1762 + $0x34] sm:$0xf]
  %v1777 = vld [vmem:[%s1762 + $0x38] sm:$0xf]
  %v1778 = vld [vmem:[%s1762 + $0x3c] sm:$0xf]
  %v1779 = vld [vmem:[%s1762 + $0x40] sm:$0xf]
  %v1780 = vld [vmem:[%s1762 + $0x44] sm:$0xf]
  %v1781 = vld [vmem:[%s1762 + $0x48] sm:$0xf]
  %v1782 = vld [vmem:[%s1762 + $0x4c] sm:$0xf]
  %v1783 = vld [vmem:[%s1762 + $0x50] sm:$0xf]
  %v1784 = vld [vmem:[%s1762 + $0x54] sm:$0xf]
  %v1785 = vld [vmem:[%s1762 + $0x58] sm:$0xf]
  %v1786 = vld [vmem:[%s1762 + $0x5c] sm:$0xf]
  %v1787 = vld [vmem:[%s1762 + $0x60] sm:$0xf]
  %v1788 = vld [vmem:[%s1762 + $0x64] sm:$0xf]
  %v1789 = vld [vmem:[%s1762 + $0x68] sm:$0xf]
  %v1790 = vld [vmem:[%s1762 + $0x6c] sm:$0xf]
  %v1791 = vld [vmem:[%s1762 + $0x70] sm:$0xf]
  %v1792 = vld [vmem:[%s1762 + $0x74] sm:$0xf]
  %v1793 = vld [vmem:[%s1762 + $0x78] sm:$0xf]
  %v1794 = vld [vmem:[%s1762 + $0x7c] sm:$0xf]
  %v1795 = vld [vmem:[%s1762 + $0x80] sm:$0xf]
  %v1796 = vld [vmem:[%s1762 + $0x84] sm:$0xf]
  %v1797 = vld [vmem:[%s1762 + $0x88] sm:$0xf]
  %v1798 = vld [vmem:[%s1762 + $0x8c] sm:$0xf]
  %v1799 = vld [vmem:[%s1762 + $0x90] sm:$0xf]
  %v1800 = vld [vmem:[%s1762 + $0x94] sm:$0xf]
  %v1801 = vld [vmem:[%s1762 + $0x98] sm:$0xf]
  %v1802 = vld [vmem:[%s1762 + $0x9c] sm:$0xf]
  %v1803 = vld [vmem:[%s1762 + $0xa0] sm:$0xf]
  %v1804 = vld [vmem:[%s1762 + $0xa4] sm:$0xf]
  %v1805 = vld [vmem:[%s1762 + $0xa8] sm:$0xf]
  %v1806 = vld [vmem:[%s1762 + $0xac] sm:$0xf]
  %v1807 = vld [vmem:[%s1762 + $0xb0] sm:$0xf]
  %v1808 = vld [vmem:[%s1762 + $0xb4] sm:$0xf]
  %v1809 = vld [vmem:[%s1762 + $0xb8] sm:$0xf]
  %v1810 = vld [vmem:[%s1762 + $0xbc] sm:$0xf]
  %v1811 = vld [vmem:[%s1762 + $0xc0] sm:$0xf]
  %v1812 = vld [vmem:[%s1762 + $0xc4] sm:$0xf]
  %v1813 = vld [vmem:[%s1762 + $0xc8] sm:$0xf]
  %v1814 = vld [vmem:[%s1762 + $0xcc] sm:$0xf]
  %v1815 = vld [vmem:[%s1762 + $0xd0] sm:$0xf]
  %v1816 = vld [vmem:[%s1762 + $0xd4] sm:$0xf]
  %v1817 = vld [vmem:[%s1762 + $0xd8] sm:$0xf]
  %v1818 = vld [vmem:[%s1762 + $0xdc] sm:$0xf]
  %v1819 = vld [vmem:[%s1762 + $0xe0] sm:$0xf]
  %v1820 = vld [vmem:[%s1762 + $0xe4] sm:$0xf]
  %v1821 = vld [vmem:[%s1762 + $0xe8] sm:$0xf]
  %v1822 = vld [vmem:[%s1762 + $0xec] sm:$0xf]
  %v1823 = vld [vmem:[%s1762 + $0xf0] sm:$0xf]
  %v1824 = vld [vmem:[%s1762 + $0xf4] sm:$0xf]
  %v1825 = vld [vmem:[%s1762 + $0xf8] sm:$0xf]
  %v1826 = vld [vmem:[%s1762 + $0xfc] sm:$0xf]
  %v1891 = vunpack.c.l.b16 %v1763
  %v1892 = vunpack.c.l.b16 %v1764
  %v1893 = vunpack.c.l.b16 %v1765
  %v1894 = vunpack.c.l.b16 %v1766
  %v1895 = vunpack.c.l.b16 %v1767
  %v1896 = vunpack.c.l.b16 %v1768
  %v1897 = vunpack.c.l.b16 %v1769
  %v1898 = vunpack.c.l.b16 %v1770
  %v1899 = vunpack.c.l.b16 %v1771
  %v1900 = vunpack.c.l.b16 %v1772
  %v1901 = vunpack.c.l.b16 %v1773
  %v1902 = vunpack.c.l.b16 %v1774
  %v1903 = vunpack.c.l.b16 %v1775
  %v1904 = vunpack.c.l.b16 %v1776
  %v1905 = vunpack.c.l.b16 %v1777
  %v1906 = vunpack.c.l.b16 %v1778
  %v1907 = vunpack.c.l.b16 %v1779
  %v1908 = vunpack.c.l.b16 %v1780
  %v1909 = vunpack.c.l.b16 %v1781
  %v1910 = vunpack.c.l.b16 %v1782
  %v1911 = vunpack.c.l.b16 %v1783
  %v1912 = vunpack.c.l.b16 %v1784
  %v1913 = vunpack.c.l.b16 %v1785
  %v1914 = vunpack.c.l.b16 %v1786
  %v1915 = vunpack.c.l.b16 %v1787
  %v1916 = vunpack.c.l.b16 %v1788
  %v1917 = vunpack.c.l.b16 %v1789
  %v1918 = vunpack.c.l.b16 %v1790
  %v1919 = vunpack.c.l.b16 %v1791
  %v1920 = vunpack.c.l.b16 %v1792
  %v1921 = vunpack.c.l.b16 %v1793
  %v1922 = vunpack.c.l.b16 %v1794
  %v1923 = vunpack.c.l.b16 %v1795
  %v1924 = vunpack.c.l.b16 %v1796
  %v1925 = vunpack.c.l.b16 %v1797
  %v1926 = vunpack.c.l.b16 %v1798
  %v1927 = vunpack.c.l.b16 %v1799
  %v1928 = vunpack.c.l.b16 %v1800
  %v1929 = vunpack.c.l.b16 %v1801
  %v1930 = vunpack.c.l.b16 %v1802
  %v1931 = vunpack.c.l.b16 %v1803
  %v1932 = vunpack.c.l.b16 %v1804
  %v1933 = vunpack.c.l.b16 %v1805
  %v1934 = vunpack.c.l.b16 %v1806
  %v1935 = vunpack.c.l.b16 %v1807
  %v1936 = vunpack.c.l.b16 %v1808
  %v1937 = vunpack.c.l.b16 %v1809
  %v1938 = vunpack.c.l.b16 %v1810
  %v1939 = vunpack.c.l.b16 %v1811
  %v1940 = vunpack.c.l.b16 %v1812
  %v1941 = vunpack.c.l.b16 %v1813
  %v1942 = vunpack.c.l.b16 %v1814
  %v1943 = vunpack.c.l.b16 %v1815
  %v1944 = vunpack.c.l.b16 %v1816
  %v1945 = vunpack.c.l.b16 %v1817
  %v1946 = vunpack.c.l.b16 %v1818
  %v1947 = vunpack.c.l.b16 %v1819
  %v1948 = vunpack.c.l.b16 %v1820
  %v1949 = vunpack.c.l.b16 %v1821
  %v1950 = vunpack.c.l.b16 %v1822
  %v1951 = vunpack.c.l.b16 %v1823
  %v1952 = vunpack.c.l.b16 %v1824
  %v1953 = vunpack.c.l.b16 %v1825
  %v1954 = vunpack.c.l.b16 %v1826
  %v1955 = vpack.c.b16 %v1892, %v1891
  %v1956 = vpack.c.b16 %v1894, %v1893
  %v1957 = vpack.c.b16 %v1896, %v1895
  %v1958 = vpack.c.b16 %v1898, %v1897
  %v1959 = vpack.c.b16 %v1900, %v1899
  %v1960 = vpack.c.b16 %v1902, %v1901
  %v1961 = vpack.c.b16 %v1904, %v1903
  %v1962 = vpack.c.b16 %v1906, %v1905
  %v1963 = vpack.c.b16 %v1908, %v1907
  %v1964 = vpack.c.b16 %v1910, %v1909
  %v1965 = vpack.c.b16 %v1912, %v1911
  %v1966 = vpack.c.b16 %v1914, %v1913
  %v1967 = vpack.c.b16 %v1916, %v1915
  %v1968 = vpack.c.b16 %v1918, %v1917
  %v1969 = vpack.c.b16 %v1920, %v1919
  %v1970 = vpack.c.b16 %v1922, %v1921
  %v1971 = vpack.c.b16 %v1924, %v1923
  %v1972 = vpack.c.b16 %v1926, %v1925
  %v1973 = vpack.c.b16 %v1928, %v1927
  %v1974 = vpack.c.b16 %v1930, %v1929
  %v1975 = vpack.c.b16 %v1932, %v1931
  %v1976 = vpack.c.b16 %v1934, %v1933
  %v1977 = vpack.c.b16 %v1936, %v1935
  %v1978 = vpack.c.b16 %v1938, %v1937
  %v1979 = vpack.c.b16 %v1940, %v1939
  %v1980 = vpack.c.b16 %v1942, %v1941
  %v1981 = vpack.c.b16 %v1944, %v1943
  %v1982 = vpack.c.b16 %v1946, %v1945
  %v1983 = vpack.c.b16 %v1948, %v1947
  %v1984 = vpack.c.b16 %v1950, %v1949
  %v1985 = vpack.c.b16 %v1952, %v1951
  %v1986 = vpack.c.b16 %v1954, %v1953
  %2019 = vmatprep.subr.bf16.mxu0 0
  %2020 = vmatpush1.bf16.msra.mxu0 %v1955
  %2021 = vmatprep.subr.bf16.mxu0 0
  %2022 = vmatpush1.bf16.msra.mxu0 %v1956
  %2023 = vmatprep.subr.bf16.mxu0 0
  %2024 = vmatpush1.bf16.msra.mxu0 %v1957
  %2025 = vmatprep.subr.bf16.mxu0 0
  %2026 = vmatpush1.bf16.msra.mxu0 %v1958
  %2027 = vmatprep.subr.bf16.mxu0 0
  %2028 = vmatpush1.bf16.msra.mxu0 %v1959
  %2029 = vmatprep.subr.bf16.mxu0 0
  %2030 = vmatpush1.bf16.msra.mxu0 %v1960
  %2031 = vmatprep.subr.bf16.mxu0 0
  %2032 = vmatpush1.bf16.msra.mxu0 %v1961
  %2033 = vmatprep.subr.bf16.mxu0 0
  %2034 = vmatpush1.bf16.msra.mxu0 %v1962
  %2035 = vmatprep.subr.bf16.mxu0 0
  %2036 = vmatpush1.bf16.msra.mxu0 %v1963
  %2037 = vmatprep.subr.bf16.mxu0 0
  %2038 = vmatpush1.bf16.msra.mxu0 %v1964
  %2039 = vmatprep.subr.bf16.mxu0 0
  %2040 = vmatpush1.bf16.msra.mxu0 %v1965
  %2041 = vmatprep.subr.bf16.mxu0 0
  %2042 = vmatpush1.bf16.msra.mxu0 %v1966
  %2043 = vmatprep.subr.bf16.mxu0 0
  %2044 = vmatpush1.bf16.msra.mxu0 %v1967
  %2045 = vmatprep.subr.bf16.mxu0 0
  %2046 = vmatpush1.bf16.msra.mxu0 %v1968
  %2047 = vmatprep.subr.bf16.mxu0 0
  %2048 = vmatpush1.bf16.msra.mxu0 %v1969
  %2049 = vmatprep.subr.bf16.mxu0 0
  %2050 = vmatpush1.bf16.msra.mxu0 %v1970
  %2051 = vmatprep.mubr.bf16.mxu0 %v412
  %2052 = vmatmul.mubr.bf16.gmra.mrb[0].mxu0 %v411
  %v2053 = vpop.f32.mrb[0].mxu0
  %v2054 = vadd.f32 0.0, %v2053
  %v2055 = vpop.f32.mrb[0].mxu0
  %v2056 = vpop.f32.mrb[0].mxu0
  %v2057 = vpop.f32.mrb[0].mxu0
  %2058 = vdwg.mxu0
  %2059 = vmatprep.subr.bf16.mxu0 0
  %2060 = vmatpush1.bf16.msra.mxu0 %v1971
  %2061 = vmatprep.subr.bf16.mxu0 0
  %2062 = vmatpush1.bf16.msra.mxu0 %v1972
  %2063 = vmatprep.subr.bf16.mxu0 0
  %2064 = vmatpush1.bf16.msra.mxu0 %v1973
  %2065 = vmatprep.subr.bf16.mxu0 0
  %2066 = vmatpush1.bf16.msra.mxu0 %v1974
  %2067 = vmatprep.subr.bf16.mxu0 0
  %2068 = vmatpush1.bf16.msra.mxu0 %v1975
  %2069 = vmatprep.subr.bf16.mxu0 0
  %2070 = vmatpush1.bf16.msra.mxu0 %v1976
  %2071 = vmatprep.subr.bf16.mxu0 0
  %2072 = vmatpush1.bf16.msra.mxu0 %v1977
  %2073 = vmatprep.subr.bf16.mxu0 0
  %2074 = vmatpush1.bf16.msra.mxu0 %v1978
  %2075 = vmatprep.subr.bf16.mxu0 0
  %2076 = vmatpush1.bf16.msra.mxu0 %v1979
  %2077 = vmatprep.subr.bf16.mxu0 0
  %2078 = vmatpush1.bf16.msra.mxu0 %v1980
  %2079 = vmatprep.subr.bf16.mxu0 0
  %2080 = vmatpush1.bf16.msra.mxu0 %v1981
  %2081 = vmatprep.subr.bf16.mxu0 0
  %2082 = vmatpush1.bf16.msra.mxu0 %v1982
  %2083 = vmatprep.subr.bf16.mxu0 0
  %2084 = vmatpush1.bf16.msra.mxu0 %v1983
  %2085 = vmatprep.subr.bf16.mxu0 0
  %2086 = vmatpush1.bf16.msra.mxu0 %v1984
  %2087 = vmatprep.subr.bf16.mxu0 0
  %2088 = vmatpush1.bf16.msra.mxu0 %v1985
  %2089 = vmatprep.subr.bf16.mxu0 0
  %2090 = vmatpush1.bf16.msra.mxu0 %v1986
  %2091 = vmatprep.mubr.bf16.mxu0 %v414
  %2092 = vmatmul.mubr.bf16.gmra.mrb[0].mxu0 %v413
  %v2093 = vpop.f32.mrb[0].mxu0
  %v2094 = vadd.f32 %v2054, %v2093
  %v2095 = vpop.f32.mrb[0].mxu0
  %v2096 = vpop.f32.mrb[0].mxu0
  %v2097 = vpop.f32.mrb[0].mxu0
  %2098 = vdwg.mxu0
  %s2099 = scalar_lea.vmem %s2, 1280
  %v2100 = vld [vmem:[%s2099] sm:$0xf]
  %v2101 = vld [vmem:[%s2099 + $0x4] sm:$0xf]
  %v2102 = vld [vmem:[%s2099 + $0x8] sm:$0xf]
  %v2103 = vld [vmem:[%s2099 + $0xc] sm:$0xf]
  %v2104 = vld [vmem:[%s2099 + $0x10] sm:$0xf]
  %v2105 = vld [vmem:[%s2099 + $0x14] sm:$0xf]
  %v2106 = vld [vmem:[%s2099 + $0x18] sm:$0xf]
  %v2107 = vld [vmem:[%s2099 + $0x1c] sm:$0xf]
  %v2108 = vld [vmem:[%s2099 + $0x20] sm:$0xf]
  %v2109 = vld [vmem:[%s2099 + $0x24] sm:$0xf]
  %v2110 = vld [vmem:[%s2099 + $0x28] sm:$0xf]
  %v2111 = vld [vmem:[%s2099 + $0x2c] sm:$0xf]
  %v2112 = vld [vmem:[%s2099 + $0x30] sm:$0xf]
  %v2113 = vld [vmem:[%s2099 + $0x34] sm:$0xf]
  %v2114 = vld [vmem:[%s2099 + $0x38] sm:$0xf]
  %v2115 = vld [vmem:[%s2099 + $0x3c] sm:$0xf]
  %v2116 = vld [vmem:[%s2099 + $0x40] sm:$0xf]
  %v2117 = vld [vmem:[%s2099 + $0x44] sm:$0xf]
  %v2118 = vld [vmem:[%s2099 + $0x48] sm:$0xf]
  %v2119 = vld [vmem:[%s2099 + $0x4c] sm:$0xf]
  %v2120 = vld [vmem:[%s2099 + $0x50] sm:$0xf]
  %v2121 = vld [vmem:[%s2099 + $0x54] sm:$0xf]
  %v2122 = vld [vmem:[%s2099 + $0x58] sm:$0xf]
  %v2123 = vld [vmem:[%s2099 + $0x5c] sm:$0xf]
  %v2124 = vld [vmem:[%s2099 + $0x60] sm:$0xf]
  %v2125 = vld [vmem:[%s2099 + $0x64] sm:$0xf]
  %v2126 = vld [vmem:[%s2099 + $0x68] sm:$0xf]
  %v2127 = vld [vmem:[%s2099 + $0x6c] sm:$0xf]
  %v2128 = vld [vmem:[%s2099 + $0x70] sm:$0xf]
  %v2129 = vld [vmem:[%s2099 + $0x74] sm:$0xf]
  %v2130 = vld [vmem:[%s2099 + $0x78] sm:$0xf]
  %v2131 = vld [vmem:[%s2099 + $0x7c] sm:$0xf]
  %v2132 = vld [vmem:[%s2099 + $0x80] sm:$0xf]
  %v2133 = vld [vmem:[%s2099 + $0x84] sm:$0xf]
  %v2134 = vld [vmem:[%s2099 + $0x88] sm:$0xf]
  %v2135 = vld [vmem:[%s2099 + $0x8c] sm:$0xf]
  %v2136 = vld [vmem:[%s2099 + $0x90] sm:$0xf]
  %v2137 = vld [vmem:[%s2099 + $0x94] sm:$0xf]
  %v2138 = vld [vmem:[%s2099 + $0x98] sm:$0xf]
  %v2139 = vld [vmem:[%s2099 + $0x9c] sm:$0xf]
  %v2140 = vld [vmem:[%s2099 + $0xa0] sm:$0xf]
  %v2141 = vld [vmem:[%s2099 + $0xa4] sm:$0xf]
  %v2142 = vld [vmem:[%s2099 + $0xa8] sm:$0xf]
  %v2143 = vld [vmem:[%s2099 + $0xac] sm:$0xf]
  %v2144 = vld [vmem:[%s2099 + $0xb0] sm:$0xf]
  %v2145 = vld [vmem:[%s2099 + $0xb4] sm:$0xf]
  %v2146 = vld [vmem:[%s2099 + $0xb8] sm:$0xf]
  %v2147 = vld [vmem:[%s2099 + $0xbc] sm:$0xf]
  %v2148 = vld [vmem:[%s2099 + $0xc0] sm:$0xf]
  %v2149 = vld [vmem:[%s2099 + $0xc4] sm:$0xf]
  %v2150 = vld [vmem:[%s2099 + $0xc8] sm:$0xf]
  %v2151 = vld [vmem:[%s2099 + $0xcc] sm:$0xf]
  %v2152 = vld [vmem:[%s2099 + $0xd0] sm:$0xf]
  %v2153 = vld [vmem:[%s2099 + $0xd4] sm:$0xf]
  %v2154 = vld [vmem:[%s2099 + $0xd8] sm:$0xf]
  %v2155 = vld [vmem:[%s2099 + $0xdc] sm:$0xf]
  %v2156 = vld [vmem:[%s2099 + $0xe0] sm:$0xf]
  %v2157 = vld [vmem:[%s2099 + $0xe4] sm:$0xf]
  %v2158 = vld [vmem:[%s2099 + $0xe8] sm:$0xf]
  %v2159 = vld [vmem:[%s2099 + $0xec] sm:$0xf]
  %v2160 = vld [vmem:[%s2099 + $0xf0] sm:$0xf]
  %v2161 = vld [vmem:[%s2099 + $0xf4] sm:$0xf]
  %v2162 = vld [vmem:[%s2099 + $0xf8] sm:$0xf]
  %v2163 = vld [vmem:[%s2099 + $0xfc] sm:$0xf]
  %v2228 = vunpack.c.l.b16 %v2100
  %v2229 = vunpack.c.l.b16 %v2101
  %v2230 = vunpack.c.l.b16 %v2102
  %v2231 = vunpack.c.l.b16 %v2103
  %v2232 = vunpack.c.l.b16 %v2104
  %v2233 = vunpack.c.l.b16 %v2105
  %v2234 = vunpack.c.l.b16 %v2106
  %v2235 = vunpack.c.l.b16 %v2107
  %v2236 = vunpack.c.l.b16 %v2108
  %v2237 = vunpack.c.l.b16 %v2109
  %v2238 = vunpack.c.l.b16 %v2110
  %v2239 = vunpack.c.l.b16 %v2111
  %v2240 = vunpack.c.l.b16 %v2112
  %v2241 = vunpack.c.l.b16 %v2113
  %v2242 = vunpack.c.l.b16 %v2114
  %v2243 = vunpack.c.l.b16 %v2115
  %v2244 = vunpack.c.l.b16 %v2116
  %v2245 = vunpack.c.l.b16 %v2117
  %v2246 = vunpack.c.l.b16 %v2118
  %v2247 = vunpack.c.l.b16 %v2119
  %v2248 = vunpack.c.l.b16 %v2120
  %v2249 = vunpack.c.l.b16 %v2121
  %v2250 = vunpack.c.l.b16 %v2122
  %v2251 = vunpack.c.l.b16 %v2123
  %v2252 = vunpack.c.l.b16 %v2124
  %v2253 = vunpack.c.l.b16 %v2125
  %v2254 = vunpack.c.l.b16 %v2126
  %v2255 = vunpack.c.l.b16 %v2127
  %v2256 = vunpack.c.l.b16 %v2128
  %v2257 = vunpack.c.l.b16 %v2129
  %v2258 = vunpack.c.l.b16 %v2130
  %v2259 = vunpack.c.l.b16 %v2131
  %v2260 = vunpack.c.l.b16 %v2132
  %v2261 = vunpack.c.l.b16 %v2133
  %v2262 = vunpack.c.l.b16 %v2134
  %v2263 = vunpack.c.l.b16 %v2135
  %v2264 = vunpack.c.l.b16 %v2136
  %v2265 = vunpack.c.l.b16 %v2137
  %v2266 = vunpack.c.l.b16 %v2138
  %v2267 = vunpack.c.l.b16 %v2139
  %v2268 = vunpack.c.l.b16 %v2140
  %v2269 = vunpack.c.l.b16 %v2141
  %v2270 = vunpack.c.l.b16 %v2142
  %v2271 = vunpack.c.l.b16 %v2143
  %v2272 = vunpack.c.l.b16 %v2144
  %v2273 = vunpack.c.l.b16 %v2145
  %v2274 = vunpack.c.l.b16 %v2146
  %v2275 = vunpack.c.l.b16 %v2147
  %v2276 = vunpack.c.l.b16 %v2148
  %v2277 = vunpack.c.l.b16 %v2149
  %v2278 = vunpack.c.l.b16 %v2150
  %v2279 = vunpack.c.l.b16 %v2151
  %v2280 = vunpack.c.l.b16 %v2152
  %v2281 = vunpack.c.l.b16 %v2153
  %v2282 = vunpack.c.l.b16 %v2154
  %v2283 = vunpack.c.l.b16 %v2155
  %v2284 = vunpack.c.l.b16 %v2156
  %v2285 = vunpack.c.l.b16 %v2157
  %v2286 = vunpack.c.l.b16 %v2158
  %v2287 = vunpack.c.l.b16 %v2159
  %v2288 = vunpack.c.l.b16 %v2160
  %v2289 = vunpack.c.l.b16 %v2161
  %v2290 = vunpack.c.l.b16 %v2162
  %v2291 = vunpack.c.l.b16 %v2163
  %v2292 = vpack.c.b16 %v2229, %v2228
  %v2293 = vpack.c.b16 %v2231, %v2230
  %v2294 = vpack.c.b16 %v2233, %v2232
  %v2295 = vpack.c.b16 %v2235, %v2234
  %v2296 = vpack.c.b16 %v2237, %v2236
  %v2297 = vpack.c.b16 %v2239, %v2238
  %v2298 = vpack.c.b16 %v2241, %v2240
  %v2299 = vpack.c.b16 %v2243, %v2242
  %v2300 = vpack.c.b16 %v2245, %v2244
  %v2301 = vpack.c.b16 %v2247, %v2246
  %v2302 = vpack.c.b16 %v2249, %v2248
  %v2303 = vpack.c.b16 %v2251, %v2250
  %v2304 = vpack.c.b16 %v2253, %v2252
  %v2305 = vpack.c.b16 %v2255, %v2254
  %v2306 = vpack.c.b16 %v2257, %v2256
  %v2307 = vpack.c.b16 %v2259, %v2258
  %v2308 = vpack.c.b16 %v2261, %v2260
  %v2309 = vpack.c.b16 %v2263, %v2262
  %v2310 = vpack.c.b16 %v2265, %v2264
  %v2311 = vpack.c.b16 %v2267, %v2266
  %v2312 = vpack.c.b16 %v2269, %v2268
  %v2313 = vpack.c.b16 %v2271, %v2270
  %v2314 = vpack.c.b16 %v2273, %v2272
  %v2315 = vpack.c.b16 %v2275, %v2274
  %v2316 = vpack.c.b16 %v2277, %v2276
  %v2317 = vpack.c.b16 %v2279, %v2278
  %v2318 = vpack.c.b16 %v2281, %v2280
  %v2319 = vpack.c.b16 %v2283, %v2282
  %v2320 = vpack.c.b16 %v2285, %v2284
  %v2321 = vpack.c.b16 %v2287, %v2286
  %v2322 = vpack.c.b16 %v2289, %v2288
  %v2323 = vpack.c.b16 %v2291, %v2290
  %2356 = vmatprep.subr.bf16.mxu0 0
  %2357 = vmatpush1.bf16.msra.mxu0 %v2292
  %2358 = vmatprep.subr.bf16.mxu0 0
  %2359 = vmatpush1.bf16.msra.mxu0 %v2293
  %2360 = vmatprep.subr.bf16.mxu0 0
  %2361 = vmatpush1.bf16.msra.mxu0 %v2294
  %2362 = vmatprep.subr.bf16.mxu0 0
  %2363 = vmatpush1.bf16.msra.mxu0 %v2295
  %2364 = vmatprep.subr.bf16.mxu0 0
  %2365 = vmatpush1.bf16.msra.mxu0 %v2296
  %2366 = vmatprep.subr.bf16.mxu0 0
  %2367 = vmatpush1.bf16.msra.mxu0 %v2297
  %2368 = vmatprep.subr.bf16.mxu0 0
  %2369 = vmatpush1.bf16.msra.mxu0 %v2298
  %2370 = vmatprep.subr.bf16.mxu0 0
  %2371 = vmatpush1.bf16.msra.mxu0 %v2299
  %2372 = vmatprep.subr.bf16.mxu0 0
  %2373 = vmatpush1.bf16.msra.mxu0 %v2300
  %2374 = vmatprep.subr.bf16.mxu0 0
  %2375 = vmatpush1.bf16.msra.mxu0 %v2301
  %2376 = vmatprep.subr.bf16.mxu0 0
  %2377 = vmatpush1.bf16.msra.mxu0 %v2302
  %2378 = vmatprep.subr.bf16.mxu0 0
  %2379 = vmatpush1.bf16.msra.mxu0 %v2303
  %2380 = vmatprep.subr.bf16.mxu0 0
  %2381 = vmatpush1.bf16.msra.mxu0 %v2304
  %2382 = vmatprep.subr.bf16.mxu0 0
  %2383 = vmatpush1.bf16.msra.mxu0 %v2305
  %2384 = vmatprep.subr.bf16.mxu0 0
  %2385 = vmatpush1.bf16.msra.mxu0 %v2306
  %2386 = vmatprep.subr.bf16.mxu0 0
  %2387 = vmatpush1.bf16.msra.mxu0 %v2307
  %2388 = vmatprep.mubr.bf16.mxu0 %v412
  %2389 = vmatmul.mubr.bf16.gmra.mrb[0].mxu0 %v411
  %v2390 = vpop.f32.mrb[0].mxu0
  %v2391 = vadd.f32 0.0, %v2390
  %v2392 = vpop.f32.mrb[0].mxu0
  %v2393 = vpop.f32.mrb[0].mxu0
  %v2394 = vpop.f32.mrb[0].mxu0
  %2395 = vdwg.mxu0
  %2396 = vmatprep.subr.bf16.mxu0 0
  %2397 = vmatpush1.bf16.msra.mxu0 %v2308
  %2398 = vmatprep.subr.bf16.mxu0 0
  %2399 = vmatpush1.bf16.msra.mxu0 %v2309
  %2400 = vmatprep.subr.bf16.mxu0 0
  %2401 = vmatpush1.bf16.msra.mxu0 %v2310
  %2402 = vmatprep.subr.bf16.mxu0 0
  %2403 = vmatpush1.bf16.msra.mxu0 %v2311
  %2404 = vmatprep.subr.bf16.mxu0 0
  %2405 = vmatpush1.bf16.msra.mxu0 %v2312
  %2406 = vmatprep.subr.bf16.mxu0 0
  %2407 = vmatpush1.bf16.msra.mxu0 %v2313
  %2408 = vmatprep.subr.bf16.mxu0 0
  %2409 = vmatpush1.bf16.msra.mxu0 %v2314
  %2410 = vmatprep.subr.bf16.mxu0 0
  %2411 = vmatpush1.bf16.msra.mxu0 %v2315
  %2412 = vmatprep.subr.bf16.mxu0 0
  %2413 = vmatpush1.bf16.msra.mxu0 %v2316
  %2414 = vmatprep.subr.bf16.mxu0 0
  %2415 = vmatpush1.bf16.msra.mxu0 %v2317
  %2416 = vmatprep.subr.bf16.mxu0 0
  %2417 = vmatpush1.bf16.msra.mxu0 %v2318
  %2418 = vmatprep.subr.bf16.mxu0 0
  %2419 = vmatpush1.bf16.msra.mxu0 %v2319
  %2420 = vmatprep.subr.bf16.mxu0 0
  %2421 = vmatpush1.bf16.msra.mxu0 %v2320
  %2422 = vmatprep.subr.bf16.mxu0 0
  %2423 = vmatpush1.bf16.msra.mxu0 %v2321
  %2424 = vmatprep.subr.bf16.mxu0 0
  %2425 = vmatpush1.bf16.msra.mxu0 %v2322
  %2426 = vmatprep.subr.bf16.mxu0 0
  %2427 = vmatpush1.bf16.msra.mxu0 %v2323
  %2428 = vmatprep.mubr.bf16.mxu0 %v414
  %2429 = vmatmul.mubr.bf16.gmra.mrb[0].mxu0 %v413
  %v2430 = vpop.f32.mrb[0].mxu0
  %v2431 = vadd.f32 %v2391, %v2430
  %v2432 = vpop.f32.mrb[0].mxu0
  %v2433 = vpop.f32.mrb[0].mxu0
  %v2434 = vpop.f32.mrb[0].mxu0
  %2435 = vdwg.mxu0
  %s2436 = scalar_lea.vmem %s2, 1536
  %v2437 = vld [vmem:[%s2436] sm:$0xf]
  %v2438 = vld [vmem:[%s2436 + $0x4] sm:$0xf]
  %v2439 = vld [vmem:[%s2436 + $0x8] sm:$0xf]
  %v2440 = vld [vmem:[%s2436 + $0xc] sm:$0xf]
  %v2441 = vld [vmem:[%s2436 + $0x10] sm:$0xf]
  %v2442 = vld [vmem:[%s2436 + $0x14] sm:$0xf]
  %v2443 = vld [vmem:[%s2436 + $0x18] sm:$0xf]
  %v2444 = vld [vmem:[%s2436 + $0x1c] sm:$0xf]
  %v2445 = vld [vmem:[%s2436 + $0x20] sm:$0xf]
  %v2446 = vld [vmem:[%s2436 + $0x24] sm:$0xf]
  %v2447 = vld [vmem:[%s2436 + $0x28] sm:$0xf]
  %v2448 = vld [vmem:[%s2436 + $0x2c] sm:$0xf]
  %v2449 = vld [vmem:[%s2436 + $0x30] sm:$0xf]
  %v2450 = vld [vmem:[%s2436 + $0x34] sm:$0xf]
  %v2451 = vld [vmem:[%s2436 + $0x38] sm:$0xf]
  %v2452 = vld [vmem:[%s2436 + $0x3c] sm:$0xf]
  %v2453 = vld [vmem:[%s2436 + $0x40] sm:$0xf]
  %v2454 = vld [vmem:[%s2436 + $0x44] sm:$0xf]
  %v2455 = vld [vmem:[%s2436 + $0x48] sm:$0xf]
  %v2456 = vld [vmem:[%s2436 + $0x4c] sm:$0xf]
  %v2457 = vld [vmem:[%s2436 + $0x50] sm:$0xf]
  %v2458 = vld [vmem:[%s2436 + $0x54] sm:$0xf]
  %v2459 = vld [vmem:[%s2436 + $0x58] sm:$0xf]
  %v2460 = vld [vmem:[%s2436 + $0x5c] sm:$0xf]
  %v2461 = vld [vmem:[%s2436 + $0x60] sm:$0xf]
  %v2462 = vld [vmem:[%s2436 + $0x64] sm:$0xf]
  %v2463 = vld [vmem:[%s2436 + $0x68] sm:$0xf]
  %v2464 = vld [vmem:[%s2436 + $0x6c] sm:$0xf]
  %v2465 = vld [vmem:[%s2436 + $0x70] sm:$0xf]
  %v2466 = vld [vmem:[%s2436 + $0x74] sm:$0xf]
  %v2467 = vld [vmem:[%s2436 + $0x78] sm:$0xf]
  %v2468 = vld [vmem:[%s2436 + $0x7c] sm:$0xf]
  %v2469 = vld [vmem:[%s2436 + $0x80] sm:$0xf]
  %v2470 = vld [vmem:[%s2436 + $0x84] sm:$0xf]
  %v2471 = vld [vmem:[%s2436 + $0x88] sm:$0xf]
  %v2472 = vld [vmem:[%s2436 + $0x8c] sm:$0xf]
  %v2473 = vld [vmem:[%s2436 + $0x90] sm:$0xf]
  %v2474 = vld [vmem:[%s2436 + $0x94] sm:$0xf]
  %v2475 = vld [vmem:[%s2436 + $0x98] sm:$0xf]
  %v2476 = vld [vmem:[%s2436 + $0x9c] sm:$0xf]
  %v2477 = vld [vmem:[%s2436 + $0xa0] sm:$0xf]
  %v2478 = vld [vmem:[%s2436 + $0xa4] sm:$0xf]
  %v2479 = vld [vmem:[%s2436 + $0xa8] sm:$0xf]
  %v2480 = vld [vmem:[%s2436 + $0xac] sm:$0xf]
  %v2481 = vld [vmem:[%s2436 + $0xb0] sm:$0xf]
  %v2482 = vld [vmem:[%s2436 + $0xb4] sm:$0xf]
  %v2483 = vld [vmem:[%s2436 + $0xb8] sm:$0xf]
  %v2484 = vld [vmem:[%s2436 + $0xbc] sm:$0xf]
  %v2485 = vld [vmem:[%s2436 + $0xc0] sm:$0xf]
  %v2486 = vld [vmem:[%s2436 + $0xc4] sm:$0xf]
  %v2487 = vld [vmem:[%s2436 + $0xc8] sm:$0xf]
  %v2488 = vld [vmem:[%s2436 + $0xcc] sm:$0xf]
  %v2489 = vld [vmem:[%s2436 + $0xd0] sm:$0xf]
  %v2490 = vld [vmem:[%s2436 + $0xd4] sm:$0xf]
  %v2491 = vld [vmem:[%s2436 + $0xd8] sm:$0xf]
  %v2492 = vld [vmem:[%s2436 + $0xdc] sm:$0xf]
  %v2493 = vld [vmem:[%s2436 + $0xe0] sm:$0xf]
  %v2494 = vld [vmem:[%s2436 + $0xe4] sm:$0xf]
  %v2495 = vld [vmem:[%s2436 + $0xe8] sm:$0xf]
  %v2496 = vld [vmem:[%s2436 + $0xec] sm:$0xf]
  %v2497 = vld [vmem:[%s2436 + $0xf0] sm:$0xf]
  %v2498 = vld [vmem:[%s2436 + $0xf4] sm:$0xf]
  %v2499 = vld [vmem:[%s2436 + $0xf8] sm:$0xf]
  %v2500 = vld [vmem:[%s2436 + $0xfc] sm:$0xf]
  %v2565 = vunpack.c.l.b16 %v2437
  %v2566 = vunpack.c.l.b16 %v2438
  %v2567 = vunpack.c.l.b16 %v2439
  %v2568 = vunpack.c.l.b16 %v2440
  %v2569 = vunpack.c.l.b16 %v2441
  %v2570 = vunpack.c.l.b16 %v2442
  %v2571 = vunpack.c.l.b16 %v2443
  %v2572 = vunpack.c.l.b16 %v2444
  %v2573 = vunpack.c.l.b16 %v2445
  %v2574 = vunpack.c.l.b16 %v2446
  %v2575 = vunpack.c.l.b16 %v2447
  %v2576 = vunpack.c.l.b16 %v2448
  %v2577 = vunpack.c.l.b16 %v2449
  %v2578 = vunpack.c.l.b16 %v2450
  %v2579 = vunpack.c.l.b16 %v2451
  %v2580 = vunpack.c.l.b16 %v2452
  %v2581 = vunpack.c.l.b16 %v2453
  %v2582 = vunpack.c.l.b16 %v2454
  %v2583 = vunpack.c.l.b16 %v2455
  %v2584 = vunpack.c.l.b16 %v2456
  %v2585 = vunpack.c.l.b16 %v2457
  %v2586 = vunpack.c.l.b16 %v2458
  %v2587 = vunpack.c.l.b16 %v2459
  %v2588 = vunpack.c.l.b16 %v2460
  %v2589 = vunpack.c.l.b16 %v2461
  %v2590 = vunpack.c.l.b16 %v2462
  %v2591 = vunpack.c.l.b16 %v2463
  %v2592 = vunpack.c.l.b16 %v2464
  %v2593 = vunpack.c.l.b16 %v2465
  %v2594 = vunpack.c.l.b16 %v2466
  %v2595 = vunpack.c.l.b16 %v2467
  %v2596 = vunpack.c.l.b16 %v2468
  %v2597 = vunpack.c.l.b16 %v2469
  %v2598 = vunpack.c.l.b16 %v2470
  %v2599 = vunpack.c.l.b16 %v2471
  %v2600 = vunpack.c.l.b16 %v2472
  %v2601 = vunpack.c.l.b16 %v2473
  %v2602 = vunpack.c.l.b16 %v2474
  %v2603 = vunpack.c.l.b16 %v2475
  %v2604 = vunpack.c.l.b16 %v2476
  %v2605 = vunpack.c.l.b16 %v2477
  %v2606 = vunpack.c.l.b16 %v2478
  %v2607 = vunpack.c.l.b16 %v2479
  %v2608 = vunpack.c.l.b16 %v2480
  %v2609 = vunpack.c.l.b16 %v2481
  %v2610 = vunpack.c.l.b16 %v2482
  %v2611 = vunpack.c.l.b16 %v2483
  %v2612 = vunpack.c.l.b16 %v2484
  %v2613 = vunpack.c.l.b16 %v2485
  %v2614 = vunpack.c.l.b16 %v2486
  %v2615 = vunpack.c.l.b16 %v2487
  %v2616 = vunpack.c.l.b16 %v2488
  %v2617 = vunpack.c.l.b16 %v2489
  %v2618 = vunpack.c.l.b16 %v2490
  %v2619 = vunpack.c.l.b16 %v2491
  %v2620 = vunpack.c.l.b16 %v2492
  %v2621 = vunpack.c.l.b16 %v2493
  %v2622 = vunpack.c.l.b16 %v2494
  %v2623 = vunpack.c.l.b16 %v2495
  %v2624 = vunpack.c.l.b16 %v2496
  %v2625 = vunpack.c.l.b16 %v2497
  %v2626 = vunpack.c.l.b16 %v2498
  %v2627 = vunpack.c.l.b16 %v2499
  %v2628 = vunpack.c.l.b16 %v2500
  %v2629 = vpack.c.b16 %v2566, %v2565
  %v2630 = vpack.c.b16 %v2568, %v2567
  %v2631 = vpack.c.b16 %v2570, %v2569
  %v2632 = vpack.c.b16 %v2572, %v2571
  %v2633 = vpack.c.b16 %v2574, %v2573
  %v2634 = vpack.c.b16 %v2576, %v2575
  %v2635 = vpack.c.b16 %v2578, %v2577
  %v2636 = vpack.c.b16 %v2580, %v2579
  %v2637 = vpack.c.b16 %v2582, %v2581
  %v2638 = vpack.c.b16 %v2584, %v2583
  %v2639 = vpack.c.b16 %v2586, %v2585
  %v2640 = vpack.c.b16 %v2588, %v2587
  %v2641 = vpack.c.b16 %v2590, %v2589
  %v2642 = vpack.c.b16 %v2592, %v2591
  %v2643 = vpack.c.b16 %v2594, %v2593
  %v2644 = vpack.c.b16 %v2596, %v2595
  %v2645 = vpack.c.b16 %v2598, %v2597
  %v2646 = vpack.c.b16 %v2600, %v2599
  %v2647 = vpack.c.b16 %v2602, %v2601
  %v2648 = vpack.c.b16 %v2604, %v2603
  %v2649 = vpack.c.b16 %v2606, %v2605
  %v2650 = vpack.c.b16 %v2608, %v2607
  %v2651 = vpack.c.b16 %v2610, %v2609
  %v2652 = vpack.c.b16 %v2612, %v2611
  %v2653 = vpack.c.b16 %v2614, %v2613
  %v2654 = vpack.c.b16 %v2616, %v2615
  %v2655 = vpack.c.b16 %v2618, %v2617
  %v2656 = vpack.c.b16 %v2620, %v2619
  %v2657 = vpack.c.b16 %v2622, %v2621
  %v2658 = vpack.c.b16 %v2624, %v2623
  %v2659 = vpack.c.b16 %v2626, %v2625
  %v2660 = vpack.c.b16 %v2628, %v2627
  %2693 = vmatprep.subr.bf16.mxu0 0
  %2694 = vmatpush1.bf16.msra.mxu0 %v2629
  %2695 = vmatprep.subr.bf16.mxu0 0
  %2696 = vmatpush1.bf16.msra.mxu0 %v2630
  %2697 = vmatprep.subr.bf16.mxu0 0
  %2698 = vmatpush1.bf16.msra.mxu0 %v2631
  %2699 = vmatprep.subr.bf16.mxu0 0
  %2700 = vmatpush1.bf16.msra.mxu0 %v2632
  %2701 = vmatprep.subr.bf16.mxu0 0
  %2702 = vmatpush1.bf16.msra.mxu0 %v2633
  %2703 = vmatprep.subr.bf16.mxu0 0
  %2704 = vmatpush1.bf16.msra.mxu0 %v2634
  %2705 = vmatprep.subr.bf16.mxu0 0
  %2706 = vmatpush1.bf16.msra.mxu0 %v2635
  %2707 = vmatprep.subr.bf16.mxu0 0
  %2708 = vmatpush1.bf16.msra.mxu0 %v2636
  %2709 = vmatprep.subr.bf16.mxu0 0
  %2710 = vmatpush1.bf16.msra.mxu0 %v2637
  %2711 = vmatprep.subr.bf16.mxu0 0
  %2712 = vmatpush1.bf16.msra.mxu0 %v2638
  %2713 = vmatprep.subr.bf16.mxu0 0
  %2714 = vmatpush1.bf16.msra.mxu0 %v2639
  %2715 = vmatprep.subr.bf16.mxu0 0
  %2716 = vmatpush1.bf16.msra.mxu0 %v2640
  %2717 = vmatprep.subr.bf16.mxu0 0
  %2718 = vmatpush1.bf16.msra.mxu0 %v2641
  %2719 = vmatprep.subr.bf16.mxu0 0
  %2720 = vmatpush1.bf16.msra.mxu0 %v2642
  %2721 = vmatprep.subr.bf16.mxu0 0
  %2722 = vmatpush1.bf16.msra.mxu0 %v2643
  %2723 = vmatprep.subr.bf16.mxu0 0
  %2724 = vmatpush1.bf16.msra.mxu0 %v2644
  %2725 = vmatprep.mubr.bf16.mxu0 %v412
  %2726 = vmatmul.mubr.bf16.gmra.mrb[0].mxu0 %v411
  %v2727 = vpop.f32.mrb[0].mxu0
  %v2728 = vadd.f32 0.0, %v2727
  %v2729 = vpop.f32.mrb[0].mxu0
  %v2730 = vpop.f32.mrb[0].mxu0
  %v2731 = vpop.f32.mrb[0].mxu0
  %2732 = vdwg.mxu0
  %2733 = vmatprep.subr.bf16.mxu0 0
  %2734 = vmatpush1.bf16.msra.mxu0 %v2645
  %2735 = vmatprep.subr.bf16.mxu0 0
  %2736 = vmatpush1.bf16.msra.mxu0 %v2646
  %2737 = vmatprep.subr.bf16.mxu0 0
  %2738 = vmatpush1.bf16.msra.mxu0 %v2647
  %2739 = vmatprep.subr.bf16.mxu0 0
  %2740 = vmatpush1.bf16.msra.mxu0 %v2648
  %2741 = vmatprep.subr.bf16.mxu0 0
  %2742 = vmatpush1.bf16.msra.mxu0 %v2649
  %2743 = vmatprep.subr.bf16.mxu0 0
  %2744 = vmatpush1.bf16.msra.mxu0 %v2650
  %2745 = vmatprep.subr.bf16.mxu0 0
  %2746 = vmatpush1.bf16.msra.mxu0 %v2651
  %2747 = vmatprep.subr.bf16.mxu0 0
  %2748 = vmatpush1.bf16.msra.mxu0 %v2652
  %2749 = vmatprep.subr.bf16.mxu0 0
  %2750 = vmatpush1.bf16.msra.mxu0 %v2653
  %2751 = vmatprep.subr.bf16.mxu0 0
  %2752 = vmatpush1.bf16.msra.mxu0 %v2654
  %2753 = vmatprep.subr.bf16.mxu0 0
  %2754 = vmatpush1.bf16.msra.mxu0 %v2655
  %2755 = vmatprep.subr.bf16.mxu0 0
  %2756 = vmatpush1.bf16.msra.mxu0 %v2656
  %2757 = vmatprep.subr.bf16.mxu0 0
  %2758 = vmatpush1.bf16.msra.mxu0 %v2657
  %2759 = vmatprep.subr.bf16.mxu0 0
  %2760 = vmatpush1.bf16.msra.mxu0 %v2658
  %2761 = vmatprep.subr.bf16.mxu0 0
  %2762 = vmatpush1.bf16.msra.mxu0 %v2659
  %2763 = vmatprep.subr.bf16.mxu0 0
  %2764 = vmatpush1.bf16.msra.mxu0 %v2660
  %2765 = vmatprep.mubr.bf16.mxu0 %v414
  %2766 = vmatmul.mubr.bf16.gmra.mrb[0].mxu0 %v413
  %v2767 = vpop.f32.mrb[0].mxu0
  %v2768 = vadd.f32 %v2728, %v2767
  %v2769 = vpop.f32.mrb[0].mxu0
  %v2770 = vpop.f32.mrb[0].mxu0
  %v2771 = vpop.f32.mrb[0].mxu0
  %2772 = vdwg.mxu0
  %s2773 = scalar_lea.vmem %s2, 1792
  %v2774 = vld [vmem:[%s2773] sm:$0xf]
  %v2775 = vld [vmem:[%s2773 + $0x4] sm:$0xf]
  %v2776 = vld [vmem:[%s2773 + $0x8] sm:$0xf]
  %v2777 = vld [vmem:[%s2773 + $0xc] sm:$0xf]
  %v2778 = vld [vmem:[%s2773 + $0x10] sm:$0xf]
  %v2779 = vld [vmem:[%s2773 + $0x14] sm:$0xf]
  %v2780 = vld [vmem:[%s2773 + $0x18] sm:$0xf]
  %v2781 = vld [vmem:[%s2773 + $0x1c] sm:$0xf]
  %v2782 = vld [vmem:[%s2773 + $0x20] sm:$0xf]
  %v2783 = vld [vmem:[%s2773 + $0x24] sm:$0xf]
  %v2784 = vld [vmem:[%s2773 + $0x28] sm:$0xf]
  %v2785 = vld [vmem:[%s2773 + $0x2c] sm:$0xf]
  %v2786 = vld [vmem:[%s2773 + $0x30] sm:$0xf]
  %v2787 = vld [vmem:[%s2773 + $0x34] sm:$0xf]
  %v2788 = vld [vmem:[%s2773 + $0x38] sm:$0xf]
  %v2789 = vld [vmem:[%s2773 + $0x3c] sm:$0xf]
  %v2790 = vld [vmem:[%s2773 + $0x40] sm:$0xf]
  %v2791 = vld [vmem:[%s2773 + $0x44] sm:$0xf]
  %v2792 = vld [vmem:[%s2773 + $0x48] sm:$0xf]
  %v2793 = vld [vmem:[%s2773 + $0x4c] sm:$0xf]
  %v2794 = vld [vmem:[%s2773 + $0x50] sm:$0xf]
  %v2795 = vld [vmem:[%s2773 + $0x54] sm:$0xf]
  %v2796 = vld [vmem:[%s2773 + $0x58] sm:$0xf]
  %v2797 = vld [vmem:[%s2773 + $0x5c] sm:$0xf]
  %v2798 = vld [vmem:[%s2773 + $0x60] sm:$0xf]
  %v2799 = vld [vmem:[%s2773 + $0x64] sm:$0xf]
  %v2800 = vld [vmem:[%s2773 + $0x68] sm:$0xf]
  %v2801 = vld [vmem:[%s2773 + $0x6c] sm:$0xf]
  %v2802 = vld [vmem:[%s2773 + $0x70] sm:$0xf]
  %v2803 = vld [vmem:[%s2773 + $0x74] sm:$0xf]
  %v2804 = vld [vmem:[%s2773 + $0x78] sm:$0xf]
  %v2805 = vld [vmem:[%s2773 + $0x7c] sm:$0xf]
  %v2806 = vld [vmem:[%s2773 + $0x80] sm:$0xf]
  %v2807 = vld [vmem:[%s2773 + $0x84] sm:$0xf]
  %v2808 = vld [vmem:[%s2773 + $0x88] sm:$0xf]
  %v2809 = vld [vmem:[%s2773 + $0x8c] sm:$0xf]
  %v2810 = vld [vmem:[%s2773 + $0x90] sm:$0xf]
  %v2811 = vld [vmem:[%s2773 + $0x94] sm:$0xf]
  %v2812 = vld [vmem:[%s2773 + $0x98] sm:$0xf]
  %v2813 = vld [vmem:[%s2773 + $0x9c] sm:$0xf]
  %v2814 = vld [vmem:[%s2773 + $0xa0] sm:$0xf]
  %v2815 = vld [vmem:[%s2773 + $0xa4] sm:$0xf]
  %v2816 = vld [vmem:[%s2773 + $0xa8] sm:$0xf]
  %v2817 = vld [vmem:[%s2773 + $0xac] sm:$0xf]
  %v2818 = vld [vmem:[%s2773 + $0xb0] sm:$0xf]
  %v2819 = vld [vmem:[%s2773 + $0xb4] sm:$0xf]
  %v2820 = vld [vmem:[%s2773 + $0xb8] sm:$0xf]
  %v2821 = vld [vmem:[%s2773 + $0xbc] sm:$0xf]
  %v2822 = vld [vmem:[%s2773 + $0xc0] sm:$0xf]
  %v2823 = vld [vmem:[%s2773 + $0xc4] sm:$0xf]
  %v2824 = vld [vmem:[%s2773 + $0xc8] sm:$0xf]
  %v2825 = vld [vmem:[%s2773 + $0xcc] sm:$0xf]
  %v2826 = vld [vmem:[%s2773 + $0xd0] sm:$0xf]
  %v2827 = vld [vmem:[%s2773 + $0xd4] sm:$0xf]
  %v2828 = vld [vmem:[%s2773 + $0xd8] sm:$0xf]
  %v2829 = vld [vmem:[%s2773 + $0xdc] sm:$0xf]
  %v2830 = vld [vmem:[%s2773 + $0xe0] sm:$0xf]
  %v2831 = vld [vmem:[%s2773 + $0xe4] sm:$0xf]
  %v2832 = vld [vmem:[%s2773 + $0xe8] sm:$0xf]
  %v2833 = vld [vmem:[%s2773 + $0xec] sm:$0xf]
  %v2834 = vld [vmem:[%s2773 + $0xf0] sm:$0xf]
  %v2835 = vld [vmem:[%s2773 + $0xf4] sm:$0xf]
  %v2836 = vld [vmem:[%s2773 + $0xf8] sm:$0xf]
  %v2837 = vld [vmem:[%s2773 + $0xfc] sm:$0xf]
  %v2902 = vunpack.c.l.b16 %v2774
  %v2903 = vunpack.c.l.b16 %v2775
  %v2904 = vunpack.c.l.b16 %v2776
  %v2905 = vunpack.c.l.b16 %v2777
  %v2906 = vunpack.c.l.b16 %v2778
  %v2907 = vunpack.c.l.b16 %v2779
  %v2908 = vunpack.c.l.b16 %v2780
  %v2909 = vunpack.c.l.b16 %v2781
  %v2910 = vunpack.c.l.b16 %v2782
  %v2911 = vunpack.c.l.b16 %v2783
  %v2912 = vunpack.c.l.b16 %v2784
  %v2913 = vunpack.c.l.b16 %v2785
  %v2914 = vunpack.c.l.b16 %v2786
  %v2915 = vunpack.c.l.b16 %v2787
  %v2916 = vunpack.c.l.b16 %v2788
  %v2917 = vunpack.c.l.b16 %v2789
  %v2918 = vunpack.c.l.b16 %v2790
  %v2919 = vunpack.c.l.b16 %v2791
  %v2920 = vunpack.c.l.b16 %v2792
  %v2921 = vunpack.c.l.b16 %v2793
  %v2922 = vunpack.c.l.b16 %v2794
  %v2923 = vunpack.c.l.b16 %v2795
  %v2924 = vunpack.c.l.b16 %v2796
  %v2925 = vunpack.c.l.b16 %v2797
  %v2926 = vunpack.c.l.b16 %v2798
  %v2927 = vunpack.c.l.b16 %v2799
  %v2928 = vunpack.c.l.b16 %v2800
  %v2929 = vunpack.c.l.b16 %v2801
  %v2930 = vunpack.c.l.b16 %v2802
  %v2931 = vunpack.c.l.b16 %v2803
  %v2932 = vunpack.c.l.b16 %v2804
  %v2933 = vunpack.c.l.b16 %v2805
  %v2934 = vunpack.c.l.b16 %v2806
  %v2935 = vunpack.c.l.b16 %v2807
  %v2936 = vunpack.c.l.b16 %v2808
  %v2937 = vunpack.c.l.b16 %v2809
  %v2938 = vunpack.c.l.b16 %v2810
  %v2939 = vunpack.c.l.b16 %v2811
  %v2940 = vunpack.c.l.b16 %v2812
  %v2941 = vunpack.c.l.b16 %v2813
  %v2942 = vunpack.c.l.b16 %v2814
  %v2943 = vunpack.c.l.b16 %v2815
  %v2944 = vunpack.c.l.b16 %v2816
  %v2945 = vunpack.c.l.b16 %v2817
  %v2946 = vunpack.c.l.b16 %v2818
  %v2947 = vunpack.c.l.b16 %v2819
  %v2948 = vunpack.c.l.b16 %v2820
  %v2949 = vunpack.c.l.b16 %v2821
  %v2950 = vunpack.c.l.b16 %v2822
  %v2951 = vunpack.c.l.b16 %v2823
  %v2952 = vunpack.c.l.b16 %v2824
  %v2953 = vunpack.c.l.b16 %v2825
  %v2954 = vunpack.c.l.b16 %v2826
  %v2955 = vunpack.c.l.b16 %v2827
  %v2956 = vunpack.c.l.b16 %v2828
  %v2957 = vunpack.c.l.b16 %v2829
  %v2958 = vunpack.c.l.b16 %v2830
  %v2959 = vunpack.c.l.b16 %v2831
  %v2960 = vunpack.c.l.b16 %v2832
  %v2961 = vunpack.c.l.b16 %v2833
  %v2962 = vunpack.c.l.b16 %v2834
  %v2963 = vunpack.c.l.b16 %v2835
  %v2964 = vunpack.c.l.b16 %v2836
  %v2965 = vunpack.c.l.b16 %v2837
  %v2966 = vpack.c.b16 %v2903, %v2902
  %v2967 = vpack.c.b16 %v2905, %v2904
  %v2968 = vpack.c.b16 %v2907, %v2906
  %v2969 = vpack.c.b16 %v2909, %v2908
  %v2970 = vpack.c.b16 %v2911, %v2910
  %v2971 = vpack.c.b16 %v2913, %v2912
  %v2972 = vpack.c.b16 %v2915, %v2914
  %v2973 = vpack.c.b16 %v2917, %v2916
  %v2974 = vpack.c.b16 %v2919, %v2918
  %v2975 = vpack.c.b16 %v2921, %v2920
  %v2976 = vpack.c.b16 %v2923, %v2922
  %v2977 = vpack.c.b16 %v2925, %v2924
  %v2978 = vpack.c.b16 %v2927, %v2926
  %v2979 = vpack.c.b16 %v2929, %v2928
  %v2980 = vpack.c.b16 %v2931, %v2930
  %v2981 = vpack.c.b16 %v2933, %v2932
  %v2982 = vpack.c.b16 %v2935, %v2934
  %v2983 = vpack.c.b16 %v2937, %v2936
  %v2984 = vpack.c.b16 %v2939, %v2938
  %v2985 = vpack.c.b16 %v2941, %v2940
  %v2986 = vpack.c.b16 %v2943, %v2942
  %v2987 = vpack.c.b16 %v2945, %v2944
  %v2988 = vpack.c.b16 %v2947, %v2946
  %v2989 = vpack.c.b16 %v2949, %v2948
  %v2990 = vpack.c.b16 %v2951, %v2950
  %v2991 = vpack.c.b16 %v2953, %v2952
  %v2992 = vpack.c.b16 %v2955, %v2954
  %v2993 = vpack.c.b16 %v2957, %v2956
  %v2994 = vpack.c.b16 %v2959, %v2958
  %v2995 = vpack.c.b16 %v2961, %v2960
  %v2996 = vpack.c.b16 %v2963, %v2962
  %v2997 = vpack.c.b16 %v2965, %v2964
  %3030 = vmatprep.subr.bf16.mxu0 0
  %3031 = vmatpush1.bf16.msra.mxu0 %v2966
  %3032 = vmatprep.subr.bf16.mxu0 0
  %3033 = vmatpush1.bf16.msra.mxu0 %v2967
  %3034 = vmatprep.subr.bf16.mxu0 0
  %3035 = vmatpush1.bf16.msra.mxu0 %v2968
  %3036 = vmatprep.subr.bf16.mxu0 0
  %3037 = vmatpush1.bf16.msra.mxu0 %v2969
  %3038 = vmatprep.subr.bf16.mxu0 0
  %3039 = vmatpush1.bf16.msra.mxu0 %v2970
  %3040 = vmatprep.subr.bf16.mxu0 0
  %3041 = vmatpush1.bf16.msra.mxu0 %v2971
  %3042 = vmatprep.subr.bf16.mxu0 0
  %3043 = vmatpush1.bf16.msra.mxu0 %v2972
  %3044 = vmatprep.subr.bf16.mxu0 0
  %3045 = vmatpush1.bf16.msra.mxu0 %v2973
  %3046 = vmatprep.subr.bf16.mxu0 0
  %3047 = vmatpush1.bf16.msra.mxu0 %v2974
  %3048 = vmatprep.subr.bf16.mxu0 0
  %3049 = vmatpush1.bf16.msra.mxu0 %v2975
  %3050 = vmatprep.subr.bf16.mxu0 0
  %3051 = vmatpush1.bf16.msra.mxu0 %v2976
  %3052 = vmatprep.subr.bf16.mxu0 0
  %3053 = vmatpush1.bf16.msra.mxu0 %v2977
  %3054 = vmatprep.subr.bf16.mxu0 0
  %3055 = vmatpush1.bf16.msra.mxu0 %v2978
  %3056 = vmatprep.subr.bf16.mxu0 0
  %3057 = vmatpush1.bf16.msra.mxu0 %v2979
  %3058 = vmatprep.subr.bf16.mxu0 0
  %3059 = vmatpush1.bf16.msra.mxu0 %v2980
  %3060 = vmatprep.subr.bf16.mxu0 0
  %3061 = vmatpush1.bf16.msra.mxu0 %v2981
  %3062 = vmatprep.mubr.bf16.mxu0 %v412
  %3063 = vmatmul.mubr.bf16.gmra.mrb[0].mxu0 %v411
  %v3064 = vpop.f32.mrb[0].mxu0
  %v3065 = vadd.f32 0.0, %v3064
  %v3066 = vpop.f32.mrb[0].mxu0
  %v3067 = vpop.f32.mrb[0].mxu0
  %v3068 = vpop.f32.mrb[0].mxu0
  %3069 = vdwg.mxu0
  %3070 = vmatprep.subr.bf16.mxu0 0
  %3071 = vmatpush1.bf16.msra.mxu0 %v2982
  %3072 = vmatprep.subr.bf16.mxu0 0
  %3073 = vmatpush1.bf16.msra.mxu0 %v2983
  %3074 = vmatprep.subr.bf16.mxu0 0
  %3075 = vmatpush1.bf16.msra.mxu0 %v2984
  %3076 = vmatprep.subr.bf16.mxu0 0
  %3077 = vmatpush1.bf16.msra.mxu0 %v2985
  %3078 = vmatprep.subr.bf16.mxu0 0
  %3079 = vmatpush1.bf16.msra.mxu0 %v2986
  %3080 = vmatprep.subr.bf16.mxu0 0
  %3081 = vmatpush1.bf16.msra.mxu0 %v2987
  %3082 = vmatprep.subr.bf16.mxu0 0
  %3083 = vmatpush1.bf16.msra.mxu0 %v2988
  %3084 = vmatprep.subr.bf16.mxu0 0
  %3085 = vmatpush1.bf16.msra.mxu0 %v2989
  %3086 = vmatprep.subr.bf16.mxu0 0
  %3087 = vmatpush1.bf16.msra.mxu0 %v2990
  %3088 = vmatprep.subr.bf16.mxu0 0
  %3089 = vmatpush1.bf16.msra.mxu0 %v2991
  %3090 = vmatprep.subr.bf16.mxu0 0
  %3091 = vmatpush1.bf16.msra.mxu0 %v2992
  %3092 = vmatprep.subr.bf16.mxu0 0
  %3093 = vmatpush1.bf16.msra.mxu0 %v2993
  %3094 = vmatprep.subr.bf16.mxu0 0
  %3095 = vmatpush1.bf16.msra.mxu0 %v2994
  %3096 = vmatprep.subr.bf16.mxu0 0
  %3097 = vmatpush1.bf16.msra.mxu0 %v2995
  %3098 = vmatprep.subr.bf16.mxu0 0
  %3099 = vmatpush1.bf16.msra.mxu0 %v2996
  %3100 = vmatprep.subr.bf16.mxu0 0
  %3101 = vmatpush1.bf16.msra.mxu0 %v2997
  %3102 = vmatprep.mubr.bf16.mxu0 %v414
  %3103 = vmatmul.mubr.bf16.gmra.mrb[0].mxu0 %v413
  %v3104 = vpop.f32.mrb[0].mxu0
  %v3105 = vadd.f32 %v3065, %v3104
  %v3106 = vpop.f32.mrb[0].mxu0
  %v3107 = vpop.f32.mrb[0].mxu0
  %v3108 = vpop.f32.mrb[0].mxu0
  %3109 = vdwg.mxu0
  %s3110 = scalar_lea.vmem %s2, 2048
  %v3111 = vld [vmem:[%s3110] sm:$0xf]
  %v3112 = vld [vmem:[%s3110 + $0x4] sm:$0xf]
  %v3113 = vld [vmem:[%s3110 + $0x8] sm:$0xf]
  %v3114 = vld [vmem:[%s3110 + $0xc] sm:$0xf]
  %v3115 = vld [vmem:[%s3110 + $0x10] sm:$0xf]
  %v3116 = vld [vmem:[%s3110 + $0x14] sm:$0xf]
  %v3117 = vld [vmem:[%s3110 + $0x18] sm:$0xf]
  %v3118 = vld [vmem:[%s3110 + $0x1c] sm:$0xf]
  %v3119 = vld [vmem:[%s3110 + $0x20] sm:$0xf]
  %v3120 = vld [vmem:[%s3110 + $0x24] sm:$0xf]
  %v3121 = vld [vmem:[%s3110 + $0x28] sm:$0xf]
  %v3122 = vld [vmem:[%s3110 + $0x2c] sm:$0xf]
  %v3123 = vld [vmem:[%s3110 + $0x30] sm:$0xf]
  %v3124 = vld [vmem:[%s3110 + $0x34] sm:$0xf]
  %v3125 = vld [vmem:[%s3110 + $0x38] sm:$0xf]
  %v3126 = vld [vmem:[%s3110 + $0x3c] sm:$0xf]
  %v3127 = vld [vmem:[%s3110 + $0x40] sm:$0xf]
  %v3128 = vld [vmem:[%s3110 + $0x44] sm:$0xf]
  %v3129 = vld [vmem:[%s3110 + $0x48] sm:$0xf]
  %v3130 = vld [vmem:[%s3110 + $0x4c] sm:$0xf]
  %v3131 = vld [vmem:[%s3110 + $0x50] sm:$0xf]
  %v3132 = vld [vmem:[%s3110 + $0x54] sm:$0xf]
  %v3133 = vld [vmem:[%s3110 + $0x58] sm:$0xf]
  %v3134 = vld [vmem:[%s3110 + $0x5c] sm:$0xf]
  %v3135 = vld [vmem:[%s3110 + $0x60] sm:$0xf]
  %v3136 = vld [vmem:[%s3110 + $0x64] sm:$0xf]
  %v3137 = vld [vmem:[%s3110 + $0x68] sm:$0xf]
  %v3138 = vld [vmem:[%s3110 + $0x6c] sm:$0xf]
  %v3139 = vld [vmem:[%s3110 + $0x70] sm:$0xf]
  %v3140 = vld [vmem:[%s3110 + $0x74] sm:$0xf]
  %v3141 = vld [vmem:[%s3110 + $0x78] sm:$0xf]
  %v3142 = vld [vmem:[%s3110 + $0x7c] sm:$0xf]
  %v3143 = vld [vmem:[%s3110 + $0x80] sm:$0xf]
  %v3144 = vld [vmem:[%s3110 + $0x84] sm:$0xf]
  %v3145 = vld [vmem:[%s3110 + $0x88] sm:$0xf]
  %v3146 = vld [vmem:[%s3110 + $0x8c] sm:$0xf]
  %v3147 = vld [vmem:[%s3110 + $0x90] sm:$0xf]
  %v3148 = vld [vmem:[%s3110 + $0x94] sm:$0xf]
  %v3149 = vld [vmem:[%s3110 + $0x98] sm:$0xf]
  %v3150 = vld [vmem:[%s3110 + $0x9c] sm:$0xf]
  %v3151 = vld [vmem:[%s3110 + $0xa0] sm:$0xf]
  %v3152 = vld [vmem:[%s3110 + $0xa4] sm:$0xf]
  %v3153 = vld [vmem:[%s3110 + $0xa8] sm:$0xf]
  %v3154 = vld [vmem:[%s3110 + $0xac] sm:$0xf]
  %v3155 = vld [vmem:[%s3110 + $0xb0] sm:$0xf]
  %v3156 = vld [vmem:[%s3110 + $0xb4] sm:$0xf]
  %v3157 = vld [vmem:[%s3110 + $0xb8] sm:$0xf]
  %v3158 = vld [vmem:[%s3110 + $0xbc] sm:$0xf]
  %v3159 = vld [vmem:[%s3110 + $0xc0] sm:$0xf]
  %v3160 = vld [vmem:[%s3110 + $0xc4] sm:$0xf]
  %v3161 = vld [vmem:[%s3110 + $0xc8] sm:$0xf]
  %v3162 = vld [vmem:[%s3110 + $0xcc] sm:$0xf]
  %v3163 = vld [vmem:[%s3110 + $0xd0] sm:$0xf]
  %v3164 = vld [vmem:[%s3110 + $0xd4] sm:$0xf]
  %v3165 = vld [vmem:[%s3110 + $0xd8] sm:$0xf]
  %v3166 = vld [vmem:[%s3110 + $0xdc] sm:$0xf]
  %v3167 = vld [vmem:[%s3110 + $0xe0] sm:$0xf]
  %v3168 = vld [vmem:[%s3110 + $0xe4] sm:$0xf]
  %v3169 = vld [vmem:[%s3110 + $0xe8] sm:$0xf]
  %v3170 = vld [vmem:[%s3110 + $0xec] sm:$0xf]
  %v3171 = vld [vmem:[%s3110 + $0xf0] sm:$0xf]
  %v3172 = vld [vmem:[%s3110 + $0xf4] sm:$0xf]
  %v3173 = vld [vmem:[%s3110 + $0xf8] sm:$0xf]
  %v3174 = vld [vmem:[%s3110 + $0xfc] sm:$0xf]
  %v3239 = vunpack.c.l.b16 %v3111
  %v3240 = vunpack.c.l.b16 %v3112
  %v3241 = vunpack.c.l.b16 %v3113
  %v3242 = vunpack.c.l.b16 %v3114
  %v3243 = vunpack.c.l.b16 %v3115
  %v3244 = vunpack.c.l.b16 %v3116
  %v3245 = vunpack.c.l.b16 %v3117
  %v3246 = vunpack.c.l.b16 %v3118
  %v3247 = vunpack.c.l.b16 %v3119
  %v3248 = vunpack.c.l.b16 %v3120
  %v3249 = vunpack.c.l.b16 %v3121
  %v3250 = vunpack.c.l.b16 %v3122
  %v3251 = vunpack.c.l.b16 %v3123
  %v3252 = vunpack.c.l.b16 %v3124
  %v3253 = vunpack.c.l.b16 %v3125
  %v3254 = vunpack.c.l.b16 %v3126
  %v3255 = vunpack.c.l.b16 %v3127
  %v3256 = vunpack.c.l.b16 %v3128
  %v3257 = vunpack.c.l.b16 %v3129
  %v3258 = vunpack.c.l.b16 %v3130
  %v3259 = vunpack.c.l.b16 %v3131
  %v3260 = vunpack.c.l.b16 %v3132
  %v3261 = vunpack.c.l.b16 %v3133
  %v3262 = vunpack.c.l.b16 %v3134
  %v3263 = vunpack.c.l.b16 %v3135
  %v3264 = vunpack.c.l.b16 %v3136
  %v3265 = vunpack.c.l.b16 %v3137
  %v3266 = vunpack.c.l.b16 %v3138
  %v3267 = vunpack.c.l.b16 %v3139
  %v3268 = vunpack.c.l.b16 %v3140
  %v3269 = vunpack.c.l.b16 %v3141
  %v3270 = vunpack.c.l.b16 %v3142
  %v3271 = vunpack.c.l.b16 %v3143
  %v3272 = vunpack.c.l.b16 %v3144
  %v3273 = vunpack.c.l.b16 %v3145
  %v3274 = vunpack.c.l.b16 %v3146
  %v3275 = vunpack.c.l.b16 %v3147
  %v3276 = vunpack.c.l.b16 %v3148
  %v3277 = vunpack.c.l.b16 %v3149
  %v3278 = vunpack.c.l.b16 %v3150
  %v3279 = vunpack.c.l.b16 %v3151
  %v3280 = vunpack.c.l.b16 %v3152
  %v3281 = vunpack.c.l.b16 %v3153
  %v3282 = vunpack.c.l.b16 %v3154
  %v3283 = vunpack.c.l.b16 %v3155
  %v3284 = vunpack.c.l.b16 %v3156
  %v3285 = vunpack.c.l.b16 %v3157
  %v3286 = vunpack.c.l.b16 %v3158
  %v3287 = vunpack.c.l.b16 %v3159
  %v3288 = vunpack.c.l.b16 %v3160
  %v3289 = vunpack.c.l.b16 %v3161
  %v3290 = vunpack.c.l.b16 %v3162
  %v3291 = vunpack.c.l.b16 %v3163
  %v3292 = vunpack.c.l.b16 %v3164
  %v3293 = vunpack.c.l.b16 %v3165
  %v3294 = vunpack.c.l.b16 %v3166
  %v3295 = vunpack.c.l.b16 %v3167
  %v3296 = vunpack.c.l.b16 %v3168
  %v3297 = vunpack.c.l.b16 %v3169
  %v3298 = vunpack.c.l.b16 %v3170
  %v3299 = vunpack.c.l.b16 %v3171
  %v3300 = vunpack.c.l.b16 %v3172
  %v3301 = vunpack.c.l.b16 %v3173
  %v3302 = vunpack.c.l.b16 %v3174
  %v3303 = vpack.c.b16 %v3240, %v3239
  %v3304 = vpack.c.b16 %v3242, %v3241
  %v3305 = vpack.c.b16 %v3244, %v3243
  %v3306 = vpack.c.b16 %v3246, %v3245
  %v3307 = vpack.c.b16 %v3248, %v3247
  %v3308 = vpack.c.b16 %v3250, %v3249
  %v3309 = vpack.c.b16 %v3252, %v3251
  %v3310 = vpack.c.b16 %v3254, %v3253
  %v3311 = vpack.c.b16 %v3256, %v3255
  %v3312 = vpack.c.b16 %v3258, %v3257
  %v3313 = vpack.c.b16 %v3260, %v3259
  %v3314 = vpack.c.b16 %v3262, %v3261
  %v3315 = vpack.c.b16 %v3264, %v3263
  %v3316 = vpack.c.b16 %v3266, %v3265
  %v3317 = vpack.c.b16 %v3268, %v3267
  %v3318 = vpack.c.b16 %v3270, %v3269
  %v3319 = vpack.c.b16 %v3272, %v3271
  %v3320 = vpack.c.b16 %v3274, %v3273
  %v3321 = vpack.c.b16 %v3276, %v3275
  %v3322 = vpack.c.b16 %v3278, %v3277
  %v3323 = vpack.c.b16 %v3280, %v3279
  %v3324 = vpack.c.b16 %v3282, %v3281
  %v3325 = vpack.c.b16 %v3284, %v3283
  %v3326 = vpack.c.b16 %v3286, %v3285
  %v3327 = vpack.c.b16 %v3288, %v3287
  %v3328 = vpack.c.b16 %v3290, %v3289
  %v3329 = vpack.c.b16 %v3292, %v3291
  %v3330 = vpack.c.b16 %v3294, %v3293
  %v3331 = vpack.c.b16 %v3296, %v3295
  %v3332 = vpack.c.b16 %v3298, %v3297
  %v3333 = vpack.c.b16 %v3300, %v3299
  %v3334 = vpack.c.b16 %v3302, %v3301
  %3367 = vmatprep.subr.bf16.mxu0 0
  %3368 = vmatpush1.bf16.msra.mxu0 %v3303
  %3369 = vmatprep.subr.bf16.mxu0 0
  %3370 = vmatpush1.bf16.msra.mxu0 %v3304
  %3371 = vmatprep.subr.bf16.mxu0 0
  %3372 = vmatpush1.bf16.msra.mxu0 %v3305
  %3373 = vmatprep.subr.bf16.mxu0 0
  %3374 = vmatpush1.bf16.msra.mxu0 %v3306
  %3375 = vmatprep.subr.bf16.mxu0 0
  %3376 = vmatpush1.bf16.msra.mxu0 %v3307
  %3377 = vmatprep.subr.bf16.mxu0 0
  %3378 = vmatpush1.bf16.msra.mxu0 %v3308
  %3379 = vmatprep.subr.bf16.mxu0 0
  %3380 = vmatpush1.bf16.msra.mxu0 %v3309
  %3381 = vmatprep.subr.bf16.mxu0 0
  %3382 = vmatpush1.bf16.msra.mxu0 %v3310
  %3383 = vmatprep.subr.bf16.mxu0 0
  %3384 = vmatpush1.bf16.msra.mxu0 %v3311
  %3385 = vmatprep.subr.bf16.mxu0 0
  %3386 = vmatpush1.bf16.msra.mxu0 %v3312
  %3387 = vmatprep.subr.bf16.mxu0 0
  %3388 = vmatpush1.bf16.msra.mxu0 %v3313
  %3389 = vmatprep.subr.bf16.mxu0 0
  %3390 = vmatpush1.bf16.msra.mxu0 %v3314
  %3391 = vmatprep.subr.bf16.mxu0 0
  %3392 = vmatpush1.bf16.msra.mxu0 %v3315
  %3393 = vmatprep.subr.bf16.mxu0 0
  %3394 = vmatpush1.bf16.msra.mxu0 %v3316
  %3395 = vmatprep.subr.bf16.mxu0 0
  %3396 = vmatpush1.bf16.msra.mxu0 %v3317
  %3397 = vmatprep.subr.bf16.mxu0 0
  %3398 = vmatpush1.bf16.msra.mxu0 %v3318
  %3399 = vmatprep.mubr.bf16.mxu0 %v412
  %3400 = vmatmul.mubr.bf16.gmra.mrb[0].mxu0 %v411
  %v3401 = vpop.f32.mrb[0].mxu0
  %v3402 = vadd.f32 0.0, %v3401
  %v3403 = vpop.f32.mrb[0].mxu0
  %v3404 = vpop.f32.mrb[0].mxu0
  %v3405 = vpop.f32.mrb[0].mxu0
  %3406 = vdwg.mxu0
  %3407 = vmatprep.subr.bf16.mxu0 0
  %3408 = vmatpush1.bf16.msra.mxu0 %v3319
  %3409 = vmatprep.subr.bf16.mxu0 0
  %3410 = vmatpush1.bf16.msra.mxu0 %v3320
  %3411 = vmatprep.subr.bf16.mxu0 0
  %3412 = vmatpush1.bf16.msra.mxu0 %v3321
  %3413 = vmatprep.subr.bf16.mxu0 0
  %3414 = vmatpush1.bf16.msra.mxu0 %v3322
  %3415 = vmatprep.subr.bf16.mxu0 0
  %3416 = vmatpush1.bf16.msra.mxu0 %v3323
  %3417 = vmatprep.subr.bf16.mxu0 0
  %3418 = vmatpush1.bf16.msra.mxu0 %v3324
  %3419 = vmatprep.subr.bf16.mxu0 0
  %3420 = vmatpush1.bf16.msra.mxu0 %v3325
  %3421 = vmatprep.subr.bf16.mxu0 0
  %3422 = vmatpush1.bf16.msra.mxu0 %v3326
  %3423 = vmatprep.subr.bf16.mxu0 0
  %3424 = vmatpush1.bf16.msra.mxu0 %v3327
  %3425 = vmatprep.subr.bf16.mxu0 0
  %3426 = vmatpush1.bf16.msra.mxu0 %v3328
  %3427 = vmatprep.subr.bf16.mxu0 0
  %3428 = vmatpush1.bf16.msra.mxu0 %v3329
  %3429 = vmatprep.subr.bf16.mxu0 0
  %3430 = vmatpush1.bf16.msra.mxu0 %v3330
  %3431 = vmatprep.subr.bf16.mxu0 0
  %3432 = vmatpush1.bf16.msra.mxu0 %v3331
  %3433 = vmatprep.subr.bf16.mxu0 0
  %3434 = vmatpush1.bf16.msra.mxu0 %v3332
  %3435 = vmatprep.subr.bf16.mxu0 0
  %3436 = vmatpush1.bf16.msra.mxu0 %v3333
  %3437 = vmatprep.subr.bf16.mxu0 0
  %3438 = vmatpush1.bf16.msra.mxu0 %v3334
  %3439 = vmatprep.mubr.bf16.mxu0 %v414
  %3440 = vmatmul.mubr.bf16.gmra.mrb[0].mxu0 %v413
  %v3441 = vpop.f32.mrb[0].mxu0
  %v3442 = vadd.f32 %v3402, %v3441
  %v3443 = vpop.f32.mrb[0].mxu0
  %v3444 = vpop.f32.mrb[0].mxu0
  %v3445 = vpop.f32.mrb[0].mxu0
  %3446 = vdwg.mxu0
  %s3447 = scalar_lea.vmem %s2, 2304
  %v3448 = vld [vmem:[%s3447] sm:$0xf]
  %v3449 = vld [vmem:[%s3447 + $0x4] sm:$0xf]
  %v3450 = vld [vmem:[%s3447 + $0x8] sm:$0xf]
  %v3451 = vld [vmem:[%s3447 + $0xc] sm:$0xf]
  %v3452 = vld [vmem:[%s3447 + $0x10] sm:$0xf]
  %v3453 = vld [vmem:[%s3447 + $0x14] sm:$0xf]
  %v3454 = vld [vmem:[%s3447 + $0x18] sm:$0xf]
  %v3455 = vld [vmem:[%s3447 + $0x1c] sm:$0xf]
  %v3456 = vld [vmem:[%s3447 + $0x20] sm:$0xf]
  %v3457 = vld [vmem:[%s3447 + $0x24] sm:$0xf]
  %v3458 = vld [vmem:[%s3447 + $0x28] sm:$0xf]
  %v3459 = vld [vmem:[%s3447 + $0x2c] sm:$0xf]
  %v3460 = vld [vmem:[%s3447 + $0x30] sm:$0xf]
  %v3461 = vld [vmem:[%s3447 + $0x34] sm:$0xf]
  %v3462 = vld [vmem:[%s3447 + $0x38] sm:$0xf]
  %v3463 = vld [vmem:[%s3447 + $0x3c] sm:$0xf]
  %v3464 = vld [vmem:[%s3447 + $0x40] sm:$0xf]
  %v3465 = vld [vmem:[%s3447 + $0x44] sm:$0xf]
  %v3466 = vld [vmem:[%s3447 + $0x48] sm:$0xf]
  %v3467 = vld [vmem:[%s3447 + $0x4c] sm:$0xf]
  %v3468 = vld [vmem:[%s3447 + $0x50] sm:$0xf]
  %v3469 = vld [vmem:[%s3447 + $0x54] sm:$0xf]
  %v3470 = vld [vmem:[%s3447 + $0x58] sm:$0xf]
  %v3471 = vld [vmem:[%s3447 + $0x5c] sm:$0xf]
  %v3472 = vld [vmem:[%s3447 + $0x60] sm:$0xf]
  %v3473 = vld [vmem:[%s3447 + $0x64] sm:$0xf]
  %v3474 = vld [vmem:[%s3447 + $0x68] sm:$0xf]
  %v3475 = vld [vmem:[%s3447 + $0x6c] sm:$0xf]
  %v3476 = vld [vmem:[%s3447 + $0x70] sm:$0xf]
  %v3477 = vld [vmem:[%s3447 + $0x74] sm:$0xf]
  %v3478 = vld [vmem:[%s3447 + $0x78] sm:$0xf]
  %v3479 = vld [vmem:[%s3447 + $0x7c] sm:$0xf]
  %v3480 = vld [vmem:[%s3447 + $0x80] sm:$0xf]
  %v3481 = vld [vmem:[%s3447 + $0x84] sm:$0xf]
  %v3482 = vld [vmem:[%s3447 + $0x88] sm:$0xf]
  %v3483 = vld [vmem:[%s3447 + $0x8c] sm:$0xf]
  %v3484 = vld [vmem:[%s3447 + $0x90] sm:$0xf]
  %v3485 = vld [vmem:[%s3447 + $0x94] sm:$0xf]
  %v3486 = vld [vmem:[%s3447 + $0x98] sm:$0xf]
  %v3487 = vld [vmem:[%s3447 + $0x9c] sm:$0xf]
  %v3488 = vld [vmem:[%s3447 + $0xa0] sm:$0xf]
  %v3489 = vld [vmem:[%s3447 + $0xa4] sm:$0xf]
  %v3490 = vld [vmem:[%s3447 + $0xa8] sm:$0xf]
  %v3491 = vld [vmem:[%s3447 + $0xac] sm:$0xf]
  %v3492 = vld [vmem:[%s3447 + $0xb0] sm:$0xf]
  %v3493 = vld [vmem:[%s3447 + $0xb4] sm:$0xf]
  %v3494 = vld [vmem:[%s3447 + $0xb8] sm:$0xf]
  %v3495 = vld [vmem:[%s3447 + $0xbc] sm:$0xf]
  %v3496 = vld [vmem:[%s3447 + $0xc0] sm:$0xf]
  %v3497 = vld [vmem:[%s3447 + $0xc4] sm:$0xf]
  %v3498 = vld [vmem:[%s3447 + $0xc8] sm:$0xf]
  %v3499 = vld [vmem:[%s3447 + $0xcc] sm:$0xf]
  %v3500 = vld [vmem:[%s3447 + $0xd0] sm:$0xf]
  %v3501 = vld [vmem:[%s3447 + $0xd4] sm:$0xf]
  %v3502 = vld [vmem:[%s3447 + $0xd8] sm:$0xf]
  %v3503 = vld [vmem:[%s3447 + $0xdc] sm:$0xf]
  %v3504 = vld [vmem:[%s3447 + $0xe0] sm:$0xf]
  %v3505 = vld [vmem:[%s3447 + $0xe4] sm:$0xf]
  %v3506 = vld [vmem:[%s3447 + $0xe8] sm:$0xf]
  %v3507 = vld [vmem:[%s3447 + $0xec] sm:$0xf]
  %v3508 = vld [vmem:[%s3447 + $0xf0] sm:$0xf]
  %v3509 = vld [vmem:[%s3447 + $0xf4] sm:$0xf]
  %v3510 = vld [vmem:[%s3447 + $0xf8] sm:$0xf]
  %v3511 = vld [vmem:[%s3447 + $0xfc] sm:$0xf]
  %v3576 = vunpack.c.l.b16 %v3448
  %v3577 = vunpack.c.l.b16 %v3449
  %v3578 = vunpack.c.l.b16 %v3450
  %v3579 = vunpack.c.l.b16 %v3451
  %v3580 = vunpack.c.l.b16 %v3452
  %v3581 = vunpack.c.l.b16 %v3453
  %v3582 = vunpack.c.l.b16 %v3454
  %v3583 = vunpack.c.l.b16 %v3455
  %v3584 = vunpack.c.l.b16 %v3456
  %v3585 = vunpack.c.l.b16 %v3457
  %v3586 = vunpack.c.l.b16 %v3458
  %v3587 = vunpack.c.l.b16 %v3459
  %v3588 = vunpack.c.l.b16 %v3460
  %v3589 = vunpack.c.l.b16 %v3461
  %v3590 = vunpack.c.l.b16 %v3462
  %v3591 = vunpack.c.l.b16 %v3463
  %v3592 = vunpack.c.l.b16 %v3464
  %v3593 = vunpack.c.l.b16 %v3465
  %v3594 = vunpack.c.l.b16 %v3466
  %v3595 = vunpack.c.l.b16 %v3467
  %v3596 = vunpack.c.l.b16 %v3468
  %v3597 = vunpack.c.l.b16 %v3469
  %v3598 = vunpack.c.l.b16 %v3470
  %v3599 = vunpack.c.l.b16 %v3471
  %v3600 = vunpack.c.l.b16 %v3472
  %v3601 = vunpack.c.l.b16 %v3473
  %v3602 = vunpack.c.l.b16 %v3474
  %v3603 = vunpack.c.l.b16 %v3475
  %v3604 = vunpack.c.l.b16 %v3476
  %v3605 = vunpack.c.l.b16 %v3477
  %v3606 = vunpack.c.l.b16 %v3478
  %v3607 = vunpack.c.l.b16 %v3479
  %v3608 = vunpack.c.l.b16 %v3480
  %v3609 = vunpack.c.l.b16 %v3481
  %v3610 = vunpack.c.l.b16 %v3482
  %v3611 = vunpack.c.l.b16 %v3483
  %v3612 = vunpack.c.l.b16 %v3484
  %v3613 = vunpack.c.l.b16 %v3485
  %v3614 = vunpack.c.l.b16 %v3486
  %v3615 = vunpack.c.l.b16 %v3487
  %v3616 = vunpack.c.l.b16 %v3488
  %v3617 = vunpack.c.l.b16 %v3489
  %v3618 = vunpack.c.l.b16 %v3490
  %v3619 = vunpack.c.l.b16 %v3491
  %v3620 = vunpack.c.l.b16 %v3492
  %v3621 = vunpack.c.l.b16 %v3493
  %v3622 = vunpack.c.l.b16 %v3494
  %v3623 = vunpack.c.l.b16 %v3495
  %v3624 = vunpack.c.l.b16 %v3496
  %v3625 = vunpack.c.l.b16 %v3497
  %v3626 = vunpack.c.l.b16 %v3498
  %v3627 = vunpack.c.l.b16 %v3499
  %v3628 = vunpack.c.l.b16 %v3500
  %v3629 = vunpack.c.l.b16 %v3501
  %v3630 = vunpack.c.l.b16 %v3502
  %v3631 = vunpack.c.l.b16 %v3503
  %v3632 = vunpack.c.l.b16 %v3504
  %v3633 = vunpack.c.l.b16 %v3505
  %v3634 = vunpack.c.l.b16 %v3506
  %v3635 = vunpack.c.l.b16 %v3507
  %v3636 = vunpack.c.l.b16 %v3508
  %v3637 = vunpack.c.l.b16 %v3509
  %v3638 = vunpack.c.l.b16 %v3510
  %v3639 = vunpack.c.l.b16 %v3511
  %v3640 = vpack.c.b16 %v3577, %v3576
  %v3641 = vpack.c.b16 %v3579, %v3578
  %v3642 = vpack.c.b16 %v3581, %v3580
  %v3643 = vpack.c.b16 %v3583, %v3582
  %v3644 = vpack.c.b16 %v3585, %v3584
  %v3645 = vpack.c.b16 %v3587, %v3586
  %v3646 = vpack.c.b16 %v3589, %v3588
  %v3647 = vpack.c.b16 %v3591, %v3590
  %v3648 = vpack.c.b16 %v3593, %v3592
  %v3649 = vpack.c.b16 %v3595, %v3594
  %v3650 = vpack.c.b16 %v3597, %v3596
  %v3651 = vpack.c.b16 %v3599, %v3598
  %v3652 = vpack.c.b16 %v3601, %v3600
  %v3653 = vpack.c.b16 %v3603, %v3602
  %v3654 = vpack.c.b16 %v3605, %v3604
  %v3655 = vpack.c.b16 %v3607, %v3606
  %v3656 = vpack.c.b16 %v3609, %v3608
  %v3657 = vpack.c.b16 %v3611, %v3610
  %v3658 = vpack.c.b16 %v3613, %v3612
  %v3659 = vpack.c.b16 %v3615, %v3614
  %v3660 = vpack.c.b16 %v3617, %v3616
  %v3661 = vpack.c.b16 %v3619, %v3618
  %v3662 = vpack.c.b16 %v3621, %v3620
  %v3663 = vpack.c.b16 %v3623, %v3622
  %v3664 = vpack.c.b16 %v3625, %v3624
  %v3665 = vpack.c.b16 %v3627, %v3626
  %v3666 = vpack.c.b16 %v3629, %v3628
  %v3667 = vpack.c.b16 %v3631, %v3630
  %v3668 = vpack.c.b16 %v3633, %v3632
  %v3669 = vpack.c.b16 %v3635, %v3634
  %v3670 = vpack.c.b16 %v3637, %v3636
  %v3671 = vpack.c.b16 %v3639, %v3638
  %3704 = vmatprep.subr.bf16.mxu0 0
  %3705 = vmatpush1.bf16.msra.mxu0 %v3640
  %3706 = vmatprep.subr.bf16.mxu0 0
  %3707 = vmatpush1.bf16.msra.mxu0 %v3641
  %3708 = vmatprep.subr.bf16.mxu0 0
  %3709 = vmatpush1.bf16.msra.mxu0 %v3642
  %3710 = vmatprep.subr.bf16.mxu0 0
  %3711 = vmatpush1.bf16.msra.mxu0 %v3643
  %3712 = vmatprep.subr.bf16.mxu0 0
  %3713 = vmatpush1.bf16.msra.mxu0 %v3644
  %3714 = vmatprep.subr.bf16.mxu0 0
  %3715 = vmatpush1.bf16.msra.mxu0 %v3645
  %3716 = vmatprep.subr.bf16.mxu0 0
  %3717 = vmatpush1.bf16.msra.mxu0 %v3646
  %3718 = vmatprep.subr.bf16.mxu0 0
  %3719 = vmatpush1.bf16.msra.mxu0 %v3647
  %3720 = vmatprep.subr.bf16.mxu0 0
  %3721 = vmatpush1.bf16.msra.mxu0 %v3648
  %3722 = vmatprep.subr.bf16.mxu0 0
  %3723 = vmatpush1.bf16.msra.mxu0 %v3649
  %3724 = vmatprep.subr.bf16.mxu0 0
  %3725 = vmatpush1.bf16.msra.mxu0 %v3650
  %3726 = vmatprep.subr.bf16.mxu0 0
  %3727 = vmatpush1.bf16.msra.mxu0 %v3651
  %3728 = vmatprep.subr.bf16.mxu0 0
  %3729 = vmatpush1.bf16.msra.mxu0 %v3652
  %3730 = vmatprep.subr.bf16.mxu0 0
  %3731 = vmatpush1.bf16.msra.mxu0 %v3653
  %3732 = vmatprep.subr.bf16.mxu0 0
  %3733 = vmatpush1.bf16.msra.mxu0 %v3654
  %3734 = vmatprep.subr.bf16.mxu0 0
  %3735 = vmatpush1.bf16.msra.mxu0 %v3655
  %3736 = vmatprep.mubr.bf16.mxu0 %v412
  %3737 = vmatmul.mubr.bf16.gmra.mrb[0].mxu0 %v411
  %v3738 = vpop.f32.mrb[0].mxu0
  %v3739 = vadd.f32 0.0, %v3738
  %v3740 = vpop.f32.mrb[0].mxu0
  %v3741 = vpop.f32.mrb[0].mxu0
  %v3742 = vpop.f32.mrb[0].mxu0
  %3743 = vdwg.mxu0
  %3744 = vmatprep.subr.bf16.mxu0 0
  %3745 = vmatpush1.bf16.msra.mxu0 %v3656
  %3746 = vmatprep.subr.bf16.mxu0 0
  %3747 = vmatpush1.bf16.msra.mxu0 %v3657
  %3748 = vmatprep.subr.bf16.mxu0 0
  %3749 = vmatpush1.bf16.msra.mxu0 %v3658
  %3750 = vmatprep.subr.bf16.mxu0 0
  %3751 = vmatpush1.bf16.msra.mxu0 %v3659
  %3752 = vmatprep.subr.bf16.mxu0 0
  %3753 = vmatpush1.bf16.msra.mxu0 %v3660
  %3754 = vmatprep.subr.bf16.mxu0 0
  %3755 = vmatpush1.bf16.msra.mxu0 %v3661
  %3756 = vmatprep.subr.bf16.mxu0 0
  %3757 = vmatpush1.bf16.msra.mxu0 %v3662
  %3758 = vmatprep.subr.bf16.mxu0 0
  %3759 = vmatpush1.bf16.msra.mxu0 %v3663
  %3760 = vmatprep.subr.bf16.mxu0 0
  %3761 = vmatpush1.bf16.msra.mxu0 %v3664
  %3762 = vmatprep.subr.bf16.mxu0 0
  %3763 = vmatpush1.bf16.msra.mxu0 %v3665
  %3764 = vmatprep.subr.bf16.mxu0 0
  %3765 = vmatpush1.bf16.msra.mxu0 %v3666
  %3766 = vmatprep.subr.bf16.mxu0 0
  %3767 = vmatpush1.bf16.msra.mxu0 %v3667
  %3768 = vmatprep.subr.bf16.mxu0 0
  %3769 = vmatpush1.bf16.msra.mxu0 %v3668
  %3770 = vmatprep.subr.bf16.mxu0 0
  %3771 = vmatpush1.bf16.msra.mxu0 %v3669
  %3772 = vmatprep.subr.bf16.mxu0 0
  %3773 = vmatpush1.bf16.msra.mxu0 %v3670
  %3774 = vmatprep.subr.bf16.mxu0 0
  %3775 = vmatpush1.bf16.msra.mxu0 %v3671
  %3776 = vmatprep.mubr.bf16.mxu0 %v414
  %3777 = vmatmul.mubr.bf16.gmra.mrb[0].mxu0 %v413
  %v3778 = vpop.f32.mrb[0].mxu0
  %v3779 = vadd.f32 %v3739, %v3778
  %v3780 = vpop.f32.mrb[0].mxu0
  %v3781 = vpop.f32.mrb[0].mxu0
  %v3782 = vpop.f32.mrb[0].mxu0
  %3783 = vdwg.mxu0
  %s3784 = scalar_lea.vmem %s2, 2560
  %v3785 = vld [vmem:[%s3784] sm:$0xf]
  %v3786 = vld [vmem:[%s3784 + $0x4] sm:$0xf]
  %v3787 = vld [vmem:[%s3784 + $0x8] sm:$0xf]
  %v3788 = vld [vmem:[%s3784 + $0xc] sm:$0xf]
  %v3789 = vld [vmem:[%s3784 + $0x10] sm:$0xf]
  %v3790 = vld [vmem:[%s3784 + $0x14] sm:$0xf]
  %v3791 = vld [vmem:[%s3784 + $0x18] sm:$0xf]
  %v3792 = vld [vmem:[%s3784 + $0x1c] sm:$0xf]
  %v3793 = vld [vmem:[%s3784 + $0x20] sm:$0xf]
  %v3794 = vld [vmem:[%s3784 + $0x24] sm:$0xf]
  %v3795 = vld [vmem:[%s3784 + $0x28] sm:$0xf]
  %v3796 = vld [vmem:[%s3784 + $0x2c] sm:$0xf]
  %v3797 = vld [vmem:[%s3784 + $0x30] sm:$0xf]
  %v3798 = vld [vmem:[%s3784 + $0x34] sm:$0xf]
  %v3799 = vld [vmem:[%s3784 + $0x38] sm:$0xf]
  %v3800 = vld [vmem:[%s3784 + $0x3c] sm:$0xf]
  %v3801 = vld [vmem:[%s3784 + $0x40] sm:$0xf]
  %v3802 = vld [vmem:[%s3784 + $0x44] sm:$0xf]
  %v3803 = vld [vmem:[%s3784 + $0x48] sm:$0xf]
  %v3804 = vld [vmem:[%s3784 + $0x4c] sm:$0xf]
  %v3805 = vld [vmem:[%s3784 + $0x50] sm:$0xf]
  %v3806 = vld [vmem:[%s3784 + $0x54] sm:$0xf]
  %v3807 = vld [vmem:[%s3784 + $0x58] sm:$0xf]
  %v3808 = vld [vmem:[%s3784 + $0x5c] sm:$0xf]
  %v3809 = vld [vmem:[%s3784 + $0x60] sm:$0xf]
  %v3810 = vld [vmem:[%s3784 + $0x64] sm:$0xf]
  %v3811 = vld [vmem:[%s3784 + $0x68] sm:$0xf]
  %v3812 = vld [vmem:[%s3784 + $0x6c] sm:$0xf]
  %v3813 = vld [vmem:[%s3784 + $0x70] sm:$0xf]
  %v3814 = vld [vmem:[%s3784 + $0x74] sm:$0xf]
  %v3815 = vld [vmem:[%s3784 + $0x78] sm:$0xf]
  %v3816 = vld [vmem:[%s3784 + $0x7c] sm:$0xf]
  %v3817 = vld [vmem:[%s3784 + $0x80] sm:$0xf]
  %v3818 = vld [vmem:[%s3784 + $0x84] sm:$0xf]
  %v3819 = vld [vmem:[%s3784 + $0x88] sm:$0xf]
  %v3820 = vld [vmem:[%s3784 + $0x8c] sm:$0xf]
  %v3821 = vld [vmem:[%s3784 + $0x90] sm:$0xf]
  %v3822 = vld [vmem:[%s3784 + $0x94] sm:$0xf]
  %v3823 = vld [vmem:[%s3784 + $0x98] sm:$0xf]
  %v3824 = vld [vmem:[%s3784 + $0x9c] sm:$0xf]
  %v3825 = vld [vmem:[%s3784 + $0xa0] sm:$0xf]
  %v3826 = vld [vmem:[%s3784 + $0xa4] sm:$0xf]
  %v3827 = vld [vmem:[%s3784 + $0xa8] sm:$0xf]
  %v3828 = vld [vmem:[%s3784 + $0xac] sm:$0xf]
  %v3829 = vld [vmem:[%s3784 + $0xb0] sm:$0xf]
  %v3830 = vld [vmem:[%s3784 + $0xb4] sm:$0xf]
  %v3831 = vld [vmem:[%s3784 + $0xb8] sm:$0xf]
  %v3832 = vld [vmem:[%s3784 + $0xbc] sm:$0xf]
  %v3833 = vld [vmem:[%s3784 + $0xc0] sm:$0xf]
  %v3834 = vld [vmem:[%s3784 + $0xc4] sm:$0xf]
  %v3835 = vld [vmem:[%s3784 + $0xc8] sm:$0xf]
  %v3836 = vld [vmem:[%s3784 + $0xcc] sm:$0xf]
  %v3837 = vld [vmem:[%s3784 + $0xd0] sm:$0xf]
  %v3838 = vld [vmem:[%s3784 + $0xd4] sm:$0xf]
  %v3839 = vld [vmem:[%s3784 + $0xd8] sm:$0xf]
  %v3840 = vld [vmem:[%s3784 + $0xdc] sm:$0xf]
  %v3841 = vld [vmem:[%s3784 + $0xe0] sm:$0xf]
  %v3842 = vld [vmem:[%s3784 + $0xe4] sm:$0xf]
  %v3843 = vld [vmem:[%s3784 + $0xe8] sm:$0xf]
  %v3844 = vld [vmem:[%s3784 + $0xec] sm:$0xf]
  %v3845 = vld [vmem:[%s3784 + $0xf0] sm:$0xf]
  %v3846 = vld [vmem:[%s3784 + $0xf4] sm:$0xf]
  %v3847 = vld [vmem:[%s3784 + $0xf8] sm:$0xf]
  %v3848 = vld [vmem:[%s3784 + $0xfc] sm:$0xf]
  %v3913 = vunpack.c.l.b16 %v3785
  %v3914 = vunpack.c.l.b16 %v3786
  %v3915 = vunpack.c.l.b16 %v3787
  %v3916 = vunpack.c.l.b16 %v3788
  %v3917 = vunpack.c.l.b16 %v3789
  %v3918 = vunpack.c.l.b16 %v3790
  %v3919 = vunpack.c.l.b16 %v3791
  %v3920 = vunpack.c.l.b16 %v3792
  %v3921 = vunpack.c.l.b16 %v3793
  %v3922 = vunpack.c.l.b16 %v3794
  %v3923 = vunpack.c.l.b16 %v3795
  %v3924 = vunpack.c.l.b16 %v3796
  %v3925 = vunpack.c.l.b16 %v3797
  %v3926 = vunpack.c.l.b16 %v3798
  %v3927 = vunpack.c.l.b16 %v3799
  %v3928 = vunpack.c.l.b16 %v3800
  %v3929 = vunpack.c.l.b16 %v3801
  %v3930 = vunpack.c.l.b16 %v3802
  %v3931 = vunpack.c.l.b16 %v3803
  %v3932 = vunpack.c.l.b16 %v3804
  %v3933 = vunpack.c.l.b16 %v3805
  %v3934 = vunpack.c.l.b16 %v3806
  %v3935 = vunpack.c.l.b16 %v3807
  %v3936 = vunpack.c.l.b16 %v3808
  %v3937 = vunpack.c.l.b16 %v3809
  %v3938 = vunpack.c.l.b16 %v3810
  %v3939 = vunpack.c.l.b16 %v3811
  %v3940 = vunpack.c.l.b16 %v3812
  %v3941 = vunpack.c.l.b16 %v3813
  %v3942 = vunpack.c.l.b16 %v3814
  %v3943 = vunpack.c.l.b16 %v3815
  %v3944 = vunpack.c.l.b16 %v3816
  %v3945 = vunpack.c.l.b16 %v3817
  %v3946 = vunpack.c.l.b16 %v3818
  %v3947 = vunpack.c.l.b16 %v3819
  %v3948 = vunpack.c.l.b16 %v3820
  %v3949 = vunpack.c.l.b16 %v3821
  %v3950 = vunpack.c.l.b16 %v3822
  %v3951 = vunpack.c.l.b16 %v3823
  %v3952 = vunpack.c.l.b16 %v3824
  %v3953 = vunpack.c.l.b16 %v3825
  %v3954 = vunpack.c.l.b16 %v3826
  %v3955 = vunpack.c.l.b16 %v3827
  %v3956 = vunpack.c.l.b16 %v3828
  %v3957 = vunpack.c.l.b16 %v3829
  %v3958 = vunpack.c.l.b16 %v3830
  %v3959 = vunpack.c.l.b16 %v3831
  %v3960 = vunpack.c.l.b16 %v3832
  %v3961 = vunpack.c.l.b16 %v3833
  %v3962 = vunpack.c.l.b16 %v3834
  %v3963 = vunpack.c.l.b16 %v3835
  %v3964 = vunpack.c.l.b16 %v3836
  %v3965 = vunpack.c.l.b16 %v3837
  %v3966 = vunpack.c.l.b16 %v3838
  %v3967 = vunpack.c.l.b16 %v3839
  %v3968 = vunpack.c.l.b16 %v3840
  %v3969 = vunpack.c.l.b16 %v3841
  %v3970 = vunpack.c.l.b16 %v3842
  %v3971 = vunpack.c.l.b16 %v3843
  %v3972 = vunpack.c.l.b16 %v3844
  %v3973 = vunpack.c.l.b16 %v3845
  %v3974 = vunpack.c.l.b16 %v3846
  %v3975 = vunpack.c.l.b16 %v3847
  %v3976 = vunpack.c.l.b16 %v3848
  %v3977 = vpack.c.b16 %v3914, %v3913
  %v3978 = vpack.c.b16 %v3916, %v3915
  %v3979 = vpack.c.b16 %v3918, %v3917
  %v3980 = vpack.c.b16 %v3920, %v3919
  %v3981 = vpack.c.b16 %v3922, %v3921
  %v3982 = vpack.c.b16 %v3924, %v3923
  %v3983 = vpack.c.b16 %v3926, %v3925
  %v3984 = vpack.c.b16 %v3928, %v3927
  %v3985 = vpack.c.b16 %v3930, %v3929
  %v3986 = vpack.c.b16 %v3932, %v3931
  %v3987 = vpack.c.b16 %v3934, %v3933
  %v3988 = vpack.c.b16 %v3936, %v3935
  %v3989 = vpack.c.b16 %v3938, %v3937
  %v3990 = vpack.c.b16 %v3940, %v3939
  %v3991 = vpack.c.b16 %v3942, %v3941
  %v3992 = vpack.c.b16 %v3944, %v3943
  %v3993 = vpack.c.b16 %v3946, %v3945
  %v3994 = vpack.c.b16 %v3948, %v3947
  %v3995 = vpack.c.b16 %v3950, %v3949
  %v3996 = vpack.c.b16 %v3952, %v3951
  %v3997 = vpack.c.b16 %v3954, %v3953
  %v3998 = vpack.c.b16 %v3956, %v3955
  %v3999 = vpack.c.b16 %v3958, %v3957
  %v4000 = vpack.c.b16 %v3960, %v3959
  %v4001 = vpack.c.b16 %v3962, %v3961
  %v4002 = vpack.c.b16 %v3964, %v3963
  %v4003 = vpack.c.b16 %v3966, %v3965
  %v4004 = vpack.c.b16 %v3968, %v3967
  %v4005 = vpack.c.b16 %v3970, %v3969
  %v4006 = vpack.c.b16 %v3972, %v3971
  %v4007 = vpack.c.b16 %v3974, %v3973
  %v4008 = vpack.c.b16 %v3976, %v3975
  %4041 = vmatprep.subr.bf16.mxu0 0
  %4042 = vmatpush1.bf16.msra.mxu0 %v3977
  %4043 = vmatprep.subr.bf16.mxu0 0
  %4044 = vmatpush1.bf16.msra.mxu0 %v3978
  %4045 = vmatprep.subr.bf16.mxu0 0
  %4046 = vmatpush1.bf16.msra.mxu0 %v3979
  %4047 = vmatprep.subr.bf16.mxu0 0
  %4048 = vmatpush1.bf16.msra.mxu0 %v3980
  %4049 = vmatprep.subr.bf16.mxu0 0
  %4050 = vmatpush1.bf16.msra.mxu0 %v3981
  %4051 = vmatprep.subr.bf16.mxu0 0
  %4052 = vmatpush1.bf16.msra.mxu0 %v3982
  %4053 = vmatprep.subr.bf16.mxu0 0
  %4054 = vmatpush1.bf16.msra.mxu0 %v3983
  %4055 = vmatprep.subr.bf16.mxu0 0
  %4056 = vmatpush1.bf16.msra.mxu0 %v3984
  %4057 = vmatprep.subr.bf16.mxu0 0
  %4058 = vmatpush1.bf16.msra.mxu0 %v3985
  %4059 = vmatprep.subr.bf16.mxu0 0
  %4060 = vmatpush1.bf16.msra.mxu0 %v3986
  %4061 = vmatprep.subr.bf16.mxu0 0
  %4062 = vmatpush1.bf16.msra.mxu0 %v3987
  %4063 = vmatprep.subr.bf16.mxu0 0
  %4064 = vmatpush1.bf16.msra.mxu0 %v3988
  %4065 = vmatprep.subr.bf16.mxu0 0
  %4066 = vmatpush1.bf16.msra.mxu0 %v3989
  %4067 = vmatprep.subr.bf16.mxu0 0
  %4068 = vmatpush1.bf16.msra.mxu0 %v3990
  %4069 = vmatprep.subr.bf16.mxu0 0
  %4070 = vmatpush1.bf16.msra.mxu0 %v3991
  %4071 = vmatprep.subr.bf16.mxu0 0
  %4072 = vmatpush1.bf16.msra.mxu0 %v3992
  %4073 = vmatprep.mubr.bf16.mxu0 %v412
  %4074 = vmatmul.mubr.bf16.gmra.mrb[0].mxu0 %v411
  %v4075 = vpop.f32.mrb[0].mxu0
  %v4076 = vadd.f32 0.0, %v4075
  %v4077 = vpop.f32.mrb[0].mxu0
  %v4078 = vpop.f32.mrb[0].mxu0
  %v4079 = vpop.f32.mrb[0].mxu0
  %4080 = vdwg.mxu0
  %4081 = vmatprep.subr.bf16.mxu0 0
  %4082 = vmatpush1.bf16.msra.mxu0 %v3993
  %4083 = vmatprep.subr.bf16.mxu0 0
  %4084 = vmatpush1.bf16.msra.mxu0 %v3994
  %4085 = vmatprep.subr.bf16.mxu0 0
  %4086 = vmatpush1.bf16.msra.mxu0 %v3995
  %4087 = vmatprep.subr.bf16.mxu0 0
  %4088 = vmatpush1.bf16.msra.mxu0 %v3996
  %4089 = vmatprep.subr.bf16.mxu0 0
  %4090 = vmatpush1.bf16.msra.mxu0 %v3997
  %4091 = vmatprep.subr.bf16.mxu0 0
  %4092 = vmatpush1.bf16.msra.mxu0 %v3998
  %4093 = vmatprep.subr.bf16.mxu0 0
  %4094 = vmatpush1.bf16.msra.mxu0 %v3999
  %4095 = vmatprep.subr.bf16.mxu0 0
  %4096 = vmatpush1.bf16.msra.mxu0 %v4000
  %4097 = vmatprep.subr.bf16.mxu0 0
  %4098 = vmatpush1.bf16.msra.mxu0 %v4001
  %4099 = vmatprep.subr.bf16.mxu0 0
  %4100 = vmatpush1.bf16.msra.mxu0 %v4002
  %4101 = vmatprep.subr.bf16.mxu0 0
  %4102 = vmatpush1.bf16.msra.mxu0 %v4003
  %4103 = vmatprep.subr.bf16.mxu0 0
  %4104 = vmatpush1.bf16.msra.mxu0 %v4004
  %4105 = vmatprep.subr.bf16.mxu0 0
  %4106 = vmatpush1.bf16.msra.mxu0 %v4005
  %4107 = vmatprep.subr.bf16.mxu0 0
  %4108 = vmatpush1.bf16.msra.mxu0 %v4006
  %4109 = vmatprep.subr.bf16.mxu0 0
  %4110 = vmatpush1.bf16.msra.mxu0 %v4007
  %4111 = vmatprep.subr.bf16.mxu0 0
  %4112 = vmatpush1.bf16.msra.mxu0 %v4008
  %4113 = vmatprep.mubr.bf16.mxu0 %v414
  %4114 = vmatmul.mubr.bf16.gmra.mrb[0].mxu0 %v413
  %v4115 = vpop.f32.mrb[0].mxu0
  %v4116 = vadd.f32 %v4076, %v4115
  %v4117 = vpop.f32.mrb[0].mxu0
  %v4118 = vpop.f32.mrb[0].mxu0
  %v4119 = vpop.f32.mrb[0].mxu0
  %4120 = vdwg.mxu0
  %s4121 = scalar_lea.vmem %s2, 2816
  %v4122 = vld [vmem:[%s4121] sm:$0xf]
  %v4123 = vld [vmem:[%s4121 + $0x4] sm:$0xf]
  %v4124 = vld [vmem:[%s4121 + $0x8] sm:$0xf]
  %v4125 = vld [vmem:[%s4121 + $0xc] sm:$0xf]
  %v4126 = vld [vmem:[%s4121 + $0x10] sm:$0xf]
  %v4127 = vld [vmem:[%s4121 + $0x14] sm:$0xf]
  %v4128 = vld [vmem:[%s4121 + $0x18] sm:$0xf]
  %v4129 = vld [vmem:[%s4121 + $0x1c] sm:$0xf]
  %v4130 = vld [vmem:[%s4121 + $0x20] sm:$0xf]
  %v4131 = vld [vmem:[%s4121 + $0x24] sm:$0xf]
  %v4132 = vld [vmem:[%s4121 + $0x28] sm:$0xf]
  %v4133 = vld [vmem:[%s4121 + $0x2c] sm:$0xf]
  %v4134 = vld [vmem:[%s4121 + $0x30] sm:$0xf]
  %v4135 = vld [vmem:[%s4121 + $0x34] sm:$0xf]
  %v4136 = vld [vmem:[%s4121 + $0x38] sm:$0xf]
  %v4137 = vld [vmem:[%s4121 + $0x3c] sm:$0xf]
  %v4138 = vld [vmem:[%s4121 + $0x40] sm:$0xf]
  %v4139 = vld [vmem:[%s4121 + $0x44] sm:$0xf]
  %v4140 = vld [vmem:[%s4121 + $0x48] sm:$0xf]
  %v4141 = vld [vmem:[%s4121 + $0x4c] sm:$0xf]
  %v4142 = vld [vmem:[%s4121 + $0x50] sm:$0xf]
  %v4143 = vld [vmem:[%s4121 + $0x54] sm:$0xf]
  %v4144 = vld [vmem:[%s4121 + $0x58] sm:$0xf]
  %v4145 = vld [vmem:[%s4121 + $0x5c] sm:$0xf]
  %v4146 = vld [vmem:[%s4121 + $0x60] sm:$0xf]
  %v4147 = vld [vmem:[%s4121 + $0x64] sm:$0xf]
  %v4148 = vld [vmem:[%s4121 + $0x68] sm:$0xf]
  %v4149 = vld [vmem:[%s4121 + $0x6c] sm:$0xf]
  %v4150 = vld [vmem:[%s4121 + $0x70] sm:$0xf]
  %v4151 = vld [vmem:[%s4121 + $0x74] sm:$0xf]
  %v4152 = vld [vmem:[%s4121 + $0x78] sm:$0xf]
  %v4153 = vld [vmem:[%s4121 + $0x7c] sm:$0xf]
  %v4154 = vld [vmem:[%s4121 + $0x80] sm:$0xf]
  %v4155 = vld [vmem:[%s4121 + $0x84] sm:$0xf]
  %v4156 = vld [vmem:[%s4121 + $0x88] sm:$0xf]
  %v4157 = vld [vmem:[%s4121 + $0x8c] sm:$0xf]
  %v4158 = vld [vmem:[%s4121 + $0x90] sm:$0xf]
  %v4159 = vld [vmem:[%s4121 + $0x94] sm:$0xf]
  %v4160 = vld [vmem:[%s4121 + $0x98] sm:$0xf]
  %v4161 = vld [vmem:[%s4121 + $0x9c] sm:$0xf]
  %v4162 = vld [vmem:[%s4121 + $0xa0] sm:$0xf]
  %v4163 = vld [vmem:[%s4121 + $0xa4] sm:$0xf]
  %v4164 = vld [vmem:[%s4121 + $0xa8] sm:$0xf]
  %v4165 = vld [vmem:[%s4121 + $0xac] sm:$0xf]
  %v4166 = vld [vmem:[%s4121 + $0xb0] sm:$0xf]
  %v4167 = vld [vmem:[%s4121 + $0xb4] sm:$0xf]
  %v4168 = vld [vmem:[%s4121 + $0xb8] sm:$0xf]
  %v4169 = vld [vmem:[%s4121 + $0xbc] sm:$0xf]
  %v4170 = vld [vmem:[%s4121 + $0xc0] sm:$0xf]
  %v4171 = vld [vmem:[%s4121 + $0xc4] sm:$0xf]
  %v4172 = vld [vmem:[%s4121 + $0xc8] sm:$0xf]
  %v4173 = vld [vmem:[%s4121 + $0xcc] sm:$0xf]
  %v4174 = vld [vmem:[%s4121 + $0xd0] sm:$0xf]
  %v4175 = vld [vmem:[%s4121 + $0xd4] sm:$0xf]
  %v4176 = vld [vmem:[%s4121 + $0xd8] sm:$0xf]
  %v4177 = vld [vmem:[%s4121 + $0xdc] sm:$0xf]
  %v4178 = vld [vmem:[%s4121 + $0xe0] sm:$0xf]
  %v4179 = vld [vmem:[%s4121 + $0xe4] sm:$0xf]
  %v4180 = vld [vmem:[%s4121 + $0xe8] sm:$0xf]
  %v4181 = vld [vmem:[%s4121 + $0xec] sm:$0xf]
  %v4182 = vld [vmem:[%s4121 + $0xf0] sm:$0xf]
  %v4183 = vld [vmem:[%s4121 + $0xf4] sm:$0xf]
  %v4184 = vld [vmem:[%s4121 + $0xf8] sm:$0xf]
  %v4185 = vld [vmem:[%s4121 + $0xfc] sm:$0xf]
  %v4250 = vunpack.c.l.b16 %v4122
  %v4251 = vunpack.c.l.b16 %v4123
  %v4252 = vunpack.c.l.b16 %v4124
  %v4253 = vunpack.c.l.b16 %v4125
  %v4254 = vunpack.c.l.b16 %v4126
  %v4255 = vunpack.c.l.b16 %v4127
  %v4256 = vunpack.c.l.b16 %v4128
  %v4257 = vunpack.c.l.b16 %v4129
  %v4258 = vunpack.c.l.b16 %v4130
  %v4259 = vunpack.c.l.b16 %v4131
  %v4260 = vunpack.c.l.b16 %v4132
  %v4261 = vunpack.c.l.b16 %v4133
  %v4262 = vunpack.c.l.b16 %v4134
  %v4263 = vunpack.c.l.b16 %v4135
  %v4264 = vunpack.c.l.b16 %v4136
  %v4265 = vunpack.c.l.b16 %v4137
  %v4266 = vunpack.c.l.b16 %v4138
  %v4267 = vunpack.c.l.b16 %v4139
  %v4268 = vunpack.c.l.b16 %v4140
  %v4269 = vunpack.c.l.b16 %v4141
  %v4270 = vunpack.c.l.b16 %v4142
  %v4271 = vunpack.c.l.b16 %v4143
  %v4272 = vunpack.c.l.b16 %v4144
  %v4273 = vunpack.c.l.b16 %v4145
  %v4274 = vunpack.c.l.b16 %v4146
  %v4275 = vunpack.c.l.b16 %v4147
  %v4276 = vunpack.c.l.b16 %v4148
  %v4277 = vunpack.c.l.b16 %v4149
  %v4278 = vunpack.c.l.b16 %v4150
  %v4279 = vunpack.c.l.b16 %v4151
  %v4280 = vunpack.c.l.b16 %v4152
  %v4281 = vunpack.c.l.b16 %v4153
  %v4282 = vunpack.c.l.b16 %v4154
  %v4283 = vunpack.c.l.b16 %v4155
  %v4284 = vunpack.c.l.b16 %v4156
  %v4285 = vunpack.c.l.b16 %v4157
  %v4286 = vunpack.c.l.b16 %v4158
  %v4287 = vunpack.c.l.b16 %v4159
  %v4288 = vunpack.c.l.b16 %v4160
  %v4289 = vunpack.c.l.b16 %v4161
  %v4290 = vunpack.c.l.b16 %v4162
  %v4291 = vunpack.c.l.b16 %v4163
  %v4292 = vunpack.c.l.b16 %v4164
  %v4293 = vunpack.c.l.b16 %v4165
  %v4294 = vunpack.c.l.b16 %v4166
  %v4295 = vunpack.c.l.b16 %v4167
  %v4296 = vunpack.c.l.b16 %v4168
  %v4297 = vunpack.c.l.b16 %v4169
  %v4298 = vunpack.c.l.b16 %v4170
  %v4299 = vunpack.c.l.b16 %v4171
  %v4300 = vunpack.c.l.b16 %v4172
  %v4301 = vunpack.c.l.b16 %v4173
  %v4302 = vunpack.c.l.b16 %v4174
  %v4303 = vunpack.c.l.b16 %v4175
  %v4304 = vunpack.c.l.b16 %v4176
  %v4305 = vunpack.c.l.b16 %v4177
  %v4306 = vunpack.c.l.b16 %v4178
  %v4307 = vunpack.c.l.b16 %v4179
  %v4308 = vunpack.c.l.b16 %v4180
  %v4309 = vunpack.c.l.b16 %v4181
  %v4310 = vunpack.c.l.b16 %v4182
  %v4311 = vunpack.c.l.b16 %v4183
  %v4312 = vunpack.c.l.b16 %v4184
  %v4313 = vunpack.c.l.b16 %v4185
  %v4314 = vpack.c.b16 %v4251, %v4250
  %v4315 = vpack.c.b16 %v4253, %v4252
  %v4316 = vpack.c.b16 %v4255, %v4254
  %v4317 = vpack.c.b16 %v4257, %v4256
  %v4318 = vpack.c.b16 %v4259, %v4258
  %v4319 = vpack.c.b16 %v4261, %v4260
  %v4320 = vpack.c.b16 %v4263, %v4262
  %v4321 = vpack.c.b16 %v4265, %v4264
  %v4322 = vpack.c.b16 %v4267, %v4266
  %v4323 = vpack.c.b16 %v4269, %v4268
  %v4324 = vpack.c.b16 %v4271, %v4270
  %v4325 = vpack.c.b16 %v4273, %v4272
  %v4326 = vpack.c.b16 %v4275, %v4274
  %v4327 = vpack.c.b16 %v4277, %v4276
  %v4328 = vpack.c.b16 %v4279, %v4278
  %v4329 = vpack.c.b16 %v4281, %v4280
  %v4330 = vpack.c.b16 %v4283, %v4282
  %v4331 = vpack.c.b16 %v4285, %v4284
  %v4332 = vpack.c.b16 %v4287, %v4286
  %v4333 = vpack.c.b16 %v4289, %v4288
  %v4334 = vpack.c.b16 %v4291, %v4290
  %v4335 = vpack.c.b16 %v4293, %v4292
  %v4336 = vpack.c.b16 %v4295, %v4294
  %v4337 = vpack.c.b16 %v4297, %v4296
  %v4338 = vpack.c.b16 %v4299, %v4298
  %v4339 = vpack.c.b16 %v4301, %v4300
  %v4340 = vpack.c.b16 %v4303, %v4302
  %v4341 = vpack.c.b16 %v4305, %v4304
  %v4342 = vpack.c.b16 %v4307, %v4306
  %v4343 = vpack.c.b16 %v4309, %v4308
  %v4344 = vpack.c.b16 %v4311, %v4310
  %v4345 = vpack.c.b16 %v4313, %v4312
  %4378 = vmatprep.subr.bf16.mxu0 0
  %4379 = vmatpush1.bf16.msra.mxu0 %v4314
  %4380 = vmatprep.subr.bf16.mxu0 0
  %4381 = vmatpush1.bf16.msra.mxu0 %v4315
  %4382 = vmatprep.subr.bf16.mxu0 0
  %4383 = vmatpush1.bf16.msra.mxu0 %v4316
  %4384 = vmatprep.subr.bf16.mxu0 0
  %4385 = vmatpush1.bf16.msra.mxu0 %v4317
  %4386 = vmatprep.subr.bf16.mxu0 0
  %4387 = vmatpush1.bf16.msra.mxu0 %v4318
  %4388 = vmatprep.subr.bf16.mxu0 0
  %4389 = vmatpush1.bf16.msra.mxu0 %v4319
  %4390 = vmatprep.subr.bf16.mxu0 0
  %4391 = vmatpush1.bf16.msra.mxu0 %v4320
  %4392 = vmatprep.subr.bf16.mxu0 0
  %4393 = vmatpush1.bf16.msra.mxu0 %v4321
  %4394 = vmatprep.subr.bf16.mxu0 0
  %4395 = vmatpush1.bf16.msra.mxu0 %v4322
  %4396 = vmatprep.subr.bf16.mxu0 0
  %4397 = vmatpush1.bf16.msra.mxu0 %v4323
  %4398 = vmatprep.subr.bf16.mxu0 0
  %4399 = vmatpush1.bf16.msra.mxu0 %v4324
  %4400 = vmatprep.subr.bf16.mxu0 0
  %4401 = vmatpush1.bf16.msra.mxu0 %v4325
  %4402 = vmatprep.subr.bf16.mxu0 0
  %4403 = vmatpush1.bf16.msra.mxu0 %v4326
  %4404 = vmatprep.subr.bf16.mxu0 0
  %4405 = vmatpush1.bf16.msra.mxu0 %v4327
  %4406 = vmatprep.subr.bf16.mxu0 0
  %4407 = vmatpush1.bf16.msra.mxu0 %v4328
  %4408 = vmatprep.subr.bf16.mxu0 0
  %4409 = vmatpush1.bf16.msra.mxu0 %v4329
  %4410 = vmatprep.mubr.bf16.mxu0 %v412
  %4411 = vmatmul.mubr.bf16.gmra.mrb[0].mxu0 %v411
  %v4412 = vpop.f32.mrb[0].mxu0
  %v4413 = vadd.f32 0.0, %v4412
  %v4414 = vpop.f32.mrb[0].mxu0
  %v4415 = vpop.f32.mrb[0].mxu0
  %v4416 = vpop.f32.mrb[0].mxu0
  %4417 = vdwg.mxu0
  %4418 = vmatprep.subr.bf16.mxu0 0
  %4419 = vmatpush1.bf16.msra.mxu0 %v4330
  %4420 = vmatprep.subr.bf16.mxu0 0
  %4421 = vmatpush1.bf16.msra.mxu0 %v4331
  %4422 = vmatprep.subr.bf16.mxu0 0
  %4423 = vmatpush1.bf16.msra.mxu0 %v4332
  %4424 = vmatprep.subr.bf16.mxu0 0
  %4425 = vmatpush1.bf16.msra.mxu0 %v4333
  %4426 = vmatprep.subr.bf16.mxu0 0
  %4427 = vmatpush1.bf16.msra.mxu0 %v4334
  %4428 = vmatprep.subr.bf16.mxu0 0
  %4429 = vmatpush1.bf16.msra.mxu0 %v4335
  %4430 = vmatprep.subr.bf16.mxu0 0
  %4431 = vmatpush1.bf16.msra.mxu0 %v4336
  %4432 = vmatprep.subr.bf16.mxu0 0
  %4433 = vmatpush1.bf16.msra.mxu0 %v4337
  %4434 = vmatprep.subr.bf16.mxu0 0
  %4435 = vmatpush1.bf16.msra.mxu0 %v4338
  %4436 = vmatprep.subr.bf16.mxu0 0
  %4437 = vmatpush1.bf16.msra.mxu0 %v4339
  %4438 = vmatprep.subr.bf16.mxu0 0
  %4439 = vmatpush1.bf16.msra.mxu0 %v4340
  %4440 = vmatprep.subr.bf16.mxu0 0
  %4441 = vmatpush1.bf16.msra.mxu0 %v4341
  %4442 = vmatprep.subr.bf16.mxu0 0
  %4443 = vmatpush1.bf16.msra.mxu0 %v4342
  %4444 = vmatprep.subr.bf16.mxu0 0
  %4445 = vmatpush1.bf16.msra.mxu0 %v4343
  %4446 = vmatprep.subr.bf16.mxu0 0
  %4447 = vmatpush1.bf16.msra.mxu0 %v4344
  %4448 = vmatprep.subr.bf16.mxu0 0
  %4449 = vmatpush1.bf16.msra.mxu0 %v4345
  %4450 = vmatprep.mubr.bf16.mxu0 %v414
  %4451 = vmatmul.mubr.bf16.gmra.mrb[0].mxu0 %v413
  %v4452 = vpop.f32.mrb[0].mxu0
  %v4453 = vadd.f32 %v4413, %v4452
  %v4454 = vpop.f32.mrb[0].mxu0
  %v4455 = vpop.f32.mrb[0].mxu0
  %v4456 = vpop.f32.mrb[0].mxu0
  %4457 = vdwg.mxu0
  %s4458 = scalar_lea.vmem %s2, 3072
  %v4459 = vld [vmem:[%s4458] sm:$0xf]
  %v4460 = vld [vmem:[%s4458 + $0x4] sm:$0xf]
  %v4461 = vld [vmem:[%s4458 + $0x8] sm:$0xf]
  %v4462 = vld [vmem:[%s4458 + $0xc] sm:$0xf]
  %v4463 = vld [vmem:[%s4458 + $0x10] sm:$0xf]
  %v4464 = vld [vmem:[%s4458 + $0x14] sm:$0xf]
  %v4465 = vld [vmem:[%s4458 + $0x18] sm:$0xf]
  %v4466 = vld [vmem:[%s4458 + $0x1c] sm:$0xf]
  %v4467 = vld [vmem:[%s4458 + $0x20] sm:$0xf]
  %v4468 = vld [vmem:[%s4458 + $0x24] sm:$0xf]
  %v4469 = vld [vmem:[%s4458 + $0x28] sm:$0xf]
  %v4470 = vld [vmem:[%s4458 + $0x2c] sm:$0xf]
  %v4471 = vld [vmem:[%s4458 + $0x30] sm:$0xf]
  %v4472 = vld [vmem:[%s4458 + $0x34] sm:$0xf]
  %v4473 = vld [vmem:[%s4458 + $0x38] sm:$0xf]
  %v4474 = vld [vmem:[%s4458 + $0x3c] sm:$0xf]
  %v4475 = vld [vmem:[%s4458 + $0x40] sm:$0xf]
  %v4476 = vld [vmem:[%s4458 + $0x44] sm:$0xf]
  %v4477 = vld [vmem:[%s4458 + $0x48] sm:$0xf]
  %v4478 = vld [vmem:[%s4458 + $0x4c] sm:$0xf]
  %v4479 = vld [vmem:[%s4458 + $0x50] sm:$0xf]
  %v4480 = vld [vmem:[%s4458 + $0x54] sm:$0xf]
  %v4481 = vld [vmem:[%s4458 + $0x58] sm:$0xf]
  %v4482 = vld [vmem:[%s4458 + $0x5c] sm:$0xf]
  %v4483 = vld [vmem:[%s4458 + $0x60] sm:$0xf]
  %v4484 = vld [vmem:[%s4458 + $0x64] sm:$0xf]
  %v4485 = vld [vmem:[%s4458 + $0x68] sm:$0xf]
  %v4486 = vld [vmem:[%s4458 + $0x6c] sm:$0xf]
  %v4487 = vld [vmem:[%s4458 + $0x70] sm:$0xf]
  %v4488 = vld [vmem:[%s4458 + $0x74] sm:$0xf]
  %v4489 = vld [vmem:[%s4458 + $0x78] sm:$0xf]
  %v4490 = vld [vmem:[%s4458 + $0x7c] sm:$0xf]
  %v4491 = vld [vmem:[%s4458 + $0x80] sm:$0xf]
  %v4492 = vld [vmem:[%s4458 + $0x84] sm:$0xf]
  %v4493 = vld [vmem:[%s4458 + $0x88] sm:$0xf]
  %v4494 = vld [vmem:[%s4458 + $0x8c] sm:$0xf]
  %v4495 = vld [vmem:[%s4458 + $0x90] sm:$0xf]
  %v4496 = vld [vmem:[%s4458 + $0x94] sm:$0xf]
  %v4497 = vld [vmem:[%s4458 + $0x98] sm:$0xf]
  %v4498 = vld [vmem:[%s4458 + $0x9c] sm:$0xf]
  %v4499 = vld [vmem:[%s4458 + $0xa0] sm:$0xf]
  %v4500 = vld [vmem:[%s4458 + $0xa4] sm:$0xf]
  %v4501 = vld [vmem:[%s4458 + $0xa8] sm:$0xf]
  %v4502 = vld [vmem:[%s4458 + $0xac] sm:$0xf]
  %v4503 = vld [vmem:[%s4458 + $0xb0] sm:$0xf]
  %v4504 = vld [vmem:[%s4458 + $0xb4] sm:$0xf]
  %v4505 = vld [vmem:[%s4458 + $0xb8] sm:$0xf]
  %v4506 = vld [vmem:[%s4458 + $0xbc] sm:$0xf]
  %v4507 = vld [vmem:[%s4458 + $0xc0] sm:$0xf]
  %v4508 = vld [vmem:[%s4458 + $0xc4] sm:$0xf]
  %v4509 = vld [vmem:[%s4458 + $0xc8] sm:$0xf]
  %v4510 = vld [vmem:[%s4458 + $0xcc] sm:$0xf]
  %v4511 = vld [vmem:[%s4458 + $0xd0] sm:$0xf]
  %v4512 = vld [vmem:[%s4458 + $0xd4] sm:$0xf]
  %v4513 = vld [vmem:[%s4458 + $0xd8] sm:$0xf]
  %v4514 = vld [vmem:[%s4458 + $0xdc] sm:$0xf]
  %v4515 = vld [vmem:[%s4458 + $0xe0] sm:$0xf]
  %v4516 = vld [vmem:[%s4458 + $0xe4] sm:$0xf]
  %v4517 = vld [vmem:[%s4458 + $0xe8] sm:$0xf]
  %v4518 = vld [vmem:[%s4458 + $0xec] sm:$0xf]
  %v4519 = vld [vmem:[%s4458 + $0xf0] sm:$0xf]
  %v4520 = vld [vmem:[%s4458 + $0xf4] sm:$0xf]
  %v4521 = vld [vmem:[%s4458 + $0xf8] sm:$0xf]
  %v4522 = vld [vmem:[%s4458 + $0xfc] sm:$0xf]
  %v4587 = vunpack.c.l.b16 %v4459
  %v4588 = vunpack.c.l.b16 %v4460
  %v4589 = vunpack.c.l.b16 %v4461
  %v4590 = vunpack.c.l.b16 %v4462
  %v4591 = vunpack.c.l.b16 %v4463
  %v4592 = vunpack.c.l.b16 %v4464
  %v4593 = vunpack.c.l.b16 %v4465
  %v4594 = vunpack.c.l.b16 %v4466
  %v4595 = vunpack.c.l.b16 %v4467
  %v4596 = vunpack.c.l.b16 %v4468
  %v4597 = vunpack.c.l.b16 %v4469
  %v4598 = vunpack.c.l.b16 %v4470
  %v4599 = vunpack.c.l.b16 %v4471
  %v4600 = vunpack.c.l.b16 %v4472
  %v4601 = vunpack.c.l.b16 %v4473
  %v4602 = vunpack.c.l.b16 %v4474
  %v4603 = vunpack.c.l.b16 %v4475
  %v4604 = vunpack.c.l.b16 %v4476
  %v4605 = vunpack.c.l.b16 %v4477
  %v4606 = vunpack.c.l.b16 %v4478
  %v4607 = vunpack.c.l.b16 %v4479
  %v4608 = vunpack.c.l.b16 %v4480
  %v4609 = vunpack.c.l.b16 %v4481
  %v4610 = vunpack.c.l.b16 %v4482
  %v4611 = vunpack.c.l.b16 %v4483
  %v4612 = vunpack.c.l.b16 %v4484
  %v4613 = vunpack.c.l.b16 %v4485
  %v4614 = vunpack.c.l.b16 %v4486
  %v4615 = vunpack.c.l.b16 %v4487
  %v4616 = vunpack.c.l.b16 %v4488
  %v4617 = vunpack.c.l.b16 %v4489
  %v4618 = vunpack.c.l.b16 %v4490
  %v4619 = vunpack.c.l.b16 %v4491
  %v4620 = vunpack.c.l.b16 %v4492
  %v4621 = vunpack.c.l.b16 %v4493
  %v4622 = vunpack.c.l.b16 %v4494
  %v4623 = vunpack.c.l.b16 %v4495
  %v4624 = vunpack.c.l.b16 %v4496
  %v4625 = vunpack.c.l.b16 %v4497
  %v4626 = vunpack.c.l.b16 %v4498
  %v4627 = vunpack.c.l.b16 %v4499
  %v4628 = vunpack.c.l.b16 %v4500
  %v4629 = vunpack.c.l.b16 %v4501
  %v4630 = vunpack.c.l.b16 %v4502
  %v4631 = vunpack.c.l.b16 %v4503
  %v4632 = vunpack.c.l.b16 %v4504
  %v4633 = vunpack.c.l.b16 %v4505
  %v4634 = vunpack.c.l.b16 %v4506
  %v4635 = vunpack.c.l.b16 %v4507
  %v4636 = vunpack.c.l.b16 %v4508
  %v4637 = vunpack.c.l.b16 %v4509
  %v4638 = vunpack.c.l.b16 %v4510
  %v4639 = vunpack.c.l.b16 %v4511
  %v4640 = vunpack.c.l.b16 %v4512
  %v4641 = vunpack.c.l.b16 %v4513
  %v4642 = vunpack.c.l.b16 %v4514
  %v4643 = vunpack.c.l.b16 %v4515
  %v4644 = vunpack.c.l.b16 %v4516
  %v4645 = vunpack.c.l.b16 %v4517
  %v4646 = vunpack.c.l.b16 %v4518
  %v4647 = vunpack.c.l.b16 %v4519
  %v4648 = vunpack.c.l.b16 %v4520
  %v4649 = vunpack.c.l.b16 %v4521
  %v4650 = vunpack.c.l.b16 %v4522
  %v4651 = vpack.c.b16 %v4588, %v4587
  %v4652 = vpack.c.b16 %v4590, %v4589
  %v4653 = vpack.c.b16 %v4592, %v4591
  %v4654 = vpack.c.b16 %v4594, %v4593
  %v4655 = vpack.c.b16 %v4596, %v4595
  %v4656 = vpack.c.b16 %v4598, %v4597
  %v4657 = vpack.c.b16 %v4600, %v4599
  %v4658 = vpack.c.b16 %v4602, %v4601
  %v4659 = vpack.c.b16 %v4604, %v4603
  %v4660 = vpack.c.b16 %v4606, %v4605
  %v4661 = vpack.c.b16 %v4608, %v4607
  %v4662 = vpack.c.b16 %v4610, %v4609
  %v4663 = vpack.c.b16 %v4612, %v4611
  %v4664 = vpack.c.b16 %v4614, %v4613
  %v4665 = vpack.c.b16 %v4616, %v4615
  %v4666 = vpack.c.b16 %v4618, %v4617
  %v4667 = vpack.c.b16 %v4620, %v4619
  %v4668 = vpack.c.b16 %v4622, %v4621
  %v4669 = vpack.c.b16 %v4624, %v4623
  %v4670 = vpack.c.b16 %v4626, %v4625
  %v4671 = vpack.c.b16 %v4628, %v4627
  %v4672 = vpack.c.b16 %v4630, %v4629
  %v4673 = vpack.c.b16 %v4632, %v4631
  %v4674 = vpack.c.b16 %v4634, %v4633
  %v4675 = vpack.c.b16 %v4636, %v4635
  %v4676 = vpack.c.b16 %v4638, %v4637
  %v4677 = vpack.c.b16 %v4640, %v4639
  %v4678 = vpack.c.b16 %v4642, %v4641
  %v4679 = vpack.c.b16 %v4644, %v4643
  %v4680 = vpack.c.b16 %v4646, %v4645
  %v4681 = vpack.c.b16 %v4648, %v4647
  %v4682 = vpack.c.b16 %v4650, %v4649
  %4715 = vmatprep.subr.bf16.mxu0 0
  %4716 = vmatpush1.bf16.msra.mxu0 %v4651
  %4717 = vmatprep.subr.bf16.mxu0 0
  %4718 = vmatpush1.bf16.msra.mxu0 %v4652
  %4719 = vmatprep.subr.bf16.mxu0 0
  %4720 = vmatpush1.bf16.msra.mxu0 %v4653
  %4721 = vmatprep.subr.bf16.mxu0 0
  %4722 = vmatpush1.bf16.msra.mxu0 %v4654
  %4723 = vmatprep.subr.bf16.mxu0 0
  %4724 = vmatpush1.bf16.msra.mxu0 %v4655
  %4725 = vmatprep.subr.bf16.mxu0 0
  %4726 = vmatpush1.bf16.msra.mxu0 %v4656
  %4727 = vmatprep.subr.bf16.mxu0 0
  %4728 = vmatpush1.bf16.msra.mxu0 %v4657
  %4729 = vmatprep.subr.bf16.mxu0 0
  %4730 = vmatpush1.bf16.msra.mxu0 %v4658
  %4731 = vmatprep.subr.bf16.mxu0 0
  %4732 = vmatpush1.bf16.msra.mxu0 %v4659
  %4733 = vmatprep.subr.bf16.mxu0 0
  %4734 = vmatpush1.bf16.msra.mxu0 %v4660
  %4735 = vmatprep.subr.bf16.mxu0 0
  %4736 = vmatpush1.bf16.msra.mxu0 %v4661
  %4737 = vmatprep.subr.bf16.mxu0 0
  %4738 = vmatpush1.bf16.msra.mxu0 %v4662
  %4739 = vmatprep.subr.bf16.mxu0 0
  %4740 = vmatpush1.bf16.msra.mxu0 %v4663
  %4741 = vmatprep.subr.bf16.mxu0 0
  %4742 = vmatpush1.bf16.msra.mxu0 %v4664
  %4743 = vmatprep.subr.bf16.mxu0 0
  %4744 = vmatpush1.bf16.msra.mxu0 %v4665
  %4745 = vmatprep.subr.bf16.mxu0 0
  %4746 = vmatpush1.bf16.msra.mxu0 %v4666
  %4747 = vmatprep.mubr.bf16.mxu0 %v412
  %4748 = vmatmul.mubr.bf16.gmra.mrb[0].mxu0 %v411
  %v4749 = vpop.f32.mrb[0].mxu0
  %v4750 = vadd.f32 0.0, %v4749
  %v4751 = vpop.f32.mrb[0].mxu0
  %v4752 = vpop.f32.mrb[0].mxu0
  %v4753 = vpop.f32.mrb[0].mxu0
  %4754 = vdwg.mxu0
  %4755 = vmatprep.subr.bf16.mxu0 0
  %4756 = vmatpush1.bf16.msra.mxu0 %v4667
  %4757 = vmatprep.subr.bf16.mxu0 0
  %4758 = vmatpush1.bf16.msra.mxu0 %v4668
  %4759 = vmatprep.subr.bf16.mxu0 0
  %4760 = vmatpush1.bf16.msra.mxu0 %v4669
  %4761 = vmatprep.subr.bf16.mxu0 0
  %4762 = vmatpush1.bf16.msra.mxu0 %v4670
  %4763 = vmatprep.subr.bf16.mxu0 0
  %4764 = vmatpush1.bf16.msra.mxu0 %v4671
  %4765 = vmatprep.subr.bf16.mxu0 0
  %4766 = vmatpush1.bf16.msra.mxu0 %v4672
  %4767 = vmatprep.subr.bf16.mxu0 0
  %4768 = vmatpush1.bf16.msra.mxu0 %v4673
  %4769 = vmatprep.subr.bf16.mxu0 0
  %4770 = vmatpush1.bf16.msra.mxu0 %v4674
  %4771 = vmatprep.subr.bf16.mxu0 0
  %4772 = vmatpush1.bf16.msra.mxu0 %v4675
  %4773 = vmatprep.subr.bf16.mxu0 0
  %4774 = vmatpush1.bf16.msra.mxu0 %v4676
  %4775 = vmatprep.subr.bf16.mxu0 0
  %4776 = vmatpush1.bf16.msra.mxu0 %v4677
  %4777 = vmatprep.subr.bf16.mxu0 0
  %4778 = vmatpush1.bf16.msra.mxu0 %v4678
  %4779 = vmatprep.subr.bf16.mxu0 0
  %4780 = vmatpush1.bf16.msra.mxu0 %v4679
  %4781 = vmatprep.subr.bf16.mxu0 0
  %4782 = vmatpush1.bf16.msra.mxu0 %v4680
  %4783 = vmatprep.subr.bf16.mxu0 0
  %4784 = vmatpush1.bf16.msra.mxu0 %v4681
  %4785 = vmatprep.subr.bf16.mxu0 0
  %4786 = vmatpush1.bf16.msra.mxu0 %v4682
  %4787 = vmatprep.mubr.bf16.mxu0 %v414
  %4788 = vmatmul.mubr.bf16.gmra.mrb[0].mxu0 %v413
  %v4789 = vpop.f32.mrb[0].mxu0
  %v4790 = vadd.f32 %v4750, %v4789
  %v4791 = vpop.f32.mrb[0].mxu0
  %v4792 = vpop.f32.mrb[0].mxu0
  %v4793 = vpop.f32.mrb[0].mxu0
  %4794 = vdwg.mxu0
  %s4795 = scalar_lea.vmem %s2, 3328
  %v4796 = vld [vmem:[%s4795] sm:$0xf]
  %v4797 = vld [vmem:[%s4795 + $0x4] sm:$0xf]
  %v4798 = vld [vmem:[%s4795 + $0x8] sm:$0xf]
  %v4799 = vld [vmem:[%s4795 + $0xc] sm:$0xf]
  %v4800 = vld [vmem:[%s4795 + $0x10] sm:$0xf]
  %v4801 = vld [vmem:[%s4795 + $0x14] sm:$0xf]
  %v4802 = vld [vmem:[%s4795 + $0x18] sm:$0xf]
  %v4803 = vld [vmem:[%s4795 + $0x1c] sm:$0xf]
  %v4804 = vld [vmem:[%s4795 + $0x20] sm:$0xf]
  %v4805 = vld [vmem:[%s4795 + $0x24] sm:$0xf]
  %v4806 = vld [vmem:[%s4795 + $0x28] sm:$0xf]
  %v4807 = vld [vmem:[%s4795 + $0x2c] sm:$0xf]
  %v4808 = vld [vmem:[%s4795 + $0x30] sm:$0xf]
  %v4809 = vld [vmem:[%s4795 + $0x34] sm:$0xf]
  %v4810 = vld [vmem:[%s4795 + $0x38] sm:$0xf]
  %v4811 = vld [vmem:[%s4795 + $0x3c] sm:$0xf]
  %v4812 = vld [vmem:[%s4795 + $0x40] sm:$0xf]
  %v4813 = vld [vmem:[%s4795 + $0x44] sm:$0xf]
  %v4814 = vld [vmem:[%s4795 + $0x48] sm:$0xf]
  %v4815 = vld [vmem:[%s4795 + $0x4c] sm:$0xf]
  %v4816 = vld [vmem:[%s4795 + $0x50] sm:$0xf]
  %v4817 = vld [vmem:[%s4795 + $0x54] sm:$0xf]
  %v4818 = vld [vmem:[%s4795 + $0x58] sm:$0xf]
  %v4819 = vld [vmem:[%s4795 + $0x5c] sm:$0xf]
  %v4820 = vld [vmem:[%s4795 + $0x60] sm:$0xf]
  %v4821 = vld [vmem:[%s4795 + $0x64] sm:$0xf]
  %v4822 = vld [vmem:[%s4795 + $0x68] sm:$0xf]
  %v4823 = vld [vmem:[%s4795 + $0x6c] sm:$0xf]
  %v4824 = vld [vmem:[%s4795 + $0x70] sm:$0xf]
  %v4825 = vld [vmem:[%s4795 + $0x74] sm:$0xf]
  %v4826 = vld [vmem:[%s4795 + $0x78] sm:$0xf]
  %v4827 = vld [vmem:[%s4795 + $0x7c] sm:$0xf]
  %v4828 = vld [vmem:[%s4795 + $0x80] sm:$0xf]
  %v4829 = vld [vmem:[%s4795 + $0x84] sm:$0xf]
  %v4830 = vld [vmem:[%s4795 + $0x88] sm:$0xf]
  %v4831 = vld [vmem:[%s4795 + $0x8c] sm:$0xf]
  %v4832 = vld [vmem:[%s4795 + $0x90] sm:$0xf]
  %v4833 = vld [vmem:[%s4795 + $0x94] sm:$0xf]
  %v4834 = vld [vmem:[%s4795 + $0x98] sm:$0xf]
  %v4835 = vld [vmem:[%s4795 + $0x9c] sm:$0xf]
  %v4836 = vld [vmem:[%s4795 + $0xa0] sm:$0xf]
  %v4837 = vld [vmem:[%s4795 + $0xa4] sm:$0xf]
  %v4838 = vld [vmem:[%s4795 + $0xa8] sm:$0xf]
  %v4839 = vld [vmem:[%s4795 + $0xac] sm:$0xf]
  %v4840 = vld [vmem:[%s4795 + $0xb0] sm:$0xf]
  %v4841 = vld [vmem:[%s4795 + $0xb4] sm:$0xf]
  %v4842 = vld [vmem:[%s4795 + $0xb8] sm:$0xf]
  %v4843 = vld [vmem:[%s4795 + $0xbc] sm:$0xf]
  %v4844 = vld [vmem:[%s4795 + $0xc0] sm:$0xf]
  %v4845 = vld [vmem:[%s4795 + $0xc4] sm:$0xf]
  %v4846 = vld [vmem:[%s4795 + $0xc8] sm:$0xf]
  %v4847 = vld [vmem:[%s4795 + $0xcc] sm:$0xf]
  %v4848 = vld [vmem:[%s4795 + $0xd0] sm:$0xf]
  %v4849 = vld [vmem:[%s4795 + $0xd4] sm:$0xf]
  %v4850 = vld [vmem:[%s4795 + $0xd8] sm:$0xf]
  %v4851 = vld [vmem:[%s4795 + $0xdc] sm:$0xf]
  %v4852 = vld [vmem:[%s4795 + $0xe0] sm:$0xf]
  %v4853 = vld [vmem:[%s4795 + $0xe4] sm:$0xf]
  %v4854 = vld [vmem:[%s4795 + $0xe8] sm:$0xf]
  %v4855 = vld [vmem:[%s4795 + $0xec] sm:$0xf]
  %v4856 = vld [vmem:[%s4795 + $0xf0] sm:$0xf]
  %v4857 = vld [vmem:[%s4795 + $0xf4] sm:$0xf]
  %v4858 = vld [vmem:[%s4795 + $0xf8] sm:$0xf]
  %v4859 = vld [vmem:[%s4795 + $0xfc] sm:$0xf]
  %v4924 = vunpack.c.l.b16 %v4796
  %v4925 = vunpack.c.l.b16 %v4797
  %v4926 = vunpack.c.l.b16 %v4798
  %v4927 = vunpack.c.l.b16 %v4799
  %v4928 = vunpack.c.l.b16 %v4800
  %v4929 = vunpack.c.l.b16 %v4801
  %v4930 = vunpack.c.l.b16 %v4802
  %v4931 = vunpack.c.l.b16 %v4803
  %v4932 = vunpack.c.l.b16 %v4804
  %v4933 = vunpack.c.l.b16 %v4805
  %v4934 = vunpack.c.l.b16 %v4806
  %v4935 = vunpack.c.l.b16 %v4807
  %v4936 = vunpack.c.l.b16 %v4808
  %v4937 = vunpack.c.l.b16 %v4809
  %v4938 = vunpack.c.l.b16 %v4810
  %v4939 = vunpack.c.l.b16 %v4811
  %v4940 = vunpack.c.l.b16 %v4812
  %v4941 = vunpack.c.l.b16 %v4813
  %v4942 = vunpack.c.l.b16 %v4814
  %v4943 = vunpack.c.l.b16 %v4815
  %v4944 = vunpack.c.l.b16 %v4816
  %v4945 = vunpack.c.l.b16 %v4817
  %v4946 = vunpack.c.l.b16 %v4818
  %v4947 = vunpack.c.l.b16 %v4819
  %v4948 = vunpack.c.l.b16 %v4820
  %v4949 = vunpack.c.l.b16 %v4821
  %v4950 = vunpack.c.l.b16 %v4822
  %v4951 = vunpack.c.l.b16 %v4823
  %v4952 = vunpack.c.l.b16 %v4824
  %v4953 = vunpack.c.l.b16 %v4825
  %v4954 = vunpack.c.l.b16 %v4826
  %v4955 = vunpack.c.l.b16 %v4827
  %v4956 = vunpack.c.l.b16 %v4828
  %v4957 = vunpack.c.l.b16 %v4829
  %v4958 = vunpack.c.l.b16 %v4830
  %v4959 = vunpack.c.l.b16 %v4831
  %v4960 = vunpack.c.l.b16 %v4832
  %v4961 = vunpack.c.l.b16 %v4833
  %v4962 = vunpack.c.l.b16 %v4834
  %v4963 = vunpack.c.l.b16 %v4835
  %v4964 = vunpack.c.l.b16 %v4836
  %v4965 = vunpack.c.l.b16 %v4837
  %v4966 = vunpack.c.l.b16 %v4838
  %v4967 = vunpack.c.l.b16 %v4839
  %v4968 = vunpack.c.l.b16 %v4840
  %v4969 = vunpack.c.l.b16 %v4841
  %v4970 = vunpack.c.l.b16 %v4842
  %v4971 = vunpack.c.l.b16 %v4843
  %v4972 = vunpack.c.l.b16 %v4844
  %v4973 = vunpack.c.l.b16 %v4845
  %v4974 = vunpack.c.l.b16 %v4846
  %v4975 = vunpack.c.l.b16 %v4847
  %v4976 = vunpack.c.l.b16 %v4848
  %v4977 = vunpack.c.l.b16 %v4849
  %v4978 = vunpack.c.l.b16 %v4850
  %v4979 = vunpack.c.l.b16 %v4851
  %v4980 = vunpack.c.l.b16 %v4852
  %v4981 = vunpack.c.l.b16 %v4853
  %v4982 = vunpack.c.l.b16 %v4854
  %v4983 = vunpack.c.l.b16 %v4855
  %v4984 = vunpack.c.l.b16 %v4856
  %v4985 = vunpack.c.l.b16 %v4857
  %v4986 = vunpack.c.l.b16 %v4858
  %v4987 = vunpack.c.l.b16 %v4859
  %v4988 = vpack.c.b16 %v4925, %v4924
  %v4989 = vpack.c.b16 %v4927, %v4926
  %v4990 = vpack.c.b16 %v4929, %v4928
  %v4991 = vpack.c.b16 %v4931, %v4930
  %v4992 = vpack.c.b16 %v4933, %v4932
  %v4993 = vpack.c.b16 %v4935, %v4934
  %v4994 = vpack.c.b16 %v4937, %v4936
  %v4995 = vpack.c.b16 %v4939, %v4938
  %v4996 = vpack.c.b16 %v4941, %v4940
  %v4997 = vpack.c.b16 %v4943, %v4942
  %v4998 = vpack.c.b16 %v4945, %v4944
  %v4999 = vpack.c.b16 %v4947, %v4946
  %v5000 = vpack.c.b16 %v4949, %v4948
  %v5001 = vpack.c.b16 %v4951, %v4950
  %v5002 = vpack.c.b16 %v4953, %v4952
  %v5003 = vpack.c.b16 %v4955, %v4954
  %v5004 = vpack.c.b16 %v4957, %v4956
  %v5005 = vpack.c.b16 %v4959, %v4958
  %v5006 = vpack.c.b16 %v4961, %v4960
  %v5007 = vpack.c.b16 %v4963, %v4962
  %v5008 = vpack.c.b16 %v4965, %v4964
  %v5009 = vpack.c.b16 %v4967, %v4966
  %v5010 = vpack.c.b16 %v4969, %v4968
  %v5011 = vpack.c.b16 %v4971, %v4970
  %v5012 = vpack.c.b16 %v4973, %v4972
  %v5013 = vpack.c.b16 %v4975, %v4974
  %v5014 = vpack.c.b16 %v4977, %v4976
  %v5015 = vpack.c.b16 %v4979, %v4978
  %v5016 = vpack.c.b16 %v4981, %v4980
  %v5017 = vpack.c.b16 %v4983, %v4982
  %v5018 = vpack.c.b16 %v4985, %v4984
  %v5019 = vpack.c.b16 %v4987, %v4986
  %5052 = vmatprep.subr.bf16.mxu0 0
  %5053 = vmatpush1.bf16.msra.mxu0 %v4988
  %5054 = vmatprep.subr.bf16.mxu0 0
  %5055 = vmatpush1.bf16.msra.mxu0 %v4989
  %5056 = vmatprep.subr.bf16.mxu0 0
  %5057 = vmatpush1.bf16.msra.mxu0 %v4990
  %5058 = vmatprep.subr.bf16.mxu0 0
  %5059 = vmatpush1.bf16.msra.mxu0 %v4991
  %5060 = vmatprep.subr.bf16.mxu0 0
  %5061 = vmatpush1.bf16.msra.mxu0 %v4992
  %5062 = vmatprep.subr.bf16.mxu0 0
  %5063 = vmatpush1.bf16.msra.mxu0 %v4993
  %5064 = vmatprep.subr.bf16.mxu0 0
  %5065 = vmatpush1.bf16.msra.mxu0 %v4994
  %5066 = vmatprep.subr.bf16.mxu0 0
  %5067 = vmatpush1.bf16.msra.mxu0 %v4995
  %5068 = vmatprep.subr.bf16.mxu0 0
  %5069 = vmatpush1.bf16.msra.mxu0 %v4996
  %5070 = vmatprep.subr.bf16.mxu0 0
  %5071 = vmatpush1.bf16.msra.mxu0 %v4997
  %5072 = vmatprep.subr.bf16.mxu0 0
  %5073 = vmatpush1.bf16.msra.mxu0 %v4998
  %5074 = vmatprep.subr.bf16.mxu0 0
  %5075 = vmatpush1.bf16.msra.mxu0 %v4999
  %5076 = vmatprep.subr.bf16.mxu0 0
  %5077 = vmatpush1.bf16.msra.mxu0 %v5000
  %5078 = vmatprep.subr.bf16.mxu0 0
  %5079 = vmatpush1.bf16.msra.mxu0 %v5001
  %5080 = vmatprep.subr.bf16.mxu0 0
  %5081 = vmatpush1.bf16.msra.mxu0 %v5002
  %5082 = vmatprep.subr.bf16.mxu0 0
  %5083 = vmatpush1.bf16.msra.mxu0 %v5003
  %5084 = vmatprep.mubr.bf16.mxu0 %v412
  %5085 = vmatmul.mubr.bf16.gmra.mrb[0].mxu0 %v411
  %v5086 = vpop.f32.mrb[0].mxu0
  %v5087 = vadd.f32 0.0, %v5086
  %v5088 = vpop.f32.mrb[0].mxu0
  %v5089 = vpop.f32.mrb[0].mxu0
  %v5090 = vpop.f32.mrb[0].mxu0
  %5091 = vdwg.mxu0
  %5092 = vmatprep.subr.bf16.mxu0 0
  %5093 = vmatpush1.bf16.msra.mxu0 %v5004
  %5094 = vmatprep.subr.bf16.mxu0 0
  %5095 = vmatpush1.bf16.msra.mxu0 %v5005
  %5096 = vmatprep.subr.bf16.mxu0 0
  %5097 = vmatpush1.bf16.msra.mxu0 %v5006
  %5098 = vmatprep.subr.bf16.mxu0 0
  %5099 = vmatpush1.bf16.msra.mxu0 %v5007
  %5100 = vmatprep.subr.bf16.mxu0 0
  %5101 = vmatpush1.bf16.msra.mxu0 %v5008
  %5102 = vmatprep.subr.bf16.mxu0 0
  %5103 = vmatpush1.bf16.msra.mxu0 %v5009
  %5104 = vmatprep.subr.bf16.mxu0 0
  %5105 = vmatpush1.bf16.msra.mxu0 %v5010
  %5106 = vmatprep.subr.bf16.mxu0 0
  %5107 = vmatpush1.bf16.msra.mxu0 %v5011
  %5108 = vmatprep.subr.bf16.mxu0 0
  %5109 = vmatpush1.bf16.msra.mxu0 %v5012
  %5110 = vmatprep.subr.bf16.mxu0 0
  %5111 = vmatpush1.bf16.msra.mxu0 %v5013
  %5112 = vmatprep.subr.bf16.mxu0 0
  %5113 = vmatpush1.bf16.msra.mxu0 %v5014
  %5114 = vmatprep.subr.bf16.mxu0 0
  %5115 = vmatpush1.bf16.msra.mxu0 %v5015
  %5116 = vmatprep.subr.bf16.mxu0 0
  %5117 = vmatpush1.bf16.msra.mxu0 %v5016
  %5118 = vmatprep.subr.bf16.mxu0 0
  %5119 = vmatpush1.bf16.msra.mxu0 %v5017
  %5120 = vmatprep.subr.bf16.mxu0 0
  %5121 = vmatpush1.bf16.msra.mxu0 %v5018
  %5122 = vmatprep.subr.bf16.mxu0 0
  %5123 = vmatpush1.bf16.msra.mxu0 %v5019
  %5124 = vmatprep.mubr.bf16.mxu0 %v414
  %5125 = vmatmul.mubr.bf16.gmra.mrb[0].mxu0 %v413
  %v5126 = vpop.f32.mrb[0].mxu0
  %v5127 = vadd.f32 %v5087, %v5126
  %v5128 = vpop.f32.mrb[0].mxu0
  %v5129 = vpop.f32.mrb[0].mxu0
  %v5130 = vpop.f32.mrb[0].mxu0
  %5131 = vdwg.mxu0
  %s5132 = scalar_lea.vmem %s2, 3584
  %v5133 = vld [vmem:[%s5132] sm:$0xf]
  %v5134 = vld [vmem:[%s5132 + $0x4] sm:$0xf]
  %v5135 = vld [vmem:[%s5132 + $0x8] sm:$0xf]
  %v5136 = vld [vmem:[%s5132 + $0xc] sm:$0xf]
  %v5137 = vld [vmem:[%s5132 + $0x10] sm:$0xf]
  %v5138 = vld [vmem:[%s5132 + $0x14] sm:$0xf]
  %v5139 = vld [vmem:[%s5132 + $0x18] sm:$0xf]
  %v5140 = vld [vmem:[%s5132 + $0x1c] sm:$0xf]
  %v5141 = vld [vmem:[%s5132 + $0x20] sm:$0xf]
  %v5142 = vld [vmem:[%s5132 + $0x24] sm:$0xf]
  %v5143 = vld [vmem:[%s5132 + $0x28] sm:$0xf]
  %v5144 = vld [vmem:[%s5132 + $0x2c] sm:$0xf]
  %v5145 = vld [vmem:[%s5132 + $0x30] sm:$0xf]
  %v5146 = vld [vmem:[%s5132 + $0x34] sm:$0xf]
  %v5147 = vld [vmem:[%s5132 + $0x38] sm:$0xf]
  %v5148 = vld [vmem:[%s5132 + $0x3c] sm:$0xf]
  %v5149 = vld [vmem:[%s5132 + $0x40] sm:$0xf]
  %v5150 = vld [vmem:[%s5132 + $0x44] sm:$0xf]
  %v5151 = vld [vmem:[%s5132 + $0x48] sm:$0xf]
  %v5152 = vld [vmem:[%s5132 + $0x4c] sm:$0xf]
  %v5153 = vld [vmem:[%s5132 + $0x50] sm:$0xf]
  %v5154 = vld [vmem:[%s5132 + $0x54] sm:$0xf]
  %v5155 = vld [vmem:[%s5132 + $0x58] sm:$0xf]
  %v5156 = vld [vmem:[%s5132 + $0x5c] sm:$0xf]
  %v5157 = vld [vmem:[%s5132 + $0x60] sm:$0xf]
  %v5158 = vld [vmem:[%s5132 + $0x64] sm:$0xf]
  %v5159 = vld [vmem:[%s5132 + $0x68] sm:$0xf]
  %v5160 = vld [vmem:[%s5132 + $0x6c] sm:$0xf]
  %v5161 = vld [vmem:[%s5132 + $0x70] sm:$0xf]
  %v5162 = vld [vmem:[%s5132 + $0x74] sm:$0xf]
  %v5163 = vld [vmem:[%s5132 + $0x78] sm:$0xf]
  %v5164 = vld [vmem:[%s5132 + $0x7c] sm:$0xf]
  %v5165 = vld [vmem:[%s5132 + $0x80] sm:$0xf]
  %v5166 = vld [vmem:[%s5132 + $0x84] sm:$0xf]
  %v5167 = vld [vmem:[%s5132 + $0x88] sm:$0xf]
  %v5168 = vld [vmem:[%s5132 + $0x8c] sm:$0xf]
  %v5169 = vld [vmem:[%s5132 + $0x90] sm:$0xf]
  %v5170 = vld [vmem:[%s5132 + $0x94] sm:$0xf]
  %v5171 = vld [vmem:[%s5132 + $0x98] sm:$0xf]
  %v5172 = vld [vmem:[%s5132 + $0x9c] sm:$0xf]
  %v5173 = vld [vmem:[%s5132 + $0xa0] sm:$0xf]
  %v5174 = vld [vmem:[%s5132 + $0xa4] sm:$0xf]
  %v5175 = vld [vmem:[%s5132 + $0xa8] sm:$0xf]
  %v5176 = vld [vmem:[%s5132 + $0xac] sm:$0xf]
  %v5177 = vld [vmem:[%s5132 + $0xb0] sm:$0xf]
  %v5178 = vld [vmem:[%s5132 + $0xb4] sm:$0xf]
  %v5179 = vld [vmem:[%s5132 + $0xb8] sm:$0xf]
  %v5180 = vld [vmem:[%s5132 + $0xbc] sm:$0xf]
  %v5181 = vld [vmem:[%s5132 + $0xc0] sm:$0xf]
  %v5182 = vld [vmem:[%s5132 + $0xc4] sm:$0xf]
  %v5183 = vld [vmem:[%s5132 + $0xc8] sm:$0xf]
  %v5184 = vld [vmem:[%s5132 + $0xcc] sm:$0xf]
  %v5185 = vld [vmem:[%s5132 + $0xd0] sm:$0xf]
  %v5186 = vld [vmem:[%s5132 + $0xd4] sm:$0xf]
  %v5187 = vld [vmem:[%s5132 + $0xd8] sm:$0xf]
  %v5188 = vld [vmem:[%s5132 + $0xdc] sm:$0xf]
  %v5189 = vld [vmem:[%s5132 + $0xe0] sm:$0xf]
  %v5190 = vld [vmem:[%s5132 + $0xe4] sm:$0xf]
  %v5191 = vld [vmem:[%s5132 + $0xe8] sm:$0xf]
  %v5192 = vld [vmem:[%s5132 + $0xec] sm:$0xf]
  %v5193 = vld [vmem:[%s5132 + $0xf0] sm:$0xf]
  %v5194 = vld [vmem:[%s5132 + $0xf4] sm:$0xf]
  %v5195 = vld [vmem:[%s5132 + $0xf8] sm:$0xf]
  %v5196 = vld [vmem:[%s5132 + $0xfc] sm:$0xf]
  %v5261 = vunpack.c.l.b16 %v5133
  %v5262 = vunpack.c.l.b16 %v5134
  %v5263 = vunpack.c.l.b16 %v5135
  %v5264 = vunpack.c.l.b16 %v5136
  %v5265 = vunpack.c.l.b16 %v5137
  %v5266 = vunpack.c.l.b16 %v5138
  %v5267 = vunpack.c.l.b16 %v5139
  %v5268 = vunpack.c.l.b16 %v5140
  %v5269 = vunpack.c.l.b16 %v5141
  %v5270 = vunpack.c.l.b16 %v5142
  %v5271 = vunpack.c.l.b16 %v5143
  %v5272 = vunpack.c.l.b16 %v5144
  %v5273 = vunpack.c.l.b16 %v5145
  %v5274 = vunpack.c.l.b16 %v5146
  %v5275 = vunpack.c.l.b16 %v5147
  %v5276 = vunpack.c.l.b16 %v5148
  %v5277 = vunpack.c.l.b16 %v5149
  %v5278 = vunpack.c.l.b16 %v5150
  %v5279 = vunpack.c.l.b16 %v5151
  %v5280 = vunpack.c.l.b16 %v5152
  %v5281 = vunpack.c.l.b16 %v5153
  %v5282 = vunpack.c.l.b16 %v5154
  %v5283 = vunpack.c.l.b16 %v5155
  %v5284 = vunpack.c.l.b16 %v5156
  %v5285 = vunpack.c.l.b16 %v5157
  %v5286 = vunpack.c.l.b16 %v5158
  %v5287 = vunpack.c.l.b16 %v5159
  %v5288 = vunpack.c.l.b16 %v5160
  %v5289 = vunpack.c.l.b16 %v5161
  %v5290 = vunpack.c.l.b16 %v5162
  %v5291 = vunpack.c.l.b16 %v5163
  %v5292 = vunpack.c.l.b16 %v5164
  %v5293 = vunpack.c.l.b16 %v5165
  %v5294 = vunpack.c.l.b16 %v5166
  %v5295 = vunpack.c.l.b16 %v5167
  %v5296 = vunpack.c.l.b16 %v5168
  %v5297 = vunpack.c.l.b16 %v5169
  %v5298 = vunpack.c.l.b16 %v5170
  %v5299 = vunpack.c.l.b16 %v5171
  %v5300 = vunpack.c.l.b16 %v5172
  %v5301 = vunpack.c.l.b16 %v5173
  %v5302 = vunpack.c.l.b16 %v5174
  %v5303 = vunpack.c.l.b16 %v5175
  %v5304 = vunpack.c.l.b16 %v5176
  %v5305 = vunpack.c.l.b16 %v5177
  %v5306 = vunpack.c.l.b16 %v5178
  %v5307 = vunpack.c.l.b16 %v5179
  %v5308 = vunpack.c.l.b16 %v5180
  %v5309 = vunpack.c.l.b16 %v5181
  %v5310 = vunpack.c.l.b16 %v5182
  %v5311 = vunpack.c.l.b16 %v5183
  %v5312 = vunpack.c.l.b16 %v5184
  %v5313 = vunpack.c.l.b16 %v5185
  %v5314 = vunpack.c.l.b16 %v5186
  %v5315 = vunpack.c.l.b16 %v5187
  %v5316 = vunpack.c.l.b16 %v5188
  %v5317 = vunpack.c.l.b16 %v5189
  %v5318 = vunpack.c.l.b16 %v5190
  %v5319 = vunpack.c.l.b16 %v5191
  %v5320 = vunpack.c.l.b16 %v5192
  %v5321 = vunpack.c.l.b16 %v5193
  %v5322 = vunpack.c.l.b16 %v5194
  %v5323 = vunpack.c.l.b16 %v5195
  %v5324 = vunpack.c.l.b16 %v5196
  %v5325 = vpack.c.b16 %v5262, %v5261
  %v5326 = vpack.c.b16 %v5264, %v5263
  %v5327 = vpack.c.b16 %v5266, %v5265
  %v5328 = vpack.c.b16 %v5268, %v5267
  %v5329 = vpack.c.b16 %v5270, %v5269
  %v5330 = vpack.c.b16 %v5272, %v5271
  %v5331 = vpack.c.b16 %v5274, %v5273
  %v5332 = vpack.c.b16 %v5276, %v5275
  %v5333 = vpack.c.b16 %v5278, %v5277
  %v5334 = vpack.c.b16 %v5280, %v5279
  %v5335 = vpack.c.b16 %v5282, %v5281
  %v5336 = vpack.c.b16 %v5284, %v5283
  %v5337 = vpack.c.b16 %v5286, %v5285
  %v5338 = vpack.c.b16 %v5288, %v5287
  %v5339 = vpack.c.b16 %v5290, %v5289
  %v5340 = vpack.c.b16 %v5292, %v5291
  %v5341 = vpack.c.b16 %v5294, %v5293
  %v5342 = vpack.c.b16 %v5296, %v5295
  %v5343 = vpack.c.b16 %v5298, %v5297
  %v5344 = vpack.c.b16 %v5300, %v5299
  %v5345 = vpack.c.b16 %v5302, %v5301
  %v5346 = vpack.c.b16 %v5304, %v5303
  %v5347 = vpack.c.b16 %v5306, %v5305
  %v5348 = vpack.c.b16 %v5308, %v5307
  %v5349 = vpack.c.b16 %v5310, %v5309
  %v5350 = vpack.c.b16 %v5312, %v5311
  %v5351 = vpack.c.b16 %v5314, %v5313
  %v5352 = vpack.c.b16 %v5316, %v5315
  %v5353 = vpack.c.b16 %v5318, %v5317
  %v5354 = vpack.c.b16 %v5320, %v5319
  %v5355 = vpack.c.b16 %v5322, %v5321
  %v5356 = vpack.c.b16 %v5324, %v5323
  %5389 = vmatprep.subr.bf16.mxu0 0
  %5390 = vmatpush1.bf16.msra.mxu0 %v5325
  %5391 = vmatprep.subr.bf16.mxu0 0
  %5392 = vmatpush1.bf16.msra.mxu0 %v5326
  %5393 = vmatprep.subr.bf16.mxu0 0
  %5394 = vmatpush1.bf16.msra.mxu0 %v5327
  %5395 = vmatprep.subr.bf16.mxu0 0
  %5396 = vmatpush1.bf16.msra.mxu0 %v5328
  %5397 = vmatprep.subr.bf16.mxu0 0
  %5398 = vmatpush1.bf16.msra.mxu0 %v5329
  %5399 = vmatprep.subr.bf16.mxu0 0
  %5400 = vmatpush1.bf16.msra.mxu0 %v5330
  %5401 = vmatprep.subr.bf16.mxu0 0
  %5402 = vmatpush1.bf16.msra.mxu0 %v5331
  %5403 = vmatprep.subr.bf16.mxu0 0
  %5404 = vmatpush1.bf16.msra.mxu0 %v5332
  %5405 = vmatprep.subr.bf16.mxu0 0
  %5406 = vmatpush1.bf16.msra.mxu0 %v5333
  %5407 = vmatprep.subr.bf16.mxu0 0
  %5408 = vmatpush1.bf16.msra.mxu0 %v5334
  %5409 = vmatprep.subr.bf16.mxu0 0
  %5410 = vmatpush1.bf16.msra.mxu0 %v5335
  %5411 = vmatprep.subr.bf16.mxu0 0
  %5412 = vmatpush1.bf16.msra.mxu0 %v5336
  %5413 = vmatprep.subr.bf16.mxu0 0
  %5414 = vmatpush1.bf16.msra.mxu0 %v5337
  %5415 = vmatprep.subr.bf16.mxu0 0
  %5416 = vmatpush1.bf16.msra.mxu0 %v5338
  %5417 = vmatprep.subr.bf16.mxu0 0
  %5418 = vmatpush1.bf16.msra.mxu0 %v5339
  %5419 = vmatprep.subr.bf16.mxu0 0
  %5420 = vmatpush1.bf16.msra.mxu0 %v5340
  %5421 = vmatprep.mubr.bf16.mxu0 %v412
  %5422 = vmatmul.mubr.bf16.gmra.mrb[0].mxu0 %v411
  %v5423 = vpop.f32.mrb[0].mxu0
  %v5424 = vadd.f32 0.0, %v5423
  %v5425 = vpop.f32.mrb[0].mxu0
  %v5426 = vpop.f32.mrb[0].mxu0
  %v5427 = vpop.f32.mrb[0].mxu0
  %5428 = vdwg.mxu0
  %5429 = vmatprep.subr.bf16.mxu0 0
  %5430 = vmatpush1.bf16.msra.mxu0 %v5341
  %5431 = vmatprep.subr.bf16.mxu0 0
  %5432 = vmatpush1.bf16.msra.mxu0 %v5342
  %5433 = vmatprep.subr.bf16.mxu0 0
  %5434 = vmatpush1.bf16.msra.mxu0 %v5343
  %5435 = vmatprep.subr.bf16.mxu0 0
  %5436 = vmatpush1.bf16.msra.mxu0 %v5344
  %5437 = vmatprep.subr.bf16.mxu0 0
  %5438 = vmatpush1.bf16.msra.mxu0 %v5345
  %5439 = vmatprep.subr.bf16.mxu0 0
  %5440 = vmatpush1.bf16.msra.mxu0 %v5346
  %5441 = vmatprep.subr.bf16.mxu0 0
  %5442 = vmatpush1.bf16.msra.mxu0 %v5347
  %5443 = vmatprep.subr.bf16.mxu0 0
  %5444 = vmatpush1.bf16.msra.mxu0 %v5348
  %5445 = vmatprep.subr.bf16.mxu0 0
  %5446 = vmatpush1.bf16.msra.mxu0 %v5349
  %5447 = vmatprep.subr.bf16.mxu0 0
  %5448 = vmatpush1.bf16.msra.mxu0 %v5350
  %5449 = vmatprep.subr.bf16.mxu0 0
  %5450 = vmatpush1.bf16.msra.mxu0 %v5351
  %5451 = vmatprep.subr.bf16.mxu0 0
  %5452 = vmatpush1.bf16.msra.mxu0 %v5352
  %5453 = vmatprep.subr.bf16.mxu0 0
  %5454 = vmatpush1.bf16.msra.mxu0 %v5353
  %5455 = vmatprep.subr.bf16.mxu0 0
  %5456 = vmatpush1.bf16.msra.mxu0 %v5354
  %5457 = vmatprep.subr.bf16.mxu0 0
  %5458 = vmatpush1.bf16.msra.mxu0 %v5355
  %5459 = vmatprep.subr.bf16.mxu0 0
  %5460 = vmatpush1.bf16.msra.mxu0 %v5356
  %5461 = vmatprep.mubr.bf16.mxu0 %v414
  %5462 = vmatmul.mubr.bf16.gmra.mrb[0].mxu0 %v413
  %v5463 = vpop.f32.mrb[0].mxu0
  %v5464 = vadd.f32 %v5424, %v5463
  %v5465 = vpop.f32.mrb[0].mxu0
  %v5466 = vpop.f32.mrb[0].mxu0
  %v5467 = vpop.f32.mrb[0].mxu0
  %5468 = vdwg.mxu0
  %s5469 = scalar_lea.vmem %s2, 3840
  %v5470 = vld [vmem:[%s5469] sm:$0xf]
  %v5471 = vld [vmem:[%s5469 + $0x4] sm:$0xf]
  %v5472 = vld [vmem:[%s5469 + $0x8] sm:$0xf]
  %v5473 = vld [vmem:[%s5469 + $0xc] sm:$0xf]
  %v5474 = vld [vmem:[%s5469 + $0x10] sm:$0xf]
  %v5475 = vld [vmem:[%s5469 + $0x14] sm:$0xf]
  %v5476 = vld [vmem:[%s5469 + $0x18] sm:$0xf]
  %v5477 = vld [vmem:[%s5469 + $0x1c] sm:$0xf]
  %v5478 = vld [vmem:[%s5469 + $0x20] sm:$0xf]
  %v5479 = vld [vmem:[%s5469 + $0x24] sm:$0xf]
  %v5480 = vld [vmem:[%s5469 + $0x28] sm:$0xf]
  %v5481 = vld [vmem:[%s5469 + $0x2c] sm:$0xf]
  %v5482 = vld [vmem:[%s5469 + $0x30] sm:$0xf]
  %v5483 = vld [vmem:[%s5469 + $0x34] sm:$0xf]
  %v5484 = vld [vmem:[%s5469 + $0x38] sm:$0xf]
  %v5485 = vld [vmem:[%s5469 + $0x3c] sm:$0xf]
  %v5486 = vld [vmem:[%s5469 + $0x40] sm:$0xf]
  %v5487 = vld [vmem:[%s5469 + $0x44] sm:$0xf]
  %v5488 = vld [vmem:[%s5469 + $0x48] sm:$0xf]
  %v5489 = vld [vmem:[%s5469 + $0x4c] sm:$0xf]
  %v5490 = vld [vmem:[%s5469 + $0x50] sm:$0xf]
  %v5491 = vld [vmem:[%s5469 + $0x54] sm:$0xf]
  %v5492 = vld [vmem:[%s5469 + $0x58] sm:$0xf]
  %v5493 = vld [vmem:[%s5469 + $0x5c] sm:$0xf]
  %v5494 = vld [vmem:[%s5469 + $0x60] sm:$0xf]
  %v5495 = vld [vmem:[%s5469 + $0x64] sm:$0xf]
  %v5496 = vld [vmem:[%s5469 + $0x68] sm:$0xf]
  %v5497 = vld [vmem:[%s5469 + $0x6c] sm:$0xf]
  %v5498 = vld [vmem:[%s5469 + $0x70] sm:$0xf]
  %v5499 = vld [vmem:[%s5469 + $0x74] sm:$0xf]
  %v5500 = vld [vmem:[%s5469 + $0x78] sm:$0xf]
  %v5501 = vld [vmem:[%s5469 + $0x7c] sm:$0xf]
  %v5502 = vld [vmem:[%s5469 + $0x80] sm:$0xf]
  %v5503 = vld [vmem:[%s5469 + $0x84] sm:$0xf]
  %v5504 = vld [vmem:[%s5469 + $0x88] sm:$0xf]
  %v5505 = vld [vmem:[%s5469 + $0x8c] sm:$0xf]
  %v5506 = vld [vmem:[%s5469 + $0x90] sm:$0xf]
  %v5507 = vld [vmem:[%s5469 + $0x94] sm:$0xf]
  %v5508 = vld [vmem:[%s5469 + $0x98] sm:$0xf]
  %v5509 = vld [vmem:[%s5469 + $0x9c] sm:$0xf]
  %v5510 = vld [vmem:[%s5469 + $0xa0] sm:$0xf]
  %v5511 = vld [vmem:[%s5469 + $0xa4] sm:$0xf]
  %v5512 = vld [vmem:[%s5469 + $0xa8] sm:$0xf]
  %v5513 = vld [vmem:[%s5469 + $0xac] sm:$0xf]
  %v5514 = vld [vmem:[%s5469 + $0xb0] sm:$0xf]
  %v5515 = vld [vmem:[%s5469 + $0xb4] sm:$0xf]
  %v5516 = vld [vmem:[%s5469 + $0xb8] sm:$0xf]
  %v5517 = vld [vmem:[%s5469 + $0xbc] sm:$0xf]
  %v5518 = vld [vmem:[%s5469 + $0xc0] sm:$0xf]
  %v5519 = vld [vmem:[%s5469 + $0xc4] sm:$0xf]
  %v5520 = vld [vmem:[%s5469 + $0xc8] sm:$0xf]
  %v5521 = vld [vmem:[%s5469 + $0xcc] sm:$0xf]
  %v5522 = vld [vmem:[%s5469 + $0xd0] sm:$0xf]
  %v5523 = vld [vmem:[%s5469 + $0xd4] sm:$0xf]
  %v5524 = vld [vmem:[%s5469 + $0xd8] sm:$0xf]
  %v5525 = vld [vmem:[%s5469 + $0xdc] sm:$0xf]
  %v5526 = vld [vmem:[%s5469 + $0xe0] sm:$0xf]
  %v5527 = vld [vmem:[%s5469 + $0xe4] sm:$0xf]
  %v5528 = vld [vmem:[%s5469 + $0xe8] sm:$0xf]
  %v5529 = vld [vmem:[%s5469 + $0xec] sm:$0xf]
  %v5530 = vld [vmem:[%s5469 + $0xf0] sm:$0xf]
  %v5531 = vld [vmem:[%s5469 + $0xf4] sm:$0xf]
  %v5532 = vld [vmem:[%s5469 + $0xf8] sm:$0xf]
  %v5533 = vld [vmem:[%s5469 + $0xfc] sm:$0xf]
  %v5598 = vunpack.c.l.b16 %v5470
  %v5599 = vunpack.c.l.b16 %v5471
  %v5600 = vunpack.c.l.b16 %v5472
  %v5601 = vunpack.c.l.b16 %v5473
  %v5602 = vunpack.c.l.b16 %v5474
  %v5603 = vunpack.c.l.b16 %v5475
  %v5604 = vunpack.c.l.b16 %v5476
  %v5605 = vunpack.c.l.b16 %v5477
  %v5606 = vunpack.c.l.b16 %v5478
  %v5607 = vunpack.c.l.b16 %v5479
  %v5608 = vunpack.c.l.b16 %v5480
  %v5609 = vunpack.c.l.b16 %v5481
  %v5610 = vunpack.c.l.b16 %v5482
  %v5611 = vunpack.c.l.b16 %v5483
  %v5612 = vunpack.c.l.b16 %v5484
  %v5613 = vunpack.c.l.b16 %v5485
  %v5614 = vunpack.c.l.b16 %v5486
  %v5615 = vunpack.c.l.b16 %v5487
  %v5616 = vunpack.c.l.b16 %v5488
  %v5617 = vunpack.c.l.b16 %v5489
  %v5618 = vunpack.c.l.b16 %v5490
  %v5619 = vunpack.c.l.b16 %v5491
  %v5620 = vunpack.c.l.b16 %v5492
  %v5621 = vunpack.c.l.b16 %v5493
  %v5622 = vunpack.c.l.b16 %v5494
  %v5623 = vunpack.c.l.b16 %v5495
  %v5624 = vunpack.c.l.b16 %v5496
  %v5625 = vunpack.c.l.b16 %v5497
  %v5626 = vunpack.c.l.b16 %v5498
  %v5627 = vunpack.c.l.b16 %v5499
  %v5628 = vunpack.c.l.b16 %v5500
  %v5629 = vunpack.c.l.b16 %v5501
  %v5630 = vunpack.c.l.b16 %v5502
  %v5631 = vunpack.c.l.b16 %v5503
  %v5632 = vunpack.c.l.b16 %v5504
  %v5633 = vunpack.c.l.b16 %v5505
  %v5634 = vunpack.c.l.b16 %v5506
  %v5635 = vunpack.c.l.b16 %v5507
  %v5636 = vunpack.c.l.b16 %v5508
  %v5637 = vunpack.c.l.b16 %v5509
  %v5638 = vunpack.c.l.b16 %v5510
  %v5639 = vunpack.c.l.b16 %v5511
  %v5640 = vunpack.c.l.b16 %v5512
  %v5641 = vunpack.c.l.b16 %v5513
  %v5642 = vunpack.c.l.b16 %v5514
  %v5643 = vunpack.c.l.b16 %v5515
  %v5644 = vunpack.c.l.b16 %v5516
  %v5645 = vunpack.c.l.b16 %v5517
  %v5646 = vunpack.c.l.b16 %v5518
  %v5647 = vunpack.c.l.b16 %v5519
  %v5648 = vunpack.c.l.b16 %v5520
  %v5649 = vunpack.c.l.b16 %v5521
  %v5650 = vunpack.c.l.b16 %v5522
  %v5651 = vunpack.c.l.b16 %v5523
  %v5652 = vunpack.c.l.b16 %v5524
  %v5653 = vunpack.c.l.b16 %v5525
  %v5654 = vunpack.c.l.b16 %v5526
  %v5655 = vunpack.c.l.b16 %v5527
  %v5656 = vunpack.c.l.b16 %v5528
  %v5657 = vunpack.c.l.b16 %v5529
  %v5658 = vunpack.c.l.b16 %v5530
  %v5659 = vunpack.c.l.b16 %v5531
  %v5660 = vunpack.c.l.b16 %v5532
  %v5661 = vunpack.c.l.b16 %v5533
  %v5662 = vpack.c.b16 %v5599, %v5598
  %v5663 = vpack.c.b16 %v5601, %v5600
  %v5664 = vpack.c.b16 %v5603, %v5602
  %v5665 = vpack.c.b16 %v5605, %v5604
  %v5666 = vpack.c.b16 %v5607, %v5606
  %v5667 = vpack.c.b16 %v5609, %v5608
  %v5668 = vpack.c.b16 %v5611, %v5610
  %v5669 = vpack.c.b16 %v5613, %v5612
  %v5670 = vpack.c.b16 %v5615, %v5614
  %v5671 = vpack.c.b16 %v5617, %v5616
  %v5672 = vpack.c.b16 %v5619, %v5618
  %v5673 = vpack.c.b16 %v5621, %v5620
  %v5674 = vpack.c.b16 %v5623, %v5622
  %v5675 = vpack.c.b16 %v5625, %v5624
  %v5676 = vpack.c.b16 %v5627, %v5626
  %v5677 = vpack.c.b16 %v5629, %v5628
  %v5678 = vpack.c.b16 %v5631, %v5630
  %v5679 = vpack.c.b16 %v5633, %v5632
  %v5680 = vpack.c.b16 %v5635, %v5634
  %v5681 = vpack.c.b16 %v5637, %v5636
  %v5682 = vpack.c.b16 %v5639, %v5638
  %v5683 = vpack.c.b16 %v5641, %v5640
  %v5684 = vpack.c.b16 %v5643, %v5642
  %v5685 = vpack.c.b16 %v5645, %v5644
  %v5686 = vpack.c.b16 %v5647, %v5646
  %v5687 = vpack.c.b16 %v5649, %v5648
  %v5688 = vpack.c.b16 %v5651, %v5650
  %v5689 = vpack.c.b16 %v5653, %v5652
  %v5690 = vpack.c.b16 %v5655, %v5654
  %v5691 = vpack.c.b16 %v5657, %v5656
  %v5692 = vpack.c.b16 %v5659, %v5658
  %v5693 = vpack.c.b16 %v5661, %v5660
  %5726 = vmatprep.subr.bf16.mxu0 0
  %5727 = vmatpush1.bf16.msra.mxu0 %v5662
  %5728 = vmatprep.subr.bf16.mxu0 0
  %5729 = vmatpush1.bf16.msra.mxu0 %v5663
  %5730 = vmatprep.subr.bf16.mxu0 0
  %5731 = vmatpush1.bf16.msra.mxu0 %v5664
  %5732 = vmatprep.subr.bf16.mxu0 0
  %5733 = vmatpush1.bf16.msra.mxu0 %v5665
  %5734 = vmatprep.subr.bf16.mxu0 0
  %5735 = vmatpush1.bf16.msra.mxu0 %v5666
  %5736 = vmatprep.subr.bf16.mxu0 0
  %5737 = vmatpush1.bf16.msra.mxu0 %v5667
  %5738 = vmatprep.subr.bf16.mxu0 0
  %5739 = vmatpush1.bf16.msra.mxu0 %v5668
  %5740 = vmatprep.subr.bf16.mxu0 0
  %5741 = vmatpush1.bf16.msra.mxu0 %v5669
  %5742 = vmatprep.subr.bf16.mxu0 0
  %5743 = vmatpush1.bf16.msra.mxu0 %v5670
  %5744 = vmatprep.subr.bf16.mxu0 0
  %5745 = vmatpush1.bf16.msra.mxu0 %v5671
  %5746 = vmatprep.subr.bf16.mxu0 0
  %5747 = vmatpush1.bf16.msra.mxu0 %v5672
  %5748 = vmatprep.subr.bf16.mxu0 0
  %5749 = vmatpush1.bf16.msra.mxu0 %v5673
  %5750 = vmatprep.subr.bf16.mxu0 0
  %5751 = vmatpush1.bf16.msra.mxu0 %v5674
  %5752 = vmatprep.subr.bf16.mxu0 0
  %5753 = vmatpush1.bf16.msra.mxu0 %v5675
  %5754 = vmatprep.subr.bf16.mxu0 0
  %5755 = vmatpush1.bf16.msra.mxu0 %v5676
  %5756 = vmatprep.subr.bf16.mxu0 0
  %5757 = vmatpush1.bf16.msra.mxu0 %v5677
  %5758 = vmatprep.mubr.bf16.mxu0 %v412
  %5759 = vmatmul.mubr.bf16.gmra.mrb[0].mxu0 %v411
  %v5760 = vpop.f32.mrb[0].mxu0
  %v5761 = vadd.f32 0.0, %v5760
  %v5762 = vpop.f32.mrb[0].mxu0
  %v5763 = vpop.f32.mrb[0].mxu0
  %v5764 = vpop.f32.mrb[0].mxu0
  %5765 = vdwg.mxu0
  %5766 = vmatprep.subr.bf16.mxu0 0
  %5767 = vmatpush1.bf16.msra.mxu0 %v5678
  %5768 = vmatprep.subr.bf16.mxu0 0
  %5769 = vmatpush1.bf16.msra.mxu0 %v5679
  %5770 = vmatprep.subr.bf16.mxu0 0
  %5771 = vmatpush1.bf16.msra.mxu0 %v5680
  %5772 = vmatprep.subr.bf16.mxu0 0
  %5773 = vmatpush1.bf16.msra.mxu0 %v5681
  %5774 = vmatprep.subr.bf16.mxu0 0
  %5775 = vmatpush1.bf16.msra.mxu0 %v5682
  %5776 = vmatprep.subr.bf16.mxu0 0
  %5777 = vmatpush1.bf16.msra.mxu0 %v5683
  %5778 = vmatprep.subr.bf16.mxu0 0
  %5779 = vmatpush1.bf16.msra.mxu0 %v5684
  %5780 = vmatprep.subr.bf16.mxu0 0
  %5781 = vmatpush1.bf16.msra.mxu0 %v5685
  %5782 = vmatprep.subr.bf16.mxu0 0
  %5783 = vmatpush1.bf16.msra.mxu0 %v5686
  %5784 = vmatprep.subr.bf16.mxu0 0
  %5785 = vmatpush1.bf16.msra.mxu0 %v5687
  %5786 = vmatprep.subr.bf16.mxu0 0
  %5787 = vmatpush1.bf16.msra.mxu0 %v5688
  %5788 = vmatprep.subr.bf16.mxu0 0
  %5789 = vmatpush1.bf16.msra.mxu0 %v5689
  %5790 = vmatprep.subr.bf16.mxu0 0
  %5791 = vmatpush1.bf16.msra.mxu0 %v5690
  %5792 = vmatprep.subr.bf16.mxu0 0
  %5793 = vmatpush1.bf16.msra.mxu0 %v5691
  %5794 = vmatprep.subr.bf16.mxu0 0
  %5795 = vmatpush1.bf16.msra.mxu0 %v5692
  %5796 = vmatprep.subr.bf16.mxu0 0
  %5797 = vmatpush1.bf16.msra.mxu0 %v5693
  %5798 = vmatprep.mubr.bf16.mxu0 %v414
  %5799 = vmatmul.mubr.bf16.gmra.mrb[0].mxu0 %v413
  %v5800 = vpop.f32.mrb[0].mxu0
  %v5801 = vadd.f32 %v5761, %v5800
  %v5802 = vpop.f32.mrb[0].mxu0
  %v5803 = vpop.f32.mrb[0].mxu0
  %v5804 = vpop.f32.mrb[0].mxu0
  %5805 = vdwg.mxu0
  %v5806 = vpack.c.bf16 %v1083, %v746
  %v5807 = vpack.c.bf16 %v1757, %v1420
  %v5808 = vpack.c.bf16 %v2431, %v2094
  %v5809 = vpack.c.bf16 %v3105, %v2768
  %v5810 = vpack.c.bf16 %v3779, %v3442
  %v5811 = vpack.c.bf16 %v4453, %v4116
  %v5812 = vpack.c.bf16 %v5127, %v4790
  %v5813 = vpack.c.bf16 %v5801, %v5464
  %v5814 = vld [vmem:[%s3] sm:$0xf]
  %v5815 = vld [vmem:[%s3 + $0x4] sm:$0xf]
  %v5818 = vunpack.c.l.b16 %v5814
  %v5819 = vunpack.c.l.b16 %v5815
  %v5820 = vpack.c.b16 %v5819, %v5818
  %5822 = vmatprep.subr.bf16.mxu0 0
  %5823 = vmatpush1.bf16.msra.mxu0 %v5806
  %5824 = vmatprep.subr.bf16.mxu0 0
  %5825 = vmatpush1.bf16.msra.mxu0 %v5807
  %5826 = vmatprep.subr.bf16.mxu0 0
  %5827 = vmatpush1.bf16.msra.mxu0 %v5808
  %5828 = vmatprep.subr.bf16.mxu0 0
  %5829 = vmatpush1.bf16.msra.mxu0 %v5809
  %5830 = vmatprep.subr.bf16.mxu0 0
  %5831 = vmatpush1.bf16.msra.mxu0 %v5810
  %5832 = vmatprep.subr.bf16.mxu0 0
  %5833 = vmatpush1.bf16.msra.mxu0 %v5811
  %5834 = vmatprep.subr.bf16.mxu0 0
  %5835 = vmatpush1.bf16.msra.mxu0 %v5812
  %5836 = vmatprep.subr.bf16.mxu0 0
  %5837 = vmatpush1.bf16.msra.mxu0 %v5813
  %5838 = vmatprep.subr.bf16.mxu0 0
  %5839 = vmatpush1.bf16.msra.mxu0 0
  %5840 = vmatprep.subr.bf16.mxu0 0
  %5841 = vmatpush1.bf16.msra.mxu0 0
  %5842 = vmatprep.subr.bf16.mxu0 0
  %5843 = vmatpush1.bf16.msra.mxu0 0
  %5844 = vmatprep.subr.bf16.mxu0 0
  %5845 = vmatpush1.bf16.msra.mxu0 0
  %5846 = vmatprep.subr.bf16.mxu0 0
  %5847 = vmatpush1.bf16.msra.mxu0 0
  %5848 = vmatprep.subr.bf16.mxu0 0
  %5849 = vmatpush1.bf16.msra.mxu0 0
  %5850 = vmatprep.subr.bf16.mxu0 0
  %5851 = vmatpush1.bf16.msra.mxu0 0
  %5852 = vmatprep.subr.bf16.mxu0 0
  %5853 = vmatpush1.bf16.msra.mxu0 0
  %5854 = vmatprep.mubr.bf16.mxu0 0
  %5855 = vmatmul.mubr.bf16.gmra.mrb[0].mxu0 %v5820
  %v5856 = vpop.f32.mrb[0].mxu0
  %v5857 = vadd.f32 0.0, %v5856
  %v5858 = vpop.f32.mrb[0].mxu0
  %v5859 = vpop.f32.mrb[0].mxu0
  %v5860 = vadd.f32 0.0, %v5859
  %v5861 = vpop.f32.mrb[0].mxu0
  %5862 = vdwg.mxu0
  %v5863 = vld [vmem:[%s4] sm:$0xff]
  %v5864 = vld [vmem:[%s4 + $0x8] sm:$0xff]
  %v5865 = vld [vmem:[%s5] sm:$0xff]
  %v5866 = vld [vmem:[%s5 + $0x8] sm:$0xff]
  %v5867 = vlaneseq
  %v5868 = vand.u32 %v5867, 127
  %vm5869 = vcmp.lt.s32.totalorder %v5868, 98
  %v5870 = vsel %vm5869, 1, 0
  %v5871 = vcvt.s32.f32 %v5870
  %v5872 = vmul.f32 %v5857, %v5871
  %v5873 = vmul.f32 %v5860, %v5871
  %5874 = vadd.xlane.f32.xlu0 %v5872
  %v5875 = vpop.xlane.xlu0 %5874
  %5876 = vadd.xlane.f32.xlu0 %v5873
  %v5877 = vpop.xlane.xlu0 %5876
  %v5878 = vmul.f32 %v5875, 0.010204081
  %v5879 = vmul.f32 %v5877, 0.010204081
  %v5880 = vsub.f32 %v5857, %v5878
  %v5881 = vsub.f32 %v5860, %v5879
  %v5882 = vmul.f32 %v5880, %v5871
  %v5883 = vmul.f32 %v5881, %v5871
  %v5884 = vmul.f32 %v5882, %v5882
  %v5885 = vmul.f32 %v5883, %v5883
  %5886 = vadd.xlane.f32.xlu0 %v5884
  %v5887 = vpop.xlane.xlu0 %5886
  %5888 = vadd.xlane.f32.xlu0 %v5885
  %v5889 = vpop.xlane.xlu0 %5888
  %v5890 = vmul.f32 %v5887, 0.010204081
  %v5891 = vmul.f32 %v5889, 0.010204081
  %v5892 = vadd.f32 %v5890, 1e-05
  %v5893 = vadd.f32 %v5891, 1e-05
  %v5894 = vrsqrt.pop %v5892
  %v5895 = vrsqrt.pop %v5893
  %v5896 = vmul.f32 %v5880, %v5894
  %v5897 = vmul.f32 %v5881, %v5895
  %5899 = vset.pattern.permute.xlu0 0
  %5900 = vperm.xlu0 %5899, %v5863
  %v5901 = vpop.permute.xlu0 %5900
  %5904 = vset.pattern.permute.xlu0 0
  %5905 = vperm.xlu0 %5904, %v5864
  %v5906 = vpop.permute.xlu0 %5905
  %v5908 = vmul.f32 %v5896, %v5901
  %v5909 = vmul.f32 %v5897, %v5906
  %5911 = vset.pattern.permute.xlu0 0
  %5912 = vperm.xlu0 %5911, %v5865
  %v5913 = vpop.permute.xlu0 %5912
  %5916 = vset.pattern.permute.xlu0 0
  %5917 = vperm.xlu0 %5916, %v5866
  %v5918 = vpop.permute.xlu0 %5917
  %v5920 = vadd.f32 %v5908, %v5913
  %v5921 = vadd.f32 %v5909, %v5918
  %vm5922 = vcmp.ge.f32.partialorder %v5920, 0.0
  %vm5923 = vcmp.ge.f32.partialorder %v5921, 0.0
  %v5924 = vmul.f32 %v5920, 0.2
  %v5925 = vmul.f32 %v5921, 0.2
  %v5926 = vsel %vm5922, %v5920, %v5924
  %v5927 = vsel %vm5923, %v5921, %v5925
  %v5928 = vpack.c.bf16 %v5927, %v5926
  %v5929 = vld [vmem:[%s6] sm:$0xf]
  %v5930 = vld [vmem:[%s6 + $0x4] sm:$0xf]
  %v5931 = vld [vmem:[%s6 + $0x8] sm:$0xf]
  %v5932 = vld [vmem:[%s6 + $0xc] sm:$0xf]
  %v5933 = vld [vmem:[%s6 + $0x10] sm:$0xf]
  %v5934 = vld [vmem:[%s6 + $0x14] sm:$0xf]
  %v5935 = vld [vmem:[%s6 + $0x18] sm:$0xf]
  %v5936 = vld [vmem:[%s6 + $0x1c] sm:$0xf]
  %v5937 = vld [vmem:[%s6 + $0x20] sm:$0xf]
  %v5938 = vld [vmem:[%s6 + $0x24] sm:$0xf]
  %v5939 = vld [vmem:[%s6 + $0x28] sm:$0xf]
  %v5940 = vld [vmem:[%s6 + $0x2c] sm:$0xf]
  %v5941 = vld [vmem:[%s6 + $0x30] sm:$0xf]
  %v5942 = vld [vmem:[%s6 + $0x34] sm:$0xf]
  %v5943 = vld [vmem:[%s6 + $0x38] sm:$0xf]
  %v5944 = vld [vmem:[%s6 + $0x3c] sm:$0xf]
  %v5961 = vunpack.c.l.b16 %v5929
  %v5962 = vunpack.c.l.b16 %v5930
  %v5963 = vunpack.c.l.b16 %v5931
  %v5964 = vunpack.c.l.b16 %v5932
  %v5965 = vunpack.c.l.b16 %v5933
  %v5966 = vunpack.c.l.b16 %v5934
  %v5967 = vunpack.c.l.b16 %v5935
  %v5968 = vunpack.c.l.b16 %v5936
  %v5969 = vunpack.c.l.b16 %v5937
  %v5970 = vunpack.c.l.b16 %v5938
  %v5971 = vunpack.c.l.b16 %v5939
  %v5972 = vunpack.c.l.b16 %v5940
  %v5973 = vunpack.c.l.b16 %v5941
  %v5974 = vunpack.c.l.b16 %v5942
  %v5975 = vunpack.c.l.b16 %v5943
  %v5976 = vunpack.c.l.b16 %v5944
  %v5977 = vpack.c.b16 %v5962, %v5961
  %v5978 = vpack.c.b16 %v5964, %v5963
  %v5979 = vpack.c.b16 %v5966, %v5965
  %v5980 = vpack.c.b16 %v5968, %v5967
  %v5981 = vpack.c.b16 %v5970, %v5969
  %v5982 = vpack.c.b16 %v5972, %v5971
  %v5983 = vpack.c.b16 %v5974, %v5973
  %v5984 = vpack.c.b16 %v5976, %v5975
  %5993 = vmatprep.subr.bf16.mxu0 0
  %5994 = vmatpush1.bf16.msra.mxu0 %v5977
  %5995 = vmatprep.subr.bf16.mxu0 0
  %5996 = vmatpush1.bf16.msra.mxu0 %v5978
  %5997 = vmatprep.subr.bf16.mxu0 0
  %5998 = vmatpush1.bf16.msra.mxu0 %v5979
  %5999 = vmatprep.subr.bf16.mxu0 0
  %6000 = vmatpush1.bf16.msra.mxu0 %v5980
  %6001 = vmatprep.subr.bf16.mxu0 0
  %6002 = vmatpush1.bf16.msra.mxu0 %v5981
  %6003 = vmatprep.subr.bf16.mxu0 0
  %6004 = vmatpush1.bf16.msra.mxu0 %v5982
  %6005 = vmatprep.subr.bf16.mxu0 0
  %6006 = vmatpush1.bf16.msra.mxu0 %v5983
  %6007 = vmatprep.subr.bf16.mxu0 0
  %6008 = vmatpush1.bf16.msra.mxu0 %v5984
  %6009 = vmatprep.subr.bf16.mxu0 0
  %6010 = vmatpush1.bf16.msra.mxu0 0
  %6011 = vmatprep.subr.bf16.mxu0 0
  %6012 = vmatpush1.bf16.msra.mxu0 0
  %6013 = vmatprep.subr.bf16.mxu0 0
  %6014 = vmatpush1.bf16.msra.mxu0 0
  %6015 = vmatprep.subr.bf16.mxu0 0
  %6016 = vmatpush1.bf16.msra.mxu0 0
  %6017 = vmatprep.subr.bf16.mxu0 0
  %6018 = vmatpush1.bf16.msra.mxu0 0
  %6019 = vmatprep.subr.bf16.mxu0 0
  %6020 = vmatpush1.bf16.msra.mxu0 0
  %6021 = vmatprep.subr.bf16.mxu0 0
  %6022 = vmatpush1.bf16.msra.mxu0 0
  %6023 = vmatprep.subr.bf16.mxu0 0
  %6024 = vmatpush1.bf16.msra.mxu0 0
  %6025 = vmatprep.mubr.bf16.mxu0 0
  %6026 = vmatmul.mubr.bf16.gmra.mrb[0].mxu0 %v5928
  %v6027 = vpop.f32.mrb[0].mxu0
  %v6028 = vadd.f32 0.0, %v6027
  %v6029 = vpop.f32.mrb[0].mxu0
  %v6030 = vpop.f32.mrb[0].mxu0
  %v6031 = vadd.f32 0.0, %v6030
  %v6032 = vpop.f32.mrb[0].mxu0
  %6033 = vdwg.mxu0
  %s6034 = scalar_lea.vmem %s6, 64
  %v6035 = vld [vmem:[%s6034] sm:$0xf]
  %v6036 = vld [vmem:[%s6034 + $0x4] sm:$0xf]
  %v6037 = vld [vmem:[%s6034 + $0x8] sm:$0xf]
  %v6038 = vld [vmem:[%s6034 + $0xc] sm:$0xf]
  %v6039 = vld [vmem:[%s6034 + $0x10] sm:$0xf]
  %v6040 = vld [vmem:[%s6034 + $0x14] sm:$0xf]
  %v6041 = vld [vmem:[%s6034 + $0x18] sm:$0xf]
  %v6042 = vld [vmem:[%s6034 + $0x1c] sm:$0xf]
  %v6043 = vld [vmem:[%s6034 + $0x20] sm:$0xf]
  %v6044 = vld [vmem:[%s6034 + $0x24] sm:$0xf]
  %v6045 = vld [vmem:[%s6034 + $0x28] sm:$0xf]
  %v6046 = vld [vmem:[%s6034 + $0x2c] sm:$0xf]
  %v6047 = vld [vmem:[%s6034 + $0x30] sm:$0xf]
  %v6048 = vld [vmem:[%s6034 + $0x34] sm:$0xf]
  %v6049 = vld [vmem:[%s6034 + $0x38] sm:$0xf]
  %v6050 = vld [vmem:[%s6034 + $0x3c] sm:$0xf]
  %v6067 = vunpack.c.l.b16 %v6035
  %v6068 = vunpack.c.l.b16 %v6036
  %v6069 = vunpack.c.l.b16 %v6037
  %v6070 = vunpack.c.l.b16 %v6038
  %v6071 = vunpack.c.l.b16 %v6039
  %v6072 = vunpack.c.l.b16 %v6040
  %v6073 = vunpack.c.l.b16 %v6041
  %v6074 = vunpack.c.l.b16 %v6042
  %v6075 = vunpack.c.l.b16 %v6043
  %v6076 = vunpack.c.l.b16 %v6044
  %v6077 = vunpack.c.l.b16 %v6045
  %v6078 = vunpack.c.l.b16 %v6046
  %v6079 = vunpack.c.l.b16 %v6047
  %v6080 = vunpack.c.l.b16 %v6048
  %v6081 = vunpack.c.l.b16 %v6049
  %v6082 = vunpack.c.l.b16 %v6050
  %v6083 = vpack.c.b16 %v6068, %v6067
  %v6084 = vpack.c.b16 %v6070, %v6069
  %v6085 = vpack.c.b16 %v6072, %v6071
  %v6086 = vpack.c.b16 %v6074, %v6073
  %v6087 = vpack.c.b16 %v6076, %v6075
  %v6088 = vpack.c.b16 %v6078, %v6077
  %v6089 = vpack.c.b16 %v6080, %v6079
  %v6090 = vpack.c.b16 %v6082, %v6081
  %6099 = vmatprep.subr.bf16.mxu0 0
  %6100 = vmatpush1.bf16.msra.mxu0 %v6083
  %6101 = vmatprep.subr.bf16.mxu0 0
  %6102 = vmatpush1.bf16.msra.mxu0 %v6084
  %6103 = vmatprep.subr.bf16.mxu0 0
  %6104 = vmatpush1.bf16.msra.mxu0 %v6085
  %6105 = vmatprep.subr.bf16.mxu0 0
  %6106 = vmatpush1.bf16.msra.mxu0 %v6086
  %6107 = vmatprep.subr.bf16.mxu0 0
  %6108 = vmatpush1.bf16.msra.mxu0 %v6087
  %6109 = vmatprep.subr.bf16.mxu0 0
  %6110 = vmatpush1.bf16.msra.mxu0 %v6088
  %6111 = vmatprep.subr.bf16.mxu0 0
  %6112 = vmatpush1.bf16.msra.mxu0 %v6089
  %6113 = vmatprep.subr.bf16.mxu0 0
  %6114 = vmatpush1.bf16.msra.mxu0 %v6090
  %6115 = vmatprep.subr.bf16.mxu0 0
  %6116 = vmatpush1.bf16.msra.mxu0 0
  %6117 = vmatprep.subr.bf16.mxu0 0
  %6118 = vmatpush1.bf16.msra.mxu0 0
  %6119 = vmatprep.subr.bf16.mxu0 0
  %6120 = vmatpush1.bf16.msra.mxu0 0
  %6121 = vmatprep.subr.bf16.mxu0 0
  %6122 = vmatpush1.bf16.msra.mxu0 0
  %6123 = vmatprep.subr.bf16.mxu0 0
  %6124 = vmatpush1.bf16.msra.mxu0 0
  %6125 = vmatprep.subr.bf16.mxu0 0
  %6126 = vmatpush1.bf16.msra.mxu0 0
  %6127 = vmatprep.subr.bf16.mxu0 0
  %6128 = vmatpush1.bf16.msra.mxu0 0
  %6129 = vmatprep.subr.bf16.mxu0 0
  %6130 = vmatpush1.bf16.msra.mxu0 0
  %6131 = vmatprep.mubr.bf16.mxu0 0
  %6132 = vmatmul.mubr.bf16.gmra.mrb[0].mxu0 %v5928
  %v6133 = vpop.f32.mrb[0].mxu0
  %v6134 = vadd.f32 0.0, %v6133
  %v6135 = vpop.f32.mrb[0].mxu0
  %v6136 = vpop.f32.mrb[0].mxu0
  %v6137 = vadd.f32 0.0, %v6136
  %v6138 = vpop.f32.mrb[0].mxu0
  %6139 = vdwg.mxu0
  %s6140 = scalar_lea.vmem %s6, 128
  %v6141 = vld [vmem:[%s6140] sm:$0xf]
  %v6142 = vld [vmem:[%s6140 + $0x4] sm:$0xf]
  %v6143 = vld [vmem:[%s6140 + $0x8] sm:$0xf]
  %v6144 = vld [vmem:[%s6140 + $0xc] sm:$0xf]
  %v6145 = vld [vmem:[%s6140 + $0x10] sm:$0xf]
  %v6146 = vld [vmem:[%s6140 + $0x14] sm:$0xf]
  %v6147 = vld [vmem:[%s6140 + $0x18] sm:$0xf]
  %v6148 = vld [vmem:[%s6140 + $0x1c] sm:$0xf]
  %v6149 = vld [vmem:[%s6140 + $0x20] sm:$0xf]
  %v6150 = vld [vmem:[%s6140 + $0x24] sm:$0xf]
  %v6151 = vld [vmem:[%s6140 + $0x28] sm:$0xf]
  %v6152 = vld [vmem:[%s6140 + $0x2c] sm:$0xf]
  %v6153 = vld [vmem:[%s6140 + $0x30] sm:$0xf]
  %v6154 = vld [vmem:[%s6140 + $0x34] sm:$0xf]
  %v6155 = vld [vmem:[%s6140 + $0x38] sm:$0xf]
  %v6156 = vld [vmem:[%s6140 + $0x3c] sm:$0xf]
  %v6173 = vunpack.c.l.b16 %v6141
  %v6174 = vunpack.c.l.b16 %v6142
  %v6175 = vunpack.c.l.b16 %v6143
  %v6176 = vunpack.c.l.b16 %v6144
  %v6177 = vunpack.c.l.b16 %v6145
  %v6178 = vunpack.c.l.b16 %v6146
  %v6179 = vunpack.c.l.b16 %v6147
  %v6180 = vunpack.c.l.b16 %v6148
  %v6181 = vunpack.c.l.b16 %v6149
  %v6182 = vunpack.c.l.b16 %v6150
  %v6183 = vunpack.c.l.b16 %v6151
  %v6184 = vunpack.c.l.b16 %v6152
  %v6185 = vunpack.c.l.b16 %v6153
  %v6186 = vunpack.c.l.b16 %v6154
  %v6187 = vunpack.c.l.b16 %v6155
  %v6188 = vunpack.c.l.b16 %v6156
  %v6189 = vpack.c.b16 %v6174, %v6173
  %v6190 = vpack.c.b16 %v6176, %v6175
  %v6191 = vpack.c.b16 %v6178, %v6177
  %v6192 = vpack.c.b16 %v6180, %v6179
  %v6193 = vpack.c.b16 %v6182, %v6181
  %v6194 = vpack.c.b16 %v6184, %v6183
  %v6195 = vpack.c.b16 %v6186, %v6185
  %v6196 = vpack.c.b16 %v6188, %v6187
  %6205 = vmatprep.subr.bf16.mxu0 0
  %6206 = vmatpush1.bf16.msra.mxu0 %v6189
  %6207 = vmatprep.subr.bf16.mxu0 0
  %6208 = vmatpush1.bf16.msra.mxu0 %v6190
  %6209 = vmatprep.subr.bf16.mxu0 0
  %6210 = vmatpush1.bf16.msra.mxu0 %v6191
  %6211 = vmatprep.subr.bf16.mxu0 0
  %6212 = vmatpush1.bf16.msra.mxu0 %v6192
  %6213 = vmatprep.subr.bf16.mxu0 0
  %6214 = vmatpush1.bf16.msra.mxu0 %v6193
  %6215 = vmatprep.subr.bf16.mxu0 0
  %6216 = vmatpush1.bf16.msra.mxu0 %v6194
  %6217 = vmatprep.subr.bf16.mxu0 0
  %6218 = vmatpush1.bf16.msra.mxu0 %v6195
  %6219 = vmatprep.subr.bf16.mxu0 0
  %6220 = vmatpush1.bf16.msra.mxu0 %v6196
  %6221 = vmatprep.subr.bf16.mxu0 0
  %6222 = vmatpush1.bf16.msra.mxu0 0
  %6223 = vmatprep.subr.bf16.mxu0 0
  %6224 = vmatpush1.bf16.msra.mxu0 0
  %6225 = vmatprep.subr.bf16.mxu0 0
  %6226 = vmatpush1.bf16.msra.mxu0 0
  %6227 = vmatprep.subr.bf16.mxu0 0
  %6228 = vmatpush1.bf16.msra.mxu0 0
  %6229 = vmatprep.subr.bf16.mxu0 0
  %6230 = vmatpush1.bf16.msra.mxu0 0
  %6231 = vmatprep.subr.bf16.mxu0 0
  %6232 = vmatpush1.bf16.msra.mxu0 0
  %6233 = vmatprep.subr.bf16.mxu0 0
  %6234 = vmatpush1.bf16.msra.mxu0 0
  %6235 = vmatprep.subr.bf16.mxu0 0
  %6236 = vmatpush1.bf16.msra.mxu0 0
  %6237 = vmatprep.mubr.bf16.mxu0 0
  %6238 = vmatmul.mubr.bf16.gmra.mrb[0].mxu0 %v5928
  %v6239 = vpop.f32.mrb[0].mxu0
  %v6240 = vadd.f32 0.0, %v6239
  %v6241 = vpop.f32.mrb[0].mxu0
  %v6242 = vpop.f32.mrb[0].mxu0
  %v6243 = vadd.f32 0.0, %v6242
  %v6244 = vpop.f32.mrb[0].mxu0
  %6245 = vdwg.mxu0
  %s6246 = scalar_lea.vmem %s6, 192
  %v6247 = vld [vmem:[%s6246] sm:$0xf]
  %v6248 = vld [vmem:[%s6246 + $0x4] sm:$0xf]
  %v6249 = vld [vmem:[%s6246 + $0x8] sm:$0xf]
  %v6250 = vld [vmem:[%s6246 + $0xc] sm:$0xf]
  %v6251 = vld [vmem:[%s6246 + $0x10] sm:$0xf]
  %v6252 = vld [vmem:[%s6246 + $0x14] sm:$0xf]
  %v6253 = vld [vmem:[%s6246 + $0x18] sm:$0xf]
  %v6254 = vld [vmem:[%s6246 + $0x1c] sm:$0xf]
  %v6255 = vld [vmem:[%s6246 + $0x20] sm:$0xf]
  %v6256 = vld [vmem:[%s6246 + $0x24] sm:$0xf]
  %v6257 = vld [vmem:[%s6246 + $0x28] sm:$0xf]
  %v6258 = vld [vmem:[%s6246 + $0x2c] sm:$0xf]
  %v6259 = vld [vmem:[%s6246 + $0x30] sm:$0xf]
  %v6260 = vld [vmem:[%s6246 + $0x34] sm:$0xf]
  %v6261 = vld [vmem:[%s6246 + $0x38] sm:$0xf]
  %v6262 = vld [vmem:[%s6246 + $0x3c] sm:$0xf]
  %v6279 = vunpack.c.l.b16 %v6247
  %v6280 = vunpack.c.l.b16 %v6248
  %v6281 = vunpack.c.l.b16 %v6249
  %v6282 = vunpack.c.l.b16 %v6250
  %v6283 = vunpack.c.l.b16 %v6251
  %v6284 = vunpack.c.l.b16 %v6252
  %v6285 = vunpack.c.l.b16 %v6253
  %v6286 = vunpack.c.l.b16 %v6254
  %v6287 = vunpack.c.l.b16 %v6255
  %v6288 = vunpack.c.l.b16 %v6256
  %v6289 = vunpack.c.l.b16 %v6257
  %v6290 = vunpack.c.l.b16 %v6258
  %v6291 = vunpack.c.l.b16 %v6259
  %v6292 = vunpack.c.l.b16 %v6260
  %v6293 = vunpack.c.l.b16 %v6261
  %v6294 = vunpack.c.l.b16 %v6262
  %v6295 = vpack.c.b16 %v6280, %v6279
  %v6296 = vpack.c.b16 %v6282, %v6281
  %v6297 = vpack.c.b16 %v6284, %v6283
  %v6298 = vpack.c.b16 %v6286, %v6285
  %v6299 = vpack.c.b16 %v6288, %v6287
  %v6300 = vpack.c.b16 %v6290, %v6289
  %v6301 = vpack.c.b16 %v6292, %v6291
  %v6302 = vpack.c.b16 %v6294, %v6293
  %6311 = vmatprep.subr.bf16.mxu0 0
  %6312 = vmatpush1.bf16.msra.mxu0 %v6295
  %6313 = vmatprep.subr.bf16.mxu0 0
  %6314 = vmatpush1.bf16.msra.mxu0 %v6296
  %6315 = vmatprep.subr.bf16.mxu0 0
  %6316 = vmatpush1.bf16.msra.mxu0 %v6297
  %6317 = vmatprep.subr.bf16.mxu0 0
  %6318 = vmatpush1.bf16.msra.mxu0 %v6298
  %6319 = vmatprep.subr.bf16.mxu0 0
  %6320 = vmatpush1.bf16.msra.mxu0 %v6299
  %6321 = vmatprep.subr.bf16.mxu0 0
  %6322 = vmatpush1.bf16.msra.mxu0 %v6300
  %6323 = vmatprep.subr.bf16.mxu0 0
  %6324 = vmatpush1.bf16.msra.mxu0 %v6301
  %6325 = vmatprep.subr.bf16.mxu0 0
  %6326 = vmatpush1.bf16.msra.mxu0 %v6302
  %6327 = vmatprep.subr.bf16.mxu0 0
  %6328 = vmatpush1.bf16.msra.mxu0 0
  %6329 = vmatprep.subr.bf16.mxu0 0
  %6330 = vmatpush1.bf16.msra.mxu0 0
  %6331 = vmatprep.subr.bf16.mxu0 0
  %6332 = vmatpush1.bf16.msra.mxu0 0
  %6333 = vmatprep.subr.bf16.mxu0 0
  %6334 = vmatpush1.bf16.msra.mxu0 0
  %6335 = vmatprep.subr.bf16.mxu0 0
  %6336 = vmatpush1.bf16.msra.mxu0 0
  %6337 = vmatprep.subr.bf16.mxu0 0
  %6338 = vmatpush1.bf16.msra.mxu0 0
  %6339 = vmatprep.subr.bf16.mxu0 0
  %6340 = vmatpush1.bf16.msra.mxu0 0
  %6341 = vmatprep.subr.bf16.mxu0 0
  %6342 = vmatpush1.bf16.msra.mxu0 0
  %6343 = vmatprep.mubr.bf16.mxu0 0
  %6344 = vmatmul.mubr.bf16.gmra.mrb[0].mxu0 %v5928
  %v6345 = vpop.f32.mrb[0].mxu0
  %v6346 = vadd.f32 0.0, %v6345
  %v6347 = vpop.f32.mrb[0].mxu0
  %v6348 = vpop.f32.mrb[0].mxu0
  %v6349 = vadd.f32 0.0, %v6348
  %v6350 = vpop.f32.mrb[0].mxu0
  %6351 = vdwg.mxu0
  %s6352 = scalar_lea.vmem %s6, 256
  %v6353 = vld [vmem:[%s6352] sm:$0xf]
  %v6354 = vld [vmem:[%s6352 + $0x4] sm:$0xf]
  %v6355 = vld [vmem:[%s6352 + $0x8] sm:$0xf]
  %v6356 = vld [vmem:[%s6352 + $0xc] sm:$0xf]
  %v6357 = vld [vmem:[%s6352 + $0x10] sm:$0xf]
  %v6358 = vld [vmem:[%s6352 + $0x14] sm:$0xf]
  %v6359 = vld [vmem:[%s6352 + $0x18] sm:$0xf]
  %v6360 = vld [vmem:[%s6352 + $0x1c] sm:$0xf]
  %v6361 = vld [vmem:[%s6352 + $0x20] sm:$0xf]
  %v6362 = vld [vmem:[%s6352 + $0x24] sm:$0xf]
  %v6363 = vld [vmem:[%s6352 + $0x28] sm:$0xf]
  %v6364 = vld [vmem:[%s6352 + $0x2c] sm:$0xf]
  %v6365 = vld [vmem:[%s6352 + $0x30] sm:$0xf]
  %v6366 = vld [vmem:[%s6352 + $0x34] sm:$0xf]
  %v6367 = vld [vmem:[%s6352 + $0x38] sm:$0xf]
  %v6368 = vld [vmem:[%s6352 + $0x3c] sm:$0xf]
  %v6385 = vunpack.c.l.b16 %v6353
  %v6386 = vunpack.c.l.b16 %v6354
  %v6387 = vunpack.c.l.b16 %v6355
  %v6388 = vunpack.c.l.b16 %v6356
  %v6389 = vunpack.c.l.b16 %v6357
  %v6390 = vunpack.c.l.b16 %v6358
  %v6391 = vunpack.c.l.b16 %v6359
  %v6392 = vunpack.c.l.b16 %v6360
  %v6393 = vunpack.c.l.b16 %v6361
  %v6394 = vunpack.c.l.b16 %v6362
  %v6395 = vunpack.c.l.b16 %v6363
  %v6396 = vunpack.c.l.b16 %v6364
  %v6397 = vunpack.c.l.b16 %v6365
  %v6398 = vunpack.c.l.b16 %v6366
  %v6399 = vunpack.c.l.b16 %v6367
  %v6400 = vunpack.c.l.b16 %v6368
  %v6401 = vpack.c.b16 %v6386, %v6385
  %v6402 = vpack.c.b16 %v6388, %v6387
  %v6403 = vpack.c.b16 %v6390, %v6389
  %v6404 = vpack.c.b16 %v6392, %v6391
  %v6405 = vpack.c.b16 %v6394, %v6393
  %v6406 = vpack.c.b16 %v6396, %v6395
  %v6407 = vpack.c.b16 %v6398, %v6397
  %v6408 = vpack.c.b16 %v6400, %v6399
  %6417 = vmatprep.subr.bf16.mxu0 0
  %6418 = vmatpush1.bf16.msra.mxu0 %v6401
  %6419 = vmatprep.subr.bf16.mxu0 0
  %6420 = vmatpush1.bf16.msra.mxu0 %v6402
  %6421 = vmatprep.subr.bf16.mxu0 0
  %6422 = vmatpush1.bf16.msra.mxu0 %v6403
  %6423 = vmatprep.subr.bf16.mxu0 0
  %6424 = vmatpush1.bf16.msra.mxu0 %v6404
  %6425 = vmatprep.subr.bf16.mxu0 0
  %6426 = vmatpush1.bf16.msra.mxu0 %v6405
  %6427 = vmatprep.subr.bf16.mxu0 0
  %6428 = vmatpush1.bf16.msra.mxu0 %v6406
  %6429 = vmatprep.subr.bf16.mxu0 0
  %6430 = vmatpush1.bf16.msra.mxu0 %v6407
  %6431 = vmatprep.subr.bf16.mxu0 0
  %6432 = vmatpush1.bf16.msra.mxu0 %v6408
  %6433 = vmatprep.subr.bf16.mxu0 0
  %6434 = vmatpush1.bf16.msra.mxu0 0
  %6435 = vmatprep.subr.bf16.mxu0 0
  %6436 = vmatpush1.bf16.msra.mxu0 0
  %6437 = vmatprep.subr.bf16.mxu0 0
  %6438 = vmatpush1.bf16.msra.mxu0 0
  %6439 = vmatprep.subr.bf16.mxu0 0
  %6440 = vmatpush1.bf16.msra.mxu0 0
  %6441 = vmatprep.subr.bf16.mxu0 0
  %6442 = vmatpush1.bf16.msra.mxu0 0
  %6443 = vmatprep.subr.bf16.mxu0 0
  %6444 = vmatpush1.bf16.msra.mxu0 0
  %6445 = vmatprep.subr.bf16.mxu0 0
  %6446 = vmatpush1.bf16.msra.mxu0 0
  %6447 = vmatprep.subr.bf16.mxu0 0
  %6448 = vmatpush1.bf16.msra.mxu0 0
  %6449 = vmatprep.mubr.bf16.mxu0 0
  %6450 = vmatmul.mubr.bf16.gmra.mrb[0].mxu0 %v5928
  %v6451 = vpop.f32.mrb[0].mxu0
  %v6452 = vadd.f32 0.0, %v6451
  %v6453 = vpop.f32.mrb[0].mxu0
  %v6454 = vpop.f32.mrb[0].mxu0
  %v6455 = vadd.f32 0.0, %v6454
  %v6456 = vpop.f32.mrb[0].mxu0
  %6457 = vdwg.mxu0
  %s6458 = scalar_lea.vmem %s6, 320
  %v6459 = vld [vmem:[%s6458] sm:$0xf]
  %v6460 = vld [vmem:[%s6458 + $0x4] sm:$0xf]
  %v6461 = vld [vmem:[%s6458 + $0x8] sm:$0xf]
  %v6462 = vld [vmem:[%s6458 + $0xc] sm:$0xf]
  %v6463 = vld [vmem:[%s6458 + $0x10] sm:$0xf]
  %v6464 = vld [vmem:[%s6458 + $0x14] sm:$0xf]
  %v6465 = vld [vmem:[%s6458 + $0x18] sm:$0xf]
  %v6466 = vld [vmem:[%s6458 + $0x1c] sm:$0xf]
  %v6467 = vld [vmem:[%s6458 + $0x20] sm:$0xf]
  %v6468 = vld [vmem:[%s6458 + $0x24] sm:$0xf]
  %v6469 = vld [vmem:[%s6458 + $0x28] sm:$0xf]
  %v6470 = vld [vmem:[%s6458 + $0x2c] sm:$0xf]
  %v6471 = vld [vmem:[%s6458 + $0x30] sm:$0xf]
  %v6472 = vld [vmem:[%s6458 + $0x34] sm:$0xf]
  %v6473 = vld [vmem:[%s6458 + $0x38] sm:$0xf]
  %v6474 = vld [vmem:[%s6458 + $0x3c] sm:$0xf]
  %v6491 = vunpack.c.l.b16 %v6459
  %v6492 = vunpack.c.l.b16 %v6460
  %v6493 = vunpack.c.l.b16 %v6461
  %v6494 = vunpack.c.l.b16 %v6462
  %v6495 = vunpack.c.l.b16 %v6463
  %v6496 = vunpack.c.l.b16 %v6464
  %v6497 = vunpack.c.l.b16 %v6465
  %v6498 = vunpack.c.l.b16 %v6466
  %v6499 = vunpack.c.l.b16 %v6467
  %v6500 = vunpack.c.l.b16 %v6468
  %v6501 = vunpack.c.l.b16 %v6469
  %v6502 = vunpack.c.l.b16 %v6470
  %v6503 = vunpack.c.l.b16 %v6471
  %v6504 = vunpack.c.l.b16 %v6472
  %v6505 = vunpack.c.l.b16 %v6473
  %v6506 = vunpack.c.l.b16 %v6474
  %v6507 = vpack.c.b16 %v6492, %v6491
  %v6508 = vpack.c.b16 %v6494, %v6493
  %v6509 = vpack.c.b16 %v6496, %v6495
  %v6510 = vpack.c.b16 %v6498, %v6497
  %v6511 = vpack.c.b16 %v6500, %v6499
  %v6512 = vpack.c.b16 %v6502, %v6501
  %v6513 = vpack.c.b16 %v6504, %v6503
  %v6514 = vpack.c.b16 %v6506, %v6505
  %6523 = vmatprep.subr.bf16.mxu0 0
  %6524 = vmatpush1.bf16.msra.mxu0 %v6507
  %6525 = vmatprep.subr.bf16.mxu0 0
  %6526 = vmatpush1.bf16.msra.mxu0 %v6508
  %6527 = vmatprep.subr.bf16.mxu0 0
  %6528 = vmatpush1.bf16.msra.mxu0 %v6509
  %6529 = vmatprep.subr.bf16.mxu0 0
  %6530 = vmatpush1.bf16.msra.mxu0 %v6510
  %6531 = vmatprep.subr.bf16.mxu0 0
  %6532 = vmatpush1.bf16.msra.mxu0 %v6511
  %6533 = vmatprep.subr.bf16.mxu0 0
  %6534 = vmatpush1.bf16.msra.mxu0 %v6512
  %6535 = vmatprep.subr.bf16.mxu0 0
  %6536 = vmatpush1.bf16.msra.mxu0 %v6513
  %6537 = vmatprep.subr.bf16.mxu0 0
  %6538 = vmatpush1.bf16.msra.mxu0 %v6514
  %6539 = vmatprep.subr.bf16.mxu0 0
  %6540 = vmatpush1.bf16.msra.mxu0 0
  %6541 = vmatprep.subr.bf16.mxu0 0
  %6542 = vmatpush1.bf16.msra.mxu0 0
  %6543 = vmatprep.subr.bf16.mxu0 0
  %6544 = vmatpush1.bf16.msra.mxu0 0
  %6545 = vmatprep.subr.bf16.mxu0 0
  %6546 = vmatpush1.bf16.msra.mxu0 0
  %6547 = vmatprep.subr.bf16.mxu0 0
  %6548 = vmatpush1.bf16.msra.mxu0 0
  %6549 = vmatprep.subr.bf16.mxu0 0
  %6550 = vmatpush1.bf16.msra.mxu0 0
  %6551 = vmatprep.subr.bf16.mxu0 0
  %6552 = vmatpush1.bf16.msra.mxu0 0
  %6553 = vmatprep.subr.bf16.mxu0 0
  %6554 = vmatpush1.bf16.msra.mxu0 0
  %6555 = vmatprep.mubr.bf16.mxu0 0
  %6556 = vmatmul.mubr.bf16.gmra.mrb[0].mxu0 %v5928
  %v6557 = vpop.f32.mrb[0].mxu0
  %v6558 = vadd.f32 0.0, %v6557
  %v6559 = vpop.f32.mrb[0].mxu0
  %v6560 = vpop.f32.mrb[0].mxu0
  %v6561 = vadd.f32 0.0, %v6560
  %v6562 = vpop.f32.mrb[0].mxu0
  %6563 = vdwg.mxu0
  %s6564 = scalar_lea.vmem %s6, 384
  %v6565 = vld [vmem:[%s6564] sm:$0xf]
  %v6566 = vld [vmem:[%s6564 + $0x4] sm:$0xf]
  %v6567 = vld [vmem:[%s6564 + $0x8] sm:$0xf]
  %v6568 = vld [vmem:[%s6564 + $0xc] sm:$0xf]
  %v6569 = vld [vmem:[%s6564 + $0x10] sm:$0xf]
  %v6570 = vld [vmem:[%s6564 + $0x14] sm:$0xf]
  %v6571 = vld [vmem:[%s6564 + $0x18] sm:$0xf]
  %v6572 = vld [vmem:[%s6564 + $0x1c] sm:$0xf]
  %v6573 = vld [vmem:[%s6564 + $0x20] sm:$0xf]
  %v6574 = vld [vmem:[%s6564 + $0x24] sm:$0xf]
  %v6575 = vld [vmem:[%s6564 + $0x28] sm:$0xf]
  %v6576 = vld [vmem:[%s6564 + $0x2c] sm:$0xf]
  %v6577 = vld [vmem:[%s6564 + $0x30] sm:$0xf]
  %v6578 = vld [vmem:[%s6564 + $0x34] sm:$0xf]
  %v6579 = vld [vmem:[%s6564 + $0x38] sm:$0xf]
  %v6580 = vld [vmem:[%s6564 + $0x3c] sm:$0xf]
  %v6597 = vunpack.c.l.b16 %v6565
  %v6598 = vunpack.c.l.b16 %v6566
  %v6599 = vunpack.c.l.b16 %v6567
  %v6600 = vunpack.c.l.b16 %v6568
  %v6601 = vunpack.c.l.b16 %v6569
  %v6602 = vunpack.c.l.b16 %v6570
  %v6603 = vunpack.c.l.b16 %v6571
  %v6604 = vunpack.c.l.b16 %v6572
  %v6605 = vunpack.c.l.b16 %v6573
  %v6606 = vunpack.c.l.b16 %v6574
  %v6607 = vunpack.c.l.b16 %v6575
  %v6608 = vunpack.c.l.b16 %v6576
  %v6609 = vunpack.c.l.b16 %v6577
  %v6610 = vunpack.c.l.b16 %v6578
  %v6611 = vunpack.c.l.b16 %v6579
  %v6612 = vunpack.c.l.b16 %v6580
  %v6613 = vpack.c.b16 %v6598, %v6597
  %v6614 = vpack.c.b16 %v6600, %v6599
  %v6615 = vpack.c.b16 %v6602, %v6601
  %v6616 = vpack.c.b16 %v6604, %v6603
  %v6617 = vpack.c.b16 %v6606, %v6605
  %v6618 = vpack.c.b16 %v6608, %v6607
  %v6619 = vpack.c.b16 %v6610, %v6609
  %v6620 = vpack.c.b16 %v6612, %v6611
  %6629 = vmatprep.subr.bf16.mxu0 0
  %6630 = vmatpush1.bf16.msra.mxu0 %v6613
  %6631 = vmatprep.subr.bf16.mxu0 0
  %6632 = vmatpush1.bf16.msra.mxu0 %v6614
  %6633 = vmatprep.subr.bf16.mxu0 0
  %6634 = vmatpush1.bf16.msra.mxu0 %v6615
  %6635 = vmatprep.subr.bf16.mxu0 0
  %6636 = vmatpush1.bf16.msra.mxu0 %v6616
  %6637 = vmatprep.subr.bf16.mxu0 0
  %6638 = vmatpush1.bf16.msra.mxu0 %v6617
  %6639 = vmatprep.subr.bf16.mxu0 0
  %6640 = vmatpush1.bf16.msra.mxu0 %v6618
  %6641 = vmatprep.subr.bf16.mxu0 0
  %6642 = vmatpush1.bf16.msra.mxu0 %v6619
  %6643 = vmatprep.subr.bf16.mxu0 0
  %6644 = vmatpush1.bf16.msra.mxu0 %v6620
  %6645 = vmatprep.subr.bf16.mxu0 0
  %6646 = vmatpush1.bf16.msra.mxu0 0
  %6647 = vmatprep.subr.bf16.mxu0 0
  %6648 = vmatpush1.bf16.msra.mxu0 0
  %6649 = vmatprep.subr.bf16.mxu0 0
  %6650 = vmatpush1.bf16.msra.mxu0 0
  %6651 = vmatprep.subr.bf16.mxu0 0
  %6652 = vmatpush1.bf16.msra.mxu0 0
  %6653 = vmatprep.subr.bf16.mxu0 0
  %6654 = vmatpush1.bf16.msra.mxu0 0
  %6655 = vmatprep.subr.bf16.mxu0 0
  %6656 = vmatpush1.bf16.msra.mxu0 0
  %6657 = vmatprep.subr.bf16.mxu0 0
  %6658 = vmatpush1.bf16.msra.mxu0 0
  %6659 = vmatprep.subr.bf16.mxu0 0
  %6660 = vmatpush1.bf16.msra.mxu0 0
  %6661 = vmatprep.mubr.bf16.mxu0 0
  %6662 = vmatmul.mubr.bf16.gmra.mrb[0].mxu0 %v5928
  %v6663 = vpop.f32.mrb[0].mxu0
  %v6664 = vadd.f32 0.0, %v6663
  %v6665 = vpop.f32.mrb[0].mxu0
  %v6666 = vpop.f32.mrb[0].mxu0
  %v6667 = vadd.f32 0.0, %v6666
  %v6668 = vpop.f32.mrb[0].mxu0
  %6669 = vdwg.mxu0
  %s6670 = scalar_lea.vmem %s6, 448
  %v6671 = vld [vmem:[%s6670] sm:$0xf]
  %v6672 = vld [vmem:[%s6670 + $0x4] sm:$0xf]
  %v6673 = vld [vmem:[%s6670 + $0x8] sm:$0xf]
  %v6674 = vld [vmem:[%s6670 + $0xc] sm:$0xf]
  %v6675 = vld [vmem:[%s6670 + $0x10] sm:$0xf]
  %v6676 = vld [vmem:[%s6670 + $0x14] sm:$0xf]
  %v6677 = vld [vmem:[%s6670 + $0x18] sm:$0xf]
  %v6678 = vld [vmem:[%s6670 + $0x1c] sm:$0xf]
  %v6679 = vld [vmem:[%s6670 + $0x20] sm:$0xf]
  %v6680 = vld [vmem:[%s6670 + $0x24] sm:$0xf]
  %v6681 = vld [vmem:[%s6670 + $0x28] sm:$0xf]
  %v6682 = vld [vmem:[%s6670 + $0x2c] sm:$0xf]
  %v6683 = vld [vmem:[%s6670 + $0x30] sm:$0xf]
  %v6684 = vld [vmem:[%s6670 + $0x34] sm:$0xf]
  %v6685 = vld [vmem:[%s6670 + $0x38] sm:$0xf]
  %v6686 = vld [vmem:[%s6670 + $0x3c] sm:$0xf]
  %v6703 = vunpack.c.l.b16 %v6671
  %v6704 = vunpack.c.l.b16 %v6672
  %v6705 = vunpack.c.l.b16 %v6673
  %v6706 = vunpack.c.l.b16 %v6674
  %v6707 = vunpack.c.l.b16 %v6675
  %v6708 = vunpack.c.l.b16 %v6676
  %v6709 = vunpack.c.l.b16 %v6677
  %v6710 = vunpack.c.l.b16 %v6678
  %v6711 = vunpack.c.l.b16 %v6679
  %v6712 = vunpack.c.l.b16 %v6680
  %v6713 = vunpack.c.l.b16 %v6681
  %v6714 = vunpack.c.l.b16 %v6682
  %v6715 = vunpack.c.l.b16 %v6683
  %v6716 = vunpack.c.l.b16 %v6684
  %v6717 = vunpack.c.l.b16 %v6685
  %v6718 = vunpack.c.l.b16 %v6686
  %v6719 = vpack.c.b16 %v6704, %v6703
  %v6720 = vpack.c.b16 %v6706, %v6705
  %v6721 = vpack.c.b16 %v6708, %v6707
  %v6722 = vpack.c.b16 %v6710, %v6709
  %v6723 = vpack.c.b16 %v6712, %v6711
  %v6724 = vpack.c.b16 %v6714, %v6713
  %v6725 = vpack.c.b16 %v6716, %v6715
  %v6726 = vpack.c.b16 %v6718, %v6717
  %6735 = vmatprep.subr.bf16.mxu0 0
  %6736 = vmatpush1.bf16.msra.mxu0 %v6719
  %6737 = vmatprep.subr.bf16.mxu0 0
  %6738 = vmatpush1.bf16.msra.mxu0 %v6720
  %6739 = vmatprep.subr.bf16.mxu0 0
  %6740 = vmatpush1.bf16.msra.mxu0 %v6721
  %6741 = vmatprep.subr.bf16.mxu0 0
  %6742 = vmatpush1.bf16.msra.mxu0 %v6722
  %6743 = vmatprep.subr.bf16.mxu0 0
  %6744 = vmatpush1.bf16.msra.mxu0 %v6723
  %6745 = vmatprep.subr.bf16.mxu0 0
  %6746 = vmatpush1.bf16.msra.mxu0 %v6724
  %6747 = vmatprep.subr.bf16.mxu0 0
  %6748 = vmatpush1.bf16.msra.mxu0 %v6725
  %6749 = vmatprep.subr.bf16.mxu0 0
  %6750 = vmatpush1.bf16.msra.mxu0 %v6726
  %6751 = vmatprep.subr.bf16.mxu0 0
  %6752 = vmatpush1.bf16.msra.mxu0 0
  %6753 = vmatprep.subr.bf16.mxu0 0
  %6754 = vmatpush1.bf16.msra.mxu0 0
  %6755 = vmatprep.subr.bf16.mxu0 0
  %6756 = vmatpush1.bf16.msra.mxu0 0
  %6757 = vmatprep.subr.bf16.mxu0 0
  %6758 = vmatpush1.bf16.msra.mxu0 0
  %6759 = vmatprep.subr.bf16.mxu0 0
  %6760 = vmatpush1.bf16.msra.mxu0 0
  %6761 = vmatprep.subr.bf16.mxu0 0
  %6762 = vmatpush1.bf16.msra.mxu0 0
  %6763 = vmatprep.subr.bf16.mxu0 0
  %6764 = vmatpush1.bf16.msra.mxu0 0
  %6765 = vmatprep.subr.bf16.mxu0 0
  %6766 = vmatpush1.bf16.msra.mxu0 0
  %6767 = vmatprep.mubr.bf16.mxu0 0
  %6768 = vmatmul.mubr.bf16.gmra.mrb[0].mxu0 %v5928
  %v6769 = vpop.f32.mrb[0].mxu0
  %v6770 = vadd.f32 0.0, %v6769
  %v6771 = vpop.f32.mrb[0].mxu0
  %v6772 = vpop.f32.mrb[0].mxu0
  %v6773 = vadd.f32 0.0, %v6772
  %v6774 = vpop.f32.mrb[0].mxu0
  %6775 = vdwg.mxu0
  %s6776 = scalar_lea.vmem %s6, 512
  %v6777 = vld [vmem:[%s6776] sm:$0xf]
  %v6778 = vld [vmem:[%s6776 + $0x4] sm:$0xf]
  %v6779 = vld [vmem:[%s6776 + $0x8] sm:$0xf]
  %v6780 = vld [vmem:[%s6776 + $0xc] sm:$0xf]
  %v6781 = vld [vmem:[%s6776 + $0x10] sm:$0xf]
  %v6782 = vld [vmem:[%s6776 + $0x14] sm:$0xf]
  %v6783 = vld [vmem:[%s6776 + $0x18] sm:$0xf]
  %v6784 = vld [vmem:[%s6776 + $0x1c] sm:$0xf]
  %v6785 = vld [vmem:[%s6776 + $0x20] sm:$0xf]
  %v6786 = vld [vmem:[%s6776 + $0x24] sm:$0xf]
  %v6787 = vld [vmem:[%s6776 + $0x28] sm:$0xf]
  %v6788 = vld [vmem:[%s6776 + $0x2c] sm:$0xf]
  %v6789 = vld [vmem:[%s6776 + $0x30] sm:$0xf]
  %v6790 = vld [vmem:[%s6776 + $0x34] sm:$0xf]
  %v6791 = vld [vmem:[%s6776 + $0x38] sm:$0xf]
  %v6792 = vld [vmem:[%s6776 + $0x3c] sm:$0xf]
  %v6809 = vunpack.c.l.b16 %v6777
  %v6810 = vunpack.c.l.b16 %v6778
  %v6811 = vunpack.c.l.b16 %v6779
  %v6812 = vunpack.c.l.b16 %v6780
  %v6813 = vunpack.c.l.b16 %v6781
  %v6814 = vunpack.c.l.b16 %v6782
  %v6815 = vunpack.c.l.b16 %v6783
  %v6816 = vunpack.c.l.b16 %v6784
  %v6817 = vunpack.c.l.b16 %v6785
  %v6818 = vunpack.c.l.b16 %v6786
  %v6819 = vunpack.c.l.b16 %v6787
  %v6820 = vunpack.c.l.b16 %v6788
  %v6821 = vunpack.c.l.b16 %v6789
  %v6822 = vunpack.c.l.b16 %v6790
  %v6823 = vunpack.c.l.b16 %v6791
  %v6824 = vunpack.c.l.b16 %v6792
  %v6825 = vpack.c.b16 %v6810, %v6809
  %v6826 = vpack.c.b16 %v6812, %v6811
  %v6827 = vpack.c.b16 %v6814, %v6813
  %v6828 = vpack.c.b16 %v6816, %v6815
  %v6829 = vpack.c.b16 %v6818, %v6817
  %v6830 = vpack.c.b16 %v6820, %v6819
  %v6831 = vpack.c.b16 %v6822, %v6821
  %v6832 = vpack.c.b16 %v6824, %v6823
  %6841 = vmatprep.subr.bf16.mxu0 0
  %6842 = vmatpush1.bf16.msra.mxu0 %v6825
  %6843 = vmatprep.subr.bf16.mxu0 0
  %6844 = vmatpush1.bf16.msra.mxu0 %v6826
  %6845 = vmatprep.subr.bf16.mxu0 0
  %6846 = vmatpush1.bf16.msra.mxu0 %v6827
  %6847 = vmatprep.subr.bf16.mxu0 0
  %6848 = vmatpush1.bf16.msra.mxu0 %v6828
  %6849 = vmatprep.subr.bf16.mxu0 0
  %6850 = vmatpush1.bf16.msra.mxu0 %v6829
  %6851 = vmatprep.subr.bf16.mxu0 0
  %6852 = vmatpush1.bf16.msra.mxu0 %v6830
  %6853 = vmatprep.subr.bf16.mxu0 0
  %6854 = vmatpush1.bf16.msra.mxu0 %v6831
  %6855 = vmatprep.subr.bf16.mxu0 0
  %6856 = vmatpush1.bf16.msra.mxu0 %v6832
  %6857 = vmatprep.subr.bf16.mxu0 0
  %6858 = vmatpush1.bf16.msra.mxu0 0
  %6859 = vmatprep.subr.bf16.mxu0 0
  %6860 = vmatpush1.bf16.msra.mxu0 0
  %6861 = vmatprep.subr.bf16.mxu0 0
  %6862 = vmatpush1.bf16.msra.mxu0 0
  %6863 = vmatprep.subr.bf16.mxu0 0
  %6864 = vmatpush1.bf16.msra.mxu0 0
  %6865 = vmatprep.subr.bf16.mxu0 0
  %6866 = vmatpush1.bf16.msra.mxu0 0
  %6867 = vmatprep.subr.bf16.mxu0 0
  %6868 = vmatpush1.bf16.msra.mxu0 0
  %6869 = vmatprep.subr.bf16.mxu0 0
  %6870 = vmatpush1.bf16.msra.mxu0 0
  %6871 = vmatprep.subr.bf16.mxu0 0
  %6872 = vmatpush1.bf16.msra.mxu0 0
  %6873 = vmatprep.mubr.bf16.mxu0 0
  %6874 = vmatmul.mubr.bf16.gmra.mrb[0].mxu0 %v5928
  %v6875 = vpop.f32.mrb[0].mxu0
  %v6876 = vadd.f32 0.0, %v6875
  %v6877 = vpop.f32.mrb[0].mxu0
  %v6878 = vpop.f32.mrb[0].mxu0
  %v6879 = vadd.f32 0.0, %v6878
  %v6880 = vpop.f32.mrb[0].mxu0
  %6881 = vdwg.mxu0
  %v6882 = vpack.c.bf16 %v6031, %v6028
  %v6883 = vpack.c.bf16 %v6137, %v6134
  %v6884 = vpack.c.bf16 %v6243, %v6240
  %v6885 = vpack.c.bf16 %v6349, %v6346
  %v6886 = vpack.c.bf16 %v6455, %v6452
  %v6887 = vpack.c.bf16 %v6561, %v6558
  %v6888 = vpack.c.bf16 %v6667, %v6664
  %v6889 = vpack.c.bf16 %v6773, %v6770
  %v6890 = vpack.c.bf16 %v6879, %v6876
  %v6891 = vld [vmem:[%s7] sm:$0xff]
  %v6892 = vld [vmem:[%s7 + $0x8] sm:$0xff]
  %v6893 = vld [vmem:[%s7 + $0x10] sm:$0xff]
  %v6894 = vld [vmem:[%s7 + $0x18] sm:$0xff]
  %v6899 = vunpack.c.l.b16 %v6891
  %v6900 = vunpack.c.h.b16 %v6891
  %v6901 = vunpack.c.l.b16 %v6892
  %v6902 = vunpack.c.h.b16 %v6892
  %v6903 = vunpack.c.l.b16 %v6893
  %v6904 = vunpack.c.h.b16 %v6893
  %v6905 = vunpack.c.l.b16 %v6894
  %v6906 = vunpack.c.h.b16 %v6894
  %v6907 = vpack.c.b16 %v6901, %v6899
  %v6908 = vpack.c.b16 %v6902, %v6900
  %v6909 = vpack.c.b16 %v6905, %v6903
  %v6910 = vpack.c.b16 %v6906, %v6904
  %vm6913 = vcmask 130048
  %v6915 = vsel %vm6913, %v6908, 0
  %v6918 = vsel %vm6913, %v6910, 0
  %6920 = vmatprep.subr.bf16.mxu0 0
  %6921 = vmatpush1.bf16.msra.mxu0 %v6882
  %6922 = vmatprep.subr.bf16.mxu0 0
  %6923 = vmatpush1.bf16.msra.mxu0 %v6883
  %6924 = vmatprep.subr.bf16.mxu0 0
  %6925 = vmatpush1.bf16.msra.mxu0 %v6884
  %6926 = vmatprep.subr.bf16.mxu0 0
  %6927 = vmatpush1.bf16.msra.mxu0 %v6885
  %6928 = vmatprep.subr.bf16.mxu0 0
  %6929 = vmatpush1.bf16.msra.mxu0 %v6886
  %6930 = vmatprep.subr.bf16.mxu0 0
  %6931 = vmatpush1.bf16.msra.mxu0 %v6887
  %6932 = vmatprep.subr.bf16.mxu0 0
  %6933 = vmatpush1.bf16.msra.mxu0 %v6888
  %6934 = vmatprep.subr.bf16.mxu0 0
  %6935 = vmatpush1.bf16.msra.mxu0 %v6889
  %6936 = vmatprep.subr.bf16.mxu0 0
  %6937 = vmatpush1.bf16.msra.mxu0 %v6890
  %6938 = vmatprep.subr.bf16.mxu0 0
  %6939 = vmatpush1.bf16.msra.mxu0 0
  %6940 = vmatprep.subr.bf16.mxu0 0
  %6941 = vmatpush1.bf16.msra.mxu0 0
  %6942 = vmatprep.subr.bf16.mxu0 0
  %6943 = vmatpush1.bf16.msra.mxu0 0
  %6944 = vmatprep.subr.bf16.mxu0 0
  %6945 = vmatpush1.bf16.msra.mxu0 0
  %6946 = vmatprep.subr.bf16.mxu0 0
  %6947 = vmatpush1.bf16.msra.mxu0 0
  %6948 = vmatprep.subr.bf16.mxu0 0
  %6949 = vmatpush1.bf16.msra.mxu0 0
  %6950 = vmatprep.subr.bf16.mxu0 0
  %6951 = vmatpush1.bf16.msra.mxu0 0
  %6952 = vmatprep.mubr.bf16.mxu0 %v6915
  %6953 = vmatmul.mubr.bf16.gmra.mrb[0].mxu0 %v6907
  %v6954 = vpop.f32.mrb[0].mxu0
  %v6955 = vadd.f32 0.0, %v6954
  %v6956 = vpop.f32.mrb[0].mxu0
  %v6957 = vpop.f32.mrb[0].mxu0
  %v6958 = vadd.f32 0.0, %v6957
  %v6959 = vpop.f32.mrb[0].mxu0
  %6960 = vmatprep.mubr.bf16.mxu0 %v6918
  %6961 = vmatmul.mubr.bf16.gmra.mrb[0].mxu0 %v6909
  %v6962 = vpop.f32.mrb[0].mxu0
  %v6963 = vadd.f32 0.0, %v6962
  %v6964 = vpop.f32.mrb[0].mxu0
  %v6965 = vpop.f32.mrb[0].mxu0
  %v6966 = vadd.f32 0.0, %v6965
  %v6967 = vpop.f32.mrb[0].mxu0
  %6968 = vdwg.mxu0
  %v6969 = vld [vmem:[%s8] sm:$0xff]
  %v6970 = vld [vmem:[%s8 + $0x8] sm:$0xff]
  %v6971 = vld [vmem:[%s8 + $0x10] sm:$0xff]
  %v6972 = vld [vmem:[%s8 + $0x18] sm:$0xff]
  %v6973 = vld [vmem:[%s9] sm:$0xff]
  %v6974 = vld [vmem:[%s9 + $0x8] sm:$0xff]
  %v6975 = vld [vmem:[%s9 + $0x10] sm:$0xff]
  %v6976 = vld [vmem:[%s9 + $0x18] sm:$0xff]
  %vm6977 = vcmp.lt.s32.totalorder %v5868, 32
  %v6978 = vsel %vm6977, 1, 0
  %v6979 = vcvt.s32.f32 %v6978
  %v6980 = vmul.f32 %v6955, %v6979
  %v6981 = vmul.f32 %v6958, %v6979
  %v6982 = vmul.f32 %v6963, %v6979
  %v6983 = vmul.f32 %v6966, %v6979
  %6984 = vadd.xlane.f32.xlu0 %v6980
  %v6985 = vpop.xlane.xlu0 %6984
  %6986 = vadd.xlane.f32.xlu0 %v6981
  %v6987 = vpop.xlane.xlu0 %6986
  %6988 = vadd.xlane.f32.xlu0 %v6982
  %v6989 = vpop.xlane.xlu0 %6988
  %6990 = vadd.xlane.f32.xlu0 %v6983
  %v6991 = vpop.xlane.xlu0 %6990
  %v6992 = vmul.f32 %v6985, 0.03125
  %v6993 = vmul.f32 %v6987, 0.03125
  %v6994 = vmul.f32 %v6989, 0.03125
  %v6995 = vmul.f32 %v6991, 0.03125
  %v6996 = vsub.f32 %v6955, %v6992
  %v6997 = vsub.f32 %v6958, %v6993
  %v6998 = vsub.f32 %v6963, %v6994
  %v6999 = vsub.f32 %v6966, %v6995
  %v7000 = vmul.f32 %v6996, %v6979
  %v7001 = vmul.f32 %v6997, %v6979
  %v7002 = vmul.f32 %v6998, %v6979
  %v7003 = vmul.f32 %v6999, %v6979
  %v7004 = vmul.f32 %v7000, %v7000
  %v7005 = vmul.f32 %v7001, %v7001
  %v7006 = vmul.f32 %v7002, %v7002
  %v7007 = vmul.f32 %v7003, %v7003
  %7008 = vadd.xlane.f32.xlu0 %v7004
  %v7009 = vpop.xlane.xlu0 %7008
  %7010 = vadd.xlane.f32.xlu0 %v7005
  %v7011 = vpop.xlane.xlu0 %7010
  %7012 = vadd.xlane.f32.xlu0 %v7006
  %v7013 = vpop.xlane.xlu0 %7012
  %7014 = vadd.xlane.f32.xlu0 %v7007
  %v7015 = vpop.xlane.xlu0 %7014
  %v7016 = vmul.f32 %v7009, 0.03125
  %v7017 = vmul.f32 %v7011, 0.03125
  %v7018 = vmul.f32 %v7013, 0.03125
  %v7019 = vmul.f32 %v7015, 0.03125
  %v7020 = vadd.f32 %v7016, 1e-05
  %v7021 = vadd.f32 %v7017, 1e-05
  %v7022 = vadd.f32 %v7018, 1e-05
  %v7023 = vadd.f32 %v7019, 1e-05
  %v7024 = vrsqrt.pop %v7020
  %v7025 = vrsqrt.pop %v7021
  %v7026 = vrsqrt.pop %v7022
  %v7027 = vrsqrt.pop %v7023
  %v7028 = vmul.f32 %v6996, %v7024
  %v7029 = vmul.f32 %v6997, %v7025
  %v7030 = vmul.f32 %v6998, %v7026
  %v7031 = vmul.f32 %v6999, %v7027
  %7033 = vset.pattern.permute.xlu0 0
  %7034 = vperm.xlu0 %7033, %v6969
  %v7035 = vpop.permute.xlu0 %7034
  %7038 = vset.pattern.permute.xlu0 0
  %7039 = vperm.xlu0 %7038, %v6970
  %v7040 = vpop.permute.xlu0 %7039
  %7043 = vset.pattern.permute.xlu0 0
  %7044 = vperm.xlu0 %7043, %v6971
  %v7045 = vpop.permute.xlu0 %7044
  %7048 = vset.pattern.permute.xlu0 0
  %7049 = vperm.xlu0 %7048, %v6972
  %v7050 = vpop.permute.xlu0 %7049
  %v7052 = vmul.f32 %v7028, %v7035
  %v7053 = vmul.f32 %v7029, %v7040
  %v7054 = vmul.f32 %v7030, %v7045
  %v7055 = vmul.f32 %v7031, %v7050
  %7057 = vset.pattern.permute.xlu0 0
  %7058 = vperm.xlu0 %7057, %v6973
  %v7059 = vpop.permute.xlu0 %7058
  %7062 = vset.pattern.permute.xlu0 0
  %7063 = vperm.xlu0 %7062, %v6974
  %v7064 = vpop.permute.xlu0 %7063
  %7067 = vset.pattern.permute.xlu0 0
  %7068 = vperm.xlu0 %7067, %v6975
  %v7069 = vpop.permute.xlu0 %7068
  %7072 = vset.pattern.permute.xlu0 0
  %7073 = vperm.xlu0 %7072, %v6976
  %v7074 = vpop.permute.xlu0 %7073
  %v7076 = vadd.f32 %v7052, %v7059
  %v7077 = vadd.f32 %v7053, %v7064
  %v7078 = vadd.f32 %v7054, %v7069
  %v7079 = vadd.f32 %v7055, %v7074
  %vm7080 = vcmp.ge.f32.partialorder %v7076, 0.0
  %vm7081 = vcmp.ge.f32.partialorder %v7077, 0.0
  %vm7082 = vcmp.ge.f32.partialorder %v7078, 0.0
  %vm7083 = vcmp.ge.f32.partialorder %v7079, 0.0
  %v7084 = vmul.f32 %v7076, 0.2
  %v7085 = vmul.f32 %v7077, 0.2
  %v7086 = vmul.f32 %v7078, 0.2
  %v7087 = vmul.f32 %v7079, 0.2
  %v7088 = vsel %vm7080, %v7076, %v7084
  %v7089 = vsel %vm7081, %v7077, %v7085
  %v7090 = vsel %vm7082, %v7078, %v7086
  %v7091 = vsel %vm7083, %v7079, %v7087
  %v7092 = vld [vmem:[%s10] sm:$0xff]
  %v7093 = vld [vmem:[%s10 + $0x8] sm:$0xff]
  %v7094 = vld [vmem:[%s10 + $0x10] sm:$0xff]
  %v7095 = vld [vmem:[%s10 + $0x18] sm:$0xff]
  %v7096 = vmul.f32 %v7088, %v7092
  %v7097 = vmul.f32 %v7089, %v7093
  %v7098 = vmul.f32 %v7090, %v7094
  %v7099 = vmul.f32 %v7091, %v7095
  %v7100 = vadd.f32 %v7096, %v7097
  %v7101 = vadd.f32 %v7100, %v7098
  %v7102 = vadd.f32 %v7101, %v7099
  %v7103 = vrot.slane %v7102, 4
  %v7104 = vadd.f32 %v7102, %v7103
  %v7105 = vrot.slane %v7104, 2
  %v7106 = vadd.f32 %v7104, %v7105
  %v7107 = vrot.slane %v7106, 1
  %v7108 = vadd.f32 %v7106, %v7107
  %v7109 = vld [vmem:[%s11] sm:$0xff]
  %v7110 = vld [vmem:[%s11 + $0x8] sm:$0xff]
  %v7111 = vld [vmem:[%s11 + $0x10] sm:$0xff]
  %v7112 = vld [vmem:[%s11 + $0x18] sm:$0xff]
  %v7113 = vld [vmem:[%s11 + $0x20] sm:$0xff]
  %v7114 = vld [vmem:[%s11 + $0x28] sm:$0xff]
  %v7115 = vld [vmem:[%s11 + $0x30] sm:$0xff]
  %v7116 = vld [vmem:[%s11 + $0x38] sm:$0xff]
  %v7117 = vld [vmem:[%s11 + $0x40] sm:$0xff]
  %v7118 = vld [vmem:[%s11 + $0x48] sm:$0xff]
  %v7119 = vld [vmem:[%s11 + $0x50] sm:$0xff]
  %v7120 = vld [vmem:[%s11 + $0x58] sm:$0xff]
  %v7121 = vld [vmem:[%s11 + $0x60] sm:$0xff]
  %v7122 = vld [vmem:[%s11 + $0x68] sm:$0xff]
  %v7123 = vld [vmem:[%s11 + $0x70] sm:$0xff]
  %v7124 = vld [vmem:[%s11 + $0x78] sm:$0xff]
  %7125 = vmatprep.subr.mxu0 0.0
  %7126 = vmatpush1.msra.mxu0 %v7109
  %7127 = vmatprep.subr.mxu0 0.0
  %7128 = vmatpush1.msra.mxu0 %v7110
  %7129 = vmatprep.subr.mxu0 0.0
  %7130 = vmatpush1.msra.mxu0 %v7111
  %7131 = vmatprep.subr.mxu0 0.0
  %7132 = vmatpush1.msra.mxu0 %v7112
  %7133 = vmatprep.subr.mxu0 0.0
  %7134 = vmatpush1.msra.mxu0 %v7113
  %7135 = vmatprep.subr.mxu0 0.0
  %7136 = vmatpush1.msra.mxu0 %v7114
  %7137 = vmatprep.subr.mxu0 0.0
  %7138 = vmatpush1.msra.mxu0 %v7115
  %7139 = vmatprep.subr.mxu0 0.0
  %7140 = vmatpush1.msra.mxu0 %v7116
  %7141 = vmatprep.subr.mxu0 0.0
  %7142 = vmatpush1.msra.mxu0 %v7117
  %7143 = vmatprep.subr.mxu0 0.0
  %7144 = vmatpush1.msra.mxu0 %v7118
  %7145 = vmatprep.subr.mxu0 0.0
  %7146 = vmatpush1.msra.mxu0 %v7119
  %7147 = vmatprep.subr.mxu0 0.0
  %7148 = vmatpush1.msra.mxu0 %v7120
  %7149 = vmatprep.subr.mxu0 0.0
  %7150 = vmatpush1.msra.mxu0 %v7121
  %7151 = vmatprep.subr.mxu0 0.0
  %7152 = vmatpush1.msra.mxu0 %v7122
  %7153 = vmatprep.subr.mxu0 0.0
  %7154 = vmatpush1.msra.mxu0 %v7123
  %7155 = vmatprep.subr.mxu0 0.0
  %7156 = vmatpush1.msra.mxu0 %v7124
  %7157 = vmatprep.subr.mxu0 0.0
  %7158 = vmatpush1.msra.mxu0 0.0
  %7159 = vmatprep.subr.mxu0 0.0
  %7160 = vmatpush1.msra.mxu0 0.0
  %7161 = vmatprep.subr.mxu0 0.0
  %7162 = vmatpush1.msra.mxu0 0.0
  %7163 = vmatprep.subr.mxu0 0.0
  %7164 = vmatpush1.msra.mxu0 0.0
  %7165 = vmatprep.subr.mxu0 0.0
  %7166 = vmatpush1.msra.mxu0 0.0
  %7167 = vmatprep.subr.mxu0 0.0
  %7168 = vmatpush1.msra.mxu0 0.0
  %7169 = vmatprep.subr.mxu0 0.0
  %7170 = vmatpush1.msra.mxu0 0.0
  %7171 = vmatprep.subr.mxu0 0.0
  %7172 = vmatpush1.msra.mxu0 0.0
  %7173 = vmatprep.subr.mxu0 0.0
  %7174 = vmatpush1.msra.mxu0 0.0
  %7175 = vmatprep.subr.mxu0 0.0
  %7176 = vmatpush1.msra.mxu0 0.0
  %7177 = vmatprep.subr.mxu0 0.0
  %7178 = vmatpush1.msra.mxu0 0.0
  %7179 = vmatprep.subr.mxu0 0.0
  %7180 = vmatpush1.msra.mxu0 0.0
  %7181 = vmatprep.subr.mxu0 0.0
  %7182 = vmatpush1.msra.mxu0 0.0
  %7183 = vmatprep.subr.mxu0 0.0
  %7184 = vmatpush1.msra.mxu0 0.0
  %7185 = vmatprep.subr.mxu0 0.0
  %7186 = vmatpush1.msra.mxu0 0.0
  %7187 = vmatprep.subr.mxu0 0.0
  %7188 = vmatpush1.msra.mxu0 0.0
  %7189 = vmatprep.mubr.f32.mxu0 0.0
  %7190 = vmatmul.mubr.f32.gmra.mrb[0].mxu0 %v7108
  %v7191 = vpop.f32.mrb[0].mxu0
  %v7192 = vadd.f32 0.0, %v7191
  %v7193 = vpop.f32.mrb[0].mxu0
  %7194 = vdwg.mxu0
  %v7195 = vsub.f32 0.0, %v7192
  %v7196 = vmul.f32 %v7195, 1.442695
  %v7197 = vpow.pop %v7196
  %v7198 = vadd.f32 %v7197, 1.0
  %v7199 = vrcp.pop %v7198
  %v7200 = vmul.f32 1.0, %v7199
  %7201 = vst [vmem:[%s12] sm:$0x1] %v7200
  // Predicated region
  $region50: #{discriminator_forward.1} parent=0 // pred_check
    _
  $region51: #{discriminator_forward.1} parent=0 // pred_check_branch
    %7203 = sbr.rel (0) target = $region53
  $region52: #{discriminator_forward.1} parent=0 // pred_region
    _
  $region53: #{discriminator_forward.1} parent=0 // pred_fallthru
    _
  // Predicated region
  $region54: #{discriminator_forward.1} parent=0 // pred_check
    _
  $region55: #{discriminator_forward.1} parent=0 // pred_check_branch
    %7205 = sbr.rel (0) target = $region57
  $region56: #{discriminator_forward.1} parent=0 // pred_region
    _
  $region57: #{discriminator_forward.1} parent=0 // pred_fallthru
    _

</llo_original>
